<compile_context>
chip_gen: v7x
topology: tpu7x:2x2x1
jax: 0.10.0
libtpu: 0.0.40
codegen_flags: <defaults>
</compile_context>

<pallas_src>
import jax
import jax.numpy as jnp
from jax import lax
from jax.experimental import pallas as pl
from jax.experimental.pallas import tpu as pltpu


def _ffb_kernel(x0_ref, x1_ref,
                w11_ref, b11_ref, w12_ref, b12_ref,
                w21_ref, b21_ref, w22f_ref, b22f_ref, wout_ref,
                o_ref, wcat_ref):
    """One batch element per grid step; RCU1 + skip + RCU2 + out_conv fused."""
    _, H, W, Cp = x0_ref.shape
    HW = H * W
    mxu_dtype = wcat_ref.dtype           # MXU-operand dtype chosen by wrapper

    # Zero halo rows (row 0 and row H+1) of the im2col scratch, written ONCE
    # per grid step: every conv only rewrites the interior rows 1..H.
    zrow = jnp.zeros((1, W, 3 * Cp), mxu_dtype)
    wcat_ref[0:1] = zrow
    wcat_ref[H + 1:H + 2] = zrow

    # Border-column masks for the W±1 shifts (hoisted; shared by all 4 convs).
    wpos = lax.broadcasted_iota(jnp.int32, (H, W, Cp), 1)
    not_first_col = wpos > 0
    not_last_col = wpos < W - 1

    def conv3x3(x, w_ref, b):
        """3x3 / stride 1 / pad 1 conv of x (H, W, Cp) f32 -> (H, W, Cp) f32.

        One lane-concatenated scratch write + three accumulating
        (H*W, 3*Cp) @ (3*Cp, Cp) matmuls with f32 accumulation.
        """
        flat = x.reshape(HW, Cp)
        # Sublane roll (XLU) of the flattened image gives the w-1 / w+1 views;
        # only the wrapped first/last columns are wrong and get zeroed, which
        # also realises the conv's zero padding along W.
        left = pltpu.roll(flat, 1, axis=0).reshape(H, W, Cp)         # x[h, w-1]
        right = pltpu.roll(flat, HW - 1, axis=0).reshape(H, W, Cp)   # x[h, w+1]
        left = jnp.where(not_first_col, left, 0.0).astype(mxu_dtype)
        right = jnp.where(not_last_col, right, 0.0).astype(mxu_dtype)
        # Interior rows 1..H hold the [kw=0 | kw=1 | kw=2] taps on lanes.
        wcat_ref[1:H + 1] = jnp.concatenate(
            [left, x.astype(mxu_dtype), right], axis=-1)
        y = b                                   # (1, Cp) f32 bias, broadcasts
        for kh in range(3):                     # kh tap = free major-axis slice
            y = y + jnp.dot(wcat_ref[kh:kh + H].reshape(HW, 3 * Cp), w_ref[kh],
                            preferred_element_type=jnp.float32)
        return y.reshape(H, W, Cp)

    def rcu(x, w1_ref, b1_ref, w2_ref, b2_ref):
        out = jnp.maximum(x, 0.0)               # activation (ReLU), f32 VPU
        out = conv3x3(out, w1_ref, b1_ref[...])  # conv1
        out = jnp.maximum(out, 0.0)             # activation
        out = conv3x3(out, w2_ref, b2_ref[...])  # conv2
        return out + x                          # skip_add

    # resConfUnit1(x1), then skip_add with x0 (x0 loaded LATE so its f32 copy
    # is not live across RCU1's two convs).
    out = rcu(x1_ref[0].astype(jnp.float32), w11_ref, b11_ref, w12_ref, b12_ref)
    out = out + x0_ref[0].astype(jnp.float32)

    # resConfUnit2 with the 1x1 out_conv folded into its second conv:
    #   final = conv2'(relu(conv1(relu(out)))) + out @ wout
    # where conv2' carries w22' = w22 ⊛ wout and b' = b22 @ wout + bout.
    z = jnp.maximum(out, 0.0)
    z = conv3x3(z, w21_ref, b21_ref[...])
    z = jnp.maximum(z, 0.0)
    z = conv3x3(z, w22f_ref, b22f_ref[...])     # includes out_conv + biases
    skip = jnp.dot(out.reshape(HW, Cp).astype(mxu_dtype), wout_ref[...],
                   preferred_element_type=jnp.float32).reshape(H, W, Cp)
    o_ref[0] = (z + skip).astype(o_ref.dtype)   # lane-dense (Cp) store


def _vmem_limit_bytes(needed_bytes):
    """Generation-aware scoped-VMEM limit (headroom under physical VMEM)."""
    try:
        phys = pltpu.get_tpu_info().vmem_capacity_bytes
    except Exception:                       # query unavailable -> assume v7x
        phys = 64 * 1024 * 1024
    cap = (100 << 20) if phys >= (128 << 20) else (56 << 20)
    return int(min(max(needed_bytes, 32 << 20), cap))


def feature_fusion_block(x0_nhwc, x1_nhwc, params, *,
                         compute_dtype=jnp.bfloat16, out_dtype=jnp.float32):
    """params = (w11,b11,w12,b12,w21,b21,w22,b22,wout,bout); 3x3 weights HWIO,
    biases (1, C), 1x1 weight (C, C).  compute_dtype sets MXU-operand /
    activation-transport precision (accumulation & elementwise are always f32);
    pass jnp.float32 for exact PyTorch-module numerics."""
    B, H, W, C = x0_nhwc.shape
    assert x1_nhwc.shape == (B, H, W, C)
    # (H, W, Cp) -> (H*W, Cp) reshapes are layout-preserving only if W % 8 == 0.
    assert W % 8 == 0, "W must be a multiple of 8 (sublane tiling)"
    (w11, b11, w12, b12, w21, b21, w22, b22, wout, bout) = params

    # Lane-dense channel padding: zero weight rows/cols keep padded channels
    # exactly zero through the whole block; they are sliced off at the end.
    Cp = ((C + 127) // 128) * 128
    pc = Cp - C

    def pad_last(a, n):
        return jnp.pad(a, [(0, 0)] * (a.ndim - 1) + [(0, n)]) if n else a

    def prep_w33(w):   # (3,3,C,C) HWIO -> (3, 3*Cp, Cp); rows (kw, cin) per kh
        w = jnp.pad(w, ((0, 0), (0, 0), (0, pc), (0, pc)))
        return w.reshape(3, 3 * Cp, Cp)

    woutp = jnp.pad(wout, ((0, pc), (0, pc)))                      # (Cp, Cp) f32

    # Fold the 1x1 out_conv into RCU2.conv2 (trace-time, f32):
    w22f = (prep_w33(w22).reshape(9 * Cp, Cp) @ woutp).reshape(3, 3 * Cp, Cp)
    b22f = pad_last(b22, pc) @ woutp + pad_last(bout, pc)          # (1, Cp)

    x0p = pad_last(x0_nhwc, pc).astype(compute_dtype)
    x1p = pad_last(x1_nhwc, pc).astype(compute_dtype)
    w11p = prep_w33(w11).astype(compute_dtype)
    w12p = prep_w33(w12).astype(compute_dtype)
    w21p = prep_w33(w21).astype(compute_dtype)
    w22fp = w22f.astype(compute_dtype)
    woutk = woutp.astype(compute_dtype)
    b11p = pad_last(b11, pc).astype(jnp.float32)
    b12p = pad_last(b12, pc).astype(jnp.float32)
    b21p = pad_last(b21, pc).astype(jnp.float32)
    b22fp = b22f.astype(jnp.float32)

    # Weights / biases are grid-invariant: single-buffer them so constant data
    # does not pay 2x VMEM (matters at Cp=256 on v7x's 64 MiB budget).
    act_spec = pl.BlockSpec((1, H, W, Cp), lambda b: (b, 0, 0, 0))
    w33_spec = pl.BlockSpec((3, 3 * Cp, Cp), lambda b: (0, 0, 0),
                            pipeline_mode=pl.Buffered(1))
    bias_spec = pl.BlockSpec((1, Cp), lambda b: (0, 0),
                             pipeline_mode=pl.Buffered(1))
    wout_spec = pl.BlockSpec((Cp, Cp), lambda b: (0, 0),
                             pipeline_mode=pl.Buffered(1))

    itm = jnp.dtype(compute_dtype).itemsize
    act = H * W * Cp
    needed = (2 * 2 * act * itm                             # x0/x1, 2 buffers
              + 2 * act * jnp.dtype(out_dtype).itemsize     # output block
              + 2 * (4 * 9 * Cp * Cp + Cp * Cp) * itm       # weights (<=2 bufs)
              + 5 * Cp * 4                                  # biases
              + (H + 2) * W * 3 * Cp * itm                  # im2col scratch
              + 10 * act * 4)                               # live f32 temps

    out = pl.pallas_call(
        _ffb_kernel,
        out_shape=jax.ShapeDtypeStruct((B, H, W, Cp), out_dtype),
        grid_spec=pltpu.PrefetchScalarGridSpec(
            num_scalar_prefetch=0,
            grid=(B,),
            in_specs=[act_spec, act_spec,
                      w33_spec, bias_spec, w33_spec, bias_spec,
                      w33_spec, bias_spec, w33_spec, bias_spec,
                      wout_spec],
            out_specs=act_spec,
            scratch_shapes=[pltpu.VMEM((H + 2, W, 3 * Cp), compute_dtype)]),
        compiler_params=pltpu.CompilerParams(
            dimension_semantics=("parallel",),
            vmem_limit_bytes=_vmem_limit_bytes(needed)),
    )(x0p, x1p, w11p, b11p, w12p, b12p, w21p, b21p, w22fp, b22fp, woutk)

    return out[..., :C]


# ---------------- pure-JAX reference (for correctness check) ----------------
def _conv3x3_ref(x, w, b):
    y = lax.conv_general_dilated(x, w, window_strides=(1, 1),
                                 padding=((1, 1), (1, 1)),
                                 dimension_numbers=('NHWC', 'HWIO', 'NHWC'))
    return y + b.reshape(1, 1, 1, -1)


def _rcu_ref(x, w1, b1, w2, b2):
    out = jnp.maximum(x, 0.0)
    out = _conv3x3_ref(out, w1, b1)
    out = jnp.maximum(out, 0.0)
    out = _conv3x3_ref(out, w2, b2)
    return out + x


def _ffb_ref(x0, x1, params):
    w11, b11, w12, b12, w21, b21, w22, b22, wout, bout = params
    out = x0 + _rcu_ref(x1, w11, b11[0], w12, b12[0])
    out = _rcu_ref(out, w21, b21[0], w22, b22[0])
    out = jnp.einsum('bhwc,cd->bhwd', out, wout) + bout[0].reshape(1, 1, 1, -1)
    return out


if __name__ == "__main__":
    B, C, H, W = 2, 4, 16, 16   # features = C = 4

    key = jax.random.PRNGKey(0)
    ks = jax.random.split(key, 12)

    # inputs in PyTorch NCHW convention, transposed to NHWC for the kernel
    x0_nchw = jax.random.normal(ks[0], (B, C, H, W), jnp.float32)
    x1_nchw = jax.random.normal(ks[1], (B, C, H, W), jnp.float32)
    x0 = jnp.transpose(x0_nchw, (0, 2, 3, 1))
    x1 = jnp.transpose(x1_nchw, (0, 2, 3, 1))

    # deterministic synthetic parameters (shapes from the module __init__)
    s33 = 1.0 / (C * 9) ** 0.5
    s11 = 1.0 / C ** 0.5
    w11 = s33 * jax.random.normal(ks[2], (3, 3, C, C), jnp.float32)   # RCU1.conv1
    b11 = s33 * jax.random.normal(ks[3], (1, C), jnp.float32)
    w12 = s33 * jax.random.normal(ks[4], (3, 3, C, C), jnp.float32)   # RCU1.conv2
    b12 = s33 * jax.random.normal(ks[5], (1, C), jnp.float32)
    w21 = s33 * jax.random.normal(ks[6], (3, 3, C, C), jnp.float32)   # RCU2.conv1
    b21 = s33 * jax.random.normal(ks[7], (1, C), jnp.float32)
    w22 = s33 * jax.random.normal(ks[8], (3, 3, C, C), jnp.float32)   # RCU2.conv2
    b22 = s33 * jax.random.normal(ks[9], (1, C), jnp.float32)
    wout = s11 * jax.random.normal(ks[10], (C, C), jnp.float32)       # out_conv (1x1)
    bout = s11 * jax.random.normal(ks[11], (1, C), jnp.float32)

    params = (w11, b11, w12, b12, w21, b21, w22, b22, wout, bout)

    ref = jax.block_until_ready(_ffb_ref(x0, x1, params))

    # f32-operand path: matches the PyTorch module numerics.
    out_f32 = jax.block_until_ready(
        feature_fusion_block(x0, x1, params, compute_dtype=jnp.float32))
    assert out_f32.shape == (B, H, W, C)
    err32 = float(jnp.max(jnp.abs(out_f32 - ref)))
    assert err32 < 1e-3, f"f32 max abs err = {err32}"

    # Default bf16-operand path (perf mode on v5e/v6e/v7x): f32 accumulation &
    # elementwise math, bf16 MXU operands — sanity-checked against f32 ref.
    out_bf16 = jax.block_until_ready(feature_fusion_block(x0, x1, params))
    assert out_bf16.shape == (B, H, W, C)
    err16 = float(jnp.max(jnp.abs(out_bf16 - ref)))
    assert err16 < 0.5, f"bf16 max abs err = {err16}"

    print("KERNEL_OK")
</pallas_src>

<mosaic_0001>
module attributes {stable_mosaic.version = 11 : i64} {
  func.func @_ffb_kernel(%arg0: i32, %arg1: memref<1x16x16x128xf32, #tpu.memory_space<vmem>>, %arg2: memref<1x16x16x128xf32, #tpu.memory_space<vmem>>, %arg3: memref<3x384x128xf32, #tpu.memory_space<vmem>>, %arg4: memref<1x128xf32, #tpu.memory_space<vmem>>, %arg5: memref<3x384x128xf32, #tpu.memory_space<vmem>>, %arg6: memref<1x128xf32, #tpu.memory_space<vmem>>, %arg7: memref<3x384x128xf32, #tpu.memory_space<vmem>>, %arg8: memref<1x128xf32, #tpu.memory_space<vmem>>, %arg9: memref<3x384x128xf32, #tpu.memory_space<vmem>>, %arg10: memref<1x128xf32, #tpu.memory_space<vmem>>, %arg11: memref<128x128xf32, #tpu.memory_space<vmem>>, %arg12: memref<1x16x16x128xf32, #tpu.memory_space<vmem>>, %arg13: memref<18x16x384xf32, #tpu.memory_space<vmem>>) attributes {dimension_semantics = [#tpu.dimension_semantics<parallel>], iteration_bounds = array<i64: 2>, scalar_prefetch = 0 : i64, scratch_operands = 1 : i64, tpu.core_type = #tpu.core_type<tc>, window_params = [{transform_indices = @transform_0, window_bounds = array<i64: 1, 16, 16, 128>}, {transform_indices = @transform_1, window_bounds = array<i64: 1, 16, 16, 128>}, {pipeline_mode = #tpu.pipeline_mode<synchronous>, transform_indices = @transform_2, window_bounds = array<i64: 3, 384, 128>}, {pipeline_mode = #tpu.pipeline_mode<synchronous>, transform_indices = @transform_3, window_bounds = array<i64: 1, 128>}, {pipeline_mode = #tpu.pipeline_mode<synchronous>, transform_indices = @transform_4, window_bounds = array<i64: 3, 384, 128>}, {pipeline_mode = #tpu.pipeline_mode<synchronous>, transform_indices = @transform_5, window_bounds = array<i64: 1, 128>}, {pipeline_mode = #tpu.pipeline_mode<synchronous>, transform_indices = @transform_6, window_bounds = array<i64: 3, 384, 128>}, {pipeline_mode = #tpu.pipeline_mode<synchronous>, transform_indices = @transform_7, window_bounds = array<i64: 1, 128>}, {pipeline_mode = #tpu.pipeline_mode<synchronous>, transform_indices = @transform_8, window_bounds = array<i64: 3, 384, 128>}, {pipeline_mode = #tpu.pipeline_mode<synchronous>, transform_indices = @transform_9, window_bounds = array<i64: 1, 128>}, {pipeline_mode = #tpu.pipeline_mode<synchronous>, transform_indices = @transform_10, window_bounds = array<i64: 128, 128>}, {transform_indices = @transform_11, window_bounds = array<i64: 1, 16, 16, 128>}]} {
    %cst = arith.constant 0.000000e+00 : f32
    %0 = vector.broadcast %cst : f32 to vector<1x16x384xf32>
    %c0 = arith.constant 0 : index
    %c0_0 = arith.constant 0 : index
    %c0_1 = arith.constant 0 : index
    %1 = vector.load %arg13[%c0, %c0_0, %c0_1] : memref<18x16x384xf32, #tpu.memory_space<vmem>>, vector<1x16x384xf32>
    tpu.vector_store %arg13[%c0, %c0_0, %c0_1], %0 {strides = array<i32>} : memref<18x16x384xf32, #tpu.memory_space<vmem>>, vector<1x16x384xf32>,
    %c17 = arith.constant 17 : index
    %c0_2 = arith.constant 0 : index
    %c0_3 = arith.constant 0 : index
    %2 = vector.load %arg13[%c17, %c0_2, %c0_3] : memref<18x16x384xf32, #tpu.memory_space<vmem>>, vector<1x16x384xf32>
    tpu.vector_store %arg13[%c17, %c0_2, %c0_3], %0 {strides = array<i32>} : memref<18x16x384xf32, #tpu.memory_space<vmem>>, vector<1x16x384xf32>,
    %3 = tpu.iota {dimensions = array<i32: 1>} : vector<16x16x128xi32>
    %c0_i32 = arith.constant 0 : i32
    %4 = vector.broadcast %c0_i32 : i32 to vector<16x16x128xi32>
    %5 = arith.cmpi sgt, %3, %4 : vector<16x16x128xi32>
    %c15_i32 = arith.constant 15 : i32
    %6 = vector.broadcast %c15_i32 : i32 to vector<16x16x128xi32>
    %7 = arith.cmpi slt, %3, %6 : vector<16x16x128xi32>
    %c0_4 = arith.constant 0 : index
    %c0_5 = arith.constant 0 : index
    %c0_6 = arith.constant 0 : index
    %c0_7 = arith.constant 0 : index
    %8 = vector.load %arg2[%c0_4, %c0_5, %c0_6, %c0_7] : memref<1x16x16x128xf32, #tpu.memory_space<vmem>>, vector<1x16x16x128xf32>
    %9 = vector.shape_cast %8 : vector<1x16x16x128xf32> to vector<16x16x128xf32>
    %cst_8 = arith.constant 0.000000e+00 : f32
    %10 = vector.broadcast %cst_8 : f32 to vector<16x16x128xf32>
    %11 = arith.maximumf %9, %10 : vector<16x16x128xf32>
    %c0_9 = arith.constant 0 : index
    %c0_10 = arith.constant 0 : index
    %12 = vector.load %arg4[%c0_9, %c0_10] : memref<1x128xf32, #tpu.memory_space<vmem>>, vector<1x128xf32>
    %13 = vector.shape_cast %11 : vector<16x16x128xf32> to vector<256x128xf32>
    %c1_i32 = arith.constant 1 : i32
    %14 = tpu.dynamic_rotate %13 by %c1_i32 dim 0 : vector<256x128xf32>, i32 -> vector<256x128xf32>
    %15 = vector.shape_cast %14 : vector<256x128xf32> to vector<16x16x128xf32>
    %c255_i32 = arith.constant 255 : i32
    %16 = tpu.dynamic_rotate %13 by %c255_i32 dim 0 : vector<256x128xf32>, i32 -> vector<256x128xf32>
    %17 = vector.shape_cast %16 : vector<256x128xf32> to vector<16x16x128xf32>
    %cst_11 = arith.constant 0.000000e+00 : f32
    %18 = vector.broadcast %cst_11 : f32 to vector<16x16x128xf32>
    %19 = arith.select %5, %15, %18 : vector<16x16x128xi1>, vector<16x16x128xf32>
    %cst_12 = arith.constant 0.000000e+00 : f32
    %20 = vector.broadcast %cst_12 : f32 to vector<16x16x128xf32>
    %21 = arith.select %7, %17, %20 : vector<16x16x128xi1>, vector<16x16x128xf32>
    %22 = tpu.concatenate %19, %11, %21 in 2 : vector<16x16x128xf32>, vector<16x16x128xf32>, vector<16x16x128xf32> -> vector<16x16x384xf32>
    %c1 = arith.constant 1 : index
    %c0_13 = arith.constant 0 : index
    %c0_14 = arith.constant 0 : index
    %23 = vector.load %arg13[%c1, %c0_13, %c0_14] : memref<18x16x384xf32, #tpu.memory_space<vmem>>, vector<16x16x384xf32>
    tpu.vector_store %arg13[%c1, %c0_13, %c0_14], %22 {strides = array<i32>} : memref<18x16x384xf32, #tpu.memory_space<vmem>>, vector<16x16x384xf32>,
    %c0_15 = arith.constant 0 : index
    %c0_16 = arith.constant 0 : index
    %c0_17 = arith.constant 0 : index
    %24 = vector.load %arg13[%c0_15, %c0_16, %c0_17] : memref<18x16x384xf32, #tpu.memory_space<vmem>>, vector<16x16x384xf32>
    %25 = vector.shape_cast %24 : vector<16x16x384xf32> to vector<256x384xf32>
    %c0_18 = arith.constant 0 : index
    %c0_19 = arith.constant 0 : index
    %c0_20 = arith.constant 0 : index
    %26 = vector.load %arg3[%c0_18, %c0_19, %c0_20] : memref<3x384x128xf32, #tpu.memory_space<vmem>>, vector<1x384x128xf32>
    %27 = vector.shape_cast %26 : vector<1x384x128xf32> to vector<384x128xf32>
    %cst_21 = arith.constant dense<0.000000e+00> : vector<256x128xf32>
    %28 = tpu.matmul %25, %27, %cst_21 {dimension_numbers = #tpu.dot_dimension_numbers<[1], [0], [0], [1], [0, 0, 1, 1], [], []>} : vector<256x384xf32>, vector<384x128xf32>, vector<256x128xf32> -> vector<256x128xf32>
    %29 = vector.broadcast %12 : vector<1x128xf32> to vector<256x128xf32>
    %30 = arith.addf %29, %28 : vector<256x128xf32>
    %c1_22 = arith.constant 1 : index
    %c0_23 = arith.constant 0 : index
    %c0_24 = arith.constant 0 : index
    %31 = vector.load %arg13[%c1_22, %c0_23, %c0_24] : memref<18x16x384xf32, #tpu.memory_space<vmem>>, vector<16x16x384xf32>
    %32 = vector.shape_cast %31 : vector<16x16x384xf32> to vector<256x384xf32>
    %c1_25 = arith.constant 1 : index
    %c0_26 = arith.constant 0 : index
    %c0_27 = arith.constant 0 : index
    %33 = vector.load %arg3[%c1_25, %c0_26, %c0_27] : memref<3x384x128xf32, #tpu.memory_space<vmem>>, vector<1x384x128xf32>
    %34 = vector.shape_cast %33 : vector<1x384x128xf32> to vector<384x128xf32>
    %cst_28 = arith.constant dense<0.000000e+00> : vector<256x128xf32>
    %35 = tpu.matmul %32, %34, %cst_28 {dimension_numbers = #tpu.dot_dimension_numbers<[1], [0], [0], [1], [0, 0, 1, 1], [], []>} : vector<256x384xf32>, vector<384x128xf32>, vector<256x128xf32> -> vector<256x128xf32>
    %36 = arith.addf %30, %35 : vector<256x128xf32>
    %c2 = arith.constant 2 : index
    %c0_29 = arith.constant 0 : index
    %c0_30 = arith.constant 0 : index
    %37 = vector.load %arg13[%c2, %c0_29, %c0_30] : memref<18x16x384xf32, #tpu.memory_space<vmem>>, vector<16x16x384xf32>
    %38 = vector.shape_cast %37 : vector<16x16x384xf32> to vector<256x384xf32>
    %c2_31 = arith.constant 2 : index
    %c0_32 = arith.constant 0 : index
    %c0_33 = arith.constant 0 : index
    %39 = vector.load %arg3[%c2_31, %c0_32, %c0_33] : memref<3x384x128xf32, #tpu.memory_space<vmem>>, vector<1x384x128xf32>
    %40 = vector.shape_cast %39 : vector<1x384x128xf32> to vector<384x128xf32>
    %cst_34 = arith.constant dense<0.000000e+00> : vector<256x128xf32>
    %41 = tpu.matmul %38, %40, %cst_34 {dimension_numbers = #tpu.dot_dimension_numbers<[1], [0], [0], [1], [0, 0, 1, 1], [], []>} : vector<256x384xf32>, vector<384x128xf32>, vector<256x128xf32> -> vector<256x128xf32>
    %42 = arith.addf %36, %41 : vector<256x128xf32>
    %43 = vector.shape_cast %42 : vector<256x128xf32> to vector<16x16x128xf32>
    %cst_35 = arith.constant 0.000000e+00 : f32
    %44 = vector.broadcast %cst_35 : f32 to vector<16x16x128xf32>
    %45 = arith.maximumf %43, %44 : vector<16x16x128xf32>
    %c0_36 = arith.constant 0 : index
    %c0_37 = arith.constant 0 : index
    %46 = vector.load %arg6[%c0_36, %c0_37] : memref<1x128xf32, #tpu.memory_space<vmem>>, vector<1x128xf32>
    %47 = vector.shape_cast %45 : vector<16x16x128xf32> to vector<256x128xf32>
    %c1_i32_38 = arith.constant 1 : i32
    %48 = tpu.dynamic_rotate %47 by %c1_i32_38 dim 0 : vector<256x128xf32>, i32 -> vector<256x128xf32>
    %49 = vector.shape_cast %48 : vector<256x128xf32> to vector<16x16x128xf32>
    %c255_i32_39 = arith.constant 255 : i32
    %50 = tpu.dynamic_rotate %47 by %c255_i32_39 dim 0 : vector<256x128xf32>, i32 -> vector<256x128xf32>
    %51 = vector.shape_cast %50 : vector<256x128xf32> to vector<16x16x128xf32>
    %cst_40 = arith.constant 0.000000e+00 : f32
    %52 = vector.broadcast %cst_40 : f32 to vector<16x16x128xf32>
    %53 = arith.select %5, %49, %52 : vector<16x16x128xi1>, vector<16x16x128xf32>
    %cst_41 = arith.constant 0.000000e+00 : f32
    %54 = vector.broadcast %cst_41 : f32 to vector<16x16x128xf32>
    %55 = arith.select %7, %51, %54 : vector<16x16x128xi1>, vector<16x16x128xf32>
    %56 = tpu.concatenate %53, %45, %55 in 2 : vector<16x16x128xf32>, vector<16x16x128xf32>, vector<16x16x128xf32> -> vector<16x16x384xf32>
    %c1_42 = arith.constant 1 : index
    %c0_43 = arith.constant 0 : index
    %c0_44 = arith.constant 0 : index
    %57 = vector.load %arg13[%c1_42, %c0_43, %c0_44] : memref<18x16x384xf32, #tpu.memory_space<vmem>>, vector<16x16x384xf32>
    tpu.vector_store %arg13[%c1_42, %c0_43, %c0_44], %56 {strides = array<i32>} : memref<18x16x384xf32, #tpu.memory_space<vmem>>, vector<16x16x384xf32>,
    %c0_45 = arith.constant 0 : index
    %c0_46 = arith.constant 0 : index
    %c0_47 = arith.constant 0 : index
    %58 = vector.load %arg13[%c0_45, %c0_46, %c0_47] : memref<18x16x384xf32, #tpu.memory_space<vmem>>, vector<16x16x384xf32>
    %59 = vector.shape_cast %58 : vector<16x16x384xf32> to vector<256x384xf32>
    %c0_48 = arith.constant 0 : index
    %c0_49 = arith.constant 0 : index
    %c0_50 = arith.constant 0 : index
    %60 = vector.load %arg5[%c0_48, %c0_49, %c0_50] : memref<3x384x128xf32, #tpu.memory_space<vmem>>, vector<1x384x128xf32>
    %61 = vector.shape_cast %60 : vector<1x384x128xf32> to vector<384x128xf32>
    %cst_51 = arith.constant dense<0.000000e+00> : vector<256x128xf32>
    %62 = tpu.matmul %59, %61, %cst_51 {dimension_numbers = #tpu.dot_dimension_numbers<[1], [0], [0], [1], [0, 0, 1, 1], [], []>} : vector<256x384xf32>, vector<384x128xf32>, vector<256x128xf32> -> vector<256x128xf32>
    %63 = vector.broadcast %46 : vector<1x128xf32> to vector<256x128xf32>
    %64 = arith.addf %63, %62 : vector<256x128xf32>
    %c1_52 = arith.constant 1 : index
    %c0_53 = arith.constant 0 : index
    %c0_54 = arith.constant 0 : index
    %65 = vector.load %arg13[%c1_52, %c0_53, %c0_54] : memref<18x16x384xf32, #tpu.memory_space<vmem>>, vector<16x16x384xf32>
    %66 = vector.shape_cast %65 : vector<16x16x384xf32> to vector<256x384xf32>
    %c1_55 = arith.constant 1 : index
    %c0_56 = arith.constant 0 : index
    %c0_57 = arith.constant 0 : index
    %67 = vector.load %arg5[%c1_55, %c0_56, %c0_57] : memref<3x384x128xf32, #tpu.memory_space<vmem>>, vector<1x384x128xf32>
    %68 = vector.shape_cast %67 : vector<1x384x128xf32> to vector<384x128xf32>
    %cst_58 = arith.constant dense<0.000000e+00> : vector<256x128xf32>
    %69 = tpu.matmul %66, %68, %cst_58 {dimension_numbers = #tpu.dot_dimension_numbers<[1], [0], [0], [1], [0, 0, 1, 1], [], []>} : vector<256x384xf32>, vector<384x128xf32>, vector<256x128xf32> -> vector<256x128xf32>
    %70 = arith.addf %64, %69 : vector<256x128xf32>
    %c2_59 = arith.constant 2 : index
    %c0_60 = arith.constant 0 : index
    %c0_61 = arith.constant 0 : index
    %71 = vector.load %arg13[%c2_59, %c0_60, %c0_61] : memref<18x16x384xf32, #tpu.memory_space<vmem>>, vector<16x16x384xf32>
    %72 = vector.shape_cast %71 : vector<16x16x384xf32> to vector<256x384xf32>
    %c2_62 = arith.constant 2 : index
    %c0_63 = arith.constant 0 : index
    %c0_64 = arith.constant 0 : index
    %73 = vector.load %arg5[%c2_62, %c0_63, %c0_64] : memref<3x384x128xf32, #tpu.memory_space<vmem>>, vector<1x384x128xf32>
    %74 = vector.shape_cast %73 : vector<1x384x128xf32> to vector<384x128xf32>
    %cst_65 = arith.constant dense<0.000000e+00> : vector<256x128xf32>
    %75 = tpu.matmul %72, %74, %cst_65 {dimension_numbers = #tpu.dot_dimension_numbers<[1], [0], [0], [1], [0, 0, 1, 1], [], []>} : vector<256x384xf32>, vector<384x128xf32>, vector<256x128xf32> -> vector<256x128xf32>
    %76 = arith.addf %70, %75 : vector<256x128xf32>
    %77 = vector.shape_cast %76 : vector<256x128xf32> to vector<16x16x128xf32>
    %78 = arith.addf %77, %9 : vector<16x16x128xf32>
    %c0_66 = arith.constant 0 : index
    %c0_67 = arith.constant 0 : index
    %c0_68 = arith.constant 0 : index
    %c0_69 = arith.constant 0 : index
    %79 = vector.load %arg1[%c0_66, %c0_67, %c0_68, %c0_69] : memref<1x16x16x128xf32, #tpu.memory_space<vmem>>, vector<1x16x16x128xf32>
    %80 = vector.shape_cast %79 : vector<1x16x16x128xf32> to vector<16x16x128xf32>
    %81 = arith.addf %78, %80 : vector<16x16x128xf32>
    %cst_70 = arith.constant 0.000000e+00 : f32
    %82 = vector.broadcast %cst_70 : f32 to vector<16x16x128xf32>
    %83 = arith.maximumf %81, %82 : vector<16x16x128xf32>
    %c0_71 = arith.constant 0 : index
    %c0_72 = arith.constant 0 : index
    %84 = vector.load %arg8[%c0_71, %c0_72] : memref<1x128xf32, #tpu.memory_space<vmem>>, vector<1x128xf32>
    %85 = vector.shape_cast %83 : vector<16x16x128xf32> to vector<256x128xf32>
    %c1_i32_73 = arith.constant 1 : i32
    %86 = tpu.dynamic_rotate %85 by %c1_i32_73 dim 0 : vector<256x128xf32>, i32 -> vector<256x128xf32>
    %87 = vector.shape_cast %86 : vector<256x128xf32> to vector<16x16x128xf32>
    %c255_i32_74 = arith.constant 255 : i32
    %88 = tpu.dynamic_rotate %85 by %c255_i32_74 dim 0 : vector<256x128xf32>, i32 -> vector<256x128xf32>
    %89 = vector.shape_cast %88 : vector<256x128xf32> to vector<16x16x128xf32>
    %cst_75 = arith.constant 0.000000e+00 : f32
    %90 = vector.broadcast %cst_75 : f32 to vector<16x16x128xf32>
    %91 = arith.select %5, %87, %90 : vector<16x16x128xi1>, vector<16x16x128xf32>
    %cst_76 = arith.constant 0.000000e+00 : f32
    %92 = vector.broadcast %cst_76 : f32 to vector<16x16x128xf32>
    %93 = arith.select %7, %89, %92 : vector<16x16x128xi1>, vector<16x16x128xf32>
    %94 = tpu.concatenate %91, %83, %93 in 2 : vector<16x16x128xf32>, vector<16x16x128xf32>, vector<16x16x128xf32> -> vector<16x16x384xf32>
    %c1_77 = arith.constant 1 : index
    %c0_78 = arith.constant 0 : index
    %c0_79 = arith.constant 0 : index
    %95 = vector.load %arg13[%c1_77, %c0_78, %c0_79] : memref<18x16x384xf32, #tpu.memory_space<vmem>>, vector<16x16x384xf32>
    tpu.vector_store %arg13[%c1_77, %c0_78, %c0_79], %94 {strides = array<i32>} : memref<18x16x384xf32, #tpu.memory_space<vmem>>, vector<16x16x384xf32>,
    %c0_80 = arith.constant 0 : index
    %c0_81 = arith.constant 0 : index
    %c0_82 = arith.constant 0 : index
    %96 = vector.load %arg13[%c0_80, %c0_81, %c0_82] : memref<18x16x384xf32, #tpu.memory_space<vmem>>, vector<16x16x384xf32>
    %97 = vector.shape_cast %96 : vector<16x16x384xf32> to vector<256x384xf32>
    %c0_83 = arith.constant 0 : index
    %c0_84 = arith.constant 0 : index
    %c0_85 = arith.constant 0 : index
    %98 = vector.load %arg7[%c0_83, %c0_84, %c0_85] : memref<3x384x128xf32, #tpu.memory_space<vmem>>, vector<1x384x128xf32>
    %99 = vector.shape_cast %98 : vector<1x384x128xf32> to vector<384x128xf32>
    %cst_86 = arith.constant dense<0.000000e+00> : vector<256x128xf32>
    %100 = tpu.matmul %97, %99, %cst_86 {dimension_numbers = #tpu.dot_dimension_numbers<[1], [0], [0], [1], [0, 0, 1, 1], [], []>} : vector<256x384xf32>, vector<384x128xf32>, vector<256x128xf32> -> vector<256x128xf32>
    %101 = vector.broadcast %84 : vector<1x128xf32> to vector<256x128xf32>
    %102 = arith.addf %101, %100 : vector<256x128xf32>
    %c1_87 = arith.constant 1 : index
    %c0_88 = arith.constant 0 : index
    %c0_89 = arith.constant 0 : index
    %103 = vector.load %arg13[%c1_87, %c0_88, %c0_89] : memref<18x16x384xf32, #tpu.memory_space<vmem>>, vector<16x16x384xf32>
    %104 = vector.shape_cast %103 : vector<16x16x384xf32> to vector<256x384xf32>
    %c1_90 = arith.constant 1 : index
    %c0_91 = arith.constant 0 : index
    %c0_92 = arith.constant 0 : index
    %105 = vector.load %arg7[%c1_90, %c0_91, %c0_92] : memref<3x384x128xf32, #tpu.memory_space<vmem>>, vector<1x384x128xf32>
    %106 = vector.shape_cast %105 : vector<1x384x128xf32> to vector<384x128xf32>
    %cst_93 = arith.constant dense<0.000000e+00> : vector<256x128xf32>
    %107 = tpu.matmul %104, %106, %cst_93 {dimension_numbers = #tpu.dot_dimension_numbers<[1], [0], [0], [1], [0, 0, 1, 1], [], []>} : vector<256x384xf32>, vector<384x128xf32>, vector<256x128xf32> -> vector<256x128xf32>
    %108 = arith.addf %102, %107 : vector<256x128xf32>
    %c2_94 = arith.constant 2 : index
    %c0_95 = arith.constant 0 : index
    %c0_96 = arith.constant 0 : index
    %109 = vector.load %arg13[%c2_94, %c0_95, %c0_96] : memref<18x16x384xf32, #tpu.memory_space<vmem>>, vector<16x16x384xf32>
    %110 = vector.shape_cast %109 : vector<16x16x384xf32> to vector<256x384xf32>
    %c2_97 = arith.constant 2 : index
    %c0_98 = arith.constant 0 : index
    %c0_99 = arith.constant 0 : index
    %111 = vector.load %arg7[%c2_97, %c0_98, %c0_99] : memref<3x384x128xf32, #tpu.memory_space<vmem>>, vector<1x384x128xf32>
    %112 = vector.shape_cast %111 : vector<1x384x128xf32> to vector<384x128xf32>
    %cst_100 = arith.constant dense<0.000000e+00> : vector<256x128xf32>
    %113 = tpu.matmul %110, %112, %cst_100 {dimension_numbers = #tpu.dot_dimension_numbers<[1], [0], [0], [1], [0, 0, 1, 1], [], []>} : vector<256x384xf32>, vector<384x128xf32>, vector<256x128xf32> -> vector<256x128xf32>
    %114 = arith.addf %108, %113 : vector<256x128xf32>
    %115 = vector.shape_cast %114 : vector<256x128xf32> to vector<16x16x128xf32>
    %cst_101 = arith.constant 0.000000e+00 : f32
    %116 = vector.broadcast %cst_101 : f32 to vector<16x16x128xf32>
    %117 = arith.maximumf %115, %116 : vector<16x16x128xf32>
    %c0_102 = arith.constant 0 : index
    %c0_103 = arith.constant 0 : index
    %118 = vector.load %arg10[%c0_102, %c0_103] : memref<1x128xf32, #tpu.memory_space<vmem>>, vector<1x128xf32>
    %119 = vector.shape_cast %117 : vector<16x16x128xf32> to vector<256x128xf32>
    %c1_i32_104 = arith.constant 1 : i32
    %120 = tpu.dynamic_rotate %119 by %c1_i32_104 dim 0 : vector<256x128xf32>, i32 -> vector<256x128xf32>
    %121 = vector.shape_cast %120 : vector<256x128xf32> to vector<16x16x128xf32>
    %c255_i32_105 = arith.constant 255 : i32
    %122 = tpu.dynamic_rotate %119 by %c255_i32_105 dim 0 : vector<256x128xf32>, i32 -> vector<256x128xf32>
    %123 = vector.shape_cast %122 : vector<256x128xf32> to vector<16x16x128xf32>
    %cst_106 = arith.constant 0.000000e+00 : f32
    %124 = vector.broadcast %cst_106 : f32 to vector<16x16x128xf32>
    %125 = arith.select %5, %121, %124 : vector<16x16x128xi1>, vector<16x16x128xf32>
    %cst_107 = arith.constant 0.000000e+00 : f32
    %126 = vector.broadcast %cst_107 : f32 to vector<16x16x128xf32>
    %127 = arith.select %7, %123, %126 : vector<16x16x128xi1>, vector<16x16x128xf32>
    %128 = tpu.concatenate %125, %117, %127 in 2 : vector<16x16x128xf32>, vector<16x16x128xf32>, vector<16x16x128xf32> -> vector<16x16x384xf32>
    %c1_108 = arith.constant 1 : index
    %c0_109 = arith.constant 0 : index
    %c0_110 = arith.constant 0 : index
    %129 = vector.load %arg13[%c1_108, %c0_109, %c0_110] : memref<18x16x384xf32, #tpu.memory_space<vmem>>, vector<16x16x384xf32>
    tpu.vector_store %arg13[%c1_108, %c0_109, %c0_110], %128 {strides = array<i32>} : memref<18x16x384xf32, #tpu.memory_space<vmem>>, vector<16x16x384xf32>,
    %c0_111 = arith.constant 0 : index
    %c0_112 = arith.constant 0 : index
    %c0_113 = arith.constant 0 : index
    %130 = vector.load %arg13[%c0_111, %c0_112, %c0_113] : memref<18x16x384xf32, #tpu.memory_space<vmem>>, vector<16x16x384xf32>
    %131 = vector.shape_cast %130 : vector<16x16x384xf32> to vector<256x384xf32>
    %c0_114 = arith.constant 0 : index
    %c0_115 = arith.constant 0 : index
    %c0_116 = arith.constant 0 : index
    %132 = vector.load %arg9[%c0_114, %c0_115, %c0_116] : memref<3x384x128xf32, #tpu.memory_space<vmem>>, vector<1x384x128xf32>
    %133 = vector.shape_cast %132 : vector<1x384x128xf32> to vector<384x128xf32>
    %cst_117 = arith.constant dense<0.000000e+00> : vector<256x128xf32>
    %134 = tpu.matmul %131, %133, %cst_117 {dimension_numbers = #tpu.dot_dimension_numbers<[1], [0], [0], [1], [0, 0, 1, 1], [], []>} : vector<256x384xf32>, vector<384x128xf32>, vector<256x128xf32> -> vector<256x128xf32>
    %135 = vector.broadcast %118 : vector<1x128xf32> to vector<256x128xf32>
    %136 = arith.addf %135, %134 : vector<256x128xf32>
    %c1_118 = arith.constant 1 : index
    %c0_119 = arith.constant 0 : index
    %c0_120 = arith.constant 0 : index
    %137 = vector.load %arg13[%c1_118, %c0_119, %c0_120] : memref<18x16x384xf32, #tpu.memory_space<vmem>>, vector<16x16x384xf32>
    %138 = vector.shape_cast %137 : vector<16x16x384xf32> to vector<256x384xf32>
    %c1_121 = arith.constant 1 : index
    %c0_122 = arith.constant 0 : index
    %c0_123 = arith.constant 0 : index
    %139 = vector.load %arg9[%c1_121, %c0_122, %c0_123] : memref<3x384x128xf32, #tpu.memory_space<vmem>>, vector<1x384x128xf32>
    %140 = vector.shape_cast %139 : vector<1x384x128xf32> to vector<384x128xf32>
    %cst_124 = arith.constant dense<0.000000e+00> : vector<256x128xf32>
    %141 = tpu.matmul %138, %140, %cst_124 {dimension_numbers = #tpu.dot_dimension_numbers<[1], [0], [0], [1], [0, 0, 1, 1], [], []>} : vector<256x384xf32>, vector<384x128xf32>, vector<256x128xf32> -> vector<256x128xf32>
    %142 = arith.addf %136, %141 : vector<256x128xf32>
    %c2_125 = arith.constant 2 : index
    %c0_126 = arith.constant 0 : index
    %c0_127 = arith.constant 0 : index
    %143 = vector.load %arg13[%c2_125, %c0_126, %c0_127] : memref<18x16x384xf32, #tpu.memory_space<vmem>>, vector<16x16x384xf32>
    %144 = vector.shape_cast %143 : vector<16x16x384xf32> to vector<256x384xf32>
    %c2_128 = arith.constant 2 : index
    %c0_129 = arith.constant 0 : index
    %c0_130 = arith.constant 0 : index
    %145 = vector.load %arg9[%c2_128, %c0_129, %c0_130] : memref<3x384x128xf32, #tpu.memory_space<vmem>>, vector<1x384x128xf32>
    %146 = vector.shape_cast %145 : vector<1x384x128xf32> to vector<384x128xf32>
    %cst_131 = arith.constant dense<0.000000e+00> : vector<256x128xf32>
    %147 = tpu.matmul %144, %146, %cst_131 {dimension_numbers = #tpu.dot_dimension_numbers<[1], [0], [0], [1], [0, 0, 1, 1], [], []>} : vector<256x384xf32>, vector<384x128xf32>, vector<256x128xf32> -> vector<256x128xf32>
    %148 = arith.addf %142, %147 : vector<256x128xf32>
    %149 = vector.shape_cast %148 : vector<256x128xf32> to vector<16x16x128xf32>
    %150 = vector.shape_cast %81 : vector<16x16x128xf32> to vector<256x128xf32>
    %c0_132 = arith.constant 0 : index
    %c0_133 = arith.constant 0 : index
    %151 = vector.load %arg11[%c0_132, %c0_133] : memref<128x128xf32, #tpu.memory_space<vmem>>, vector<128x128xf32>
    %cst_134 = arith.constant dense<0.000000e+00> : vector<256x128xf32>
    %152 = tpu.matmul %150, %151, %cst_134 {dimension_numbers = #tpu.dot_dimension_numbers<[1], [0], [0], [1], [0, 0, 1, 1], [], []>} : vector<256x128xf32>, vector<128x128xf32>, vector<256x128xf32> -> vector<256x128xf32>
    %153 = vector.shape_cast %152 : vector<256x128xf32> to vector<16x16x128xf32>
    %154 = arith.addf %149, %153 : vector<16x16x128xf32>
    %c0_135 = arith.constant 0 : index
    %c0_136 = arith.constant 0 : index
    %c0_137 = arith.constant 0 : index
    %c0_138 = arith.constant 0 : index
    %155 = vector.load %arg12[%c0_135, %c0_136, %c0_137, %c0_138] : memref<1x16x16x128xf32, #tpu.memory_space<vmem>>, vector<1x16x16x128xf32>
    %156 = vector.shape_cast %155 : vector<1x16x16x128xf32> to vector<16x16x128xf32>
    %157 = vector.shape_cast %154 : vector<16x16x128xf32> to vector<1x16x16x128xf32>
    tpu.vector_store %arg12[%c0_135, %c0_136, %c0_137, %c0_138], %157 {strides = array<i32>} : memref<1x16x16x128xf32, #tpu.memory_space<vmem>>, vector<1x16x16x128xf32>,
    return
  }
  func.func @transform_0(%arg0: i32) -> (i32, i32, i32, i32) {
    %c0_i32 = arith.constant 0 : i32
    %c0_i32_0 = arith.constant 0 : i32
    %c0_i32_1 = arith.constant 0 : i32
    %c0_i32_2 = arith.constant 0 : i32
    return %arg0, %c0_i32, %c0_i32_0, %c0_i32_1 : i32, i32, i32, i32
  }
  func.func @transform_1(%arg0: i32) -> (i32, i32, i32, i32) {
    %c0_i32 = arith.constant 0 : i32
    %c0_i32_0 = arith.constant 0 : i32
    %c0_i32_1 = arith.constant 0 : i32
    %c0_i32_2 = arith.constant 0 : i32
    return %arg0, %c0_i32, %c0_i32_0, %c0_i32_1 : i32, i32, i32, i32
  }
  func.func @transform_2(%arg0: i32) -> (i32, i32, i32) {
    %c0_i32 = arith.constant 0 : i32
    %c0_i32_0 = arith.constant 0 : i32
    %c0_i32_1 = arith.constant 0 : i32
    %c0_i32_2 = arith.constant 0 : i32
    return %c0_i32, %c0_i32_0, %c0_i32_1 : i32, i32, i32
  }
  func.func @transform_3(%arg0: i32) -> (i32, i32) {
    %c0_i32 = arith.constant 0 : i32
    %c0_i32_0 = arith.constant 0 : i32
    %c0_i32_1 = arith.constant 0 : i32
    return %c0_i32, %c0_i32_0 : i32, i32
  }
  func.func @transform_4(%arg0: i32) -> (i32, i32, i32) {
    %c0_i32 = arith.constant 0 : i32
    %c0_i32_0 = arith.constant 0 : i32
    %c0_i32_1 = arith.constant 0 : i32
    %c0_i32_2 = arith.constant 0 : i32
    return %c0_i32, %c0_i32_0, %c0_i32_1 : i32, i32, i32
  }
  func.func @transform_5(%arg0: i32) -> (i32, i32) {
    %c0_i32 = arith.constant 0 : i32
    %c0_i32_0 = arith.constant 0 : i32
    %c0_i32_1 = arith.constant 0 : i32
    return %c0_i32, %c0_i32_0 : i32, i32
  }
  func.func @transform_6(%arg0: i32) -> (i32, i32, i32) {
    %c0_i32 = arith.constant 0 : i32
    %c0_i32_0 = arith.constant 0 : i32
    %c0_i32_1 = arith.constant 0 : i32
    %c0_i32_2 = arith.constant 0 : i32
    return %c0_i32, %c0_i32_0, %c0_i32_1 : i32, i32, i32
  }
  func.func @transform_7(%arg0: i32) -> (i32, i32) {
    %c0_i32 = arith.constant 0 : i32
    %c0_i32_0 = arith.constant 0 : i32
    %c0_i32_1 = arith.constant 0 : i32
    return %c0_i32, %c0_i32_0 : i32, i32
  }
  func.func @transform_8(%arg0: i32) -> (i32, i32, i32) {
    %c0_i32 = arith.constant 0 : i32
    %c0_i32_0 = arith.constant 0 : i32
    %c0_i32_1 = arith.constant 0 : i32
    %c0_i32_2 = arith.constant 0 : i32
    return %c0_i32, %c0_i32_0, %c0_i32_1 : i32, i32, i32
  }
  func.func @transform_9(%arg0: i32) -> (i32, i32) {
    %c0_i32 = arith.constant 0 : i32
    %c0_i32_0 = arith.constant 0 : i32
    %c0_i32_1 = arith.constant 0 : i32
    return %c0_i32, %c0_i32_0 : i32, i32
  }
  func.func @transform_10(%arg0: i32) -> (i32, i32) {
    %c0_i32 = arith.constant 0 : i32
    %c0_i32_0 = arith.constant 0 : i32
    %c0_i32_1 = arith.constant 0 : i32
    return %c0_i32, %c0_i32_0 : i32, i32
  }
  func.func @transform_11(%arg0: i32) -> (i32, i32, i32, i32) {
    %c0_i32 = arith.constant 0 : i32
    %c0_i32_0 = arith.constant 0 : i32
    %c0_i32_1 = arith.constant 0 : i32
    %c0_i32_2 = arith.constant 0 : i32
    return %arg0, %c0_i32, %c0_i32_0, %c0_i32_1 : i32, i32, i32, i32
  }
}

</mosaic_0001>

<llo_original>
// kernel: tpu_custom_call.1
$region0: #{tpu_custom_call.1}
  #allocation0 [shape = 'u32[]', space=smem, size = 0x4, offset = 0x4, fixed_abs, tag = 'smem constant byte address 0x4 - core index']
  #allocation1 [shape = 'u32[144,128]{1,0:T(1,128)}', space=vmem, size = 0x12000, scoped, tag = 'internal scratch']
  #allocation2 [shape = 'f32[18,16,384]{2,1,0:T(8,128)}', space=vmem, size = 0x6c000, scoped, tag = 'scratch operand']
  %s0 = inlined_call_operand.hbm [shape: f32[2,16,16,128], index: 0, kind: input, shape index: {}]
  %s1 = inlined_call_operand.hbm [shape: f32[2,16,16,128], index: 1, kind: input, shape index: {}]
  %s2 = inlined_call_operand.hbm [shape: f32[3,384,128], index: 2, kind: input, shape index: {}]
  %s3 = inlined_call_operand.vmem [shape: f32[1,128], index: 3, kind: input, shape index: {}]
  %s4 = inlined_call_operand.hbm [shape: f32[3,384,128], index: 4, kind: input, shape index: {}]
  %s5 = inlined_call_operand.vmem [shape: f32[1,128], index: 5, kind: input, shape index: {}]
  %s6 = inlined_call_operand.hbm [shape: f32[3,384,128], index: 6, kind: input, shape index: {}]
  %s7 = inlined_call_operand.vmem [shape: f32[1,128], index: 7, kind: input, shape index: {}]
  %s8 = inlined_call_operand.hbm [shape: f32[3,384,128], index: 8, kind: input, shape index: {}]
  %s9 = inlined_call_operand.vmem [shape: f32[1,128], index: 9, kind: input, shape index: {}]
  %s10 = inlined_call_operand.hbm [shape: f32[128,128], index: 10, kind: input, shape index: {}]
  %s11 = inlined_call_operand.hbm [shape: f32[2,16,16,128], index: 11, kind: output, shape index: {}]
  %s12 = sld [smem:[#allocation0]]
  $region105: #{tpu_custom_call.1} parent=0
    _
  %s14 = ssub.s32 1, %s12
  %s15 = scalar_select 0, %s14, %s12
  $region1: #{tpu_custom_call.1} parent=0
    #allocation3 [shape = 'u8[262144]{0}', space=vmem, size = 0x40000, scoped, tag = 'input window, operand 0']
    #allocation4 [shape = 's32[2]{0}', space=sflag, size = 0x8, scoped, tag = 'scoped memory for tpu_custom_call.1']
    #allocation5 [shape = 's32[2]{0}', space=sflag, size = 0x8, scoped, tag = 'scoped memory for tpu_custom_call.1']
    #allocation6 [shape = 'u8[262144]{0}', space=vmem, size = 0x40000, scoped, tag = 'input window, operand 1']
    #allocation7 [shape = 's32[2]{0}', space=sflag, size = 0x8, scoped, tag = 'scoped memory for tpu_custom_call.1']
    #allocation8 [shape = 'u8[589824]{0}', space=vmem, size = 0x90000, scoped, tag = 'input window, operand 2, single buffered']
    #allocation9 [shape = 'u8[589824]{0}', space=vmem, size = 0x90000, scoped, tag = 'input window, operand 4, single buffered']
    #allocation10 [shape = 's32[1]{0}', space=sflag, size = 0x4, scoped, tag = 'scoped memory for tpu_custom_call.1']
    #allocation11 [shape = 'u8[589824]{0}', space=vmem, size = 0x90000, scoped, tag = 'input window, operand 6, single buffered']
    #allocation12 [shape = 'u8[589824]{0}', space=vmem, size = 0x90000, scoped, tag = 'input window, operand 8, single buffered']
    #allocation13 [shape = 's32[1]{0}', space=sflag, size = 0x4, scoped, tag = 'scoped memory for tpu_custom_call.1']
    #allocation14 [shape = 'u8[65536]{0}', space=vmem, size = 0x10000, scoped, tag = 'input window, operand 10, single buffered']
    #allocation15 [shape = 'u8[262144]{0}', space=vmem, size = 0x40000, scoped, tag = 'output window, operand 0']
    %16 = vsyncpa [#allocation4], 0
    %s17 = scalar_lea.sflag [#allocation4], 1
    %18 = vsyncpa %s17, 0
    %19 = vsyncpa [#allocation7], 0
    %s20 = scalar_lea.sflag [#allocation7], 1
    %21 = vsyncpa %s20, 0
    %22 = vsyncpa [#allocation10], 0
    %23 = vsyncpa [#allocation13], 0
    %24 = vsyncpa [#allocation5], 0
    %s25 = scalar_lea.sflag [#allocation5], 1
    %26 = vsyncpa %s25, 0
    loop: start=0, step=1, limit=4
    $region2: #{tpu_custom_call.1} parent=1 // loop_pre_header
      _
    $region3: #{tpu_custom_call.1} parent=1 // loop_header
      %s28 = sphi 0, %s32
      %p29 = scmp.ge.s32.totalorder %s28, 4
      %s38 = sphi 0, %s40
      %s41 = sphi 0, %s38
      %s42 = sphi 0, %s41
      %s58 = sphi 0, %s42
      %s64 = sphi 0, %s66
      %s67 = sphi 0, %s64
      %s68 = sphi 0, %s67
      %s84 = sphi 0, %s68
      %s88 = sphi 0, %s88
      %s90 = sphi 0, %s88
      %s91 = sphi 0, %s90
      %s105 = sphi 0, %s91
      %s109 = sphi 0, %s109
      %s111 = sphi 0, %s109
      %s112 = sphi 0, %s111
      %s126 = sphi 0, %s112
      %s130 = sphi 0, %s130
      %s132 = sphi 0, %s130
      %s133 = sphi 0, %s132
      %s147 = sphi 0, %s133
      %s151 = sphi 0, %s151
      %s153 = sphi 0, %s151
      %s154 = sphi 0, %s153
      %s168 = sphi 0, %s154
      %s172 = sphi 0, %s172
      %s174 = sphi 0, %s172
      %s175 = sphi 0, %s174
      %s189 = sphi 0, %s175
      %s193 = sphi 0, %s193
      %s195 = sphi 0, %s193
      %s196 = sphi 0, %s195
      %s210 = sphi 0, %s196
      %s214 = sphi 0, %s214
      %s216 = sphi 0, %s214
      %s217 = sphi 0, %s216
      %s231 = sphi 0, %s217
      %s235 = sphi 0, %s235
      %s237 = sphi 0, %s235
      %s238 = sphi 0, %s237
      %s252 = sphi 0, %s238
      %s256 = sphi 0, %s256
      %s258 = sphi 0, %s256
      %s259 = sphi 0, %s258
      %s273 = sphi 0, %s259
      %s279 = sphi 0, %s281
      %s282 = sphi 0, %s279
      %s283 = sphi 0, %s282
      %s299 = sphi 0, %s283
    $region4: #{tpu_custom_call.1} parent=1 // loop_header_branch
      %31 = sbr.rel (%p29) target = $region8
    $region5: #{tpu_custom_call.1} parent=1 // loop_body
      %s33 = ssub.s32 %s28, 1
      %s34 = ssub.s32 %s28, 2
      %s35 = sadd.s32 %s28, 1
      %s36 = ssub.s32 %s28, %s35
      %p37 = scmp.eq.s32.totalorder %s36, 0
      %s39 = sadd.s32 %s38, 1
      %s40 = scalar_select %p37, %s38, %s39
      %p43 = pneg %p37
      %p44 = scmp.eq.s32.totalorder %s28, 1
      %p45 = por %p43, %p44
      %p46 = scmp.ne.s32.totalorder %s38, %s41
      %p47 = scmp.eq.s32.totalorder %s28, 0
      %p48 = por %p46, %p47
      %p49 = scmp.ne.s32.totalorder %s38, %s41
      %p50 = scmp.eq.s32.totalorder %s33, 1
      %p51 = por %p49, %p50
      %p52 = scmp.ne.s32.totalorder %s41, %s42
      %p53 = scmp.eq.s32.totalorder %s33, 0
      %p54 = por %p52, %p53
      %p55 = scmp.ne.s32.totalorder %s41, %s42
      %p56 = scmp.eq.s32.totalorder %s34, 1
      %p57 = por %p55, %p56
      %p59 = scmp.ne.s32.totalorder %s42, %s58
      %p60 = scmp.eq.s32.totalorder %s34, 0
      %p61 = por %p59, %p60
      %s62 = ssub.s32 %s28, %s35
      %p63 = scmp.eq.s32.totalorder %s62, 0
      %s65 = sadd.s32 %s64, 1
      %s66 = scalar_select %p63, %s64, %s65
      %p69 = pneg %p63
      %p70 = scmp.eq.s32.totalorder %s28, 1
      %p71 = por %p69, %p70
      %p72 = scmp.ne.s32.totalorder %s64, %s67
      %p73 = scmp.eq.s32.totalorder %s28, 0
      %p74 = por %p72, %p73
      %p75 = scmp.ne.s32.totalorder %s64, %s67
      %p76 = scmp.eq.s32.totalorder %s33, 1
      %p77 = por %p75, %p76
      %p78 = scmp.ne.s32.totalorder %s67, %s68
      %p79 = scmp.eq.s32.totalorder %s33, 0
      %p80 = por %p78, %p79
      %p81 = scmp.ne.s32.totalorder %s67, %s68
      %p82 = scmp.eq.s32.totalorder %s34, 1
      %p83 = por %p81, %p82
      %p85 = scmp.ne.s32.totalorder %s68, %s84
      %p86 = scmp.eq.s32.totalorder %s34, 0
      %p87 = por %p85, %p86
      %s89 = sadd.s32 %s88, 1
      %p92 = scmp.eq.s32.totalorder %s28, 1
      %p93 = scmp.ne.s32.totalorder %s88, %s90
      %p94 = scmp.eq.s32.totalorder %s28, 0
      %p95 = por %p93, %p94
      %p96 = scmp.ne.s32.totalorder %s88, %s90
      %p97 = scmp.eq.s32.totalorder %s33, 1
      %p98 = por %p96, %p97
      %p99 = scmp.ne.s32.totalorder %s90, %s91
      %p100 = scmp.eq.s32.totalorder %s33, 0
      %p101 = por %p99, %p100
      %p102 = scmp.ne.s32.totalorder %s90, %s91
      %p103 = scmp.eq.s32.totalorder %s34, 1
      %p104 = por %p102, %p103
      %p106 = scmp.ne.s32.totalorder %s91, %s105
      %p107 = scmp.eq.s32.totalorder %s34, 0
      %p108 = por %p106, %p107
      %s110 = sadd.s32 %s109, 1
      %p113 = scmp.eq.s32.totalorder %s28, 1
      %p114 = scmp.ne.s32.totalorder %s109, %s111
      %p115 = scmp.eq.s32.totalorder %s28, 0
      %p116 = por %p114, %p115
      %p117 = scmp.ne.s32.totalorder %s109, %s111
      %p118 = scmp.eq.s32.totalorder %s33, 1
      %p119 = por %p117, %p118
      %p120 = scmp.ne.s32.totalorder %s111, %s112
      %p121 = scmp.eq.s32.totalorder %s33, 0
      %p122 = por %p120, %p121
      %p123 = scmp.ne.s32.totalorder %s111, %s112
      %p124 = scmp.eq.s32.totalorder %s34, 1
      %p125 = por %p123, %p124
      %p127 = scmp.ne.s32.totalorder %s112, %s126
      %p128 = scmp.eq.s32.totalorder %s34, 0
      %p129 = por %p127, %p128
      %s131 = sadd.s32 %s130, 1
      %p134 = scmp.eq.s32.totalorder %s28, 1
      %p135 = scmp.ne.s32.totalorder %s130, %s132
      %p136 = scmp.eq.s32.totalorder %s28, 0
      %p137 = por %p135, %p136
      %p138 = scmp.ne.s32.totalorder %s130, %s132
      %p139 = scmp.eq.s32.totalorder %s33, 1
      %p140 = por %p138, %p139
      %p141 = scmp.ne.s32.totalorder %s132, %s133
      %p142 = scmp.eq.s32.totalorder %s33, 0
      %p143 = por %p141, %p142
      %p144 = scmp.ne.s32.totalorder %s132, %s133
      %p145 = scmp.eq.s32.totalorder %s34, 1
      %p146 = por %p144, %p145
      %p148 = scmp.ne.s32.totalorder %s133, %s147
      %p149 = scmp.eq.s32.totalorder %s34, 0
      %p150 = por %p148, %p149
      %s152 = sadd.s32 %s151, 1
      %p155 = scmp.eq.s32.totalorder %s28, 1
      %p156 = scmp.ne.s32.totalorder %s151, %s153
      %p157 = scmp.eq.s32.totalorder %s28, 0
      %p158 = por %p156, %p157
      %p159 = scmp.ne.s32.totalorder %s151, %s153
      %p160 = scmp.eq.s32.totalorder %s33, 1
      %p161 = por %p159, %p160
      %p162 = scmp.ne.s32.totalorder %s153, %s154
      %p163 = scmp.eq.s32.totalorder %s33, 0
      %p164 = por %p162, %p163
      %p165 = scmp.ne.s32.totalorder %s153, %s154
      %p166 = scmp.eq.s32.totalorder %s34, 1
      %p167 = por %p165, %p166
      %p169 = scmp.ne.s32.totalorder %s154, %s168
      %p170 = scmp.eq.s32.totalorder %s34, 0
      %p171 = por %p169, %p170
      %s173 = sadd.s32 %s172, 1
      %p176 = scmp.eq.s32.totalorder %s28, 1
      %p177 = scmp.ne.s32.totalorder %s172, %s174
      %p178 = scmp.eq.s32.totalorder %s28, 0
      %p179 = por %p177, %p178
      %p180 = scmp.ne.s32.totalorder %s172, %s174
      %p181 = scmp.eq.s32.totalorder %s33, 1
      %p182 = por %p180, %p181
      %p183 = scmp.ne.s32.totalorder %s174, %s175
      %p184 = scmp.eq.s32.totalorder %s33, 0
      %p185 = por %p183, %p184
      %p186 = scmp.ne.s32.totalorder %s174, %s175
      %p187 = scmp.eq.s32.totalorder %s34, 1
      %p188 = por %p186, %p187
      %p190 = scmp.ne.s32.totalorder %s175, %s189
      %p191 = scmp.eq.s32.totalorder %s34, 0
      %p192 = por %p190, %p191
      %s194 = sadd.s32 %s193, 1
      %p197 = scmp.eq.s32.totalorder %s28, 1
      %p198 = scmp.ne.s32.totalorder %s193, %s195
      %p199 = scmp.eq.s32.totalorder %s28, 0
      %p200 = por %p198, %p199
      %p201 = scmp.ne.s32.totalorder %s193, %s195
      %p202 = scmp.eq.s32.totalorder %s33, 1
      %p203 = por %p201, %p202
      %p204 = scmp.ne.s32.totalorder %s195, %s196
      %p205 = scmp.eq.s32.totalorder %s33, 0
      %p206 = por %p204, %p205
      %p207 = scmp.ne.s32.totalorder %s195, %s196
      %p208 = scmp.eq.s32.totalorder %s34, 1
      %p209 = por %p207, %p208
      %p211 = scmp.ne.s32.totalorder %s196, %s210
      %p212 = scmp.eq.s32.totalorder %s34, 0
      %p213 = por %p211, %p212
      %s215 = sadd.s32 %s214, 1
      %p218 = scmp.eq.s32.totalorder %s28, 1
      %p219 = scmp.ne.s32.totalorder %s214, %s216
      %p220 = scmp.eq.s32.totalorder %s28, 0
      %p221 = por %p219, %p220
      %p222 = scmp.ne.s32.totalorder %s214, %s216
      %p223 = scmp.eq.s32.totalorder %s33, 1
      %p224 = por %p222, %p223
      %p225 = scmp.ne.s32.totalorder %s216, %s217
      %p226 = scmp.eq.s32.totalorder %s33, 0
      %p227 = por %p225, %p226
      %p228 = scmp.ne.s32.totalorder %s216, %s217
      %p229 = scmp.eq.s32.totalorder %s34, 1
      %p230 = por %p228, %p229
      %p232 = scmp.ne.s32.totalorder %s217, %s231
      %p233 = scmp.eq.s32.totalorder %s34, 0
      %p234 = por %p232, %p233
      %s236 = sadd.s32 %s235, 1
      %p239 = scmp.eq.s32.totalorder %s28, 1
      %p240 = scmp.ne.s32.totalorder %s235, %s237
      %p241 = scmp.eq.s32.totalorder %s28, 0
      %p242 = por %p240, %p241
      %p243 = scmp.ne.s32.totalorder %s235, %s237
      %p244 = scmp.eq.s32.totalorder %s33, 1
      %p245 = por %p243, %p244
      %p246 = scmp.ne.s32.totalorder %s237, %s238
      %p247 = scmp.eq.s32.totalorder %s33, 0
      %p248 = por %p246, %p247
      %p249 = scmp.ne.s32.totalorder %s237, %s238
      %p250 = scmp.eq.s32.totalorder %s34, 1
      %p251 = por %p249, %p250
      %p253 = scmp.ne.s32.totalorder %s238, %s252
      %p254 = scmp.eq.s32.totalorder %s34, 0
      %p255 = por %p253, %p254
      %s257 = sadd.s32 %s256, 1
      %p260 = scmp.eq.s32.totalorder %s28, 1
      %p261 = scmp.ne.s32.totalorder %s256, %s258
      %p262 = scmp.eq.s32.totalorder %s28, 0
      %p263 = por %p261, %p262
      %p264 = scmp.ne.s32.totalorder %s256, %s258
      %p265 = scmp.eq.s32.totalorder %s33, 1
      %p266 = por %p264, %p265
      %p267 = scmp.ne.s32.totalorder %s258, %s259
      %p268 = scmp.eq.s32.totalorder %s33, 0
      %p269 = por %p267, %p268
      %p270 = scmp.ne.s32.totalorder %s258, %s259
      %p271 = scmp.eq.s32.totalorder %s34, 1
      %p272 = por %p270, %p271
      %p274 = scmp.ne.s32.totalorder %s259, %s273
      %p275 = scmp.eq.s32.totalorder %s34, 0
      %p276 = por %p274, %p275
      %s277 = ssub.s32 %s28, %s35
      %p278 = scmp.eq.s32.totalorder %s277, 0
      %s280 = sadd.s32 %s279, 1
      %s281 = scalar_select %p278, %s279, %s280
      %p284 = pneg %p278
      %p285 = scmp.eq.s32.totalorder %s28, 1
      %p286 = por %p284, %p285
      %p287 = scmp.ne.s32.totalorder %s279, %s282
      %p288 = scmp.eq.s32.totalorder %s28, 0
      %p289 = por %p287, %p288
      %p290 = scmp.ne.s32.totalorder %s279, %s282
      %p291 = scmp.eq.s32.totalorder %s33, 1
      %p292 = por %p290, %p291
      %p293 = scmp.ne.s32.totalorder %s282, %s283
      %p294 = scmp.eq.s32.totalorder %s33, 0
      %p295 = por %p293, %p294
      %p296 = scmp.ne.s32.totalorder %s282, %s283
      %p297 = scmp.eq.s32.totalorder %s34, 1
      %p298 = por %p296, %p297
      %p300 = scmp.ne.s32.totalorder %s283, %s299
      %p301 = scmp.eq.s32.totalorder %s34, 0
      %p302 = por %p300, %p301
      %p303 = scmp.le.s32.totalorder 1, %s28
      %p304 = scmp.lt.s32.totalorder %s28, 3
      %p305 = pnand %p303, %p304
      %p306 = pneg %p305
      // Predicated region
      $region9: #{tpu_custom_call.1} parent=5 // pred_check
        _
      $region10: #{tpu_custom_call.1} parent=5 // pred_check_branch
        %308 = sbr.rel (%p305) target = $region12
      $region11: #{tpu_custom_call.1} parent=5 // pred_region
        %s309 = ssub.s32 %s28, 1
        // Predicated region
        $region13: #{tpu_custom_call.1} parent=11 // pred_check
          %p310 = pneg %p101
        $region14: #{tpu_custom_call.1} parent=11 // pred_check_branch
          %312 = sbr.rel (%p310) target = $region16
        $region15: #{tpu_custom_call.1} parent=11 // pred_region
          %s314 = ssub.s32 18432, 18432
          %315 = vsyncadd [#allocation7], %s314
          %s316 = sshll.u32 [#allocation8], 4
          %s317 = int_to_ptr.vmem [resolvable:$true] %s316
          %322 = dma.hbm_to_vmem [thread:$0]  %s2, 18432, %s317, [#allocation7], 128, 128, 8
        $region16: #{tpu_custom_call.1} parent=11 // pred_fallthru
          _
        // Predicated region
        $region17: #{tpu_custom_call.1} parent=11 // pred_check
          %p323 = pneg %p122
        $region18: #{tpu_custom_call.1} parent=11 // pred_check_branch
          %325 = sbr.rel (%p323) target = $region20
        $region19: #{tpu_custom_call.1} parent=11 // pred_region
          _
        $region20: #{tpu_custom_call.1} parent=11 // pred_fallthru
          _
        // Predicated region
        $region21: #{tpu_custom_call.1} parent=11 // pred_check
          %p326 = pneg %p143
        $region22: #{tpu_custom_call.1} parent=11 // pred_check_branch
          %328 = sbr.rel (%p326) target = $region24
        $region23: #{tpu_custom_call.1} parent=11 // pred_region
          %s330 = ssub.s32 18432, 18432
          %331 = vsyncadd [#allocation10], %s330
          %s332 = sshll.u32 [#allocation9], 4
          %s333 = int_to_ptr.vmem [resolvable:$true] %s332
          %338 = dma.hbm_to_vmem [thread:$0]  %s4, 18432, %s333, [#allocation10], 128, 128, 8
        $region24: #{tpu_custom_call.1} parent=11 // pred_fallthru
          _
        // Predicated region
        $region25: #{tpu_custom_call.1} parent=11 // pred_check
          %p339 = pneg %p164
        $region26: #{tpu_custom_call.1} parent=11 // pred_check_branch
          %341 = sbr.rel (%p339) target = $region28
        $region27: #{tpu_custom_call.1} parent=11 // pred_region
          _
        $region28: #{tpu_custom_call.1} parent=11 // pred_fallthru
          _
        // Predicated region
        $region29: #{tpu_custom_call.1} parent=11 // pred_check
          %p342 = pneg %p185
        $region30: #{tpu_custom_call.1} parent=11 // pred_check_branch
          %344 = sbr.rel (%p342) target = $region32
        $region31: #{tpu_custom_call.1} parent=11 // pred_region
          %s346 = ssub.s32 18432, 18432
          %347 = vsyncadd [#allocation10], %s346
          %s348 = sshll.u32 [#allocation11], 4
          %s349 = int_to_ptr.vmem [resolvable:$true] %s348
          %354 = dma.hbm_to_vmem [thread:$0]  %s6, 18432, %s349, [#allocation10], 128, 128, 8
        $region32: #{tpu_custom_call.1} parent=11 // pred_fallthru
          _
        // Predicated region
        $region33: #{tpu_custom_call.1} parent=11 // pred_check
          %p355 = pneg %p206
        $region34: #{tpu_custom_call.1} parent=11 // pred_check_branch
          %357 = sbr.rel (%p355) target = $region36
        $region35: #{tpu_custom_call.1} parent=11 // pred_region
          _
        $region36: #{tpu_custom_call.1} parent=11 // pred_fallthru
          _
        // Predicated region
        $region37: #{tpu_custom_call.1} parent=11 // pred_check
          %p358 = pneg %p227
        $region38: #{tpu_custom_call.1} parent=11 // pred_check_branch
          %360 = sbr.rel (%p358) target = $region40
        $region39: #{tpu_custom_call.1} parent=11 // pred_region
          %s362 = ssub.s32 18432, 18432
          %363 = vsyncadd [#allocation13], %s362
          %s364 = sshll.u32 [#allocation12], 4
          %s365 = int_to_ptr.vmem [resolvable:$true] %s364
          %370 = dma.hbm_to_vmem [thread:$0]  %s8, 18432, %s365, [#allocation13], 128, 128, 8
        $region40: #{tpu_custom_call.1} parent=11 // pred_fallthru
          _
        // Predicated region
        $region41: #{tpu_custom_call.1} parent=11 // pred_check
          %p371 = pneg %p248
        $region42: #{tpu_custom_call.1} parent=11 // pred_check_branch
          %373 = sbr.rel (%p371) target = $region44
        $region43: #{tpu_custom_call.1} parent=11 // pred_region
          _
        $region44: #{tpu_custom_call.1} parent=11 // pred_fallthru
          _
        // Predicated region
        $region45: #{tpu_custom_call.1} parent=11 // pred_check
          %p374 = pneg %p269
        $region46: #{tpu_custom_call.1} parent=11 // pred_check_branch
          %376 = sbr.rel (%p374) target = $region48
        $region47: #{tpu_custom_call.1} parent=11 // pred_region
          %s378 = ssub.s32 2048, 2048
          %379 = vsyncadd [#allocation13], %s378
          %s380 = sshll.u32 [#allocation14], 4
          %s381 = int_to_ptr.vmem [resolvable:$true] %s380
          %386 = dma.hbm_to_vmem [thread:$0]  %s10, 2048, %s381, [#allocation13], 128, 128, 8
        $region48: #{tpu_custom_call.1} parent=11 // pred_fallthru
          _
      $region12: #{tpu_custom_call.1} parent=5 // pred_fallthru
        _
      %p387 = scmp.lt.s32.totalorder %s28, 2
      // Predicated region
      $region49: #{tpu_custom_call.1} parent=5 // pred_check
        %p388 = pneg %p387
      $region50: #{tpu_custom_call.1} parent=5 // pred_check_branch
        %390 = sbr.rel (%p388) target = $region52
      $region51: #{tpu_custom_call.1} parent=5 // pred_region
        // Predicated region
        $region53: #{tpu_custom_call.1} parent=51 // pred_check
          %p391 = pneg %p48
        $region54: #{tpu_custom_call.1} parent=51 // pred_check_branch
          %393 = sbr.rel (%p391) target = $region56
        $region55: #{tpu_custom_call.1} parent=51 // pred_region
          %s394 = sand.u32 %s38, 1
          %s395 = scalar_lea.sflag [#allocation4], %s394
          %s396 = sand.u32 %s38, 1
          %s397 = smul.addr %s396, 256
          %s398 = scalar_lea.vmem [#allocation3], %s397
          %s400 = ssub.s32 4096, 4096
          %401 = vsyncadd %s395, %s400
          %s402 = smul.addr %s28, 32
          %s403 = smul.addr %s402, 128
          %s404 = scalar_lea.hbm %s0, %s403
          %s405 = sshll.u32 %s398, 4
          %s406 = int_to_ptr.vmem [resolvable:$true] %s405
          %411 = dma.hbm_to_vmem [thread:$0]  %s404, 4096, %s406, %s395, 128, 128, 8
        $region56: #{tpu_custom_call.1} parent=51 // pred_fallthru
          _
        // Predicated region
        $region57: #{tpu_custom_call.1} parent=51 // pred_check
          %p412 = pneg %p74
        $region58: #{tpu_custom_call.1} parent=51 // pred_check_branch
          %414 = sbr.rel (%p412) target = $region60
        $region59: #{tpu_custom_call.1} parent=51 // pred_region
          %s415 = sand.u32 %s28, 1
          %s416 = scalar_lea.sflag [#allocation7], %s415
          %s417 = sand.u32 %s64, 1
          %s418 = smul.addr %s417, 256
          %s419 = scalar_lea.vmem [#allocation6], %s418
          %s421 = ssub.s32 4096, 4096
          %422 = vsyncadd %s416, %s421
          %s423 = smul.addr %s28, 32
          %s424 = smul.addr %s423, 128
          %s425 = scalar_lea.hbm %s1, %s424
          %s426 = sshll.u32 %s419, 4
          %s427 = int_to_ptr.vmem [resolvable:$true] %s426
          %432 = dma.hbm_to_vmem [thread:$0]  %s425, 4096, %s427, %s416, 128, 128, 8
        $region60: #{tpu_custom_call.1} parent=51 // pred_fallthru
          _
      $region52: #{tpu_custom_call.1} parent=5 // pred_fallthru
        _
      %p433 = scmp.le.s32.totalorder 1, %s28
      %p434 = scmp.lt.s32.totalorder %s28, 3
      %p435 = pnand %p433, %p434
      %p436 = pneg %p435
      // Predicated region
      $region61: #{tpu_custom_call.1} parent=5 // pred_check
        _
      $region62: #{tpu_custom_call.1} parent=5 // pred_check_branch
        %438 = sbr.rel (%p435) target = $region64
      $region63: #{tpu_custom_call.1} parent=5 // pred_region
        %s439 = ssub.s32 %s28, 1
        %s440 = sand.u32 %s41, 1
        %s441 = scalar_lea.sflag [#allocation4], %s440
        %s442 = sand.u32 %s41, 1
        %s443 = smul.addr %s442, 256
        %s444 = scalar_lea.vmem [#allocation3], %s443
        // Predicated region
        $region65: #{tpu_custom_call.1} parent=63 // pred_check
          %p445 = pneg %p54
        $region66: #{tpu_custom_call.1} parent=63 // pred_check_branch
          %447 = sbr.rel (%p445) target = $region68
        $region67: #{tpu_custom_call.1} parent=63 // pred_region
          %448 = dma.done %s441, 4096
        $region68: #{tpu_custom_call.1} parent=63 // pred_fallthru
          _
        %s449 = sand.u32 %s33, 1
        %s450 = scalar_lea.sflag [#allocation7], %s449
        %s451 = sand.u32 %s67, 1
        %s452 = smul.addr %s451, 256
        %s453 = scalar_lea.vmem [#allocation6], %s452
        // Predicated region
        $region69: #{tpu_custom_call.1} parent=63 // pred_check
          %p454 = pneg %p80
        $region70: #{tpu_custom_call.1} parent=63 // pred_check_branch
          %456 = sbr.rel (%p454) target = $region72
        $region71: #{tpu_custom_call.1} parent=63 // pred_region
          %457 = dma.done %s450, 4096
        $region72: #{tpu_custom_call.1} parent=63 // pred_fallthru
          _
        // Predicated region
        $region73: #{tpu_custom_call.1} parent=63 // pred_check
          %p458 = pneg %p101
        $region74: #{tpu_custom_call.1} parent=63 // pred_check_branch
          %460 = sbr.rel (%p458) target = $region76
        $region75: #{tpu_custom_call.1} parent=63 // pred_region
          %461 = dma.done [#allocation7], 18432
        $region76: #{tpu_custom_call.1} parent=63 // pred_fallthru
          _
        // Predicated region
        $region77: #{tpu_custom_call.1} parent=63 // pred_check
          %p462 = pneg %p143
        $region78: #{tpu_custom_call.1} parent=63 // pred_check_branch
          %464 = sbr.rel (%p462) target = $region80
        $region79: #{tpu_custom_call.1} parent=63 // pred_region
          %465 = dma.done [#allocation10], 18432
        $region80: #{tpu_custom_call.1} parent=63 // pred_fallthru
          _
        // Predicated region
        $region81: #{tpu_custom_call.1} parent=63 // pred_check
          %p466 = pneg %p185
        $region82: #{tpu_custom_call.1} parent=63 // pred_check_branch
          %468 = sbr.rel (%p466) target = $region84
        $region83: #{tpu_custom_call.1} parent=63 // pred_region
          %469 = dma.done [#allocation10], 18432
        $region84: #{tpu_custom_call.1} parent=63 // pred_fallthru
          _
        // Predicated region
        $region85: #{tpu_custom_call.1} parent=63 // pred_check
          %p470 = pneg %p227
        $region86: #{tpu_custom_call.1} parent=63 // pred_check_branch
          %472 = sbr.rel (%p470) target = $region88
        $region87: #{tpu_custom_call.1} parent=63 // pred_region
          %473 = dma.done [#allocation13], 18432
        $region88: #{tpu_custom_call.1} parent=63 // pred_fallthru
          _
        // Predicated region
        $region89: #{tpu_custom_call.1} parent=63 // pred_check
          %p474 = pneg %p269
        $region90: #{tpu_custom_call.1} parent=63 // pred_check_branch
          %476 = sbr.rel (%p474) target = $region92
        $region91: #{tpu_custom_call.1} parent=63 // pred_region
          %477 = dma.done [#allocation13], 2048
        $region92: #{tpu_custom_call.1} parent=63 // pred_fallthru
          _
        %s478 = sand.u32 %s41, 1
        %s479 = scalar_lea.sflag [#allocation4], %s478
        %s480 = sand.u32 %s41, 1
        %s481 = smul.addr %s480, 256
        %s482 = scalar_lea.vmem [#allocation3], %s481
        %p483 = pneg %p54
        %p484 = pneg %p51
        %s485 = sand.u32 %s33, 1
        %s486 = scalar_lea.sflag [#allocation7], %s485
        %s487 = sand.u32 %s67, 1
        %s488 = smul.addr %s487, 256
        %s489 = scalar_lea.vmem [#allocation6], %s488
        %p490 = pneg %p80
        %p491 = pneg %p77
        %p492 = pneg %p101
        %p493 = pneg %p98
        %p494 = pneg %p122
        %p495 = pneg %p119
        %p496 = pneg %p143
        %p497 = pneg %p140
        %p498 = pneg %p164
        %p499 = pneg %p161
        %p500 = pneg %p185
        %p501 = pneg %p182
        %p502 = pneg %p206
        %p503 = pneg %p203
        %p504 = pneg %p227
        %p505 = pneg %p224
        %p506 = pneg %p248
        %p507 = pneg %p245
        %p508 = pneg %p269
        %p509 = pneg %p266
        %p510 = pneg %p295
        %p511 = pneg %p292
        %s512 = sand.u32 %s282, 1
        %s513 = scalar_lea.sflag [#allocation5], %s512
        %s514 = sand.u32 %s282, 1
        %s515 = smul.addr %s514, 256
        %s516 = scalar_lea.vmem [#allocation15], %s515
        %517 = vst [vmem:[#allocation2] sm:$0xff] 0.0
        %518 = vst [vmem:[#allocation2 + $0x8] sm:$0xff] 0.0
        %519 = vst [vmem:[#allocation2 + $0x10] sm:$0xff] 0.0
        %520 = vst [vmem:[#allocation2 + $0x18] sm:$0xff] 0.0
        %521 = vst [vmem:[#allocation2 + $0x20] sm:$0xff] 0.0
        %522 = vst [vmem:[#allocation2 + $0x28] sm:$0xff] 0.0
        %s523 = scalar_lea.vmem [#allocation2], 816
        %524 = vst [vmem:[%s523] sm:$0xff] 0.0
        %525 = vst [vmem:[%s523 + $0x8] sm:$0xff] 0.0
        %526 = vst [vmem:[%s523 + $0x10] sm:$0xff] 0.0
        %527 = vst [vmem:[%s523 + $0x18] sm:$0xff] 0.0
        %528 = vst [vmem:[%s523 + $0x20] sm:$0xff] 0.0
        %529 = vst [vmem:[%s523 + $0x28] sm:$0xff] 0.0
        %v530 = vlaneseq
        %v531 = vshrl.u32 %v530, 7
        %v532 = vadd.s32 %v531, 8
        %vm533 = vcmp.gt.s32.totalorder %v531, 0
        %vm534 = vcmp.gt.s32.totalorder %v532, 0
        %vm535 = vcmp.lt.s32.totalorder %v531, 15
        %vm536 = vcmp.lt.s32.totalorder %v532, 15
        %v537 = vld [vmem:[%s453] sm:$0xff]
        %v538 = vld [vmem:[%s453 + $0x8] sm:$0xff]
        %v539 = vld [vmem:[%s453 + $0x10] sm:$0xff]
        %v540 = vld [vmem:[%s453 + $0x18] sm:$0xff]
        %v541 = vld [vmem:[%s453 + $0x20] sm:$0xff]
        %v542 = vld [vmem:[%s453 + $0x28] sm:$0xff]
        %v543 = vld [vmem:[%s453 + $0x30] sm:$0xff]
        %v544 = vld [vmem:[%s453 + $0x38] sm:$0xff]
        %v545 = vld [vmem:[%s453 + $0x40] sm:$0xff]
        %v546 = vld [vmem:[%s453 + $0x48] sm:$0xff]
        %v547 = vld [vmem:[%s453 + $0x50] sm:$0xff]
        %v548 = vld [vmem:[%s453 + $0x58] sm:$0xff]
        %v549 = vld [vmem:[%s453 + $0x60] sm:$0xff]
        %v550 = vld [vmem:[%s453 + $0x68] sm:$0xff]
        %v551 = vld [vmem:[%s453 + $0x70] sm:$0xff]
        %v552 = vld [vmem:[%s453 + $0x78] sm:$0xff]
        %v553 = vld [vmem:[%s453 + $0x80] sm:$0xff]
        %v554 = vld [vmem:[%s453 + $0x88] sm:$0xff]
        %v555 = vld [vmem:[%s453 + $0x90] sm:$0xff]
        %v556 = vld [vmem:[%s453 + $0x98] sm:$0xff]
        %v557 = vld [vmem:[%s453 + $0xa0] sm:$0xff]
        %v558 = vld [vmem:[%s453 + $0xa8] sm:$0xff]
        %v559 = vld [vmem:[%s453 + $0xb0] sm:$0xff]
        %v560 = vld [vmem:[%s453 + $0xb8] sm:$0xff]
        %v561 = vld [vmem:[%s453 + $0xc0] sm:$0xff]
        %v562 = vld [vmem:[%s453 + $0xc8] sm:$0xff]
        %v563 = vld [vmem:[%s453 + $0xd0] sm:$0xff]
        %v564 = vld [vmem:[%s453 + $0xd8] sm:$0xff]
        %v565 = vld [vmem:[%s453 + $0xe0] sm:$0xff]
        %v566 = vld [vmem:[%s453 + $0xe8] sm:$0xff]
        %v567 = vld [vmem:[%s453 + $0xf0] sm:$0xff]
        %v568 = vld [vmem:[%s453 + $0xf8] sm:$0xff]
        %v569 = vmax.f32 %v537, 0.0
        %v570 = vmax.f32 %v538, 0.0
        %v571 = vmax.f32 %v539, 0.0
        %v572 = vmax.f32 %v540, 0.0
        %v573 = vmax.f32 %v541, 0.0
        %v574 = vmax.f32 %v542, 0.0
        %v575 = vmax.f32 %v543, 0.0
        %v576 = vmax.f32 %v544, 0.0
        %v577 = vmax.f32 %v545, 0.0
        %v578 = vmax.f32 %v546, 0.0
        %v579 = vmax.f32 %v547, 0.0
        %v580 = vmax.f32 %v548, 0.0
        %v581 = vmax.f32 %v549, 0.0
        %v582 = vmax.f32 %v550, 0.0
        %v583 = vmax.f32 %v551, 0.0
        %v584 = vmax.f32 %v552, 0.0
        %v585 = vmax.f32 %v553, 0.0
        %v586 = vmax.f32 %v554, 0.0
        %v587 = vmax.f32 %v555, 0.0
        %v588 = vmax.f32 %v556, 0.0
        %v589 = vmax.f32 %v557, 0.0
        %v590 = vmax.f32 %v558, 0.0
        %v591 = vmax.f32 %v559, 0.0
        %v592 = vmax.f32 %v560, 0.0
        %v593 = vmax.f32 %v561, 0.0
        %v594 = vmax.f32 %v562, 0.0
        %v595 = vmax.f32 %v563, 0.0
        %v596 = vmax.f32 %v564, 0.0
        %v597 = vmax.f32 %v565, 0.0
        %v598 = vmax.f32 %v566, 0.0
        %v599 = vmax.f32 %v567, 0.0
        %v600 = vmax.f32 %v568, 0.0
        %v601 = vld [vmem:[%s3] sm:$0x1]
        %v602 = vrot.slane %v569, 7
        %v603 = vrot.slane %v570, 7
        %v604 = vrot.slane %v571, 7
        %v605 = vrot.slane %v572, 7
        %v606 = vrot.slane %v573, 7
        %v607 = vrot.slane %v574, 7
        %v608 = vrot.slane %v575, 7
        %v609 = vrot.slane %v576, 7
        %v610 = vrot.slane %v577, 7
        %v611 = vrot.slane %v578, 7
        %v612 = vrot.slane %v579, 7
        %v613 = vrot.slane %v580, 7
        %v614 = vrot.slane %v581, 7
        %v615 = vrot.slane %v582, 7
        %v616 = vrot.slane %v583, 7
        %v617 = vrot.slane %v584, 7
        %v618 = vrot.slane %v585, 7
        %v619 = vrot.slane %v586, 7
        %v620 = vrot.slane %v587, 7
        %v621 = vrot.slane %v588, 7
        %v622 = vrot.slane %v589, 7
        %v623 = vrot.slane %v590, 7
        %v624 = vrot.slane %v591, 7
        %v625 = vrot.slane %v592, 7
        %v626 = vrot.slane %v593, 7
        %v627 = vrot.slane %v594, 7
        %v628 = vrot.slane %v595, 7
        %v629 = vrot.slane %v596, 7
        %v630 = vrot.slane %v597, 7
        %v631 = vrot.slane %v598, 7
        %v632 = vrot.slane %v599, 7
        %v633 = vrot.slane %v600, 7
        %vm634 = vcmp.lt.s32.totalorder %v531, 1
        %v635 = vsel %vm634, %v632, %v633
        %v636 = vsel %vm634, %v631, %v632
        %v637 = vsel %vm634, %v630, %v631
        %v638 = vsel %vm634, %v629, %v630
        %v639 = vsel %vm634, %v628, %v629
        %v640 = vsel %vm634, %v627, %v628
        %v641 = vsel %vm634, %v626, %v627
        %v642 = vsel %vm634, %v625, %v626
        %v643 = vsel %vm634, %v624, %v625
        %v644 = vsel %vm634, %v623, %v624
        %v645 = vsel %vm634, %v622, %v623
        %v646 = vsel %vm634, %v621, %v622
        %v647 = vsel %vm634, %v620, %v621
        %v648 = vsel %vm634, %v619, %v620
        %v649 = vsel %vm634, %v618, %v619
        %v650 = vsel %vm634, %v617, %v618
        %v651 = vsel %vm634, %v616, %v617
        %v652 = vsel %vm634, %v615, %v616
        %v653 = vsel %vm634, %v614, %v615
        %v654 = vsel %vm634, %v613, %v614
        %v655 = vsel %vm634, %v612, %v613
        %v656 = vsel %vm634, %v611, %v612
        %v657 = vsel %vm634, %v610, %v611
        %v658 = vsel %vm634, %v609, %v610
        %v659 = vsel %vm634, %v608, %v609
        %v660 = vsel %vm634, %v607, %v608
        %v661 = vsel %vm634, %v606, %v607
        %v662 = vsel %vm634, %v605, %v606
        %v663 = vsel %vm634, %v604, %v605
        %v664 = vsel %vm634, %v603, %v604
        %v665 = vsel %vm634, %v602, %v603
        %v666 = vsel %vm634, %v633, %v602
        %v667 = vrot.slane %v569, 1
        %v668 = vrot.slane %v570, 1
        %v669 = vrot.slane %v571, 1
        %v670 = vrot.slane %v572, 1
        %v671 = vrot.slane %v573, 1
        %v672 = vrot.slane %v574, 1
        %v673 = vrot.slane %v575, 1
        %v674 = vrot.slane %v576, 1
        %v675 = vrot.slane %v577, 1
        %v676 = vrot.slane %v578, 1
        %v677 = vrot.slane %v579, 1
        %v678 = vrot.slane %v580, 1
        %v679 = vrot.slane %v581, 1
        %v680 = vrot.slane %v582, 1
        %v681 = vrot.slane %v583, 1
        %v682 = vrot.slane %v584, 1
        %v683 = vrot.slane %v585, 1
        %v684 = vrot.slane %v586, 1
        %v685 = vrot.slane %v587, 1
        %v686 = vrot.slane %v588, 1
        %v687 = vrot.slane %v589, 1
        %v688 = vrot.slane %v590, 1
        %v689 = vrot.slane %v591, 1
        %v690 = vrot.slane %v592, 1
        %v691 = vrot.slane %v593, 1
        %v692 = vrot.slane %v594, 1
        %v693 = vrot.slane %v595, 1
        %v694 = vrot.slane %v596, 1
        %v695 = vrot.slane %v597, 1
        %v696 = vrot.slane %v598, 1
        %v697 = vrot.slane %v599, 1
        %v698 = vrot.slane %v600, 1
        %vm699 = vcmp.lt.s32.totalorder %v531, 7
        %v700 = vsel %vm699, %v697, %v698
        %v701 = vsel %vm699, %v696, %v697
        %v702 = vsel %vm699, %v695, %v696
        %v703 = vsel %vm699, %v694, %v695
        %v704 = vsel %vm699, %v693, %v694
        %v705 = vsel %vm699, %v692, %v693
        %v706 = vsel %vm699, %v691, %v692
        %v707 = vsel %vm699, %v690, %v691
        %v708 = vsel %vm699, %v689, %v690
        %v709 = vsel %vm699, %v688, %v689
        %v710 = vsel %vm699, %v687, %v688
        %v711 = vsel %vm699, %v686, %v687
        %v712 = vsel %vm699, %v685, %v686
        %v713 = vsel %vm699, %v684, %v685
        %v714 = vsel %vm699, %v683, %v684
        %v715 = vsel %vm699, %v682, %v683
        %v716 = vsel %vm699, %v681, %v682
        %v717 = vsel %vm699, %v680, %v681
        %v718 = vsel %vm699, %v679, %v680
        %v719 = vsel %vm699, %v678, %v679
        %v720 = vsel %vm699, %v677, %v678
        %v721 = vsel %vm699, %v676, %v677
        %v722 = vsel %vm699, %v675, %v676
        %v723 = vsel %vm699, %v674, %v675
        %v724 = vsel %vm699, %v673, %v674
        %v725 = vsel %vm699, %v672, %v673
        %v726 = vsel %vm699, %v671, %v672
        %v727 = vsel %vm699, %v670, %v671
        %v728 = vsel %vm699, %v669, %v670
        %v729 = vsel %vm699, %v668, %v669
        %v730 = vsel %vm699, %v667, %v668
        %v731 = vsel %vm699, %v698, %v667
        %v732 = vsel %vm533, %v666, 0.0
        %v733 = vsel %vm534, %v665, 0.0
        %v734 = vsel %vm533, %v664, 0.0
        %v735 = vsel %vm534, %v663, 0.0
        %v736 = vsel %vm533, %v662, 0.0
        %v737 = vsel %vm534, %v661, 0.0
        %v738 = vsel %vm533, %v660, 0.0
        %v739 = vsel %vm534, %v659, 0.0
        %v740 = vsel %vm533, %v658, 0.0
        %v741 = vsel %vm534, %v657, 0.0
        %v742 = vsel %vm533, %v656, 0.0
        %v743 = vsel %vm534, %v655, 0.0
        %v744 = vsel %vm533, %v654, 0.0
        %v745 = vsel %vm534, %v653, 0.0
        %v746 = vsel %vm533, %v652, 0.0
        %v747 = vsel %vm534, %v651, 0.0
        %v748 = vsel %vm533, %v650, 0.0
        %v749 = vsel %vm534, %v649, 0.0
        %v750 = vsel %vm533, %v648, 0.0
        %v751 = vsel %vm534, %v647, 0.0
        %v752 = vsel %vm533, %v646, 0.0
        %v753 = vsel %vm534, %v645, 0.0
        %v754 = vsel %vm533, %v644, 0.0
        %v755 = vsel %vm534, %v643, 0.0
        %v756 = vsel %vm533, %v642, 0.0
        %v757 = vsel %vm534, %v641, 0.0
        %v758 = vsel %vm533, %v640, 0.0
        %v759 = vsel %vm534, %v639, 0.0
        %v760 = vsel %vm533, %v638, 0.0
        %v761 = vsel %vm534, %v637, 0.0
        %v762 = vsel %vm533, %v636, 0.0
        %v763 = vsel %vm534, %v635, 0.0
        %v764 = vsel %vm535, %v730, 0.0
        %v765 = vsel %vm536, %v729, 0.0
        %v766 = vsel %vm535, %v728, 0.0
        %v767 = vsel %vm536, %v727, 0.0
        %v768 = vsel %vm535, %v726, 0.0
        %v769 = vsel %vm536, %v725, 0.0
        %v770 = vsel %vm535, %v724, 0.0
        %v771 = vsel %vm536, %v723, 0.0
        %v772 = vsel %vm535, %v722, 0.0
        %v773 = vsel %vm536, %v721, 0.0
        %v774 = vsel %vm535, %v720, 0.0
        %v775 = vsel %vm536, %v719, 0.0
        %v776 = vsel %vm535, %v718, 0.0
        %v777 = vsel %vm536, %v717, 0.0
        %v778 = vsel %vm535, %v716, 0.0
        %v779 = vsel %vm536, %v715, 0.0
        %v780 = vsel %vm535, %v714, 0.0
        %v781 = vsel %vm536, %v713, 0.0
        %v782 = vsel %vm535, %v712, 0.0
        %v783 = vsel %vm536, %v711, 0.0
        %v784 = vsel %vm535, %v710, 0.0
        %v785 = vsel %vm536, %v709, 0.0
        %v786 = vsel %vm535, %v708, 0.0
        %v787 = vsel %vm536, %v707, 0.0
        %v788 = vsel %vm535, %v706, 0.0
        %v789 = vsel %vm536, %v705, 0.0
        %v790 = vsel %vm535, %v704, 0.0
        %v791 = vsel %vm536, %v703, 0.0
        %v792 = vsel %vm535, %v702, 0.0
        %v793 = vsel %vm536, %v701, 0.0
        %v794 = vsel %vm535, %v700, 0.0
        %v795 = vsel %vm536, %v731, 0.0
        %s796 = scalar_lea.vmem [#allocation2], 48
        %797 = vst [vmem:[%s796] sm:$0xff] %v732
        %798 = vst [vmem:[%s796 + $0x8] sm:$0xff] %v569
        %799 = vst [vmem:[%s796 + $0x10] sm:$0xff] %v764
        %800 = vst [vmem:[%s796 + $0x18] sm:$0xff] %v733
        %801 = vst [vmem:[%s796 + $0x20] sm:$0xff] %v570
        %802 = vst [vmem:[%s796 + $0x28] sm:$0xff] %v765
        %803 = vst [vmem:[%s796 + $0x30] sm:$0xff] %v734
        %804 = vst [vmem:[%s796 + $0x38] sm:$0xff] %v571
        %805 = vst [vmem:[%s796 + $0x40] sm:$0xff] %v766
        %806 = vst [vmem:[%s796 + $0x48] sm:$0xff] %v735
        %807 = vst [vmem:[%s796 + $0x50] sm:$0xff] %v572
        %808 = vst [vmem:[%s796 + $0x58] sm:$0xff] %v767
        %809 = vst [vmem:[%s796 + $0x60] sm:$0xff] %v736
        %810 = vst [vmem:[%s796 + $0x68] sm:$0xff] %v573
        %811 = vst [vmem:[%s796 + $0x70] sm:$0xff] %v768
        %812 = vst [vmem:[%s796 + $0x78] sm:$0xff] %v737
        %813 = vst [vmem:[%s796 + $0x80] sm:$0xff] %v574
        %814 = vst [vmem:[%s796 + $0x88] sm:$0xff] %v769
        %815 = vst [vmem:[%s796 + $0x90] sm:$0xff] %v738
        %816 = vst [vmem:[%s796 + $0x98] sm:$0xff] %v575
        %817 = vst [vmem:[%s796 + $0xa0] sm:$0xff] %v770
        %818 = vst [vmem:[%s796 + $0xa8] sm:$0xff] %v739
        %819 = vst [vmem:[%s796 + $0xb0] sm:$0xff] %v576
        %820 = vst [vmem:[%s796 + $0xb8] sm:$0xff] %v771
        %821 = vst [vmem:[%s796 + $0xc0] sm:$0xff] %v740
        %822 = vst [vmem:[%s796 + $0xc8] sm:$0xff] %v577
        %823 = vst [vmem:[%s796 + $0xd0] sm:$0xff] %v772
        %824 = vst [vmem:[%s796 + $0xd8] sm:$0xff] %v741
        %825 = vst [vmem:[%s796 + $0xe0] sm:$0xff] %v578
        %826 = vst [vmem:[%s796 + $0xe8] sm:$0xff] %v773
        %827 = vst [vmem:[%s796 + $0xf0] sm:$0xff] %v742
        %828 = vst [vmem:[%s796 + $0xf8] sm:$0xff] %v579
        %829 = vst [vmem:[%s796 + $0x100] sm:$0xff] %v774
        %830 = vst [vmem:[%s796 + $0x108] sm:$0xff] %v743
        %831 = vst [vmem:[%s796 + $0x110] sm:$0xff] %v580
        %832 = vst [vmem:[%s796 + $0x118] sm:$0xff] %v775
        %833 = vst [vmem:[%s796 + $0x120] sm:$0xff] %v744
        %834 = vst [vmem:[%s796 + $0x128] sm:$0xff] %v581
        %835 = vst [vmem:[%s796 + $0x130] sm:$0xff] %v776
        %836 = vst [vmem:[%s796 + $0x138] sm:$0xff] %v745
        %837 = vst [vmem:[%s796 + $0x140] sm:$0xff] %v582
        %838 = vst [vmem:[%s796 + $0x148] sm:$0xff] %v777
        %839 = vst [vmem:[%s796 + $0x150] sm:$0xff] %v746
        %840 = vst [vmem:[%s796 + $0x158] sm:$0xff] %v583
        %841 = vst [vmem:[%s796 + $0x160] sm:$0xff] %v778
        %842 = vst [vmem:[%s796 + $0x168] sm:$0xff] %v747
        %843 = vst [vmem:[%s796 + $0x170] sm:$0xff] %v584
        %844 = vst [vmem:[%s796 + $0x178] sm:$0xff] %v779
        %845 = vst [vmem:[%s796 + $0x180] sm:$0xff] %v748
        %846 = vst [vmem:[%s796 + $0x188] sm:$0xff] %v585
        %847 = vst [vmem:[%s796 + $0x190] sm:$0xff] %v780
        %848 = vst [vmem:[%s796 + $0x198] sm:$0xff] %v749
        %849 = vst [vmem:[%s796 + $0x1a0] sm:$0xff] %v586
        %850 = vst [vmem:[%s796 + $0x1a8] sm:$0xff] %v781
        %851 = vst [vmem:[%s796 + $0x1b0] sm:$0xff] %v750
        %852 = vst [vmem:[%s796 + $0x1b8] sm:$0xff] %v587
        %853 = vst [vmem:[%s796 + $0x1c0] sm:$0xff] %v782
        %854 = vst [vmem:[%s796 + $0x1c8] sm:$0xff] %v751
        %855 = vst [vmem:[%s796 + $0x1d0] sm:$0xff] %v588
        %856 = vst [vmem:[%s796 + $0x1d8] sm:$0xff] %v783
        %857 = vst [vmem:[%s796 + $0x1e0] sm:$0xff] %v752
        %858 = vst [vmem:[%s796 + $0x1e8] sm:$0xff] %v589
        %859 = vst [vmem:[%s796 + $0x1f0] sm:$0xff] %v784
        %860 = vst [vmem:[%s796 + $0x1f8] sm:$0xff] %v753
        %861 = vst [vmem:[%s796 + $0x200] sm:$0xff] %v590
        %862 = vst [vmem:[%s796 + $0x208] sm:$0xff] %v785
        %863 = vst [vmem:[%s796 + $0x210] sm:$0xff] %v754
        %864 = vst [vmem:[%s796 + $0x218] sm:$0xff] %v591
        %865 = vst [vmem:[%s796 + $0x220] sm:$0xff] %v786
        %866 = vst [vmem:[%s796 + $0x228] sm:$0xff] %v755
        %867 = vst [vmem:[%s796 + $0x230] sm:$0xff] %v592
        %868 = vst [vmem:[%s796 + $0x238] sm:$0xff] %v787
        %869 = vst [vmem:[%s796 + $0x240] sm:$0xff] %v756
        %870 = vst [vmem:[%s796 + $0x248] sm:$0xff] %v593
        %871 = vst [vmem:[%s796 + $0x250] sm:$0xff] %v788
        %872 = vst [vmem:[%s796 + $0x258] sm:$0xff] %v757
        %873 = vst [vmem:[%s796 + $0x260] sm:$0xff] %v594
        %874 = vst [vmem:[%s796 + $0x268] sm:$0xff] %v789
        %875 = vst [vmem:[%s796 + $0x270] sm:$0xff] %v758
        %876 = vst [vmem:[%s796 + $0x278] sm:$0xff] %v595
        %877 = vst [vmem:[%s796 + $0x280] sm:$0xff] %v790
        %878 = vst [vmem:[%s796 + $0x288] sm:$0xff] %v759
        %879 = vst [vmem:[%s796 + $0x290] sm:$0xff] %v596
        %880 = vst [vmem:[%s796 + $0x298] sm:$0xff] %v791
        %881 = vst [vmem:[%s796 + $0x2a0] sm:$0xff] %v760
        %882 = vst [vmem:[%s796 + $0x2a8] sm:$0xff] %v597
        %883 = vst [vmem:[%s796 + $0x2b0] sm:$0xff] %v792
        %884 = vst [vmem:[%s796 + $0x2b8] sm:$0xff] %v761
        %885 = vst [vmem:[%s796 + $0x2c0] sm:$0xff] %v598
        %886 = vst [vmem:[%s796 + $0x2c8] sm:$0xff] %v793
        %887 = vst [vmem:[%s796 + $0x2d0] sm:$0xff] %v762
        %888 = vst [vmem:[%s796 + $0x2d8] sm:$0xff] %v599
        %889 = vst [vmem:[%s796 + $0x2e0] sm:$0xff] %v794
        %890 = vst [vmem:[%s796 + $0x2e8] sm:$0xff] %v763
        %891 = vst [vmem:[%s796 + $0x2f0] sm:$0xff] %v600
        %892 = vst [vmem:[%s796 + $0x2f8] sm:$0xff] %v795
        %v893 = vld [vmem:[#allocation2] sm:$0xff]
        %v894 = vld [vmem:[#allocation2 + $0x8] sm:$0xff]
        %v895 = vld [vmem:[#allocation2 + $0x10] sm:$0xff]
        %v896 = vld [vmem:[#allocation2 + $0x18] sm:$0xff]
        %v897 = vld [vmem:[#allocation2 + $0x20] sm:$0xff]
        %v898 = vld [vmem:[#allocation2 + $0x28] sm:$0xff]
        %v899 = vld [vmem:[#allocation2 + $0x30] sm:$0xff]
        %v900 = vld [vmem:[#allocation2 + $0x38] sm:$0xff]
        %v901 = vld [vmem:[#allocation2 + $0x40] sm:$0xff]
        %v902 = vld [vmem:[#allocation2 + $0x48] sm:$0xff]
        %v903 = vld [vmem:[#allocation2 + $0x50] sm:$0xff]
        %v904 = vld [vmem:[#allocation2 + $0x58] sm:$0xff]
        %v905 = vld [vmem:[#allocation2 + $0x60] sm:$0xff]
        %v906 = vld [vmem:[#allocation2 + $0x68] sm:$0xff]
        %v907 = vld [vmem:[#allocation2 + $0x70] sm:$0xff]
        %v908 = vld [vmem:[#allocation2 + $0x78] sm:$0xff]
        %v909 = vld [vmem:[#allocation2 + $0x80] sm:$0xff]
        %v910 = vld [vmem:[#allocation2 + $0x88] sm:$0xff]
        %v911 = vld [vmem:[#allocation2 + $0x90] sm:$0xff]
        %v912 = vld [vmem:[#allocation2 + $0x98] sm:$0xff]
        %v913 = vld [vmem:[#allocation2 + $0xa0] sm:$0xff]
        %v914 = vld [vmem:[#allocation2 + $0xa8] sm:$0xff]
        %v915 = vld [vmem:[#allocation2 + $0xb0] sm:$0xff]
        %v916 = vld [vmem:[#allocation2 + $0xb8] sm:$0xff]
        %v917 = vld [vmem:[#allocation2 + $0xc0] sm:$0xff]
        %v918 = vld [vmem:[#allocation2 + $0xc8] sm:$0xff]
        %v919 = vld [vmem:[#allocation2 + $0xd0] sm:$0xff]
        %v920 = vld [vmem:[#allocation2 + $0xd8] sm:$0xff]
        %v921 = vld [vmem:[#allocation2 + $0xe0] sm:$0xff]
        %v922 = vld [vmem:[#allocation2 + $0xe8] sm:$0xff]
        %v923 = vld [vmem:[#allocation2 + $0xf0] sm:$0xff]
        %v924 = vld [vmem:[#allocation2 + $0xf8] sm:$0xff]
        %v925 = vld [vmem:[#allocation2 + $0x100] sm:$0xff]
        %v926 = vld [vmem:[#allocation2 + $0x108] sm:$0xff]
        %v927 = vld [vmem:[#allocation2 + $0x110] sm:$0xff]
        %v928 = vld [vmem:[#allocation2 + $0x118] sm:$0xff]
        %v929 = vld [vmem:[#allocation2 + $0x120] sm:$0xff]
        %v930 = vld [vmem:[#allocation2 + $0x128] sm:$0xff]
        %v931 = vld [vmem:[#allocation2 + $0x130] sm:$0xff]
        %v932 = vld [vmem:[#allocation2 + $0x138] sm:$0xff]
        %v933 = vld [vmem:[#allocation2 + $0x140] sm:$0xff]
        %v934 = vld [vmem:[#allocation2 + $0x148] sm:$0xff]
        %v935 = vld [vmem:[#allocation2 + $0x150] sm:$0xff]
        %v936 = vld [vmem:[#allocation2 + $0x158] sm:$0xff]
        %v937 = vld [vmem:[#allocation2 + $0x160] sm:$0xff]
        %v938 = vld [vmem:[#allocation2 + $0x168] sm:$0xff]
        %v939 = vld [vmem:[#allocation2 + $0x170] sm:$0xff]
        %v940 = vld [vmem:[#allocation2 + $0x178] sm:$0xff]
        %v941 = vld [vmem:[#allocation2 + $0x180] sm:$0xff]
        %v942 = vld [vmem:[#allocation2 + $0x188] sm:$0xff]
        %v943 = vld [vmem:[#allocation2 + $0x190] sm:$0xff]
        %v944 = vld [vmem:[#allocation2 + $0x198] sm:$0xff]
        %v945 = vld [vmem:[#allocation2 + $0x1a0] sm:$0xff]
        %v946 = vld [vmem:[#allocation2 + $0x1a8] sm:$0xff]
        %v947 = vld [vmem:[#allocation2 + $0x1b0] sm:$0xff]
        %v948 = vld [vmem:[#allocation2 + $0x1b8] sm:$0xff]
        %v949 = vld [vmem:[#allocation2 + $0x1c0] sm:$0xff]
        %v950 = vld [vmem:[#allocation2 + $0x1c8] sm:$0xff]
        %v951 = vld [vmem:[#allocation2 + $0x1d0] sm:$0xff]
        %v952 = vld [vmem:[#allocation2 + $0x1d8] sm:$0xff]
        %v953 = vld [vmem:[#allocation2 + $0x1e0] sm:$0xff]
        %v954 = vld [vmem:[#allocation2 + $0x1e8] sm:$0xff]
        %v955 = vld [vmem:[#allocation2 + $0x1f0] sm:$0xff]
        %v956 = vld [vmem:[#allocation2 + $0x1f8] sm:$0xff]
        %v957 = vld [vmem:[#allocation2 + $0x200] sm:$0xff]
        %v958 = vld [vmem:[#allocation2 + $0x208] sm:$0xff]
        %v959 = vld [vmem:[#allocation2 + $0x210] sm:$0xff]
        %v960 = vld [vmem:[#allocation2 + $0x218] sm:$0xff]
        %v961 = vld [vmem:[#allocation2 + $0x220] sm:$0xff]
        %v962 = vld [vmem:[#allocation2 + $0x228] sm:$0xff]
        %v963 = vld [vmem:[#allocation2 + $0x230] sm:$0xff]
        %v964 = vld [vmem:[#allocation2 + $0x238] sm:$0xff]
        %v965 = vld [vmem:[#allocation2 + $0x240] sm:$0xff]
        %v966 = vld [vmem:[#allocation2 + $0x248] sm:$0xff]
        %v967 = vld [vmem:[#allocation2 + $0x250] sm:$0xff]
        %v968 = vld [vmem:[#allocation2 + $0x258] sm:$0xff]
        %v969 = vld [vmem:[#allocation2 + $0x260] sm:$0xff]
        %v970 = vld [vmem:[#allocation2 + $0x268] sm:$0xff]
        %v971 = vld [vmem:[#allocation2 + $0x270] sm:$0xff]
        %v972 = vld [vmem:[#allocation2 + $0x278] sm:$0xff]
        %v973 = vld [vmem:[#allocation2 + $0x280] sm:$0xff]
        %v974 = vld [vmem:[#allocation2 + $0x288] sm:$0xff]
        %v975 = vld [vmem:[#allocation2 + $0x290] sm:$0xff]
        %v976 = vld [vmem:[#allocation2 + $0x298] sm:$0xff]
        %v977 = vld [vmem:[#allocation2 + $0x2a0] sm:$0xff]
        %v978 = vld [vmem:[#allocation2 + $0x2a8] sm:$0xff]
        %v979 = vld [vmem:[#allocation2 + $0x2b0] sm:$0xff]
        %v980 = vld [vmem:[#allocation2 + $0x2b8] sm:$0xff]
        %v981 = vld [vmem:[#allocation2 + $0x2c0] sm:$0xff]
        %v982 = vld [vmem:[#allocation2 + $0x2c8] sm:$0xff]
        %v983 = vld [vmem:[#allocation2 + $0x2d0] sm:$0xff]
        %v984 = vld [vmem:[#allocation2 + $0x2d8] sm:$0xff]
        %v985 = vld [vmem:[#allocation2 + $0x2e0] sm:$0xff]
        %v986 = vld [vmem:[#allocation2 + $0x2e8] sm:$0xff]
        %v987 = vld [vmem:[#allocation2 + $0x2f0] sm:$0xff]
        %v988 = vld [vmem:[#allocation2 + $0x2f8] sm:$0xff]
        %v989 = vld [vmem:[#allocation8] sm:$0xff]
        %v990 = vld [vmem:[#allocation8 + $0x8] sm:$0xff]
        %v991 = vld [vmem:[#allocation8 + $0x10] sm:$0xff]
        %v992 = vld [vmem:[#allocation8 + $0x18] sm:$0xff]
        %v993 = vld [vmem:[#allocation8 + $0x20] sm:$0xff]
        %v994 = vld [vmem:[#allocation8 + $0x28] sm:$0xff]
        %v995 = vld [vmem:[#allocation8 + $0x30] sm:$0xff]
        %v996 = vld [vmem:[#allocation8 + $0x38] sm:$0xff]
        %v997 = vld [vmem:[#allocation8 + $0x40] sm:$0xff]
        %v998 = vld [vmem:[#allocation8 + $0x48] sm:$0xff]
        %v999 = vld [vmem:[#allocation8 + $0x50] sm:$0xff]
        %v1000 = vld [vmem:[#allocation8 + $0x58] sm:$0xff]
        %v1001 = vld [vmem:[#allocation8 + $0x60] sm:$0xff]
        %v1002 = vld [vmem:[#allocation8 + $0x68] sm:$0xff]
        %v1003 = vld [vmem:[#allocation8 + $0x70] sm:$0xff]
        %v1004 = vld [vmem:[#allocation8 + $0x78] sm:$0xff]
        %v1005 = vld [vmem:[#allocation8 + $0x80] sm:$0xff]
        %v1006 = vld [vmem:[#allocation8 + $0x88] sm:$0xff]
        %v1007 = vld [vmem:[#allocation8 + $0x90] sm:$0xff]
        %v1008 = vld [vmem:[#allocation8 + $0x98] sm:$0xff]
        %v1009 = vld [vmem:[#allocation8 + $0xa0] sm:$0xff]
        %v1010 = vld [vmem:[#allocation8 + $0xa8] sm:$0xff]
        %v1011 = vld [vmem:[#allocation8 + $0xb0] sm:$0xff]
        %v1012 = vld [vmem:[#allocation8 + $0xb8] sm:$0xff]
        %v1013 = vld [vmem:[#allocation8 + $0xc0] sm:$0xff]
        %v1014 = vld [vmem:[#allocation8 + $0xc8] sm:$0xff]
        %v1015 = vld [vmem:[#allocation8 + $0xd0] sm:$0xff]
        %v1016 = vld [vmem:[#allocation8 + $0xd8] sm:$0xff]
        %v1017 = vld [vmem:[#allocation8 + $0xe0] sm:$0xff]
        %v1018 = vld [vmem:[#allocation8 + $0xe8] sm:$0xff]
        %v1019 = vld [vmem:[#allocation8 + $0xf0] sm:$0xff]
        %v1020 = vld [vmem:[#allocation8 + $0xf8] sm:$0xff]
        %v1021 = vld [vmem:[#allocation8 + $0x100] sm:$0xff]
        %v1022 = vld [vmem:[#allocation8 + $0x108] sm:$0xff]
        %v1023 = vld [vmem:[#allocation8 + $0x110] sm:$0xff]
        %v1024 = vld [vmem:[#allocation8 + $0x118] sm:$0xff]
        %v1025 = vld [vmem:[#allocation8 + $0x120] sm:$0xff]
        %v1026 = vld [vmem:[#allocation8 + $0x128] sm:$0xff]
        %v1027 = vld [vmem:[#allocation8 + $0x130] sm:$0xff]
        %v1028 = vld [vmem:[#allocation8 + $0x138] sm:$0xff]
        %v1029 = vld [vmem:[#allocation8 + $0x140] sm:$0xff]
        %v1030 = vld [vmem:[#allocation8 + $0x148] sm:$0xff]
        %v1031 = vld [vmem:[#allocation8 + $0x150] sm:$0xff]
        %v1032 = vld [vmem:[#allocation8 + $0x158] sm:$0xff]
        %v1033 = vld [vmem:[#allocation8 + $0x160] sm:$0xff]
        %v1034 = vld [vmem:[#allocation8 + $0x168] sm:$0xff]
        %v1035 = vld [vmem:[#allocation8 + $0x170] sm:$0xff]
        %v1036 = vld [vmem:[#allocation8 + $0x178] sm:$0xff]
        %1037 = vmatprep.subr.mxu0 0.0
        %1038 = vmatpush1.msra.mxu0 %v989
        %1039 = vmatprep.subr.mxu0 0.0
        %1040 = vmatpush1.msra.mxu0 %v990
        %1041 = vmatprep.subr.mxu0 0.0
        %1042 = vmatpush1.msra.mxu0 %v991
        %1043 = vmatprep.subr.mxu0 0.0
        %1044 = vmatpush1.msra.mxu0 %v992
        %1045 = vmatprep.subr.mxu0 0.0
        %1046 = vmatpush1.msra.mxu0 %v993
        %1047 = vmatprep.subr.mxu0 0.0
        %1048 = vmatpush1.msra.mxu0 %v994
        %1049 = vmatprep.subr.mxu0 0.0
        %1050 = vmatpush1.msra.mxu0 %v995
        %1051 = vmatprep.subr.mxu0 0.0
        %1052 = vmatpush1.msra.mxu0 %v996
        %1053 = vmatprep.subr.mxu0 0.0
        %1054 = vmatpush1.msra.mxu0 %v997
        %1055 = vmatprep.subr.mxu0 0.0
        %1056 = vmatpush1.msra.mxu0 %v998
        %1057 = vmatprep.subr.mxu0 0.0
        %1058 = vmatpush1.msra.mxu0 %v999
        %1059 = vmatprep.subr.mxu0 0.0
        %1060 = vmatpush1.msra.mxu0 %v1000
        %1061 = vmatprep.subr.mxu0 0.0
        %1062 = vmatpush1.msra.mxu0 %v1001
        %1063 = vmatprep.subr.mxu0 0.0
        %1064 = vmatpush1.msra.mxu0 %v1002
        %1065 = vmatprep.subr.mxu0 0.0
        %1066 = vmatpush1.msra.mxu0 %v1003
        %1067 = vmatprep.subr.mxu0 0.0
        %1068 = vmatpush1.msra.mxu0 %v1004
        %1069 = vmatprep.subr.mxu0 0.0
        %1070 = vmatpush1.msra.mxu0 %v1005
        %1071 = vmatprep.subr.mxu0 0.0
        %1072 = vmatpush1.msra.mxu0 %v1006
        %1073 = vmatprep.subr.mxu0 0.0
        %1074 = vmatpush1.msra.mxu0 %v1007
        %1075 = vmatprep.subr.mxu0 0.0
        %1076 = vmatpush1.msra.mxu0 %v1008
        %1077 = vmatprep.subr.mxu0 0.0
        %1078 = vmatpush1.msra.mxu0 %v1009
        %1079 = vmatprep.subr.mxu0 0.0
        %1080 = vmatpush1.msra.mxu0 %v1010
        %1081 = vmatprep.subr.mxu0 0.0
        %1082 = vmatpush1.msra.mxu0 %v1011
        %1083 = vmatprep.subr.mxu0 0.0
        %1084 = vmatpush1.msra.mxu0 %v1012
        %1085 = vmatprep.subr.mxu0 0.0
        %1086 = vmatpush1.msra.mxu0 %v1013
        %1087 = vmatprep.subr.mxu0 0.0
        %1088 = vmatpush1.msra.mxu0 %v1014
        %1089 = vmatprep.subr.mxu0 0.0
        %1090 = vmatpush1.msra.mxu0 %v1015
        %1091 = vmatprep.subr.mxu0 0.0
        %1092 = vmatpush1.msra.mxu0 %v1016
        %1093 = vmatprep.subr.mxu0 0.0
        %1094 = vmatpush1.msra.mxu0 %v1017
        %1095 = vmatprep.subr.mxu0 0.0
        %1096 = vmatpush1.msra.mxu0 %v1018
        %1097 = vmatprep.subr.mxu0 0.0
        %1098 = vmatpush1.msra.mxu0 %v1019
        %1099 = vmatprep.subr.mxu0 0.0
        %1100 = vmatpush1.msra.mxu0 %v1020
        %1101 = vmatprep.mubr.f32.mxu0 %v894
        %1102 = vmatmul.mubr.f32.gmra.mrb[0].mxu0 %v893
        %v1103 = vpop.f32.mrb[0].mxu0
        %v1104 = vadd.f32 0.0, %v1103
        %v1105 = vpop.f32.mrb[0].mxu0
        %1106 = vmatprep.mubr.f32.mxu0 %v897
        %1107 = vmatmul.mubr.f32.gmra.mrb[0].mxu0 %v896
        %v1108 = vpop.f32.mrb[0].mxu0
        %v1109 = vadd.f32 0.0, %v1108
        %v1110 = vpop.f32.mrb[0].mxu0
        %1111 = vmatprep.mubr.f32.mxu0 %v900
        %1112 = vmatmul.mubr.f32.gmra.mrb[0].mxu0 %v899
        %v1113 = vpop.f32.mrb[0].mxu0
        %v1114 = vadd.f32 0.0, %v1113
        %v1115 = vpop.f32.mrb[0].mxu0
        %1116 = vmatprep.mubr.f32.mxu0 %v903
        %1117 = vmatmul.mubr.f32.gmra.mrb[0].mxu0 %v902
        %v1118 = vpop.f32.mrb[0].mxu0
        %v1119 = vadd.f32 0.0, %v1118
        %v1120 = vpop.f32.mrb[0].mxu0
        %1121 = vmatprep.mubr.f32.mxu0 %v906
        %1122 = vmatmul.mubr.f32.gmra.mrb[0].mxu0 %v905
        %v1123 = vpop.f32.mrb[0].mxu0
        %v1124 = vadd.f32 0.0, %v1123
        %v1125 = vpop.f32.mrb[0].mxu0
        %1126 = vmatprep.mubr.f32.mxu0 %v909
        %1127 = vmatmul.mubr.f32.gmra.mrb[0].mxu0 %v908
        %v1128 = vpop.f32.mrb[0].mxu0
        %v1129 = vadd.f32 0.0, %v1128
        %v1130 = vpop.f32.mrb[0].mxu0
        %1131 = vmatprep.mubr.f32.mxu0 %v912
        %1132 = vmatmul.mubr.f32.gmra.mrb[0].mxu0 %v911
        %v1133 = vpop.f32.mrb[0].mxu0
        %v1134 = vadd.f32 0.0, %v1133
        %v1135 = vpop.f32.mrb[0].mxu0
        %1136 = vmatprep.mubr.f32.mxu0 %v915
        %1137 = vmatmul.mubr.f32.gmra.mrb[0].mxu0 %v914
        %v1138 = vpop.f32.mrb[0].mxu0
        %v1139 = vadd.f32 0.0, %v1138
        %v1140 = vpop.f32.mrb[0].mxu0
        %1141 = vmatprep.mubr.f32.mxu0 %v918
        %1142 = vmatmul.mubr.f32.gmra.mrb[0].mxu0 %v917
        %v1143 = vpop.f32.mrb[0].mxu0
        %v1144 = vadd.f32 0.0, %v1143
        %v1145 = vpop.f32.mrb[0].mxu0
        %1146 = vmatprep.mubr.f32.mxu0 %v921
        %1147 = vmatmul.mubr.f32.gmra.mrb[0].mxu0 %v920
        %v1148 = vpop.f32.mrb[0].mxu0
        %v1149 = vadd.f32 0.0, %v1148
        %v1150 = vpop.f32.mrb[0].mxu0
        %1151 = vmatprep.mubr.f32.mxu0 %v924
        %1152 = vmatmul.mubr.f32.gmra.mrb[0].mxu0 %v923
        %v1153 = vpop.f32.mrb[0].mxu0
        %v1154 = vadd.f32 0.0, %v1153
        %v1155 = vpop.f32.mrb[0].mxu0
        %1156 = vmatprep.mubr.f32.mxu0 %v927
        %1157 = vmatmul.mubr.f32.gmra.mrb[0].mxu0 %v926
        %v1158 = vpop.f32.mrb[0].mxu0
        %v1159 = vadd.f32 0.0, %v1158
        %v1160 = vpop.f32.mrb[0].mxu0
        %1161 = vmatprep.mubr.f32.mxu0 %v930
        %1162 = vmatmul.mubr.f32.gmra.mrb[0].mxu0 %v929
        %v1163 = vpop.f32.mrb[0].mxu0
        %v1164 = vadd.f32 0.0, %v1163
        %v1165 = vpop.f32.mrb[0].mxu0
        %1166 = vmatprep.mubr.f32.mxu0 %v933
        %1167 = vmatmul.mubr.f32.gmra.mrb[0].mxu0 %v932
        %v1168 = vpop.f32.mrb[0].mxu0
        %v1169 = vadd.f32 0.0, %v1168
        %v1170 = vpop.f32.mrb[0].mxu0
        %1171 = vmatprep.mubr.f32.mxu0 %v936
        %1172 = vmatmul.mubr.f32.gmra.mrb[0].mxu0 %v935
        %v1173 = vpop.f32.mrb[0].mxu0
        %v1174 = vadd.f32 0.0, %v1173
        %v1175 = vpop.f32.mrb[0].mxu0
        %1176 = vmatprep.mubr.f32.mxu0 %v939
        %1177 = vmatmul.mubr.f32.gmra.mrb[0].mxu0 %v938
        %v1178 = vpop.f32.mrb[0].mxu0
        %v1179 = vadd.f32 0.0, %v1178
        %v1180 = vpop.f32.mrb[0].mxu0
        %1181 = vmatprep.mubr.f32.mxu0 %v942
        %1182 = vmatmul.mubr.f32.gmra.mrb[0].mxu0 %v941
        %v1183 = vpop.f32.mrb[0].mxu0
        %v1184 = vadd.f32 0.0, %v1183
        %v1185 = vpop.f32.mrb[0].mxu0
        %1186 = vmatprep.mubr.f32.mxu0 %v945
        %1187 = vmatmul.mubr.f32.gmra.mrb[0].mxu0 %v944
        %v1188 = vpop.f32.mrb[0].mxu0
        %v1189 = vadd.f32 0.0, %v1188
        %v1190 = vpop.f32.mrb[0].mxu0
        %1191 = vmatprep.mubr.f32.mxu0 %v948
        %1192 = vmatmul.mubr.f32.gmra.mrb[0].mxu0 %v947
        %v1193 = vpop.f32.mrb[0].mxu0
        %v1194 = vadd.f32 0.0, %v1193
        %v1195 = vpop.f32.mrb[0].mxu0
        %1196 = vmatprep.mubr.f32.mxu0 %v951
        %1197 = vmatmul.mubr.f32.gmra.mrb[0].mxu0 %v950
        %v1198 = vpop.f32.mrb[0].mxu0
        %v1199 = vadd.f32 0.0, %v1198
        %v1200 = vpop.f32.mrb[0].mxu0
        %1201 = vmatprep.mubr.f32.mxu0 %v954
        %1202 = vmatmul.mubr.f32.gmra.mrb[0].mxu0 %v953
        %v1203 = vpop.f32.mrb[0].mxu0
        %v1204 = vadd.f32 0.0, %v1203
        %v1205 = vpop.f32.mrb[0].mxu0
        %1206 = vmatprep.mubr.f32.mxu0 %v957
        %1207 = vmatmul.mubr.f32.gmra.mrb[0].mxu0 %v956
        %v1208 = vpop.f32.mrb[0].mxu0
        %v1209 = vadd.f32 0.0, %v1208
        %v1210 = vpop.f32.mrb[0].mxu0
        %1211 = vmatprep.mubr.f32.mxu0 %v960
        %1212 = vmatmul.mubr.f32.gmra.mrb[0].mxu0 %v959
        %v1213 = vpop.f32.mrb[0].mxu0
        %v1214 = vadd.f32 0.0, %v1213
        %v1215 = vpop.f32.mrb[0].mxu0
        %1216 = vmatprep.mubr.f32.mxu0 %v963
        %1217 = vmatmul.mubr.f32.gmra.mrb[0].mxu0 %v962
        %v1218 = vpop.f32.mrb[0].mxu0
        %v1219 = vadd.f32 0.0, %v1218
        %v1220 = vpop.f32.mrb[0].mxu0
        %1221 = vmatprep.mubr.f32.mxu0 %v966
        %1222 = vmatmul.mubr.f32.gmra.mrb[0].mxu0 %v965
        %v1223 = vpop.f32.mrb[0].mxu0
        %v1224 = vadd.f32 0.0, %v1223
        %v1225 = vpop.f32.mrb[0].mxu0
        %1226 = vmatprep.mubr.f32.mxu0 %v969
        %1227 = vmatmul.mubr.f32.gmra.mrb[0].mxu0 %v968
        %v1228 = vpop.f32.mrb[0].mxu0
        %v1229 = vadd.f32 0.0, %v1228
        %v1230 = vpop.f32.mrb[0].mxu0
        %1231 = vmatprep.mubr.f32.mxu0 %v972
        %1232 = vmatmul.mubr.f32.gmra.mrb[0].mxu0 %v971
        %v1233 = vpop.f32.mrb[0].mxu0
        %v1234 = vadd.f32 0.0, %v1233
        %v1235 = vpop.f32.mrb[0].mxu0
        %1236 = vmatprep.mubr.f32.mxu0 %v975
        %1237 = vmatmul.mubr.f32.gmra.mrb[0].mxu0 %v974
        %v1238 = vpop.f32.mrb[0].mxu0
        %v1239 = vadd.f32 0.0, %v1238
        %v1240 = vpop.f32.mrb[0].mxu0
        %1241 = vmatprep.mubr.f32.mxu0 %v978
        %1242 = vmatmul.mubr.f32.gmra.mrb[0].mxu0 %v977
        %v1243 = vpop.f32.mrb[0].mxu0
        %v1244 = vadd.f32 0.0, %v1243
        %v1245 = vpop.f32.mrb[0].mxu0
        %1246 = vmatprep.mubr.f32.mxu0 %v981
        %1247 = vmatmul.mubr.f32.gmra.mrb[0].mxu0 %v980
        %v1248 = vpop.f32.mrb[0].mxu0
        %v1249 = vadd.f32 0.0, %v1248
        %v1250 = vpop.f32.mrb[0].mxu0
        %1251 = vmatprep.mubr.f32.mxu0 %v984
        %1252 = vmatmul.mubr.f32.gmra.mrb[0].mxu0 %v983
        %v1253 = vpop.f32.mrb[0].mxu0
        %v1254 = vadd.f32 0.0, %v1253
        %v1255 = vpop.f32.mrb[0].mxu0
        %1256 = vmatprep.mubr.f32.mxu0 %v987
        %1257 = vmatmul.mubr.f32.gmra.mrb[0].mxu0 %v986
        %v1258 = vpop.f32.mrb[0].mxu0
        %v1259 = vadd.f32 0.0, %v1258
        %v1260 = vpop.f32.mrb[0].mxu0
        %1261 = vdwg.mxu0
        %1262 = vmatprep.subr.mxu0 0.0
        %1263 = vmatpush1.msra.mxu0 %v1021
        %1264 = vmatprep.subr.mxu0 0.0
        %1265 = vmatpush1.msra.mxu0 %v1022
        %1266 = vmatprep.subr.mxu0 0.0
        %1267 = vmatpush1.msra.mxu0 %v1023
        %1268 = vmatprep.subr.mxu0 0.0
        %1269 = vmatpush1.msra.mxu0 %v1024
        %1270 = vmatprep.subr.mxu0 0.0
        %1271 = vmatpush1.msra.mxu0 %v1025
        %1272 = vmatprep.subr.mxu0 0.0
        %1273 = vmatpush1.msra.mxu0 %v1026
        %1274 = vmatprep.subr.mxu0 0.0
        %1275 = vmatpush1.msra.mxu0 %v1027
        %1276 = vmatprep.subr.mxu0 0.0
        %1277 = vmatpush1.msra.mxu0 %v1028
        %1278 = vmatprep.subr.mxu0 0.0
        %1279 = vmatpush1.msra.mxu0 %v1029
        %1280 = vmatprep.subr.mxu0 0.0
        %1281 = vmatpush1.msra.mxu0 %v1030
        %1282 = vmatprep.subr.mxu0 0.0
        %1283 = vmatpush1.msra.mxu0 %v1031
        %1284 = vmatprep.subr.mxu0 0.0
        %1285 = vmatpush1.msra.mxu0 %v1032
        %1286 = vmatprep.subr.mxu0 0.0
        %1287 = vmatpush1.msra.mxu0 %v1033
        %1288 = vmatprep.subr.mxu0 0.0
        %1289 = vmatpush1.msra.mxu0 %v1034
        %1290 = vmatprep.subr.mxu0 0.0
        %1291 = vmatpush1.msra.mxu0 %v1035
        %1292 = vmatprep.subr.mxu0 0.0
        %1293 = vmatpush1.msra.mxu0 %v1036
        %1294 = vmatprep.subr.mxu0 0.0
        %1295 = vmatpush1.msra.mxu0 0.0
        %1296 = vmatprep.subr.mxu0 0.0
        %1297 = vmatpush1.msra.mxu0 0.0
        %1298 = vmatprep.subr.mxu0 0.0
        %1299 = vmatpush1.msra.mxu0 0.0
        %1300 = vmatprep.subr.mxu0 0.0
        %1301 = vmatpush1.msra.mxu0 0.0
        %1302 = vmatprep.subr.mxu0 0.0
        %1303 = vmatpush1.msra.mxu0 0.0
        %1304 = vmatprep.subr.mxu0 0.0
        %1305 = vmatpush1.msra.mxu0 0.0
        %1306 = vmatprep.subr.mxu0 0.0
        %1307 = vmatpush1.msra.mxu0 0.0
        %1308 = vmatprep.subr.mxu0 0.0
        %1309 = vmatpush1.msra.mxu0 0.0
        %1310 = vmatprep.subr.mxu0 0.0
        %1311 = vmatpush1.msra.mxu0 0.0
        %1312 = vmatprep.subr.mxu0 0.0
        %1313 = vmatpush1.msra.mxu0 0.0
        %1314 = vmatprep.subr.mxu0 0.0
        %1315 = vmatpush1.msra.mxu0 0.0
        %1316 = vmatprep.subr.mxu0 0.0
        %1317 = vmatpush1.msra.mxu0 0.0
        %1318 = vmatprep.subr.mxu0 0.0
        %1319 = vmatpush1.msra.mxu0 0.0
        %1320 = vmatprep.subr.mxu0 0.0
        %1321 = vmatpush1.msra.mxu0 0.0
        %1322 = vmatprep.subr.mxu0 0.0
        %1323 = vmatpush1.msra.mxu0 0.0
        %1324 = vmatprep.subr.mxu0 0.0
        %1325 = vmatpush1.msra.mxu0 0.0
        %1326 = vmatprep.mubr.f32.mxu0 0.0
        %1327 = vmatmul.mubr.f32.gmra.mrb[0].mxu0 %v895
        %v1328 = vpop.f32.mrb[0].mxu0
        %v1329 = vadd.f32 %v1104, %v1328
        %v1330 = vpop.f32.mrb[0].mxu0
        %1331 = vmatprep.mubr.f32.mxu0 0.0
        %1332 = vmatmul.mubr.f32.gmra.mrb[0].mxu0 %v898
        %v1333 = vpop.f32.mrb[0].mxu0
        %v1334 = vadd.f32 %v1109, %v1333
        %v1335 = vpop.f32.mrb[0].mxu0
        %1336 = vmatprep.mubr.f32.mxu0 0.0
        %1337 = vmatmul.mubr.f32.gmra.mrb[0].mxu0 %v901
        %v1338 = vpop.f32.mrb[0].mxu0
        %v1339 = vadd.f32 %v1114, %v1338
        %v1340 = vpop.f32.mrb[0].mxu0
        %1341 = vmatprep.mubr.f32.mxu0 0.0
        %1342 = vmatmul.mubr.f32.gmra.mrb[0].mxu0 %v904
        %v1343 = vpop.f32.mrb[0].mxu0
        %v1344 = vadd.f32 %v1119, %v1343
        %v1345 = vpop.f32.mrb[0].mxu0
        %1346 = vmatprep.mubr.f32.mxu0 0.0
        %1347 = vmatmul.mubr.f32.gmra.mrb[0].mxu0 %v907
        %v1348 = vpop.f32.mrb[0].mxu0
        %v1349 = vadd.f32 %v1124, %v1348
        %v1350 = vpop.f32.mrb[0].mxu0
        %1351 = vmatprep.mubr.f32.mxu0 0.0
        %1352 = vmatmul.mubr.f32.gmra.mrb[0].mxu0 %v910
        %v1353 = vpop.f32.mrb[0].mxu0
        %v1354 = vadd.f32 %v1129, %v1353
        %v1355 = vpop.f32.mrb[0].mxu0
        %1356 = vmatprep.mubr.f32.mxu0 0.0
        %1357 = vmatmul.mubr.f32.gmra.mrb[0].mxu0 %v913
        %v1358 = vpop.f32.mrb[0].mxu0
        %v1359 = vadd.f32 %v1134, %v1358
        %v1360 = vpop.f32.mrb[0].mxu0
        %1361 = vmatprep.mubr.f32.mxu0 0.0
        %1362 = vmatmul.mubr.f32.gmra.mrb[0].mxu0 %v916
        %v1363 = vpop.f32.mrb[0].mxu0
        %v1364 = vadd.f32 %v1139, %v1363
        %v1365 = vpop.f32.mrb[0].mxu0
        %1366 = vmatprep.mubr.f32.mxu0 0.0
        %1367 = vmatmul.mubr.f32.gmra.mrb[0].mxu0 %v919
        %v1368 = vpop.f32.mrb[0].mxu0
        %v1369 = vadd.f32 %v1144, %v1368
        %v1370 = vpop.f32.mrb[0].mxu0
        %1371 = vmatprep.mubr.f32.mxu0 0.0
        %1372 = vmatmul.mubr.f32.gmra.mrb[0].mxu0 %v922
        %v1373 = vpop.f32.mrb[0].mxu0
        %v1374 = vadd.f32 %v1149, %v1373
        %v1375 = vpop.f32.mrb[0].mxu0
        %1376 = vmatprep.mubr.f32.mxu0 0.0
        %1377 = vmatmul.mubr.f32.gmra.mrb[0].mxu0 %v925
        %v1378 = vpop.f32.mrb[0].mxu0
        %v1379 = vadd.f32 %v1154, %v1378
        %v1380 = vpop.f32.mrb[0].mxu0
        %1381 = vmatprep.mubr.f32.mxu0 0.0
        %1382 = vmatmul.mubr.f32.gmra.mrb[0].mxu0 %v928
        %v1383 = vpop.f32.mrb[0].mxu0
        %v1384 = vadd.f32 %v1159, %v1383
        %v1385 = vpop.f32.mrb[0].mxu0
        %1386 = vmatprep.mubr.f32.mxu0 0.0
        %1387 = vmatmul.mubr.f32.gmra.mrb[0].mxu0 %v931
        %v1388 = vpop.f32.mrb[0].mxu0
        %v1389 = vadd.f32 %v1164, %v1388
        %v1390 = vpop.f32.mrb[0].mxu0
        %1391 = vmatprep.mubr.f32.mxu0 0.0
        %1392 = vmatmul.mubr.f32.gmra.mrb[0].mxu0 %v934
        %v1393 = vpop.f32.mrb[0].mxu0
        %v1394 = vadd.f32 %v1169, %v1393
        %v1395 = vpop.f32.mrb[0].mxu0
        %1396 = vmatprep.mubr.f32.mxu0 0.0
        %1397 = vmatmul.mubr.f32.gmra.mrb[0].mxu0 %v937
        %v1398 = vpop.f32.mrb[0].mxu0
        %v1399 = vadd.f32 %v1174, %v1398
        %v1400 = vpop.f32.mrb[0].mxu0
        %1401 = vmatprep.mubr.f32.mxu0 0.0
        %1402 = vmatmul.mubr.f32.gmra.mrb[0].mxu0 %v940
        %v1403 = vpop.f32.mrb[0].mxu0
        %v1404 = vadd.f32 %v1179, %v1403
        %v1405 = vpop.f32.mrb[0].mxu0
        %1406 = vmatprep.mubr.f32.mxu0 0.0
        %1407 = vmatmul.mubr.f32.gmra.mrb[0].mxu0 %v943
        %v1408 = vpop.f32.mrb[0].mxu0
        %v1409 = vadd.f32 %v1184, %v1408
        %v1410 = vpop.f32.mrb[0].mxu0
        %1411 = vmatprep.mubr.f32.mxu0 0.0
        %1412 = vmatmul.mubr.f32.gmra.mrb[0].mxu0 %v946
        %v1413 = vpop.f32.mrb[0].mxu0
        %v1414 = vadd.f32 %v1189, %v1413
        %v1415 = vpop.f32.mrb[0].mxu0
        %1416 = vmatprep.mubr.f32.mxu0 0.0
        %1417 = vmatmul.mubr.f32.gmra.mrb[0].mxu0 %v949
        %v1418 = vpop.f32.mrb[0].mxu0
        %v1419 = vadd.f32 %v1194, %v1418
        %v1420 = vpop.f32.mrb[0].mxu0
        %1421 = vmatprep.mubr.f32.mxu0 0.0
        %1422 = vmatmul.mubr.f32.gmra.mrb[0].mxu0 %v952
        %v1423 = vpop.f32.mrb[0].mxu0
        %v1424 = vadd.f32 %v1199, %v1423
        %v1425 = vpop.f32.mrb[0].mxu0
        %1426 = vmatprep.mubr.f32.mxu0 0.0
        %1427 = vmatmul.mubr.f32.gmra.mrb[0].mxu0 %v955
        %v1428 = vpop.f32.mrb[0].mxu0
        %v1429 = vadd.f32 %v1204, %v1428
        %v1430 = vpop.f32.mrb[0].mxu0
        %1431 = vmatprep.mubr.f32.mxu0 0.0
        %1432 = vmatmul.mubr.f32.gmra.mrb[0].mxu0 %v958
        %v1433 = vpop.f32.mrb[0].mxu0
        %v1434 = vadd.f32 %v1209, %v1433
        %v1435 = vpop.f32.mrb[0].mxu0
        %1436 = vmatprep.mubr.f32.mxu0 0.0
        %1437 = vmatmul.mubr.f32.gmra.mrb[0].mxu0 %v961
        %v1438 = vpop.f32.mrb[0].mxu0
        %v1439 = vadd.f32 %v1214, %v1438
        %v1440 = vpop.f32.mrb[0].mxu0
        %1441 = vmatprep.mubr.f32.mxu0 0.0
        %1442 = vmatmul.mubr.f32.gmra.mrb[0].mxu0 %v964
        %v1443 = vpop.f32.mrb[0].mxu0
        %v1444 = vadd.f32 %v1219, %v1443
        %v1445 = vpop.f32.mrb[0].mxu0
        %1446 = vmatprep.mubr.f32.mxu0 0.0
        %1447 = vmatmul.mubr.f32.gmra.mrb[0].mxu0 %v967
        %v1448 = vpop.f32.mrb[0].mxu0
        %v1449 = vadd.f32 %v1224, %v1448
        %v1450 = vpop.f32.mrb[0].mxu0
        %1451 = vmatprep.mubr.f32.mxu0 0.0
        %1452 = vmatmul.mubr.f32.gmra.mrb[0].mxu0 %v970
        %v1453 = vpop.f32.mrb[0].mxu0
        %v1454 = vadd.f32 %v1229, %v1453
        %v1455 = vpop.f32.mrb[0].mxu0
        %1456 = vmatprep.mubr.f32.mxu0 0.0
        %1457 = vmatmul.mubr.f32.gmra.mrb[0].mxu0 %v973
        %v1458 = vpop.f32.mrb[0].mxu0
        %v1459 = vadd.f32 %v1234, %v1458
        %v1460 = vpop.f32.mrb[0].mxu0
        %1461 = vmatprep.mubr.f32.mxu0 0.0
        %1462 = vmatmul.mubr.f32.gmra.mrb[0].mxu0 %v976
        %v1463 = vpop.f32.mrb[0].mxu0
        %v1464 = vadd.f32 %v1239, %v1463
        %v1465 = vpop.f32.mrb[0].mxu0
        %1466 = vmatprep.mubr.f32.mxu0 0.0
        %1467 = vmatmul.mubr.f32.gmra.mrb[0].mxu0 %v979
        %v1468 = vpop.f32.mrb[0].mxu0
        %v1469 = vadd.f32 %v1244, %v1468
        %v1470 = vpop.f32.mrb[0].mxu0
        %1471 = vmatprep.mubr.f32.mxu0 0.0
        %1472 = vmatmul.mubr.f32.gmra.mrb[0].mxu0 %v982
        %v1473 = vpop.f32.mrb[0].mxu0
        %v1474 = vadd.f32 %v1249, %v1473
        %v1475 = vpop.f32.mrb[0].mxu0
        %1476 = vmatprep.mubr.f32.mxu0 0.0
        %1477 = vmatmul.mubr.f32.gmra.mrb[0].mxu0 %v985
        %v1478 = vpop.f32.mrb[0].mxu0
        %v1479 = vadd.f32 %v1254, %v1478
        %v1480 = vpop.f32.mrb[0].mxu0
        %1481 = vmatprep.mubr.f32.mxu0 0.0
        %1482 = vmatmul.mubr.f32.gmra.mrb[0].mxu0 %v988
        %v1483 = vpop.f32.mrb[0].mxu0
        %v1484 = vadd.f32 %v1259, %v1483
        %v1485 = vpop.f32.mrb[0].mxu0
        %1486 = vdwg.mxu0
        %v1488 = vlaneseq
        %v1489 = vshrl.u32 %v1488, 7
        %v1490 = vsub.s32 0, %v1489
        %v1491 = vrot.slane %v601, %v1490
        %v1493 = vadd.f32 %v1491, %v1329
        %v1494 = vadd.f32 %v1491, %v1334
        %v1495 = vadd.f32 %v1491, %v1339
        %v1496 = vadd.f32 %v1491, %v1344
        %v1497 = vadd.f32 %v1491, %v1349
        %v1498 = vadd.f32 %v1491, %v1354
        %v1499 = vadd.f32 %v1491, %v1359
        %v1500 = vadd.f32 %v1491, %v1364
        %v1501 = vadd.f32 %v1491, %v1369
        %v1502 = vadd.f32 %v1491, %v1374
        %v1503 = vadd.f32 %v1491, %v1379
        %v1504 = vadd.f32 %v1491, %v1384
        %v1505 = vadd.f32 %v1491, %v1389
        %v1506 = vadd.f32 %v1491, %v1394
        %v1507 = vadd.f32 %v1491, %v1399
        %v1508 = vadd.f32 %v1491, %v1404
        %v1509 = vadd.f32 %v1491, %v1409
        %v1510 = vadd.f32 %v1491, %v1414
        %v1511 = vadd.f32 %v1491, %v1419
        %v1512 = vadd.f32 %v1491, %v1424
        %v1513 = vadd.f32 %v1491, %v1429
        %v1514 = vadd.f32 %v1491, %v1434
        %v1515 = vadd.f32 %v1491, %v1439
        %v1516 = vadd.f32 %v1491, %v1444
        %v1517 = vadd.f32 %v1491, %v1449
        %v1518 = vadd.f32 %v1491, %v1454
        %v1519 = vadd.f32 %v1491, %v1459
        %v1520 = vadd.f32 %v1491, %v1464
        %v1521 = vadd.f32 %v1491, %v1469
        %v1522 = vadd.f32 %v1491, %v1474
        %v1523 = vadd.f32 %v1491, %v1479
        %v1524 = vadd.f32 %v1491, %v1484
        %v1525 = vld [vmem:[%s796] sm:$0xff]
        %v1526 = vld [vmem:[%s796 + $0x8] sm:$0xff]
        %v1527 = vld [vmem:[%s796 + $0x10] sm:$0xff]
        %v1528 = vld [vmem:[%s796 + $0x18] sm:$0xff]
        %v1529 = vld [vmem:[%s796 + $0x20] sm:$0xff]
        %v1530 = vld [vmem:[%s796 + $0x28] sm:$0xff]
        %v1531 = vld [vmem:[%s796 + $0x30] sm:$0xff]
        %v1532 = vld [vmem:[%s796 + $0x38] sm:$0xff]
        %v1533 = vld [vmem:[%s796 + $0x40] sm:$0xff]
        %v1534 = vld [vmem:[%s796 + $0x48] sm:$0xff]
        %v1535 = vld [vmem:[%s796 + $0x50] sm:$0xff]
        %v1536 = vld [vmem:[%s796 + $0x58] sm:$0xff]
        %v1537 = vld [vmem:[%s796 + $0x60] sm:$0xff]
        %v1538 = vld [vmem:[%s796 + $0x68] sm:$0xff]
        %v1539 = vld [vmem:[%s796 + $0x70] sm:$0xff]
        %v1540 = vld [vmem:[%s796 + $0x78] sm:$0xff]
        %v1541 = vld [vmem:[%s796 + $0x80] sm:$0xff]
        %v1542 = vld [vmem:[%s796 + $0x88] sm:$0xff]
        %v1543 = vld [vmem:[%s796 + $0x90] sm:$0xff]
        %v1544 = vld [vmem:[%s796 + $0x98] sm:$0xff]
        %v1545 = vld [vmem:[%s796 + $0xa0] sm:$0xff]
        %v1546 = vld [vmem:[%s796 + $0xa8] sm:$0xff]
        %v1547 = vld [vmem:[%s796 + $0xb0] sm:$0xff]
        %v1548 = vld [vmem:[%s796 + $0xb8] sm:$0xff]
        %v1549 = vld [vmem:[%s796 + $0xc0] sm:$0xff]
        %v1550 = vld [vmem:[%s796 + $0xc8] sm:$0xff]
        %v1551 = vld [vmem:[%s796 + $0xd0] sm:$0xff]
        %v1552 = vld [vmem:[%s796 + $0xd8] sm:$0xff]
        %v1553 = vld [vmem:[%s796 + $0xe0] sm:$0xff]
        %v1554 = vld [vmem:[%s796 + $0xe8] sm:$0xff]
        %v1555 = vld [vmem:[%s796 + $0xf0] sm:$0xff]
        %v1556 = vld [vmem:[%s796 + $0xf8] sm:$0xff]
        %v1557 = vld [vmem:[%s796 + $0x100] sm:$0xff]
        %v1558 = vld [vmem:[%s796 + $0x108] sm:$0xff]
        %v1559 = vld [vmem:[%s796 + $0x110] sm:$0xff]
        %v1560 = vld [vmem:[%s796 + $0x118] sm:$0xff]
        %v1561 = vld [vmem:[%s796 + $0x120] sm:$0xff]
        %v1562 = vld [vmem:[%s796 + $0x128] sm:$0xff]
        %v1563 = vld [vmem:[%s796 + $0x130] sm:$0xff]
        %v1564 = vld [vmem:[%s796 + $0x138] sm:$0xff]
        %v1565 = vld [vmem:[%s796 + $0x140] sm:$0xff]
        %v1566 = vld [vmem:[%s796 + $0x148] sm:$0xff]
        %v1567 = vld [vmem:[%s796 + $0x150] sm:$0xff]
        %v1568 = vld [vmem:[%s796 + $0x158] sm:$0xff]
        %v1569 = vld [vmem:[%s796 + $0x160] sm:$0xff]
        %v1570 = vld [vmem:[%s796 + $0x168] sm:$0xff]
        %v1571 = vld [vmem:[%s796 + $0x170] sm:$0xff]
        %v1572 = vld [vmem:[%s796 + $0x178] sm:$0xff]
        %v1573 = vld [vmem:[%s796 + $0x180] sm:$0xff]
        %v1574 = vld [vmem:[%s796 + $0x188] sm:$0xff]
        %v1575 = vld [vmem:[%s796 + $0x190] sm:$0xff]
        %v1576 = vld [vmem:[%s796 + $0x198] sm:$0xff]
        %v1577 = vld [vmem:[%s796 + $0x1a0] sm:$0xff]
        %v1578 = vld [vmem:[%s796 + $0x1a8] sm:$0xff]
        %v1579 = vld [vmem:[%s796 + $0x1b0] sm:$0xff]
        %v1580 = vld [vmem:[%s796 + $0x1b8] sm:$0xff]
        %v1581 = vld [vmem:[%s796 + $0x1c0] sm:$0xff]
        %v1582 = vld [vmem:[%s796 + $0x1c8] sm:$0xff]
        %v1583 = vld [vmem:[%s796 + $0x1d0] sm:$0xff]
        %v1584 = vld [vmem:[%s796 + $0x1d8] sm:$0xff]
        %v1585 = vld [vmem:[%s796 + $0x1e0] sm:$0xff]
        %v1586 = vld [vmem:[%s796 + $0x1e8] sm:$0xff]
        %v1587 = vld [vmem:[%s796 + $0x1f0] sm:$0xff]
        %v1588 = vld [vmem:[%s796 + $0x1f8] sm:$0xff]
        %v1589 = vld [vmem:[%s796 + $0x200] sm:$0xff]
        %v1590 = vld [vmem:[%s796 + $0x208] sm:$0xff]
        %v1591 = vld [vmem:[%s796 + $0x210] sm:$0xff]
        %v1592 = vld [vmem:[%s796 + $0x218] sm:$0xff]
        %v1593 = vld [vmem:[%s796 + $0x220] sm:$0xff]
        %v1594 = vld [vmem:[%s796 + $0x228] sm:$0xff]
        %v1595 = vld [vmem:[%s796 + $0x230] sm:$0xff]
        %v1596 = vld [vmem:[%s796 + $0x238] sm:$0xff]
        %v1597 = vld [vmem:[%s796 + $0x240] sm:$0xff]
        %v1598 = vld [vmem:[%s796 + $0x248] sm:$0xff]
        %v1599 = vld [vmem:[%s796 + $0x250] sm:$0xff]
        %v1600 = vld [vmem:[%s796 + $0x258] sm:$0xff]
        %v1601 = vld [vmem:[%s796 + $0x260] sm:$0xff]
        %v1602 = vld [vmem:[%s796 + $0x268] sm:$0xff]
        %v1603 = vld [vmem:[%s796 + $0x270] sm:$0xff]
        %v1604 = vld [vmem:[%s796 + $0x278] sm:$0xff]
        %v1605 = vld [vmem:[%s796 + $0x280] sm:$0xff]
        %v1606 = vld [vmem:[%s796 + $0x288] sm:$0xff]
        %v1607 = vld [vmem:[%s796 + $0x290] sm:$0xff]
        %v1608 = vld [vmem:[%s796 + $0x298] sm:$0xff]
        %v1609 = vld [vmem:[%s796 + $0x2a0] sm:$0xff]
        %v1610 = vld [vmem:[%s796 + $0x2a8] sm:$0xff]
        %v1611 = vld [vmem:[%s796 + $0x2b0] sm:$0xff]
        %v1612 = vld [vmem:[%s796 + $0x2b8] sm:$0xff]
        %v1613 = vld [vmem:[%s796 + $0x2c0] sm:$0xff]
        %v1614 = vld [vmem:[%s796 + $0x2c8] sm:$0xff]
        %v1615 = vld [vmem:[%s796 + $0x2d0] sm:$0xff]
        %v1616 = vld [vmem:[%s796 + $0x2d8] sm:$0xff]
        %v1617 = vld [vmem:[%s796 + $0x2e0] sm:$0xff]
        %v1618 = vld [vmem:[%s796 + $0x2e8] sm:$0xff]
        %v1619 = vld [vmem:[%s796 + $0x2f0] sm:$0xff]
        %v1620 = vld [vmem:[%s796 + $0x2f8] sm:$0xff]
        %s1621 = scalar_lea.vmem [#allocation8], 384
        %v1622 = vld [vmem:[%s1621] sm:$0xff]
        %v1623 = vld [vmem:[%s1621 + $0x8] sm:$0xff]
        %v1624 = vld [vmem:[%s1621 + $0x10] sm:$0xff]
        %v1625 = vld [vmem:[%s1621 + $0x18] sm:$0xff]
        %v1626 = vld [vmem:[%s1621 + $0x20] sm:$0xff]
        %v1627 = vld [vmem:[%s1621 + $0x28] sm:$0xff]
        %v1628 = vld [vmem:[%s1621 + $0x30] sm:$0xff]
        %v1629 = vld [vmem:[%s1621 + $0x38] sm:$0xff]
        %v1630 = vld [vmem:[%s1621 + $0x40] sm:$0xff]
        %v1631 = vld [vmem:[%s1621 + $0x48] sm:$0xff]
        %v1632 = vld [vmem:[%s1621 + $0x50] sm:$0xff]
        %v1633 = vld [vmem:[%s1621 + $0x58] sm:$0xff]
        %v1634 = vld [vmem:[%s1621 + $0x60] sm:$0xff]
        %v1635 = vld [vmem:[%s1621 + $0x68] sm:$0xff]
        %v1636 = vld [vmem:[%s1621 + $0x70] sm:$0xff]
        %v1637 = vld [vmem:[%s1621 + $0x78] sm:$0xff]
        %v1638 = vld [vmem:[%s1621 + $0x80] sm:$0xff]
        %v1639 = vld [vmem:[%s1621 + $0x88] sm:$0xff]
        %v1640 = vld [vmem:[%s1621 + $0x90] sm:$0xff]
        %v1641 = vld [vmem:[%s1621 + $0x98] sm:$0xff]
        %v1642 = vld [vmem:[%s1621 + $0xa0] sm:$0xff]
        %v1643 = vld [vmem:[%s1621 + $0xa8] sm:$0xff]
        %v1644 = vld [vmem:[%s1621 + $0xb0] sm:$0xff]
        %v1645 = vld [vmem:[%s1621 + $0xb8] sm:$0xff]
        %v1646 = vld [vmem:[%s1621 + $0xc0] sm:$0xff]
        %v1647 = vld [vmem:[%s1621 + $0xc8] sm:$0xff]
        %v1648 = vld [vmem:[%s1621 + $0xd0] sm:$0xff]
        %v1649 = vld [vmem:[%s1621 + $0xd8] sm:$0xff]
        %v1650 = vld [vmem:[%s1621 + $0xe0] sm:$0xff]
        %v1651 = vld [vmem:[%s1621 + $0xe8] sm:$0xff]
        %v1652 = vld [vmem:[%s1621 + $0xf0] sm:$0xff]
        %v1653 = vld [vmem:[%s1621 + $0xf8] sm:$0xff]
        %v1654 = vld [vmem:[%s1621 + $0x100] sm:$0xff]
        %v1655 = vld [vmem:[%s1621 + $0x108] sm:$0xff]
        %v1656 = vld [vmem:[%s1621 + $0x110] sm:$0xff]
        %v1657 = vld [vmem:[%s1621 + $0x118] sm:$0xff]
        %v1658 = vld [vmem:[%s1621 + $0x120] sm:$0xff]
        %v1659 = vld [vmem:[%s1621 + $0x128] sm:$0xff]
        %v1660 = vld [vmem:[%s1621 + $0x130] sm:$0xff]
        %v1661 = vld [vmem:[%s1621 + $0x138] sm:$0xff]
        %v1662 = vld [vmem:[%s1621 + $0x140] sm:$0xff]
        %v1663 = vld [vmem:[%s1621 + $0x148] sm:$0xff]
        %v1664 = vld [vmem:[%s1621 + $0x150] sm:$0xff]
        %v1665 = vld [vmem:[%s1621 + $0x158] sm:$0xff]
        %v1666 = vld [vmem:[%s1621 + $0x160] sm:$0xff]
        %v1667 = vld [vmem:[%s1621 + $0x168] sm:$0xff]
        %v1668 = vld [vmem:[%s1621 + $0x170] sm:$0xff]
        %v1669 = vld [vmem:[%s1621 + $0x178] sm:$0xff]
        %1670 = vmatprep.subr.mxu0 0.0
        %1671 = vmatpush1.msra.mxu0 %v1622
        %1672 = vmatprep.subr.mxu0 0.0
        %1673 = vmatpush1.msra.mxu0 %v1623
        %1674 = vmatprep.subr.mxu0 0.0
        %1675 = vmatpush1.msra.mxu0 %v1624
        %1676 = vmatprep.subr.mxu0 0.0
        %1677 = vmatpush1.msra.mxu0 %v1625
        %1678 = vmatprep.subr.mxu0 0.0
        %1679 = vmatpush1.msra.mxu0 %v1626
        %1680 = vmatprep.subr.mxu0 0.0
        %1681 = vmatpush1.msra.mxu0 %v1627
        %1682 = vmatprep.subr.mxu0 0.0
        %1683 = vmatpush1.msra.mxu0 %v1628
        %1684 = vmatprep.subr.mxu0 0.0
        %1685 = vmatpush1.msra.mxu0 %v1629
        %1686 = vmatprep.subr.mxu0 0.0
        %1687 = vmatpush1.msra.mxu0 %v1630
        %1688 = vmatprep.subr.mxu0 0.0
        %1689 = vmatpush1.msra.mxu0 %v1631
        %1690 = vmatprep.subr.mxu0 0.0
        %1691 = vmatpush1.msra.mxu0 %v1632
        %1692 = vmatprep.subr.mxu0 0.0
        %1693 = vmatpush1.msra.mxu0 %v1633
        %1694 = vmatprep.subr.mxu0 0.0
        %1695 = vmatpush1.msra.mxu0 %v1634
        %1696 = vmatprep.subr.mxu0 0.0
        %1697 = vmatpush1.msra.mxu0 %v1635
        %1698 = vmatprep.subr.mxu0 0.0
        %1699 = vmatpush1.msra.mxu0 %v1636
        %1700 = vmatprep.subr.mxu0 0.0
        %1701 = vmatpush1.msra.mxu0 %v1637
        %1702 = vmatprep.subr.mxu0 0.0
        %1703 = vmatpush1.msra.mxu0 %v1638
        %1704 = vmatprep.subr.mxu0 0.0
        %1705 = vmatpush1.msra.mxu0 %v1639
        %1706 = vmatprep.subr.mxu0 0.0
        %1707 = vmatpush1.msra.mxu0 %v1640
        %1708 = vmatprep.subr.mxu0 0.0
        %1709 = vmatpush1.msra.mxu0 %v1641
        %1710 = vmatprep.subr.mxu0 0.0
        %1711 = vmatpush1.msra.mxu0 %v1642
        %1712 = vmatprep.subr.mxu0 0.0
        %1713 = vmatpush1.msra.mxu0 %v1643
        %1714 = vmatprep.subr.mxu0 0.0
        %1715 = vmatpush1.msra.mxu0 %v1644
        %1716 = vmatprep.subr.mxu0 0.0
        %1717 = vmatpush1.msra.mxu0 %v1645
        %1718 = vmatprep.subr.mxu0 0.0
        %1719 = vmatpush1.msra.mxu0 %v1646
        %1720 = vmatprep.subr.mxu0 0.0
        %1721 = vmatpush1.msra.mxu0 %v1647
        %1722 = vmatprep.subr.mxu0 0.0
        %1723 = vmatpush1.msra.mxu0 %v1648
        %1724 = vmatprep.subr.mxu0 0.0
        %1725 = vmatpush1.msra.mxu0 %v1649
        %1726 = vmatprep.subr.mxu0 0.0
        %1727 = vmatpush1.msra.mxu0 %v1650
        %1728 = vmatprep.subr.mxu0 0.0
        %1729 = vmatpush1.msra.mxu0 %v1651
        %1730 = vmatprep.subr.mxu0 0.0
        %1731 = vmatpush1.msra.mxu0 %v1652
        %1732 = vmatprep.subr.mxu0 0.0
        %1733 = vmatpush1.msra.mxu0 %v1653
        %1734 = vmatprep.mubr.f32.mxu0 %v1526
        %1735 = vmatmul.mubr.f32.gmra.mrb[0].mxu0 %v1525
        %v1736 = vpop.f32.mrb[0].mxu0
        %v1737 = vadd.f32 0.0, %v1736
        %v1738 = vpop.f32.mrb[0].mxu0
        %1739 = vmatprep.mubr.f32.mxu0 %v1529
        %1740 = vmatmul.mubr.f32.gmra.mrb[0].mxu0 %v1528
        %v1741 = vpop.f32.mrb[0].mxu0
        %v1742 = vadd.f32 0.0, %v1741
        %v1743 = vpop.f32.mrb[0].mxu0
        %1744 = vmatprep.mubr.f32.mxu0 %v1532
        %1745 = vmatmul.mubr.f32.gmra.mrb[0].mxu0 %v1531
        %v1746 = vpop.f32.mrb[0].mxu0
        %v1747 = vadd.f32 0.0, %v1746
        %v1748 = vpop.f32.mrb[0].mxu0
        %1749 = vmatprep.mubr.f32.mxu0 %v1535
        %1750 = vmatmul.mubr.f32.gmra.mrb[0].mxu0 %v1534
        %v1751 = vpop.f32.mrb[0].mxu0
        %v1752 = vadd.f32 0.0, %v1751
        %v1753 = vpop.f32.mrb[0].mxu0
        %1754 = vmatprep.mubr.f32.mxu0 %v1538
        %1755 = vmatmul.mubr.f32.gmra.mrb[0].mxu0 %v1537
        %v1756 = vpop.f32.mrb[0].mxu0
        %v1757 = vadd.f32 0.0, %v1756
        %v1758 = vpop.f32.mrb[0].mxu0
        %1759 = vmatprep.mubr.f32.mxu0 %v1541
        %1760 = vmatmul.mubr.f32.gmra.mrb[0].mxu0 %v1540
        %v1761 = vpop.f32.mrb[0].mxu0
        %v1762 = vadd.f32 0.0, %v1761
        %v1763 = vpop.f32.mrb[0].mxu0
        %1764 = vmatprep.mubr.f32.mxu0 %v1544
        %1765 = vmatmul.mubr.f32.gmra.mrb[0].mxu0 %v1543
        %v1766 = vpop.f32.mrb[0].mxu0
        %v1767 = vadd.f32 0.0, %v1766
        %v1768 = vpop.f32.mrb[0].mxu0
        %1769 = vmatprep.mubr.f32.mxu0 %v1547
        %1770 = vmatmul.mubr.f32.gmra.mrb[0].mxu0 %v1546
        %v1771 = vpop.f32.mrb[0].mxu0
        %v1772 = vadd.f32 0.0, %v1771
        %v1773 = vpop.f32.mrb[0].mxu0
        %1774 = vmatprep.mubr.f32.mxu0 %v1550
        %1775 = vmatmul.mubr.f32.gmra.mrb[0].mxu0 %v1549
        %v1776 = vpop.f32.mrb[0].mxu0
        %v1777 = vadd.f32 0.0, %v1776
        %v1778 = vpop.f32.mrb[0].mxu0
        %1779 = vmatprep.mubr.f32.mxu0 %v1553
        %1780 = vmatmul.mubr.f32.gmra.mrb[0].mxu0 %v1552
        %v1781 = vpop.f32.mrb[0].mxu0
        %v1782 = vadd.f32 0.0, %v1781
        %v1783 = vpop.f32.mrb[0].mxu0
        %1784 = vmatprep.mubr.f32.mxu0 %v1556
        %1785 = vmatmul.mubr.f32.gmra.mrb[0].mxu0 %v1555
        %v1786 = vpop.f32.mrb[0].mxu0
        %v1787 = vadd.f32 0.0, %v1786
        %v1788 = vpop.f32.mrb[0].mxu0
        %1789 = vmatprep.mubr.f32.mxu0 %v1559
        %1790 = vmatmul.mubr.f32.gmra.mrb[0].mxu0 %v1558
        %v1791 = vpop.f32.mrb[0].mxu0
        %v1792 = vadd.f32 0.0, %v1791
        %v1793 = vpop.f32.mrb[0].mxu0
        %1794 = vmatprep.mubr.f32.mxu0 %v1562
        %1795 = vmatmul.mubr.f32.gmra.mrb[0].mxu0 %v1561
        %v1796 = vpop.f32.mrb[0].mxu0
        %v1797 = vadd.f32 0.0, %v1796
        %v1798 = vpop.f32.mrb[0].mxu0
        %1799 = vmatprep.mubr.f32.mxu0 %v1565
        %1800 = vmatmul.mubr.f32.gmra.mrb[0].mxu0 %v1564
        %v1801 = vpop.f32.mrb[0].mxu0
        %v1802 = vadd.f32 0.0, %v1801
        %v1803 = vpop.f32.mrb[0].mxu0
        %1804 = vmatprep.mubr.f32.mxu0 %v1568
        %1805 = vmatmul.mubr.f32.gmra.mrb[0].mxu0 %v1567
        %v1806 = vpop.f32.mrb[0].mxu0
        %v1807 = vadd.f32 0.0, %v1806
        %v1808 = vpop.f32.mrb[0].mxu0
        %1809 = vmatprep.mubr.f32.mxu0 %v1571
        %1810 = vmatmul.mubr.f32.gmra.mrb[0].mxu0 %v1570
        %v1811 = vpop.f32.mrb[0].mxu0
        %v1812 = vadd.f32 0.0, %v1811
        %v1813 = vpop.f32.mrb[0].mxu0
        %1814 = vmatprep.mubr.f32.mxu0 %v1574
        %1815 = vmatmul.mubr.f32.gmra.mrb[0].mxu0 %v1573
        %v1816 = vpop.f32.mrb[0].mxu0
        %v1817 = vadd.f32 0.0, %v1816
        %v1818 = vpop.f32.mrb[0].mxu0
        %1819 = vmatprep.mubr.f32.mxu0 %v1577
        %1820 = vmatmul.mubr.f32.gmra.mrb[0].mxu0 %v1576
        %v1821 = vpop.f32.mrb[0].mxu0
        %v1822 = vadd.f32 0.0, %v1821
        %v1823 = vpop.f32.mrb[0].mxu0
        %1824 = vmatprep.mubr.f32.mxu0 %v1580
        %1825 = vmatmul.mubr.f32.gmra.mrb[0].mxu0 %v1579
        %v1826 = vpop.f32.mrb[0].mxu0
        %v1827 = vadd.f32 0.0, %v1826
        %v1828 = vpop.f32.mrb[0].mxu0
        %1829 = vmatprep.mubr.f32.mxu0 %v1583
        %1830 = vmatmul.mubr.f32.gmra.mrb[0].mxu0 %v1582
        %v1831 = vpop.f32.mrb[0].mxu0
        %v1832 = vadd.f32 0.0, %v1831
        %v1833 = vpop.f32.mrb[0].mxu0
        %1834 = vmatprep.mubr.f32.mxu0 %v1586
        %1835 = vmatmul.mubr.f32.gmra.mrb[0].mxu0 %v1585
        %v1836 = vpop.f32.mrb[0].mxu0
        %v1837 = vadd.f32 0.0, %v1836
        %v1838 = vpop.f32.mrb[0].mxu0
        %1839 = vmatprep.mubr.f32.mxu0 %v1589
        %1840 = vmatmul.mubr.f32.gmra.mrb[0].mxu0 %v1588
        %v1841 = vpop.f32.mrb[0].mxu0
        %v1842 = vadd.f32 0.0, %v1841
        %v1843 = vpop.f32.mrb[0].mxu0
        %1844 = vmatprep.mubr.f32.mxu0 %v1592
        %1845 = vmatmul.mubr.f32.gmra.mrb[0].mxu0 %v1591
        %v1846 = vpop.f32.mrb[0].mxu0
        %v1847 = vadd.f32 0.0, %v1846
        %v1848 = vpop.f32.mrb[0].mxu0
        %1849 = vmatprep.mubr.f32.mxu0 %v1595
        %1850 = vmatmul.mubr.f32.gmra.mrb[0].mxu0 %v1594
        %v1851 = vpop.f32.mrb[0].mxu0
        %v1852 = vadd.f32 0.0, %v1851
        %v1853 = vpop.f32.mrb[0].mxu0
        %1854 = vmatprep.mubr.f32.mxu0 %v1598
        %1855 = vmatmul.mubr.f32.gmra.mrb[0].mxu0 %v1597
        %v1856 = vpop.f32.mrb[0].mxu0
        %v1857 = vadd.f32 0.0, %v1856
        %v1858 = vpop.f32.mrb[0].mxu0
        %1859 = vmatprep.mubr.f32.mxu0 %v1601
        %1860 = vmatmul.mubr.f32.gmra.mrb[0].mxu0 %v1600
        %v1861 = vpop.f32.mrb[0].mxu0
        %v1862 = vadd.f32 0.0, %v1861
        %v1863 = vpop.f32.mrb[0].mxu0
        %1864 = vmatprep.mubr.f32.mxu0 %v1604
        %1865 = vmatmul.mubr.f32.gmra.mrb[0].mxu0 %v1603
        %v1866 = vpop.f32.mrb[0].mxu0
        %v1867 = vadd.f32 0.0, %v1866
        %v1868 = vpop.f32.mrb[0].mxu0
        %1869 = vmatprep.mubr.f32.mxu0 %v1607
        %1870 = vmatmul.mubr.f32.gmra.mrb[0].mxu0 %v1606
        %v1871 = vpop.f32.mrb[0].mxu0
        %v1872 = vadd.f32 0.0, %v1871
        %v1873 = vpop.f32.mrb[0].mxu0
        %1874 = vmatprep.mubr.f32.mxu0 %v1610
        %1875 = vmatmul.mubr.f32.gmra.mrb[0].mxu0 %v1609
        %v1876 = vpop.f32.mrb[0].mxu0
        %v1877 = vadd.f32 0.0, %v1876
        %v1878 = vpop.f32.mrb[0].mxu0
        %1879 = vmatprep.mubr.f32.mxu0 %v1613
        %1880 = vmatmul.mubr.f32.gmra.mrb[0].mxu0 %v1612
        %v1881 = vpop.f32.mrb[0].mxu0
        %v1882 = vadd.f32 0.0, %v1881
        %v1883 = vpop.f32.mrb[0].mxu0
        %1884 = vmatprep.mubr.f32.mxu0 %v1616
        %1885 = vmatmul.mubr.f32.gmra.mrb[0].mxu0 %v1615
        %v1886 = vpop.f32.mrb[0].mxu0
        %v1887 = vadd.f32 0.0, %v1886
        %v1888 = vpop.f32.mrb[0].mxu0
        %1889 = vmatprep.mubr.f32.mxu0 %v1619
        %1890 = vmatmul.mubr.f32.gmra.mrb[0].mxu0 %v1618
        %v1891 = vpop.f32.mrb[0].mxu0
        %v1892 = vadd.f32 0.0, %v1891
        %v1893 = vpop.f32.mrb[0].mxu0
        %1894 = vdwg.mxu0
        %1895 = vmatprep.subr.mxu0 0.0
        %1896 = vmatpush1.msra.mxu0 %v1654
        %1897 = vmatprep.subr.mxu0 0.0
        %1898 = vmatpush1.msra.mxu0 %v1655
        %1899 = vmatprep.subr.mxu0 0.0
        %1900 = vmatpush1.msra.mxu0 %v1656
        %1901 = vmatprep.subr.mxu0 0.0
        %1902 = vmatpush1.msra.mxu0 %v1657
        %1903 = vmatprep.subr.mxu0 0.0
        %1904 = vmatpush1.msra.mxu0 %v1658
        %1905 = vmatprep.subr.mxu0 0.0
        %1906 = vmatpush1.msra.mxu0 %v1659
        %1907 = vmatprep.subr.mxu0 0.0
        %1908 = vmatpush1.msra.mxu0 %v1660
        %1909 = vmatprep.subr.mxu0 0.0
        %1910 = vmatpush1.msra.mxu0 %v1661
        %1911 = vmatprep.subr.mxu0 0.0
        %1912 = vmatpush1.msra.mxu0 %v1662
        %1913 = vmatprep.subr.mxu0 0.0
        %1914 = vmatpush1.msra.mxu0 %v1663
        %1915 = vmatprep.subr.mxu0 0.0
        %1916 = vmatpush1.msra.mxu0 %v1664
        %1917 = vmatprep.subr.mxu0 0.0
        %1918 = vmatpush1.msra.mxu0 %v1665
        %1919 = vmatprep.subr.mxu0 0.0
        %1920 = vmatpush1.msra.mxu0 %v1666
        %1921 = vmatprep.subr.mxu0 0.0
        %1922 = vmatpush1.msra.mxu0 %v1667
        %1923 = vmatprep.subr.mxu0 0.0
        %1924 = vmatpush1.msra.mxu0 %v1668
        %1925 = vmatprep.subr.mxu0 0.0
        %1926 = vmatpush1.msra.mxu0 %v1669
        %1927 = vmatprep.subr.mxu0 0.0
        %1928 = vmatpush1.msra.mxu0 0.0
        %1929 = vmatprep.subr.mxu0 0.0
        %1930 = vmatpush1.msra.mxu0 0.0
        %1931 = vmatprep.subr.mxu0 0.0
        %1932 = vmatpush1.msra.mxu0 0.0
        %1933 = vmatprep.subr.mxu0 0.0
        %1934 = vmatpush1.msra.mxu0 0.0
        %1935 = vmatprep.subr.mxu0 0.0
        %1936 = vmatpush1.msra.mxu0 0.0
        %1937 = vmatprep.subr.mxu0 0.0
        %1938 = vmatpush1.msra.mxu0 0.0
        %1939 = vmatprep.subr.mxu0 0.0
        %1940 = vmatpush1.msra.mxu0 0.0
        %1941 = vmatprep.subr.mxu0 0.0
        %1942 = vmatpush1.msra.mxu0 0.0
        %1943 = vmatprep.subr.mxu0 0.0
        %1944 = vmatpush1.msra.mxu0 0.0
        %1945 = vmatprep.subr.mxu0 0.0
        %1946 = vmatpush1.msra.mxu0 0.0
        %1947 = vmatprep.subr.mxu0 0.0
        %1948 = vmatpush1.msra.mxu0 0.0
        %1949 = vmatprep.subr.mxu0 0.0
        %1950 = vmatpush1.msra.mxu0 0.0
        %1951 = vmatprep.subr.mxu0 0.0
        %1952 = vmatpush1.msra.mxu0 0.0
        %1953 = vmatprep.subr.mxu0 0.0
        %1954 = vmatpush1.msra.mxu0 0.0
        %1955 = vmatprep.subr.mxu0 0.0
        %1956 = vmatpush1.msra.mxu0 0.0
        %1957 = vmatprep.subr.mxu0 0.0
        %1958 = vmatpush1.msra.mxu0 0.0
        %1959 = vmatprep.mubr.f32.mxu0 0.0
        %1960 = vmatmul.mubr.f32.gmra.mrb[0].mxu0 %v1527
        %v1961 = vpop.f32.mrb[0].mxu0
        %v1962 = vadd.f32 %v1737, %v1961
        %v1963 = vpop.f32.mrb[0].mxu0
        %1964 = vmatprep.mubr.f32.mxu0 0.0
        %1965 = vmatmul.mubr.f32.gmra.mrb[0].mxu0 %v1530
        %v1966 = vpop.f32.mrb[0].mxu0
        %v1967 = vadd.f32 %v1742, %v1966
        %v1968 = vpop.f32.mrb[0].mxu0
        %1969 = vmatprep.mubr.f32.mxu0 0.0
        %1970 = vmatmul.mubr.f32.gmra.mrb[0].mxu0 %v1533
        %v1971 = vpop.f32.mrb[0].mxu0
        %v1972 = vadd.f32 %v1747, %v1971
        %v1973 = vpop.f32.mrb[0].mxu0
        %1974 = vmatprep.mubr.f32.mxu0 0.0
        %1975 = vmatmul.mubr.f32.gmra.mrb[0].mxu0 %v1536
        %v1976 = vpop.f32.mrb[0].mxu0
        %v1977 = vadd.f32 %v1752, %v1976
        %v1978 = vpop.f32.mrb[0].mxu0
        %1979 = vmatprep.mubr.f32.mxu0 0.0
        %1980 = vmatmul.mubr.f32.gmra.mrb[0].mxu0 %v1539
        %v1981 = vpop.f32.mrb[0].mxu0
        %v1982 = vadd.f32 %v1757, %v1981
        %v1983 = vpop.f32.mrb[0].mxu0
        %1984 = vmatprep.mubr.f32.mxu0 0.0
        %1985 = vmatmul.mubr.f32.gmra.mrb[0].mxu0 %v1542
        %v1986 = vpop.f32.mrb[0].mxu0
        %v1987 = vadd.f32 %v1762, %v1986
        %v1988 = vpop.f32.mrb[0].mxu0
        %1989 = vmatprep.mubr.f32.mxu0 0.0
        %1990 = vmatmul.mubr.f32.gmra.mrb[0].mxu0 %v1545
        %v1991 = vpop.f32.mrb[0].mxu0
        %v1992 = vadd.f32 %v1767, %v1991
        %v1993 = vpop.f32.mrb[0].mxu0
        %1994 = vmatprep.mubr.f32.mxu0 0.0
        %1995 = vmatmul.mubr.f32.gmra.mrb[0].mxu0 %v1548
        %v1996 = vpop.f32.mrb[0].mxu0
        %v1997 = vadd.f32 %v1772, %v1996
        %v1998 = vpop.f32.mrb[0].mxu0
        %1999 = vmatprep.mubr.f32.mxu0 0.0
        %2000 = vmatmul.mubr.f32.gmra.mrb[0].mxu0 %v1551
        %v2001 = vpop.f32.mrb[0].mxu0
        %v2002 = vadd.f32 %v1777, %v2001
        %v2003 = vpop.f32.mrb[0].mxu0
        %2004 = vmatprep.mubr.f32.mxu0 0.0
        %2005 = vmatmul.mubr.f32.gmra.mrb[0].mxu0 %v1554
        %v2006 = vpop.f32.mrb[0].mxu0
        %v2007 = vadd.f32 %v1782, %v2006
        %v2008 = vpop.f32.mrb[0].mxu0
        %2009 = vmatprep.mubr.f32.mxu0 0.0
        %2010 = vmatmul.mubr.f32.gmra.mrb[0].mxu0 %v1557
        %v2011 = vpop.f32.mrb[0].mxu0
        %v2012 = vadd.f32 %v1787, %v2011
        %v2013 = vpop.f32.mrb[0].mxu0
        %2014 = vmatprep.mubr.f32.mxu0 0.0
        %2015 = vmatmul.mubr.f32.gmra.mrb[0].mxu0 %v1560
        %v2016 = vpop.f32.mrb[0].mxu0
        %v2017 = vadd.f32 %v1792, %v2016
        %v2018 = vpop.f32.mrb[0].mxu0
        %2019 = vmatprep.mubr.f32.mxu0 0.0
        %2020 = vmatmul.mubr.f32.gmra.mrb[0].mxu0 %v1563
        %v2021 = vpop.f32.mrb[0].mxu0
        %v2022 = vadd.f32 %v1797, %v2021
        %v2023 = vpop.f32.mrb[0].mxu0
        %2024 = vmatprep.mubr.f32.mxu0 0.0
        %2025 = vmatmul.mubr.f32.gmra.mrb[0].mxu0 %v1566
        %v2026 = vpop.f32.mrb[0].mxu0
        %v2027 = vadd.f32 %v1802, %v2026
        %v2028 = vpop.f32.mrb[0].mxu0
        %2029 = vmatprep.mubr.f32.mxu0 0.0
        %2030 = vmatmul.mubr.f32.gmra.mrb[0].mxu0 %v1569
        %v2031 = vpop.f32.mrb[0].mxu0
        %v2032 = vadd.f32 %v1807, %v2031
        %v2033 = vpop.f32.mrb[0].mxu0
        %2034 = vmatprep.mubr.f32.mxu0 0.0
        %2035 = vmatmul.mubr.f32.gmra.mrb[0].mxu0 %v1572
        %v2036 = vpop.f32.mrb[0].mxu0
        %v2037 = vadd.f32 %v1812, %v2036
        %v2038 = vpop.f32.mrb[0].mxu0
        %2039 = vmatprep.mubr.f32.mxu0 0.0
        %2040 = vmatmul.mubr.f32.gmra.mrb[0].mxu0 %v1575
        %v2041 = vpop.f32.mrb[0].mxu0
        %v2042 = vadd.f32 %v1817, %v2041
        %v2043 = vpop.f32.mrb[0].mxu0
        %2044 = vmatprep.mubr.f32.mxu0 0.0
        %2045 = vmatmul.mubr.f32.gmra.mrb[0].mxu0 %v1578
        %v2046 = vpop.f32.mrb[0].mxu0
        %v2047 = vadd.f32 %v1822, %v2046
        %v2048 = vpop.f32.mrb[0].mxu0
        %2049 = vmatprep.mubr.f32.mxu0 0.0
        %2050 = vmatmul.mubr.f32.gmra.mrb[0].mxu0 %v1581
        %v2051 = vpop.f32.mrb[0].mxu0
        %v2052 = vadd.f32 %v1827, %v2051
        %v2053 = vpop.f32.mrb[0].mxu0
        %2054 = vmatprep.mubr.f32.mxu0 0.0
        %2055 = vmatmul.mubr.f32.gmra.mrb[0].mxu0 %v1584
        %v2056 = vpop.f32.mrb[0].mxu0
        %v2057 = vadd.f32 %v1832, %v2056
        %v2058 = vpop.f32.mrb[0].mxu0
        %2059 = vmatprep.mubr.f32.mxu0 0.0
        %2060 = vmatmul.mubr.f32.gmra.mrb[0].mxu0 %v1587
        %v2061 = vpop.f32.mrb[0].mxu0
        %v2062 = vadd.f32 %v1837, %v2061
        %v2063 = vpop.f32.mrb[0].mxu0
        %2064 = vmatprep.mubr.f32.mxu0 0.0
        %2065 = vmatmul.mubr.f32.gmra.mrb[0].mxu0 %v1590
        %v2066 = vpop.f32.mrb[0].mxu0
        %v2067 = vadd.f32 %v1842, %v2066
        %v2068 = vpop.f32.mrb[0].mxu0
        %2069 = vmatprep.mubr.f32.mxu0 0.0
        %2070 = vmatmul.mubr.f32.gmra.mrb[0].mxu0 %v1593
        %v2071 = vpop.f32.mrb[0].mxu0
        %v2072 = vadd.f32 %v1847, %v2071
        %v2073 = vpop.f32.mrb[0].mxu0
        %2074 = vmatprep.mubr.f32.mxu0 0.0
        %2075 = vmatmul.mubr.f32.gmra.mrb[0].mxu0 %v1596
        %v2076 = vpop.f32.mrb[0].mxu0
        %v2077 = vadd.f32 %v1852, %v2076
        %v2078 = vpop.f32.mrb[0].mxu0
        %2079 = vmatprep.mubr.f32.mxu0 0.0
        %2080 = vmatmul.mubr.f32.gmra.mrb[0].mxu0 %v1599
        %v2081 = vpop.f32.mrb[0].mxu0
        %v2082 = vadd.f32 %v1857, %v2081
        %v2083 = vpop.f32.mrb[0].mxu0
        %2084 = vmatprep.mubr.f32.mxu0 0.0
        %2085 = vmatmul.mubr.f32.gmra.mrb[0].mxu0 %v1602
        %v2086 = vpop.f32.mrb[0].mxu0
        %v2087 = vadd.f32 %v1862, %v2086
        %v2088 = vpop.f32.mrb[0].mxu0
        %2089 = vmatprep.mubr.f32.mxu0 0.0
        %2090 = vmatmul.mubr.f32.gmra.mrb[0].mxu0 %v1605
        %v2091 = vpop.f32.mrb[0].mxu0
        %v2092 = vadd.f32 %v1867, %v2091
        %v2093 = vpop.f32.mrb[0].mxu0
        %2094 = vmatprep.mubr.f32.mxu0 0.0
        %2095 = vmatmul.mubr.f32.gmra.mrb[0].mxu0 %v1608
        %v2096 = vpop.f32.mrb[0].mxu0
        %v2097 = vadd.f32 %v1872, %v2096
        %v2098 = vpop.f32.mrb[0].mxu0
        %2099 = vmatprep.mubr.f32.mxu0 0.0
        %2100 = vmatmul.mubr.f32.gmra.mrb[0].mxu0 %v1611
        %v2101 = vpop.f32.mrb[0].mxu0
        %v2102 = vadd.f32 %v1877, %v2101
        %v2103 = vpop.f32.mrb[0].mxu0
        %2104 = vmatprep.mubr.f32.mxu0 0.0
        %2105 = vmatmul.mubr.f32.gmra.mrb[0].mxu0 %v1614
        %v2106 = vpop.f32.mrb[0].mxu0
        %v2107 = vadd.f32 %v1882, %v2106
        %v2108 = vpop.f32.mrb[0].mxu0
        %2109 = vmatprep.mubr.f32.mxu0 0.0
        %2110 = vmatmul.mubr.f32.gmra.mrb[0].mxu0 %v1617
        %v2111 = vpop.f32.mrb[0].mxu0
        %v2112 = vadd.f32 %v1887, %v2111
        %v2113 = vpop.f32.mrb[0].mxu0
        %2114 = vmatprep.mubr.f32.mxu0 0.0
        %2115 = vmatmul.mubr.f32.gmra.mrb[0].mxu0 %v1620
        %v2116 = vpop.f32.mrb[0].mxu0
        %v2117 = vadd.f32 %v1892, %v2116
        %v2118 = vpop.f32.mrb[0].mxu0
        %2119 = vdwg.mxu0
        %v2120 = vadd.f32 %v1493, %v1962
        %v2121 = vadd.f32 %v1494, %v1967
        %v2122 = vadd.f32 %v1495, %v1972
        %v2123 = vadd.f32 %v1496, %v1977
        %v2124 = vadd.f32 %v1497, %v1982
        %v2125 = vadd.f32 %v1498, %v1987
        %v2126 = vadd.f32 %v1499, %v1992
        %v2127 = vadd.f32 %v1500, %v1997
        %v2128 = vadd.f32 %v1501, %v2002
        %v2129 = vadd.f32 %v1502, %v2007
        %v2130 = vadd.f32 %v1503, %v2012
        %v2131 = vadd.f32 %v1504, %v2017
        %v2132 = vadd.f32 %v1505, %v2022
        %v2133 = vadd.f32 %v1506, %v2027
        %v2134 = vadd.f32 %v1507, %v2032
        %v2135 = vadd.f32 %v1508, %v2037
        %v2136 = vadd.f32 %v1509, %v2042
        %v2137 = vadd.f32 %v1510, %v2047
        %v2138 = vadd.f32 %v1511, %v2052
        %v2139 = vadd.f32 %v1512, %v2057
        %v2140 = vadd.f32 %v1513, %v2062
        %v2141 = vadd.f32 %v1514, %v2067
        %v2142 = vadd.f32 %v1515, %v2072
        %v2143 = vadd.f32 %v1516, %v2077
        %v2144 = vadd.f32 %v1517, %v2082
        %v2145 = vadd.f32 %v1518, %v2087
        %v2146 = vadd.f32 %v1519, %v2092
        %v2147 = vadd.f32 %v1520, %v2097
        %v2148 = vadd.f32 %v1521, %v2102
        %v2149 = vadd.f32 %v1522, %v2107
        %v2150 = vadd.f32 %v1523, %v2112
        %v2151 = vadd.f32 %v1524, %v2117
        %s2152 = scalar_lea.vmem [#allocation2], 96
        %v2153 = vld [vmem:[%s2152] sm:$0xff]
        %v2154 = vld [vmem:[%s2152 + $0x8] sm:$0xff]
        %v2155 = vld [vmem:[%s2152 + $0x10] sm:$0xff]
        %v2156 = vld [vmem:[%s2152 + $0x18] sm:$0xff]
        %v2157 = vld [vmem:[%s2152 + $0x20] sm:$0xff]
        %v2158 = vld [vmem:[%s2152 + $0x28] sm:$0xff]
        %v2159 = vld [vmem:[%s2152 + $0x30] sm:$0xff]
        %v2160 = vld [vmem:[%s2152 + $0x38] sm:$0xff]
        %v2161 = vld [vmem:[%s2152 + $0x40] sm:$0xff]
        %v2162 = vld [vmem:[%s2152 + $0x48] sm:$0xff]
        %v2163 = vld [vmem:[%s2152 + $0x50] sm:$0xff]
        %v2164 = vld [vmem:[%s2152 + $0x58] sm:$0xff]
        %v2165 = vld [vmem:[%s2152 + $0x60] sm:$0xff]
        %v2166 = vld [vmem:[%s2152 + $0x68] sm:$0xff]
        %v2167 = vld [vmem:[%s2152 + $0x70] sm:$0xff]
        %v2168 = vld [vmem:[%s2152 + $0x78] sm:$0xff]
        %v2169 = vld [vmem:[%s2152 + $0x80] sm:$0xff]
        %v2170 = vld [vmem:[%s2152 + $0x88] sm:$0xff]
        %v2171 = vld [vmem:[%s2152 + $0x90] sm:$0xff]
        %v2172 = vld [vmem:[%s2152 + $0x98] sm:$0xff]
        %v2173 = vld [vmem:[%s2152 + $0xa0] sm:$0xff]
        %v2174 = vld [vmem:[%s2152 + $0xa8] sm:$0xff]
        %v2175 = vld [vmem:[%s2152 + $0xb0] sm:$0xff]
        %v2176 = vld [vmem:[%s2152 + $0xb8] sm:$0xff]
        %v2177 = vld [vmem:[%s2152 + $0xc0] sm:$0xff]
        %v2178 = vld [vmem:[%s2152 + $0xc8] sm:$0xff]
        %v2179 = vld [vmem:[%s2152 + $0xd0] sm:$0xff]
        %v2180 = vld [vmem:[%s2152 + $0xd8] sm:$0xff]
        %v2181 = vld [vmem:[%s2152 + $0xe0] sm:$0xff]
        %v2182 = vld [vmem:[%s2152 + $0xe8] sm:$0xff]
        %v2183 = vld [vmem:[%s2152 + $0xf0] sm:$0xff]
        %v2184 = vld [vmem:[%s2152 + $0xf8] sm:$0xff]
        %v2185 = vld [vmem:[%s2152 + $0x100] sm:$0xff]
        %v2186 = vld [vmem:[%s2152 + $0x108] sm:$0xff]
        %v2187 = vld [vmem:[%s2152 + $0x110] sm:$0xff]
        %v2188 = vld [vmem:[%s2152 + $0x118] sm:$0xff]
        %v2189 = vld [vmem:[%s2152 + $0x120] sm:$0xff]
        %v2190 = vld [vmem:[%s2152 + $0x128] sm:$0xff]
        %v2191 = vld [vmem:[%s2152 + $0x130] sm:$0xff]
        %v2192 = vld [vmem:[%s2152 + $0x138] sm:$0xff]
        %v2193 = vld [vmem:[%s2152 + $0x140] sm:$0xff]
        %v2194 = vld [vmem:[%s2152 + $0x148] sm:$0xff]
        %v2195 = vld [vmem:[%s2152 + $0x150] sm:$0xff]
        %v2196 = vld [vmem:[%s2152 + $0x158] sm:$0xff]
        %v2197 = vld [vmem:[%s2152 + $0x160] sm:$0xff]
        %v2198 = vld [vmem:[%s2152 + $0x168] sm:$0xff]
        %v2199 = vld [vmem:[%s2152 + $0x170] sm:$0xff]
        %v2200 = vld [vmem:[%s2152 + $0x178] sm:$0xff]
        %v2201 = vld [vmem:[%s2152 + $0x180] sm:$0xff]
        %v2202 = vld [vmem:[%s2152 + $0x188] sm:$0xff]
        %v2203 = vld [vmem:[%s2152 + $0x190] sm:$0xff]
        %v2204 = vld [vmem:[%s2152 + $0x198] sm:$0xff]
        %v2205 = vld [vmem:[%s2152 + $0x1a0] sm:$0xff]
        %v2206 = vld [vmem:[%s2152 + $0x1a8] sm:$0xff]
        %v2207 = vld [vmem:[%s2152 + $0x1b0] sm:$0xff]
        %v2208 = vld [vmem:[%s2152 + $0x1b8] sm:$0xff]
        %v2209 = vld [vmem:[%s2152 + $0x1c0] sm:$0xff]
        %v2210 = vld [vmem:[%s2152 + $0x1c8] sm:$0xff]
        %v2211 = vld [vmem:[%s2152 + $0x1d0] sm:$0xff]
        %v2212 = vld [vmem:[%s2152 + $0x1d8] sm:$0xff]
        %v2213 = vld [vmem:[%s2152 + $0x1e0] sm:$0xff]
        %v2214 = vld [vmem:[%s2152 + $0x1e8] sm:$0xff]
        %v2215 = vld [vmem:[%s2152 + $0x1f0] sm:$0xff]
        %v2216 = vld [vmem:[%s2152 + $0x1f8] sm:$0xff]
        %v2217 = vld [vmem:[%s2152 + $0x200] sm:$0xff]
        %v2218 = vld [vmem:[%s2152 + $0x208] sm:$0xff]
        %v2219 = vld [vmem:[%s2152 + $0x210] sm:$0xff]
        %v2220 = vld [vmem:[%s2152 + $0x218] sm:$0xff]
        %v2221 = vld [vmem:[%s2152 + $0x220] sm:$0xff]
        %v2222 = vld [vmem:[%s2152 + $0x228] sm:$0xff]
        %v2223 = vld [vmem:[%s2152 + $0x230] sm:$0xff]
        %v2224 = vld [vmem:[%s2152 + $0x238] sm:$0xff]
        %v2225 = vld [vmem:[%s2152 + $0x240] sm:$0xff]
        %v2226 = vld [vmem:[%s2152 + $0x248] sm:$0xff]
        %v2227 = vld [vmem:[%s2152 + $0x250] sm:$0xff]
        %v2228 = vld [vmem:[%s2152 + $0x258] sm:$0xff]
        %v2229 = vld [vmem:[%s2152 + $0x260] sm:$0xff]
        %v2230 = vld [vmem:[%s2152 + $0x268] sm:$0xff]
        %v2231 = vld [vmem:[%s2152 + $0x270] sm:$0xff]
        %v2232 = vld [vmem:[%s2152 + $0x278] sm:$0xff]
        %v2233 = vld [vmem:[%s2152 + $0x280] sm:$0xff]
        %v2234 = vld [vmem:[%s2152 + $0x288] sm:$0xff]
        %v2235 = vld [vmem:[%s2152 + $0x290] sm:$0xff]
        %v2236 = vld [vmem:[%s2152 + $0x298] sm:$0xff]
        %v2237 = vld [vmem:[%s2152 + $0x2a0] sm:$0xff]
        %v2238 = vld [vmem:[%s2152 + $0x2a8] sm:$0xff]
        %v2239 = vld [vmem:[%s2152 + $0x2b0] sm:$0xff]
        %v2240 = vld [vmem:[%s2152 + $0x2b8] sm:$0xff]
        %v2241 = vld [vmem:[%s2152 + $0x2c0] sm:$0xff]
        %v2242 = vld [vmem:[%s2152 + $0x2c8] sm:$0xff]
        %v2243 = vld [vmem:[%s2152 + $0x2d0] sm:$0xff]
        %v2244 = vld [vmem:[%s2152 + $0x2d8] sm:$0xff]
        %v2245 = vld [vmem:[%s2152 + $0x2e0] sm:$0xff]
        %v2246 = vld [vmem:[%s2152 + $0x2e8] sm:$0xff]
        %v2247 = vld [vmem:[%s2152 + $0x2f0] sm:$0xff]
        %v2248 = vld [vmem:[%s2152 + $0x2f8] sm:$0xff]
        %s2249 = scalar_lea.vmem [#allocation8], 768
        %v2250 = vld [vmem:[%s2249] sm:$0xff]
        %v2251 = vld [vmem:[%s2249 + $0x8] sm:$0xff]
        %v2252 = vld [vmem:[%s2249 + $0x10] sm:$0xff]
        %v2253 = vld [vmem:[%s2249 + $0x18] sm:$0xff]
        %v2254 = vld [vmem:[%s2249 + $0x20] sm:$0xff]
        %v2255 = vld [vmem:[%s2249 + $0x28] sm:$0xff]
        %v2256 = vld [vmem:[%s2249 + $0x30] sm:$0xff]
        %v2257 = vld [vmem:[%s2249 + $0x38] sm:$0xff]
        %v2258 = vld [vmem:[%s2249 + $0x40] sm:$0xff]
        %v2259 = vld [vmem:[%s2249 + $0x48] sm:$0xff]
        %v2260 = vld [vmem:[%s2249 + $0x50] sm:$0xff]
        %v2261 = vld [vmem:[%s2249 + $0x58] sm:$0xff]
        %v2262 = vld [vmem:[%s2249 + $0x60] sm:$0xff]
        %v2263 = vld [vmem:[%s2249 + $0x68] sm:$0xff]
        %v2264 = vld [vmem:[%s2249 + $0x70] sm:$0xff]
        %v2265 = vld [vmem:[%s2249 + $0x78] sm:$0xff]
        %v2266 = vld [vmem:[%s2249 + $0x80] sm:$0xff]
        %v2267 = vld [vmem:[%s2249 + $0x88] sm:$0xff]
        %v2268 = vld [vmem:[%s2249 + $0x90] sm:$0xff]
        %v2269 = vld [vmem:[%s2249 + $0x98] sm:$0xff]
        %v2270 = vld [vmem:[%s2249 + $0xa0] sm:$0xff]
        %v2271 = vld [vmem:[%s2249 + $0xa8] sm:$0xff]
        %v2272 = vld [vmem:[%s2249 + $0xb0] sm:$0xff]
        %v2273 = vld [vmem:[%s2249 + $0xb8] sm:$0xff]
        %v2274 = vld [vmem:[%s2249 + $0xc0] sm:$0xff]
        %v2275 = vld [vmem:[%s2249 + $0xc8] sm:$0xff]
        %v2276 = vld [vmem:[%s2249 + $0xd0] sm:$0xff]
        %v2277 = vld [vmem:[%s2249 + $0xd8] sm:$0xff]
        %v2278 = vld [vmem:[%s2249 + $0xe0] sm:$0xff]
        %v2279 = vld [vmem:[%s2249 + $0xe8] sm:$0xff]
        %v2280 = vld [vmem:[%s2249 + $0xf0] sm:$0xff]
        %v2281 = vld [vmem:[%s2249 + $0xf8] sm:$0xff]
        %v2282 = vld [vmem:[%s2249 + $0x100] sm:$0xff]
        %v2283 = vld [vmem:[%s2249 + $0x108] sm:$0xff]
        %v2284 = vld [vmem:[%s2249 + $0x110] sm:$0xff]
        %v2285 = vld [vmem:[%s2249 + $0x118] sm:$0xff]
        %v2286 = vld [vmem:[%s2249 + $0x120] sm:$0xff]
        %v2287 = vld [vmem:[%s2249 + $0x128] sm:$0xff]
        %v2288 = vld [vmem:[%s2249 + $0x130] sm:$0xff]
        %v2289 = vld [vmem:[%s2249 + $0x138] sm:$0xff]
        %v2290 = vld [vmem:[%s2249 + $0x140] sm:$0xff]
        %v2291 = vld [vmem:[%s2249 + $0x148] sm:$0xff]
        %v2292 = vld [vmem:[%s2249 + $0x150] sm:$0xff]
        %v2293 = vld [vmem:[%s2249 + $0x158] sm:$0xff]
        %v2294 = vld [vmem:[%s2249 + $0x160] sm:$0xff]
        %v2295 = vld [vmem:[%s2249 + $0x168] sm:$0xff]
        %v2296 = vld [vmem:[%s2249 + $0x170] sm:$0xff]
        %v2297 = vld [vmem:[%s2249 + $0x178] sm:$0xff]
        %2298 = vmatprep.subr.mxu0 0.0
        %2299 = vmatpush1.msra.mxu0 %v2250
        %2300 = vmatprep.subr.mxu0 0.0
        %2301 = vmatpush1.msra.mxu0 %v2251
        %2302 = vmatprep.subr.mxu0 0.0
        %2303 = vmatpush1.msra.mxu0 %v2252
        %2304 = vmatprep.subr.mxu0 0.0
        %2305 = vmatpush1.msra.mxu0 %v2253
        %2306 = vmatprep.subr.mxu0 0.0
        %2307 = vmatpush1.msra.mxu0 %v2254
        %2308 = vmatprep.subr.mxu0 0.0
        %2309 = vmatpush1.msra.mxu0 %v2255
        %2310 = vmatprep.subr.mxu0 0.0
        %2311 = vmatpush1.msra.mxu0 %v2256
        %2312 = vmatprep.subr.mxu0 0.0
        %2313 = vmatpush1.msra.mxu0 %v2257
        %2314 = vmatprep.subr.mxu0 0.0
        %2315 = vmatpush1.msra.mxu0 %v2258
        %2316 = vmatprep.subr.mxu0 0.0
        %2317 = vmatpush1.msra.mxu0 %v2259
        %2318 = vmatprep.subr.mxu0 0.0
        %2319 = vmatpush1.msra.mxu0 %v2260
        %2320 = vmatprep.subr.mxu0 0.0
        %2321 = vmatpush1.msra.mxu0 %v2261
        %2322 = vmatprep.subr.mxu0 0.0
        %2323 = vmatpush1.msra.mxu0 %v2262
        %2324 = vmatprep.subr.mxu0 0.0
        %2325 = vmatpush1.msra.mxu0 %v2263
        %2326 = vmatprep.subr.mxu0 0.0
        %2327 = vmatpush1.msra.mxu0 %v2264
        %2328 = vmatprep.subr.mxu0 0.0
        %2329 = vmatpush1.msra.mxu0 %v2265
        %2330 = vmatprep.subr.mxu0 0.0
        %2331 = vmatpush1.msra.mxu0 %v2266
        %2332 = vmatprep.subr.mxu0 0.0
        %2333 = vmatpush1.msra.mxu0 %v2267
        %2334 = vmatprep.subr.mxu0 0.0
        %2335 = vmatpush1.msra.mxu0 %v2268
        %2336 = vmatprep.subr.mxu0 0.0
        %2337 = vmatpush1.msra.mxu0 %v2269
        %2338 = vmatprep.subr.mxu0 0.0
        %2339 = vmatpush1.msra.mxu0 %v2270
        %2340 = vmatprep.subr.mxu0 0.0
        %2341 = vmatpush1.msra.mxu0 %v2271
        %2342 = vmatprep.subr.mxu0 0.0
        %2343 = vmatpush1.msra.mxu0 %v2272
        %2344 = vmatprep.subr.mxu0 0.0
        %2345 = vmatpush1.msra.mxu0 %v2273
        %2346 = vmatprep.subr.mxu0 0.0
        %2347 = vmatpush1.msra.mxu0 %v2274
        %2348 = vmatprep.subr.mxu0 0.0
        %2349 = vmatpush1.msra.mxu0 %v2275
        %2350 = vmatprep.subr.mxu0 0.0
        %2351 = vmatpush1.msra.mxu0 %v2276
        %2352 = vmatprep.subr.mxu0 0.0
        %2353 = vmatpush1.msra.mxu0 %v2277
        %2354 = vmatprep.subr.mxu0 0.0
        %2355 = vmatpush1.msra.mxu0 %v2278
        %2356 = vmatprep.subr.mxu0 0.0
        %2357 = vmatpush1.msra.mxu0 %v2279
        %2358 = vmatprep.subr.mxu0 0.0
        %2359 = vmatpush1.msra.mxu0 %v2280
        %2360 = vmatprep.subr.mxu0 0.0
        %2361 = vmatpush1.msra.mxu0 %v2281
        %2362 = vmatprep.mubr.f32.mxu0 %v2154
        %2363 = vmatmul.mubr.f32.gmra.mrb[0].mxu0 %v2153
        %v2364 = vpop.f32.mrb[0].mxu0
        %v2365 = vadd.f32 0.0, %v2364
        %v2366 = vpop.f32.mrb[0].mxu0
        %2367 = vmatprep.mubr.f32.mxu0 %v2157
        %2368 = vmatmul.mubr.f32.gmra.mrb[0].mxu0 %v2156
        %v2369 = vpop.f32.mrb[0].mxu0
        %v2370 = vadd.f32 0.0, %v2369
        %v2371 = vpop.f32.mrb[0].mxu0
        %2372 = vmatprep.mubr.f32.mxu0 %v2160
        %2373 = vmatmul.mubr.f32.gmra.mrb[0].mxu0 %v2159
        %v2374 = vpop.f32.mrb[0].mxu0
        %v2375 = vadd.f32 0.0, %v2374
        %v2376 = vpop.f32.mrb[0].mxu0
        %2377 = vmatprep.mubr.f32.mxu0 %v2163
        %2378 = vmatmul.mubr.f32.gmra.mrb[0].mxu0 %v2162
        %v2379 = vpop.f32.mrb[0].mxu0
        %v2380 = vadd.f32 0.0, %v2379
        %v2381 = vpop.f32.mrb[0].mxu0
        %2382 = vmatprep.mubr.f32.mxu0 %v2166
        %2383 = vmatmul.mubr.f32.gmra.mrb[0].mxu0 %v2165
        %v2384 = vpop.f32.mrb[0].mxu0
        %v2385 = vadd.f32 0.0, %v2384
        %v2386 = vpop.f32.mrb[0].mxu0
        %2387 = vmatprep.mubr.f32.mxu0 %v2169
        %2388 = vmatmul.mubr.f32.gmra.mrb[0].mxu0 %v2168
        %v2389 = vpop.f32.mrb[0].mxu0
        %v2390 = vadd.f32 0.0, %v2389
        %v2391 = vpop.f32.mrb[0].mxu0
        %2392 = vmatprep.mubr.f32.mxu0 %v2172
        %2393 = vmatmul.mubr.f32.gmra.mrb[0].mxu0 %v2171
        %v2394 = vpop.f32.mrb[0].mxu0
        %v2395 = vadd.f32 0.0, %v2394
        %v2396 = vpop.f32.mrb[0].mxu0
        %2397 = vmatprep.mubr.f32.mxu0 %v2175
        %2398 = vmatmul.mubr.f32.gmra.mrb[0].mxu0 %v2174
        %v2399 = vpop.f32.mrb[0].mxu0
        %v2400 = vadd.f32 0.0, %v2399
        %v2401 = vpop.f32.mrb[0].mxu0
        %2402 = vmatprep.mubr.f32.mxu0 %v2178
        %2403 = vmatmul.mubr.f32.gmra.mrb[0].mxu0 %v2177
        %v2404 = vpop.f32.mrb[0].mxu0
        %v2405 = vadd.f32 0.0, %v2404
        %v2406 = vpop.f32.mrb[0].mxu0
        %2407 = vmatprep.mubr.f32.mxu0 %v2181
        %2408 = vmatmul.mubr.f32.gmra.mrb[0].mxu0 %v2180
        %v2409 = vpop.f32.mrb[0].mxu0
        %v2410 = vadd.f32 0.0, %v2409
        %v2411 = vpop.f32.mrb[0].mxu0
        %2412 = vmatprep.mubr.f32.mxu0 %v2184
        %2413 = vmatmul.mubr.f32.gmra.mrb[0].mxu0 %v2183
        %v2414 = vpop.f32.mrb[0].mxu0
        %v2415 = vadd.f32 0.0, %v2414
        %v2416 = vpop.f32.mrb[0].mxu0
        %2417 = vmatprep.mubr.f32.mxu0 %v2187
        %2418 = vmatmul.mubr.f32.gmra.mrb[0].mxu0 %v2186
        %v2419 = vpop.f32.mrb[0].mxu0
        %v2420 = vadd.f32 0.0, %v2419
        %v2421 = vpop.f32.mrb[0].mxu0
        %2422 = vmatprep.mubr.f32.mxu0 %v2190
        %2423 = vmatmul.mubr.f32.gmra.mrb[0].mxu0 %v2189
        %v2424 = vpop.f32.mrb[0].mxu0
        %v2425 = vadd.f32 0.0, %v2424
        %v2426 = vpop.f32.mrb[0].mxu0
        %2427 = vmatprep.mubr.f32.mxu0 %v2193
        %2428 = vmatmul.mubr.f32.gmra.mrb[0].mxu0 %v2192
        %v2429 = vpop.f32.mrb[0].mxu0
        %v2430 = vadd.f32 0.0, %v2429
        %v2431 = vpop.f32.mrb[0].mxu0
        %2432 = vmatprep.mubr.f32.mxu0 %v2196
        %2433 = vmatmul.mubr.f32.gmra.mrb[0].mxu0 %v2195
        %v2434 = vpop.f32.mrb[0].mxu0
        %v2435 = vadd.f32 0.0, %v2434
        %v2436 = vpop.f32.mrb[0].mxu0
        %2437 = vmatprep.mubr.f32.mxu0 %v2199
        %2438 = vmatmul.mubr.f32.gmra.mrb[0].mxu0 %v2198
        %v2439 = vpop.f32.mrb[0].mxu0
        %v2440 = vadd.f32 0.0, %v2439
        %v2441 = vpop.f32.mrb[0].mxu0
        %2442 = vmatprep.mubr.f32.mxu0 %v2202
        %2443 = vmatmul.mubr.f32.gmra.mrb[0].mxu0 %v2201
        %v2444 = vpop.f32.mrb[0].mxu0
        %v2445 = vadd.f32 0.0, %v2444
        %v2446 = vpop.f32.mrb[0].mxu0
        %2447 = vmatprep.mubr.f32.mxu0 %v2205
        %2448 = vmatmul.mubr.f32.gmra.mrb[0].mxu0 %v2204
        %v2449 = vpop.f32.mrb[0].mxu0
        %v2450 = vadd.f32 0.0, %v2449
        %v2451 = vpop.f32.mrb[0].mxu0
        %2452 = vmatprep.mubr.f32.mxu0 %v2208
        %2453 = vmatmul.mubr.f32.gmra.mrb[0].mxu0 %v2207
        %v2454 = vpop.f32.mrb[0].mxu0
        %v2455 = vadd.f32 0.0, %v2454
        %v2456 = vpop.f32.mrb[0].mxu0
        %2457 = vmatprep.mubr.f32.mxu0 %v2211
        %2458 = vmatmul.mubr.f32.gmra.mrb[0].mxu0 %v2210
        %v2459 = vpop.f32.mrb[0].mxu0
        %v2460 = vadd.f32 0.0, %v2459
        %v2461 = vpop.f32.mrb[0].mxu0
        %2462 = vmatprep.mubr.f32.mxu0 %v2214
        %2463 = vmatmul.mubr.f32.gmra.mrb[0].mxu0 %v2213
        %v2464 = vpop.f32.mrb[0].mxu0
        %v2465 = vadd.f32 0.0, %v2464
        %v2466 = vpop.f32.mrb[0].mxu0
        %2467 = vmatprep.mubr.f32.mxu0 %v2217
        %2468 = vmatmul.mubr.f32.gmra.mrb[0].mxu0 %v2216
        %v2469 = vpop.f32.mrb[0].mxu0
        %v2470 = vadd.f32 0.0, %v2469
        %v2471 = vpop.f32.mrb[0].mxu0
        %2472 = vmatprep.mubr.f32.mxu0 %v2220
        %2473 = vmatmul.mubr.f32.gmra.mrb[0].mxu0 %v2219
        %v2474 = vpop.f32.mrb[0].mxu0
        %v2475 = vadd.f32 0.0, %v2474
        %v2476 = vpop.f32.mrb[0].mxu0
        %2477 = vmatprep.mubr.f32.mxu0 %v2223
        %2478 = vmatmul.mubr.f32.gmra.mrb[0].mxu0 %v2222
        %v2479 = vpop.f32.mrb[0].mxu0
        %v2480 = vadd.f32 0.0, %v2479
        %v2481 = vpop.f32.mrb[0].mxu0
        %2482 = vmatprep.mubr.f32.mxu0 %v2226
        %2483 = vmatmul.mubr.f32.gmra.mrb[0].mxu0 %v2225
        %v2484 = vpop.f32.mrb[0].mxu0
        %v2485 = vadd.f32 0.0, %v2484
        %v2486 = vpop.f32.mrb[0].mxu0
        %2487 = vmatprep.mubr.f32.mxu0 %v2229
        %2488 = vmatmul.mubr.f32.gmra.mrb[0].mxu0 %v2228
        %v2489 = vpop.f32.mrb[0].mxu0
        %v2490 = vadd.f32 0.0, %v2489
        %v2491 = vpop.f32.mrb[0].mxu0
        %2492 = vmatprep.mubr.f32.mxu0 %v2232
        %2493 = vmatmul.mubr.f32.gmra.mrb[0].mxu0 %v2231
        %v2494 = vpop.f32.mrb[0].mxu0
        %v2495 = vadd.f32 0.0, %v2494
        %v2496 = vpop.f32.mrb[0].mxu0
        %2497 = vmatprep.mubr.f32.mxu0 %v2235
        %2498 = vmatmul.mubr.f32.gmra.mrb[0].mxu0 %v2234
        %v2499 = vpop.f32.mrb[0].mxu0
        %v2500 = vadd.f32 0.0, %v2499
        %v2501 = vpop.f32.mrb[0].mxu0
        %2502 = vmatprep.mubr.f32.mxu0 %v2238
        %2503 = vmatmul.mubr.f32.gmra.mrb[0].mxu0 %v2237
        %v2504 = vpop.f32.mrb[0].mxu0
        %v2505 = vadd.f32 0.0, %v2504
        %v2506 = vpop.f32.mrb[0].mxu0
        %2507 = vmatprep.mubr.f32.mxu0 %v2241
        %2508 = vmatmul.mubr.f32.gmra.mrb[0].mxu0 %v2240
        %v2509 = vpop.f32.mrb[0].mxu0
        %v2510 = vadd.f32 0.0, %v2509
        %v2511 = vpop.f32.mrb[0].mxu0
        %2512 = vmatprep.mubr.f32.mxu0 %v2244
        %2513 = vmatmul.mubr.f32.gmra.mrb[0].mxu0 %v2243
        %v2514 = vpop.f32.mrb[0].mxu0
        %v2515 = vadd.f32 0.0, %v2514
        %v2516 = vpop.f32.mrb[0].mxu0
        %2517 = vmatprep.mubr.f32.mxu0 %v2247
        %2518 = vmatmul.mubr.f32.gmra.mrb[0].mxu0 %v2246
        %v2519 = vpop.f32.mrb[0].mxu0
        %v2520 = vadd.f32 0.0, %v2519
        %v2521 = vpop.f32.mrb[0].mxu0
        %2522 = vdwg.mxu0
        %2523 = vmatprep.subr.mxu0 0.0
        %2524 = vmatpush1.msra.mxu0 %v2282
        %2525 = vmatprep.subr.mxu0 0.0
        %2526 = vmatpush1.msra.mxu0 %v2283
        %2527 = vmatprep.subr.mxu0 0.0
        %2528 = vmatpush1.msra.mxu0 %v2284
        %2529 = vmatprep.subr.mxu0 0.0
        %2530 = vmatpush1.msra.mxu0 %v2285
        %2531 = vmatprep.subr.mxu0 0.0
        %2532 = vmatpush1.msra.mxu0 %v2286
        %2533 = vmatprep.subr.mxu0 0.0
        %2534 = vmatpush1.msra.mxu0 %v2287
        %2535 = vmatprep.subr.mxu0 0.0
        %2536 = vmatpush1.msra.mxu0 %v2288
        %2537 = vmatprep.subr.mxu0 0.0
        %2538 = vmatpush1.msra.mxu0 %v2289
        %2539 = vmatprep.subr.mxu0 0.0
        %2540 = vmatpush1.msra.mxu0 %v2290
        %2541 = vmatprep.subr.mxu0 0.0
        %2542 = vmatpush1.msra.mxu0 %v2291
        %2543 = vmatprep.subr.mxu0 0.0
        %2544 = vmatpush1.msra.mxu0 %v2292
        %2545 = vmatprep.subr.mxu0 0.0
        %2546 = vmatpush1.msra.mxu0 %v2293
        %2547 = vmatprep.subr.mxu0 0.0
        %2548 = vmatpush1.msra.mxu0 %v2294
        %2549 = vmatprep.subr.mxu0 0.0
        %2550 = vmatpush1.msra.mxu0 %v2295
        %2551 = vmatprep.subr.mxu0 0.0
        %2552 = vmatpush1.msra.mxu0 %v2296
        %2553 = vmatprep.subr.mxu0 0.0
        %2554 = vmatpush1.msra.mxu0 %v2297
        %2555 = vmatprep.subr.mxu0 0.0
        %2556 = vmatpush1.msra.mxu0 0.0
        %2557 = vmatprep.subr.mxu0 0.0
        %2558 = vmatpush1.msra.mxu0 0.0
        %2559 = vmatprep.subr.mxu0 0.0
        %2560 = vmatpush1.msra.mxu0 0.0
        %2561 = vmatprep.subr.mxu0 0.0
        %2562 = vmatpush1.msra.mxu0 0.0
        %2563 = vmatprep.subr.mxu0 0.0
        %2564 = vmatpush1.msra.mxu0 0.0
        %2565 = vmatprep.subr.mxu0 0.0
        %2566 = vmatpush1.msra.mxu0 0.0
        %2567 = vmatprep.subr.mxu0 0.0
        %2568 = vmatpush1.msra.mxu0 0.0
        %2569 = vmatprep.subr.mxu0 0.0
        %2570 = vmatpush1.msra.mxu0 0.0
        %2571 = vmatprep.subr.mxu0 0.0
        %2572 = vmatpush1.msra.mxu0 0.0
        %2573 = vmatprep.subr.mxu0 0.0
        %2574 = vmatpush1.msra.mxu0 0.0
        %2575 = vmatprep.subr.mxu0 0.0
        %2576 = vmatpush1.msra.mxu0 0.0
        %2577 = vmatprep.subr.mxu0 0.0
        %2578 = vmatpush1.msra.mxu0 0.0
        %2579 = vmatprep.subr.mxu0 0.0
        %2580 = vmatpush1.msra.mxu0 0.0
        %2581 = vmatprep.subr.mxu0 0.0
        %2582 = vmatpush1.msra.mxu0 0.0
        %2583 = vmatprep.subr.mxu0 0.0
        %2584 = vmatpush1.msra.mxu0 0.0
        %2585 = vmatprep.subr.mxu0 0.0
        %2586 = vmatpush1.msra.mxu0 0.0
        %2587 = vmatprep.mubr.f32.mxu0 0.0
        %2588 = vmatmul.mubr.f32.gmra.mrb[0].mxu0 %v2155
        %v2589 = vpop.f32.mrb[0].mxu0
        %v2590 = vadd.f32 %v2365, %v2589
        %v2591 = vpop.f32.mrb[0].mxu0
        %2592 = vmatprep.mubr.f32.mxu0 0.0
        %2593 = vmatmul.mubr.f32.gmra.mrb[0].mxu0 %v2158
        %v2594 = vpop.f32.mrb[0].mxu0
        %v2595 = vadd.f32 %v2370, %v2594
        %v2596 = vpop.f32.mrb[0].mxu0
        %2597 = vmatprep.mubr.f32.mxu0 0.0
        %2598 = vmatmul.mubr.f32.gmra.mrb[0].mxu0 %v2161
        %v2599 = vpop.f32.mrb[0].mxu0
        %v2600 = vadd.f32 %v2375, %v2599
        %v2601 = vpop.f32.mrb[0].mxu0
        %2602 = vmatprep.mubr.f32.mxu0 0.0
        %2603 = vmatmul.mubr.f32.gmra.mrb[0].mxu0 %v2164
        %v2604 = vpop.f32.mrb[0].mxu0
        %v2605 = vadd.f32 %v2380, %v2604
        %v2606 = vpop.f32.mrb[0].mxu0
        %2607 = vmatprep.mubr.f32.mxu0 0.0
        %2608 = vmatmul.mubr.f32.gmra.mrb[0].mxu0 %v2167
        %v2609 = vpop.f32.mrb[0].mxu0
        %v2610 = vadd.f32 %v2385, %v2609
        %v2611 = vpop.f32.mrb[0].mxu0
        %2612 = vmatprep.mubr.f32.mxu0 0.0
        %2613 = vmatmul.mubr.f32.gmra.mrb[0].mxu0 %v2170
        %v2614 = vpop.f32.mrb[0].mxu0
        %v2615 = vadd.f32 %v2390, %v2614
        %v2616 = vpop.f32.mrb[0].mxu0
        %2617 = vmatprep.mubr.f32.mxu0 0.0
        %2618 = vmatmul.mubr.f32.gmra.mrb[0].mxu0 %v2173
        %v2619 = vpop.f32.mrb[0].mxu0
        %v2620 = vadd.f32 %v2395, %v2619
        %v2621 = vpop.f32.mrb[0].mxu0
        %2622 = vmatprep.mubr.f32.mxu0 0.0
        %2623 = vmatmul.mubr.f32.gmra.mrb[0].mxu0 %v2176
        %v2624 = vpop.f32.mrb[0].mxu0
        %v2625 = vadd.f32 %v2400, %v2624
        %v2626 = vpop.f32.mrb[0].mxu0
        %2627 = vmatprep.mubr.f32.mxu0 0.0
        %2628 = vmatmul.mubr.f32.gmra.mrb[0].mxu0 %v2179
        %v2629 = vpop.f32.mrb[0].mxu0
        %v2630 = vadd.f32 %v2405, %v2629
        %v2631 = vpop.f32.mrb[0].mxu0
        %2632 = vmatprep.mubr.f32.mxu0 0.0
        %2633 = vmatmul.mubr.f32.gmra.mrb[0].mxu0 %v2182
        %v2634 = vpop.f32.mrb[0].mxu0
        %v2635 = vadd.f32 %v2410, %v2634
        %v2636 = vpop.f32.mrb[0].mxu0
        %2637 = vmatprep.mubr.f32.mxu0 0.0
        %2638 = vmatmul.mubr.f32.gmra.mrb[0].mxu0 %v2185
        %v2639 = vpop.f32.mrb[0].mxu0
        %v2640 = vadd.f32 %v2415, %v2639
        %v2641 = vpop.f32.mrb[0].mxu0
        %2642 = vmatprep.mubr.f32.mxu0 0.0
        %2643 = vmatmul.mubr.f32.gmra.mrb[0].mxu0 %v2188
        %v2644 = vpop.f32.mrb[0].mxu0
        %v2645 = vadd.f32 %v2420, %v2644
        %v2646 = vpop.f32.mrb[0].mxu0
        %2647 = vmatprep.mubr.f32.mxu0 0.0
        %2648 = vmatmul.mubr.f32.gmra.mrb[0].mxu0 %v2191
        %v2649 = vpop.f32.mrb[0].mxu0
        %v2650 = vadd.f32 %v2425, %v2649
        %v2651 = vpop.f32.mrb[0].mxu0
        %2652 = vmatprep.mubr.f32.mxu0 0.0
        %2653 = vmatmul.mubr.f32.gmra.mrb[0].mxu0 %v2194
        %v2654 = vpop.f32.mrb[0].mxu0
        %v2655 = vadd.f32 %v2430, %v2654
        %v2656 = vpop.f32.mrb[0].mxu0
        %2657 = vmatprep.mubr.f32.mxu0 0.0
        %2658 = vmatmul.mubr.f32.gmra.mrb[0].mxu0 %v2197
        %v2659 = vpop.f32.mrb[0].mxu0
        %v2660 = vadd.f32 %v2435, %v2659
        %v2661 = vpop.f32.mrb[0].mxu0
        %2662 = vmatprep.mubr.f32.mxu0 0.0
        %2663 = vmatmul.mubr.f32.gmra.mrb[0].mxu0 %v2200
        %v2664 = vpop.f32.mrb[0].mxu0
        %v2665 = vadd.f32 %v2440, %v2664
        %v2666 = vpop.f32.mrb[0].mxu0
        %2667 = vmatprep.mubr.f32.mxu0 0.0
        %2668 = vmatmul.mubr.f32.gmra.mrb[0].mxu0 %v2203
        %v2669 = vpop.f32.mrb[0].mxu0
        %v2670 = vadd.f32 %v2445, %v2669
        %v2671 = vpop.f32.mrb[0].mxu0
        %2672 = vmatprep.mubr.f32.mxu0 0.0
        %2673 = vmatmul.mubr.f32.gmra.mrb[0].mxu0 %v2206
        %v2674 = vpop.f32.mrb[0].mxu0
        %v2675 = vadd.f32 %v2450, %v2674
        %v2676 = vpop.f32.mrb[0].mxu0
        %2677 = vmatprep.mubr.f32.mxu0 0.0
        %2678 = vmatmul.mubr.f32.gmra.mrb[0].mxu0 %v2209
        %v2679 = vpop.f32.mrb[0].mxu0
        %v2680 = vadd.f32 %v2455, %v2679
        %v2681 = vpop.f32.mrb[0].mxu0
        %2682 = vmatprep.mubr.f32.mxu0 0.0
        %2683 = vmatmul.mubr.f32.gmra.mrb[0].mxu0 %v2212
        %v2684 = vpop.f32.mrb[0].mxu0
        %v2685 = vadd.f32 %v2460, %v2684
        %v2686 = vpop.f32.mrb[0].mxu0
        %2687 = vmatprep.mubr.f32.mxu0 0.0
        %2688 = vmatmul.mubr.f32.gmra.mrb[0].mxu0 %v2215
        %v2689 = vpop.f32.mrb[0].mxu0
        %v2690 = vadd.f32 %v2465, %v2689
        %v2691 = vpop.f32.mrb[0].mxu0
        %2692 = vmatprep.mubr.f32.mxu0 0.0
        %2693 = vmatmul.mubr.f32.gmra.mrb[0].mxu0 %v2218
        %v2694 = vpop.f32.mrb[0].mxu0
        %v2695 = vadd.f32 %v2470, %v2694
        %v2696 = vpop.f32.mrb[0].mxu0
        %2697 = vmatprep.mubr.f32.mxu0 0.0
        %2698 = vmatmul.mubr.f32.gmra.mrb[0].mxu0 %v2221
        %v2699 = vpop.f32.mrb[0].mxu0
        %v2700 = vadd.f32 %v2475, %v2699
        %v2701 = vpop.f32.mrb[0].mxu0
        %2702 = vmatprep.mubr.f32.mxu0 0.0
        %2703 = vmatmul.mubr.f32.gmra.mrb[0].mxu0 %v2224
        %v2704 = vpop.f32.mrb[0].mxu0
        %v2705 = vadd.f32 %v2480, %v2704
        %v2706 = vpop.f32.mrb[0].mxu0
        %2707 = vmatprep.mubr.f32.mxu0 0.0
        %2708 = vmatmul.mubr.f32.gmra.mrb[0].mxu0 %v2227
        %v2709 = vpop.f32.mrb[0].mxu0
        %v2710 = vadd.f32 %v2485, %v2709
        %v2711 = vpop.f32.mrb[0].mxu0
        %2712 = vmatprep.mubr.f32.mxu0 0.0
        %2713 = vmatmul.mubr.f32.gmra.mrb[0].mxu0 %v2230
        %v2714 = vpop.f32.mrb[0].mxu0
        %v2715 = vadd.f32 %v2490, %v2714
        %v2716 = vpop.f32.mrb[0].mxu0
        %2717 = vmatprep.mubr.f32.mxu0 0.0
        %2718 = vmatmul.mubr.f32.gmra.mrb[0].mxu0 %v2233
        %v2719 = vpop.f32.mrb[0].mxu0
        %v2720 = vadd.f32 %v2495, %v2719
        %v2721 = vpop.f32.mrb[0].mxu0
        %2722 = vmatprep.mubr.f32.mxu0 0.0
        %2723 = vmatmul.mubr.f32.gmra.mrb[0].mxu0 %v2236
        %v2724 = vpop.f32.mrb[0].mxu0
        %v2725 = vadd.f32 %v2500, %v2724
        %v2726 = vpop.f32.mrb[0].mxu0
        %2727 = vmatprep.mubr.f32.mxu0 0.0
        %2728 = vmatmul.mubr.f32.gmra.mrb[0].mxu0 %v2239
        %v2729 = vpop.f32.mrb[0].mxu0
        %v2730 = vadd.f32 %v2505, %v2729
        %v2731 = vpop.f32.mrb[0].mxu0
        %2732 = vmatprep.mubr.f32.mxu0 0.0
        %2733 = vmatmul.mubr.f32.gmra.mrb[0].mxu0 %v2242
        %v2734 = vpop.f32.mrb[0].mxu0
        %v2735 = vadd.f32 %v2510, %v2734
        %v2736 = vpop.f32.mrb[0].mxu0
        %2737 = vmatprep.mubr.f32.mxu0 0.0
        %2738 = vmatmul.mubr.f32.gmra.mrb[0].mxu0 %v2245
        %v2739 = vpop.f32.mrb[0].mxu0
        %v2740 = vadd.f32 %v2515, %v2739
        %v2741 = vpop.f32.mrb[0].mxu0
        %2742 = vmatprep.mubr.f32.mxu0 0.0
        %2743 = vmatmul.mubr.f32.gmra.mrb[0].mxu0 %v2248
        %v2744 = vpop.f32.mrb[0].mxu0
        %v2745 = vadd.f32 %v2520, %v2744
        %v2746 = vpop.f32.mrb[0].mxu0
        %2747 = vdwg.mxu0
        %v2748 = vadd.f32 %v2120, %v2590
        %v2749 = vadd.f32 %v2121, %v2595
        %v2750 = vadd.f32 %v2122, %v2600
        %v2751 = vadd.f32 %v2123, %v2605
        %v2752 = vadd.f32 %v2124, %v2610
        %v2753 = vadd.f32 %v2125, %v2615
        %v2754 = vadd.f32 %v2126, %v2620
        %v2755 = vadd.f32 %v2127, %v2625
        %v2756 = vadd.f32 %v2128, %v2630
        %v2757 = vadd.f32 %v2129, %v2635
        %v2758 = vadd.f32 %v2130, %v2640
        %v2759 = vadd.f32 %v2131, %v2645
        %v2760 = vadd.f32 %v2132, %v2650
        %v2761 = vadd.f32 %v2133, %v2655
        %v2762 = vadd.f32 %v2134, %v2660
        %v2763 = vadd.f32 %v2135, %v2665
        %v2764 = vadd.f32 %v2136, %v2670
        %v2765 = vadd.f32 %v2137, %v2675
        %v2766 = vadd.f32 %v2138, %v2680
        %v2767 = vadd.f32 %v2139, %v2685
        %v2768 = vadd.f32 %v2140, %v2690
        %v2769 = vadd.f32 %v2141, %v2695
        %v2770 = vadd.f32 %v2142, %v2700
        %v2771 = vadd.f32 %v2143, %v2705
        %v2772 = vadd.f32 %v2144, %v2710
        %v2773 = vadd.f32 %v2145, %v2715
        %v2774 = vadd.f32 %v2146, %v2720
        %v2775 = vadd.f32 %v2147, %v2725
        %v2776 = vadd.f32 %v2148, %v2730
        %v2777 = vadd.f32 %v2149, %v2735
        %v2778 = vadd.f32 %v2150, %v2740
        %v2779 = vadd.f32 %v2151, %v2745
        %v2780 = vmax.f32 %v2748, 0.0
        %v2781 = vmax.f32 %v2749, 0.0
        %v2782 = vmax.f32 %v2750, 0.0
        %v2783 = vmax.f32 %v2751, 0.0
        %v2784 = vmax.f32 %v2752, 0.0
        %v2785 = vmax.f32 %v2753, 0.0
        %v2786 = vmax.f32 %v2754, 0.0
        %v2787 = vmax.f32 %v2755, 0.0
        %v2788 = vmax.f32 %v2756, 0.0
        %v2789 = vmax.f32 %v2757, 0.0
        %v2790 = vmax.f32 %v2758, 0.0
        %v2791 = vmax.f32 %v2759, 0.0
        %v2792 = vmax.f32 %v2760, 0.0
        %v2793 = vmax.f32 %v2761, 0.0
        %v2794 = vmax.f32 %v2762, 0.0
        %v2795 = vmax.f32 %v2763, 0.0
        %v2796 = vmax.f32 %v2764, 0.0
        %v2797 = vmax.f32 %v2765, 0.0
        %v2798 = vmax.f32 %v2766, 0.0
        %v2799 = vmax.f32 %v2767, 0.0
        %v2800 = vmax.f32 %v2768, 0.0
        %v2801 = vmax.f32 %v2769, 0.0
        %v2802 = vmax.f32 %v2770, 0.0
        %v2803 = vmax.f32 %v2771, 0.0
        %v2804 = vmax.f32 %v2772, 0.0
        %v2805 = vmax.f32 %v2773, 0.0
        %v2806 = vmax.f32 %v2774, 0.0
        %v2807 = vmax.f32 %v2775, 0.0
        %v2808 = vmax.f32 %v2776, 0.0
        %v2809 = vmax.f32 %v2777, 0.0
        %v2810 = vmax.f32 %v2778, 0.0
        %v2811 = vmax.f32 %v2779, 0.0
        %v2812 = vld [vmem:[%s5] sm:$0x1]
        %v2813 = vrot.slane %v2780, 7
        %v2814 = vrot.slane %v2781, 7
        %v2815 = vrot.slane %v2782, 7
        %v2816 = vrot.slane %v2783, 7
        %v2817 = vrot.slane %v2784, 7
        %v2818 = vrot.slane %v2785, 7
        %v2819 = vrot.slane %v2786, 7
        %v2820 = vrot.slane %v2787, 7
        %v2821 = vrot.slane %v2788, 7
        %v2822 = vrot.slane %v2789, 7
        %v2823 = vrot.slane %v2790, 7
        %v2824 = vrot.slane %v2791, 7
        %v2825 = vrot.slane %v2792, 7
        %v2826 = vrot.slane %v2793, 7
        %v2827 = vrot.slane %v2794, 7
        %v2828 = vrot.slane %v2795, 7
        %v2829 = vrot.slane %v2796, 7
        %v2830 = vrot.slane %v2797, 7
        %v2831 = vrot.slane %v2798, 7
        %v2832 = vrot.slane %v2799, 7
        %v2833 = vrot.slane %v2800, 7
        %v2834 = vrot.slane %v2801, 7
        %v2835 = vrot.slane %v2802, 7
        %v2836 = vrot.slane %v2803, 7
        %v2837 = vrot.slane %v2804, 7
        %v2838 = vrot.slane %v2805, 7
        %v2839 = vrot.slane %v2806, 7
        %v2840 = vrot.slane %v2807, 7
        %v2841 = vrot.slane %v2808, 7
        %v2842 = vrot.slane %v2809, 7
        %v2843 = vrot.slane %v2810, 7
        %v2844 = vrot.slane %v2811, 7
        %v2845 = vsel %vm634, %v2843, %v2844
        %v2846 = vsel %vm634, %v2842, %v2843
        %v2847 = vsel %vm634, %v2841, %v2842
        %v2848 = vsel %vm634, %v2840, %v2841
        %v2849 = vsel %vm634, %v2839, %v2840
        %v2850 = vsel %vm634, %v2838, %v2839
        %v2851 = vsel %vm634, %v2837, %v2838
        %v2852 = vsel %vm634, %v2836, %v2837
        %v2853 = vsel %vm634, %v2835, %v2836
        %v2854 = vsel %vm634, %v2834, %v2835
        %v2855 = vsel %vm634, %v2833, %v2834
        %v2856 = vsel %vm634, %v2832, %v2833
        %v2857 = vsel %vm634, %v2831, %v2832
        %v2858 = vsel %vm634, %v2830, %v2831
        %v2859 = vsel %vm634, %v2829, %v2830
        %v2860 = vsel %vm634, %v2828, %v2829
        %v2861 = vsel %vm634, %v2827, %v2828
        %v2862 = vsel %vm634, %v2826, %v2827
        %v2863 = vsel %vm634, %v2825, %v2826
        %v2864 = vsel %vm634, %v2824, %v2825
        %v2865 = vsel %vm634, %v2823, %v2824
        %v2866 = vsel %vm634, %v2822, %v2823
        %v2867 = vsel %vm634, %v2821, %v2822
        %v2868 = vsel %vm634, %v2820, %v2821
        %v2869 = vsel %vm634, %v2819, %v2820
        %v2870 = vsel %vm634, %v2818, %v2819
        %v2871 = vsel %vm634, %v2817, %v2818
        %v2872 = vsel %vm634, %v2816, %v2817
        %v2873 = vsel %vm634, %v2815, %v2816
        %v2874 = vsel %vm634, %v2814, %v2815
        %v2875 = vsel %vm634, %v2813, %v2814
        %v2876 = vsel %vm634, %v2844, %v2813
        %v2877 = vrot.slane %v2780, 1
        %v2878 = vrot.slane %v2781, 1
        %v2879 = vrot.slane %v2782, 1
        %v2880 = vrot.slane %v2783, 1
        %v2881 = vrot.slane %v2784, 1
        %v2882 = vrot.slane %v2785, 1
        %v2883 = vrot.slane %v2786, 1
        %v2884 = vrot.slane %v2787, 1
        %v2885 = vrot.slane %v2788, 1
        %v2886 = vrot.slane %v2789, 1
        %v2887 = vrot.slane %v2790, 1
        %v2888 = vrot.slane %v2791, 1
        %v2889 = vrot.slane %v2792, 1
        %v2890 = vrot.slane %v2793, 1
        %v2891 = vrot.slane %v2794, 1
        %v2892 = vrot.slane %v2795, 1
        %v2893 = vrot.slane %v2796, 1
        %v2894 = vrot.slane %v2797, 1
        %v2895 = vrot.slane %v2798, 1
        %v2896 = vrot.slane %v2799, 1
        %v2897 = vrot.slane %v2800, 1
        %v2898 = vrot.slane %v2801, 1
        %v2899 = vrot.slane %v2802, 1
        %v2900 = vrot.slane %v2803, 1
        %v2901 = vrot.slane %v2804, 1
        %v2902 = vrot.slane %v2805, 1
        %v2903 = vrot.slane %v2806, 1
        %v2904 = vrot.slane %v2807, 1
        %v2905 = vrot.slane %v2808, 1
        %v2906 = vrot.slane %v2809, 1
        %v2907 = vrot.slane %v2810, 1
        %v2908 = vrot.slane %v2811, 1
        %v2909 = vsel %vm699, %v2907, %v2908
        %v2910 = vsel %vm699, %v2906, %v2907
        %v2911 = vsel %vm699, %v2905, %v2906
        %v2912 = vsel %vm699, %v2904, %v2905
        %v2913 = vsel %vm699, %v2903, %v2904
        %v2914 = vsel %vm699, %v2902, %v2903
        %v2915 = vsel %vm699, %v2901, %v2902
        %v2916 = vsel %vm699, %v2900, %v2901
        %v2917 = vsel %vm699, %v2899, %v2900
        %v2918 = vsel %vm699, %v2898, %v2899
        %v2919 = vsel %vm699, %v2897, %v2898
        %v2920 = vsel %vm699, %v2896, %v2897
        %v2921 = vsel %vm699, %v2895, %v2896
        %v2922 = vsel %vm699, %v2894, %v2895
        %v2923 = vsel %vm699, %v2893, %v2894
        %v2924 = vsel %vm699, %v2892, %v2893
        %v2925 = vsel %vm699, %v2891, %v2892
        %v2926 = vsel %vm699, %v2890, %v2891
        %v2927 = vsel %vm699, %v2889, %v2890
        %v2928 = vsel %vm699, %v2888, %v2889
        %v2929 = vsel %vm699, %v2887, %v2888
        %v2930 = vsel %vm699, %v2886, %v2887
        %v2931 = vsel %vm699, %v2885, %v2886
        %v2932 = vsel %vm699, %v2884, %v2885
        %v2933 = vsel %vm699, %v2883, %v2884
        %v2934 = vsel %vm699, %v2882, %v2883
        %v2935 = vsel %vm699, %v2881, %v2882
        %v2936 = vsel %vm699, %v2880, %v2881
        %v2937 = vsel %vm699, %v2879, %v2880
        %v2938 = vsel %vm699, %v2878, %v2879
        %v2939 = vsel %vm699, %v2877, %v2878
        %v2940 = vsel %vm699, %v2908, %v2877
        %v2941 = vsel %vm533, %v2876, 0.0
        %v2942 = vsel %vm534, %v2875, 0.0
        %v2943 = vsel %vm533, %v2874, 0.0
        %v2944 = vsel %vm534, %v2873, 0.0
        %v2945 = vsel %vm533, %v2872, 0.0
        %v2946 = vsel %vm534, %v2871, 0.0
        %v2947 = vsel %vm533, %v2870, 0.0
        %v2948 = vsel %vm534, %v2869, 0.0
        %v2949 = vsel %vm533, %v2868, 0.0
        %v2950 = vsel %vm534, %v2867, 0.0
        %v2951 = vsel %vm533, %v2866, 0.0
        %v2952 = vsel %vm534, %v2865, 0.0
        %v2953 = vsel %vm533, %v2864, 0.0
        %v2954 = vsel %vm534, %v2863, 0.0
        %v2955 = vsel %vm533, %v2862, 0.0
        %v2956 = vsel %vm534, %v2861, 0.0
        %v2957 = vsel %vm533, %v2860, 0.0
        %v2958 = vsel %vm534, %v2859, 0.0
        %v2959 = vsel %vm533, %v2858, 0.0
        %v2960 = vsel %vm534, %v2857, 0.0
        %v2961 = vsel %vm533, %v2856, 0.0
        %v2962 = vsel %vm534, %v2855, 0.0
        %v2963 = vsel %vm533, %v2854, 0.0
        %v2964 = vsel %vm534, %v2853, 0.0
        %v2965 = vsel %vm533, %v2852, 0.0
        %v2966 = vsel %vm534, %v2851, 0.0
        %v2967 = vsel %vm533, %v2850, 0.0
        %v2968 = vsel %vm534, %v2849, 0.0
        %v2969 = vsel %vm533, %v2848, 0.0
        %v2970 = vsel %vm534, %v2847, 0.0
        %v2971 = vsel %vm533, %v2846, 0.0
        %v2972 = vsel %vm534, %v2845, 0.0
        %v2973 = vsel %vm535, %v2939, 0.0
        %v2974 = vsel %vm536, %v2938, 0.0
        %v2975 = vsel %vm535, %v2937, 0.0
        %v2976 = vsel %vm536, %v2936, 0.0
        %v2977 = vsel %vm535, %v2935, 0.0
        %v2978 = vsel %vm536, %v2934, 0.0
        %v2979 = vsel %vm535, %v2933, 0.0
        %v2980 = vsel %vm536, %v2932, 0.0
        %v2981 = vsel %vm535, %v2931, 0.0
        %v2982 = vsel %vm536, %v2930, 0.0
        %v2983 = vsel %vm535, %v2929, 0.0
        %v2984 = vsel %vm536, %v2928, 0.0
        %v2985 = vsel %vm535, %v2927, 0.0
        %v2986 = vsel %vm536, %v2926, 0.0
        %v2987 = vsel %vm535, %v2925, 0.0
        %v2988 = vsel %vm536, %v2924, 0.0
        %v2989 = vsel %vm535, %v2923, 0.0
        %v2990 = vsel %vm536, %v2922, 0.0
        %v2991 = vsel %vm535, %v2921, 0.0
        %v2992 = vsel %vm536, %v2920, 0.0
        %v2993 = vsel %vm535, %v2919, 0.0
        %v2994 = vsel %vm536, %v2918, 0.0
        %v2995 = vsel %vm535, %v2917, 0.0
        %v2996 = vsel %vm536, %v2916, 0.0
        %v2997 = vsel %vm535, %v2915, 0.0
        %v2998 = vsel %vm536, %v2914, 0.0
        %v2999 = vsel %vm535, %v2913, 0.0
        %v3000 = vsel %vm536, %v2912, 0.0
        %v3001 = vsel %vm535, %v2911, 0.0
        %v3002 = vsel %vm536, %v2910, 0.0
        %v3003 = vsel %vm535, %v2909, 0.0
        %v3004 = vsel %vm536, %v2940, 0.0
        %3005 = vst [vmem:[%s796] sm:$0xff] %v2941
        %3006 = vst [vmem:[%s796 + $0x8] sm:$0xff] %v2780
        %3007 = vst [vmem:[%s796 + $0x10] sm:$0xff] %v2973
        %3008 = vst [vmem:[%s796 + $0x18] sm:$0xff] %v2942
        %3009 = vst [vmem:[%s796 + $0x20] sm:$0xff] %v2781
        %3010 = vst [vmem:[%s796 + $0x28] sm:$0xff] %v2974
        %3011 = vst [vmem:[%s796 + $0x30] sm:$0xff] %v2943
        %3012 = vst [vmem:[%s796 + $0x38] sm:$0xff] %v2782
        %3013 = vst [vmem:[%s796 + $0x40] sm:$0xff] %v2975
        %3014 = vst [vmem:[%s796 + $0x48] sm:$0xff] %v2944
        %3015 = vst [vmem:[%s796 + $0x50] sm:$0xff] %v2783
        %3016 = vst [vmem:[%s796 + $0x58] sm:$0xff] %v2976
        %3017 = vst [vmem:[%s796 + $0x60] sm:$0xff] %v2945
        %3018 = vst [vmem:[%s796 + $0x68] sm:$0xff] %v2784
        %3019 = vst [vmem:[%s796 + $0x70] sm:$0xff] %v2977
        %3020 = vst [vmem:[%s796 + $0x78] sm:$0xff] %v2946
        %3021 = vst [vmem:[%s796 + $0x80] sm:$0xff] %v2785
        %3022 = vst [vmem:[%s796 + $0x88] sm:$0xff] %v2978
        %3023 = vst [vmem:[%s796 + $0x90] sm:$0xff] %v2947
        %3024 = vst [vmem:[%s796 + $0x98] sm:$0xff] %v2786
        %3025 = vst [vmem:[%s796 + $0xa0] sm:$0xff] %v2979
        %3026 = vst [vmem:[%s796 + $0xa8] sm:$0xff] %v2948
        %3027 = vst [vmem:[%s796 + $0xb0] sm:$0xff] %v2787
        %3028 = vst [vmem:[%s796 + $0xb8] sm:$0xff] %v2980
        %3029 = vst [vmem:[%s796 + $0xc0] sm:$0xff] %v2949
        %3030 = vst [vmem:[%s796 + $0xc8] sm:$0xff] %v2788
        %3031 = vst [vmem:[%s796 + $0xd0] sm:$0xff] %v2981
        %3032 = vst [vmem:[%s796 + $0xd8] sm:$0xff] %v2950
        %3033 = vst [vmem:[%s796 + $0xe0] sm:$0xff] %v2789
        %3034 = vst [vmem:[%s796 + $0xe8] sm:$0xff] %v2982
        %3035 = vst [vmem:[%s796 + $0xf0] sm:$0xff] %v2951
        %3036 = vst [vmem:[%s796 + $0xf8] sm:$0xff] %v2790
        %3037 = vst [vmem:[%s796 + $0x100] sm:$0xff] %v2983
        %3038 = vst [vmem:[%s796 + $0x108] sm:$0xff] %v2952
        %3039 = vst [vmem:[%s796 + $0x110] sm:$0xff] %v2791
        %3040 = vst [vmem:[%s796 + $0x118] sm:$0xff] %v2984
        %3041 = vst [vmem:[%s796 + $0x120] sm:$0xff] %v2953
        %3042 = vst [vmem:[%s796 + $0x128] sm:$0xff] %v2792
        %3043 = vst [vmem:[%s796 + $0x130] sm:$0xff] %v2985
        %3044 = vst [vmem:[%s796 + $0x138] sm:$0xff] %v2954
        %3045 = vst [vmem:[%s796 + $0x140] sm:$0xff] %v2793
        %3046 = vst [vmem:[%s796 + $0x148] sm:$0xff] %v2986
        %3047 = vst [vmem:[%s796 + $0x150] sm:$0xff] %v2955
        %3048 = vst [vmem:[%s796 + $0x158] sm:$0xff] %v2794
        %3049 = vst [vmem:[%s796 + $0x160] sm:$0xff] %v2987
        %3050 = vst [vmem:[%s796 + $0x168] sm:$0xff] %v2956
        %3051 = vst [vmem:[%s796 + $0x170] sm:$0xff] %v2795
        %3052 = vst [vmem:[%s796 + $0x178] sm:$0xff] %v2988
        %3053 = vst [vmem:[%s796 + $0x180] sm:$0xff] %v2957
        %3054 = vst [vmem:[%s796 + $0x188] sm:$0xff] %v2796
        %3055 = vst [vmem:[%s796 + $0x190] sm:$0xff] %v2989
        %3056 = vst [vmem:[%s796 + $0x198] sm:$0xff] %v2958
        %3057 = vst [vmem:[%s796 + $0x1a0] sm:$0xff] %v2797
        %3058 = vst [vmem:[%s796 + $0x1a8] sm:$0xff] %v2990
        %3059 = vst [vmem:[%s796 + $0x1b0] sm:$0xff] %v2959
        %3060 = vst [vmem:[%s796 + $0x1b8] sm:$0xff] %v2798
        %3061 = vst [vmem:[%s796 + $0x1c0] sm:$0xff] %v2991
        %3062 = vst [vmem:[%s796 + $0x1c8] sm:$0xff] %v2960
        %3063 = vst [vmem:[%s796 + $0x1d0] sm:$0xff] %v2799
        %3064 = vst [vmem:[%s796 + $0x1d8] sm:$0xff] %v2992
        %3065 = vst [vmem:[%s796 + $0x1e0] sm:$0xff] %v2961
        %3066 = vst [vmem:[%s796 + $0x1e8] sm:$0xff] %v2800
        %3067 = vst [vmem:[%s796 + $0x1f0] sm:$0xff] %v2993
        %3068 = vst [vmem:[%s796 + $0x1f8] sm:$0xff] %v2962
        %3069 = vst [vmem:[%s796 + $0x200] sm:$0xff] %v2801
        %3070 = vst [vmem:[%s796 + $0x208] sm:$0xff] %v2994
        %3071 = vst [vmem:[%s796 + $0x210] sm:$0xff] %v2963
        %3072 = vst [vmem:[%s796 + $0x218] sm:$0xff] %v2802
        %3073 = vst [vmem:[%s796 + $0x220] sm:$0xff] %v2995
        %3074 = vst [vmem:[%s796 + $0x228] sm:$0xff] %v2964
        %3075 = vst [vmem:[%s796 + $0x230] sm:$0xff] %v2803
        %3076 = vst [vmem:[%s796 + $0x238] sm:$0xff] %v2996
        %3077 = vst [vmem:[%s796 + $0x240] sm:$0xff] %v2965
        %3078 = vst [vmem:[%s796 + $0x248] sm:$0xff] %v2804
        %3079 = vst [vmem:[%s796 + $0x250] sm:$0xff] %v2997
        %3080 = vst [vmem:[%s796 + $0x258] sm:$0xff] %v2966
        %3081 = vst [vmem:[%s796 + $0x260] sm:$0xff] %v2805
        %3082 = vst [vmem:[%s796 + $0x268] sm:$0xff] %v2998
        %3083 = vst [vmem:[%s796 + $0x270] sm:$0xff] %v2967
        %3084 = vst [vmem:[%s796 + $0x278] sm:$0xff] %v2806
        %3085 = vst [vmem:[%s796 + $0x280] sm:$0xff] %v2999
        %3086 = vst [vmem:[%s796 + $0x288] sm:$0xff] %v2968
        %3087 = vst [vmem:[%s796 + $0x290] sm:$0xff] %v2807
        %3088 = vst [vmem:[%s796 + $0x298] sm:$0xff] %v3000
        %3089 = vst [vmem:[%s796 + $0x2a0] sm:$0xff] %v2969
        %3090 = vst [vmem:[%s796 + $0x2a8] sm:$0xff] %v2808
        %3091 = vst [vmem:[%s796 + $0x2b0] sm:$0xff] %v3001
        %3092 = vst [vmem:[%s796 + $0x2b8] sm:$0xff] %v2970
        %3093 = vst [vmem:[%s796 + $0x2c0] sm:$0xff] %v2809
        %3094 = vst [vmem:[%s796 + $0x2c8] sm:$0xff] %v3002
        %3095 = vst [vmem:[%s796 + $0x2d0] sm:$0xff] %v2971
        %3096 = vst [vmem:[%s796 + $0x2d8] sm:$0xff] %v2810
        %3097 = vst [vmem:[%s796 + $0x2e0] sm:$0xff] %v3003
        %3098 = vst [vmem:[%s796 + $0x2e8] sm:$0xff] %v2972
        %3099 = vst [vmem:[%s796 + $0x2f0] sm:$0xff] %v2811
        %3100 = vst [vmem:[%s796 + $0x2f8] sm:$0xff] %v3004
        %v3101 = vld [vmem:[#allocation2] sm:$0xff]
        %v3102 = vld [vmem:[#allocation2 + $0x8] sm:$0xff]
        %v3103 = vld [vmem:[#allocation2 + $0x10] sm:$0xff]
        %v3104 = vld [vmem:[#allocation2 + $0x18] sm:$0xff]
        %v3105 = vld [vmem:[#allocation2 + $0x20] sm:$0xff]
        %v3106 = vld [vmem:[#allocation2 + $0x28] sm:$0xff]
        %v3107 = vld [vmem:[#allocation2 + $0x30] sm:$0xff]
        %v3108 = vld [vmem:[#allocation2 + $0x38] sm:$0xff]
        %v3109 = vld [vmem:[#allocation2 + $0x40] sm:$0xff]
        %v3110 = vld [vmem:[#allocation2 + $0x48] sm:$0xff]
        %v3111 = vld [vmem:[#allocation2 + $0x50] sm:$0xff]
        %v3112 = vld [vmem:[#allocation2 + $0x58] sm:$0xff]
        %v3113 = vld [vmem:[#allocation2 + $0x60] sm:$0xff]
        %v3114 = vld [vmem:[#allocation2 + $0x68] sm:$0xff]
        %v3115 = vld [vmem:[#allocation2 + $0x70] sm:$0xff]
        %v3116 = vld [vmem:[#allocation2 + $0x78] sm:$0xff]
        %v3117 = vld [vmem:[#allocation2 + $0x80] sm:$0xff]
        %v3118 = vld [vmem:[#allocation2 + $0x88] sm:$0xff]
        %v3119 = vld [vmem:[#allocation2 + $0x90] sm:$0xff]
        %v3120 = vld [vmem:[#allocation2 + $0x98] sm:$0xff]
        %v3121 = vld [vmem:[#allocation2 + $0xa0] sm:$0xff]
        %v3122 = vld [vmem:[#allocation2 + $0xa8] sm:$0xff]
        %v3123 = vld [vmem:[#allocation2 + $0xb0] sm:$0xff]
        %v3124 = vld [vmem:[#allocation2 + $0xb8] sm:$0xff]
        %v3125 = vld [vmem:[#allocation2 + $0xc0] sm:$0xff]
        %v3126 = vld [vmem:[#allocation2 + $0xc8] sm:$0xff]
        %v3127 = vld [vmem:[#allocation2 + $0xd0] sm:$0xff]
        %v3128 = vld [vmem:[#allocation2 + $0xd8] sm:$0xff]
        %v3129 = vld [vmem:[#allocation2 + $0xe0] sm:$0xff]
        %v3130 = vld [vmem:[#allocation2 + $0xe8] sm:$0xff]
        %v3131 = vld [vmem:[#allocation2 + $0xf0] sm:$0xff]
        %v3132 = vld [vmem:[#allocation2 + $0xf8] sm:$0xff]
        %v3133 = vld [vmem:[#allocation2 + $0x100] sm:$0xff]
        %v3134 = vld [vmem:[#allocation2 + $0x108] sm:$0xff]
        %v3135 = vld [vmem:[#allocation2 + $0x110] sm:$0xff]
        %v3136 = vld [vmem:[#allocation2 + $0x118] sm:$0xff]
        %v3137 = vld [vmem:[#allocation2 + $0x120] sm:$0xff]
        %v3138 = vld [vmem:[#allocation2 + $0x128] sm:$0xff]
        %v3139 = vld [vmem:[#allocation2 + $0x130] sm:$0xff]
        %v3140 = vld [vmem:[#allocation2 + $0x138] sm:$0xff]
        %v3141 = vld [vmem:[#allocation2 + $0x140] sm:$0xff]
        %v3142 = vld [vmem:[#allocation2 + $0x148] sm:$0xff]
        %v3143 = vld [vmem:[#allocation2 + $0x150] sm:$0xff]
        %v3144 = vld [vmem:[#allocation2 + $0x158] sm:$0xff]
        %v3145 = vld [vmem:[#allocation2 + $0x160] sm:$0xff]
        %v3146 = vld [vmem:[#allocation2 + $0x168] sm:$0xff]
        %v3147 = vld [vmem:[#allocation2 + $0x170] sm:$0xff]
        %v3148 = vld [vmem:[#allocation2 + $0x178] sm:$0xff]
        %v3149 = vld [vmem:[#allocation2 + $0x180] sm:$0xff]
        %v3150 = vld [vmem:[#allocation2 + $0x188] sm:$0xff]
        %v3151 = vld [vmem:[#allocation2 + $0x190] sm:$0xff]
        %v3152 = vld [vmem:[#allocation2 + $0x198] sm:$0xff]
        %v3153 = vld [vmem:[#allocation2 + $0x1a0] sm:$0xff]
        %v3154 = vld [vmem:[#allocation2 + $0x1a8] sm:$0xff]
        %v3155 = vld [vmem:[#allocation2 + $0x1b0] sm:$0xff]
        %v3156 = vld [vmem:[#allocation2 + $0x1b8] sm:$0xff]
        %v3157 = vld [vmem:[#allocation2 + $0x1c0] sm:$0xff]
        %v3158 = vld [vmem:[#allocation2 + $0x1c8] sm:$0xff]
        %v3159 = vld [vmem:[#allocation2 + $0x1d0] sm:$0xff]
        %v3160 = vld [vmem:[#allocation2 + $0x1d8] sm:$0xff]
        %v3161 = vld [vmem:[#allocation2 + $0x1e0] sm:$0xff]
        %v3162 = vld [vmem:[#allocation2 + $0x1e8] sm:$0xff]
        %v3163 = vld [vmem:[#allocation2 + $0x1f0] sm:$0xff]
        %v3164 = vld [vmem:[#allocation2 + $0x1f8] sm:$0xff]
        %v3165 = vld [vmem:[#allocation2 + $0x200] sm:$0xff]
        %v3166 = vld [vmem:[#allocation2 + $0x208] sm:$0xff]
        %v3167 = vld [vmem:[#allocation2 + $0x210] sm:$0xff]
        %v3168 = vld [vmem:[#allocation2 + $0x218] sm:$0xff]
        %v3169 = vld [vmem:[#allocation2 + $0x220] sm:$0xff]
        %v3170 = vld [vmem:[#allocation2 + $0x228] sm:$0xff]
        %v3171 = vld [vmem:[#allocation2 + $0x230] sm:$0xff]
        %v3172 = vld [vmem:[#allocation2 + $0x238] sm:$0xff]
        %v3173 = vld [vmem:[#allocation2 + $0x240] sm:$0xff]
        %v3174 = vld [vmem:[#allocation2 + $0x248] sm:$0xff]
        %v3175 = vld [vmem:[#allocation2 + $0x250] sm:$0xff]
        %v3176 = vld [vmem:[#allocation2 + $0x258] sm:$0xff]
        %v3177 = vld [vmem:[#allocation2 + $0x260] sm:$0xff]
        %v3178 = vld [vmem:[#allocation2 + $0x268] sm:$0xff]
        %v3179 = vld [vmem:[#allocation2 + $0x270] sm:$0xff]
        %v3180 = vld [vmem:[#allocation2 + $0x278] sm:$0xff]
        %v3181 = vld [vmem:[#allocation2 + $0x280] sm:$0xff]
        %v3182 = vld [vmem:[#allocation2 + $0x288] sm:$0xff]
        %v3183 = vld [vmem:[#allocation2 + $0x290] sm:$0xff]
        %v3184 = vld [vmem:[#allocation2 + $0x298] sm:$0xff]
        %v3185 = vld [vmem:[#allocation2 + $0x2a0] sm:$0xff]
        %v3186 = vld [vmem:[#allocation2 + $0x2a8] sm:$0xff]
        %v3187 = vld [vmem:[#allocation2 + $0x2b0] sm:$0xff]
        %v3188 = vld [vmem:[#allocation2 + $0x2b8] sm:$0xff]
        %v3189 = vld [vmem:[#allocation2 + $0x2c0] sm:$0xff]
        %v3190 = vld [vmem:[#allocation2 + $0x2c8] sm:$0xff]
        %v3191 = vld [vmem:[#allocation2 + $0x2d0] sm:$0xff]
        %v3192 = vld [vmem:[#allocation2 + $0x2d8] sm:$0xff]
        %v3193 = vld [vmem:[#allocation2 + $0x2e0] sm:$0xff]
        %v3194 = vld [vmem:[#allocation2 + $0x2e8] sm:$0xff]
        %v3195 = vld [vmem:[#allocation2 + $0x2f0] sm:$0xff]
        %v3196 = vld [vmem:[#allocation2 + $0x2f8] sm:$0xff]
        %v3197 = vld [vmem:[#allocation9] sm:$0xff]
        %v3198 = vld [vmem:[#allocation9 + $0x8] sm:$0xff]
        %v3199 = vld [vmem:[#allocation9 + $0x10] sm:$0xff]
        %v3200 = vld [vmem:[#allocation9 + $0x18] sm:$0xff]
        %v3201 = vld [vmem:[#allocation9 + $0x20] sm:$0xff]
        %v3202 = vld [vmem:[#allocation9 + $0x28] sm:$0xff]
        %v3203 = vld [vmem:[#allocation9 + $0x30] sm:$0xff]
        %v3204 = vld [vmem:[#allocation9 + $0x38] sm:$0xff]
        %v3205 = vld [vmem:[#allocation9 + $0x40] sm:$0xff]
        %v3206 = vld [vmem:[#allocation9 + $0x48] sm:$0xff]
        %v3207 = vld [vmem:[#allocation9 + $0x50] sm:$0xff]
        %v3208 = vld [vmem:[#allocation9 + $0x58] sm:$0xff]
        %v3209 = vld [vmem:[#allocation9 + $0x60] sm:$0xff]
        %v3210 = vld [vmem:[#allocation9 + $0x68] sm:$0xff]
        %v3211 = vld [vmem:[#allocation9 + $0x70] sm:$0xff]
        %v3212 = vld [vmem:[#allocation9 + $0x78] sm:$0xff]
        %v3213 = vld [vmem:[#allocation9 + $0x80] sm:$0xff]
        %v3214 = vld [vmem:[#allocation9 + $0x88] sm:$0xff]
        %v3215 = vld [vmem:[#allocation9 + $0x90] sm:$0xff]
        %v3216 = vld [vmem:[#allocation9 + $0x98] sm:$0xff]
        %v3217 = vld [vmem:[#allocation9 + $0xa0] sm:$0xff]
        %v3218 = vld [vmem:[#allocation9 + $0xa8] sm:$0xff]
        %v3219 = vld [vmem:[#allocation9 + $0xb0] sm:$0xff]
        %v3220 = vld [vmem:[#allocation9 + $0xb8] sm:$0xff]
        %v3221 = vld [vmem:[#allocation9 + $0xc0] sm:$0xff]
        %v3222 = vld [vmem:[#allocation9 + $0xc8] sm:$0xff]
        %v3223 = vld [vmem:[#allocation9 + $0xd0] sm:$0xff]
        %v3224 = vld [vmem:[#allocation9 + $0xd8] sm:$0xff]
        %v3225 = vld [vmem:[#allocation9 + $0xe0] sm:$0xff]
        %v3226 = vld [vmem:[#allocation9 + $0xe8] sm:$0xff]
        %v3227 = vld [vmem:[#allocation9 + $0xf0] sm:$0xff]
        %v3228 = vld [vmem:[#allocation9 + $0xf8] sm:$0xff]
        %v3229 = vld [vmem:[#allocation9 + $0x100] sm:$0xff]
        %v3230 = vld [vmem:[#allocation9 + $0x108] sm:$0xff]
        %v3231 = vld [vmem:[#allocation9 + $0x110] sm:$0xff]
        %v3232 = vld [vmem:[#allocation9 + $0x118] sm:$0xff]
        %v3233 = vld [vmem:[#allocation9 + $0x120] sm:$0xff]
        %v3234 = vld [vmem:[#allocation9 + $0x128] sm:$0xff]
        %v3235 = vld [vmem:[#allocation9 + $0x130] sm:$0xff]
        %v3236 = vld [vmem:[#allocation9 + $0x138] sm:$0xff]
        %v3237 = vld [vmem:[#allocation9 + $0x140] sm:$0xff]
        %v3238 = vld [vmem:[#allocation9 + $0x148] sm:$0xff]
        %v3239 = vld [vmem:[#allocation9 + $0x150] sm:$0xff]
        %v3240 = vld [vmem:[#allocation9 + $0x158] sm:$0xff]
        %v3241 = vld [vmem:[#allocation9 + $0x160] sm:$0xff]
        %v3242 = vld [vmem:[#allocation9 + $0x168] sm:$0xff]
        %v3243 = vld [vmem:[#allocation9 + $0x170] sm:$0xff]
        %v3244 = vld [vmem:[#allocation9 + $0x178] sm:$0xff]
        %3245 = vmatprep.subr.mxu0 0.0
        %3246 = vmatpush1.msra.mxu0 %v3197
        %3247 = vmatprep.subr.mxu0 0.0
        %3248 = vmatpush1.msra.mxu0 %v3198
        %3249 = vmatprep.subr.mxu0 0.0
        %3250 = vmatpush1.msra.mxu0 %v3199
        %3251 = vmatprep.subr.mxu0 0.0
        %3252 = vmatpush1.msra.mxu0 %v3200
        %3253 = vmatprep.subr.mxu0 0.0
        %3254 = vmatpush1.msra.mxu0 %v3201
        %3255 = vmatprep.subr.mxu0 0.0
        %3256 = vmatpush1.msra.mxu0 %v3202
        %3257 = vmatprep.subr.mxu0 0.0
        %3258 = vmatpush1.msra.mxu0 %v3203
        %3259 = vmatprep.subr.mxu0 0.0
        %3260 = vmatpush1.msra.mxu0 %v3204
        %3261 = vmatprep.subr.mxu0 0.0
        %3262 = vmatpush1.msra.mxu0 %v3205
        %3263 = vmatprep.subr.mxu0 0.0
        %3264 = vmatpush1.msra.mxu0 %v3206
        %3265 = vmatprep.subr.mxu0 0.0
        %3266 = vmatpush1.msra.mxu0 %v3207
        %3267 = vmatprep.subr.mxu0 0.0
        %3268 = vmatpush1.msra.mxu0 %v3208
        %3269 = vmatprep.subr.mxu0 0.0
        %3270 = vmatpush1.msra.mxu0 %v3209
        %3271 = vmatprep.subr.mxu0 0.0
        %3272 = vmatpush1.msra.mxu0 %v3210
        %3273 = vmatprep.subr.mxu0 0.0
        %3274 = vmatpush1.msra.mxu0 %v3211
        %3275 = vmatprep.subr.mxu0 0.0
        %3276 = vmatpush1.msra.mxu0 %v3212
        %3277 = vmatprep.subr.mxu0 0.0
        %3278 = vmatpush1.msra.mxu0 %v3213
        %3279 = vmatprep.subr.mxu0 0.0
        %3280 = vmatpush1.msra.mxu0 %v3214
        %3281 = vmatprep.subr.mxu0 0.0
        %3282 = vmatpush1.msra.mxu0 %v3215
        %3283 = vmatprep.subr.mxu0 0.0
        %3284 = vmatpush1.msra.mxu0 %v3216
        %3285 = vmatprep.subr.mxu0 0.0
        %3286 = vmatpush1.msra.mxu0 %v3217
        %3287 = vmatprep.subr.mxu0 0.0
        %3288 = vmatpush1.msra.mxu0 %v3218
        %3289 = vmatprep.subr.mxu0 0.0
        %3290 = vmatpush1.msra.mxu0 %v3219
        %3291 = vmatprep.subr.mxu0 0.0
        %3292 = vmatpush1.msra.mxu0 %v3220
        %3293 = vmatprep.subr.mxu0 0.0
        %3294 = vmatpush1.msra.mxu0 %v3221
        %3295 = vmatprep.subr.mxu0 0.0
        %3296 = vmatpush1.msra.mxu0 %v3222
        %3297 = vmatprep.subr.mxu0 0.0
        %3298 = vmatpush1.msra.mxu0 %v3223
        %3299 = vmatprep.subr.mxu0 0.0
        %3300 = vmatpush1.msra.mxu0 %v3224
        %3301 = vmatprep.subr.mxu0 0.0
        %3302 = vmatpush1.msra.mxu0 %v3225
        %3303 = vmatprep.subr.mxu0 0.0
        %3304 = vmatpush1.msra.mxu0 %v3226
        %3305 = vmatprep.subr.mxu0 0.0
        %3306 = vmatpush1.msra.mxu0 %v3227
        %3307 = vmatprep.subr.mxu0 0.0
        %3308 = vmatpush1.msra.mxu0 %v3228
        %3309 = vmatprep.mubr.f32.mxu0 %v3102
        %3310 = vmatmul.mubr.f32.gmra.mrb[0].mxu0 %v3101
        %v3311 = vpop.f32.mrb[0].mxu0
        %v3312 = vadd.f32 0.0, %v3311
        %v3313 = vpop.f32.mrb[0].mxu0
        %3314 = vmatprep.mubr.f32.mxu0 %v3105
        %3315 = vmatmul.mubr.f32.gmra.mrb[0].mxu0 %v3104
        %v3316 = vpop.f32.mrb[0].mxu0
        %v3317 = vadd.f32 0.0, %v3316
        %v3318 = vpop.f32.mrb[0].mxu0
        %3319 = vmatprep.mubr.f32.mxu0 %v3108
        %3320 = vmatmul.mubr.f32.gmra.mrb[0].mxu0 %v3107
        %v3321 = vpop.f32.mrb[0].mxu0
        %v3322 = vadd.f32 0.0, %v3321
        %v3323 = vpop.f32.mrb[0].mxu0
        %3324 = vmatprep.mubr.f32.mxu0 %v3111
        %3325 = vmatmul.mubr.f32.gmra.mrb[0].mxu0 %v3110
        %v3326 = vpop.f32.mrb[0].mxu0
        %v3327 = vadd.f32 0.0, %v3326
        %v3328 = vpop.f32.mrb[0].mxu0
        %3329 = vmatprep.mubr.f32.mxu0 %v3114
        %3330 = vmatmul.mubr.f32.gmra.mrb[0].mxu0 %v3113
        %v3331 = vpop.f32.mrb[0].mxu0
        %v3332 = vadd.f32 0.0, %v3331
        %v3333 = vpop.f32.mrb[0].mxu0
        %3334 = vmatprep.mubr.f32.mxu0 %v3117
        %3335 = vmatmul.mubr.f32.gmra.mrb[0].mxu0 %v3116
        %v3336 = vpop.f32.mrb[0].mxu0
        %v3337 = vadd.f32 0.0, %v3336
        %v3338 = vpop.f32.mrb[0].mxu0
        %3339 = vmatprep.mubr.f32.mxu0 %v3120
        %3340 = vmatmul.mubr.f32.gmra.mrb[0].mxu0 %v3119
        %v3341 = vpop.f32.mrb[0].mxu0
        %v3342 = vadd.f32 0.0, %v3341
        %v3343 = vpop.f32.mrb[0].mxu0
        %3344 = vmatprep.mubr.f32.mxu0 %v3123
        %3345 = vmatmul.mubr.f32.gmra.mrb[0].mxu0 %v3122
        %v3346 = vpop.f32.mrb[0].mxu0
        %v3347 = vadd.f32 0.0, %v3346
        %v3348 = vpop.f32.mrb[0].mxu0
        %3349 = vmatprep.mubr.f32.mxu0 %v3126
        %3350 = vmatmul.mubr.f32.gmra.mrb[0].mxu0 %v3125
        %v3351 = vpop.f32.mrb[0].mxu0
        %v3352 = vadd.f32 0.0, %v3351
        %v3353 = vpop.f32.mrb[0].mxu0
        %3354 = vmatprep.mubr.f32.mxu0 %v3129
        %3355 = vmatmul.mubr.f32.gmra.mrb[0].mxu0 %v3128
        %v3356 = vpop.f32.mrb[0].mxu0
        %v3357 = vadd.f32 0.0, %v3356
        %v3358 = vpop.f32.mrb[0].mxu0
        %3359 = vmatprep.mubr.f32.mxu0 %v3132
        %3360 = vmatmul.mubr.f32.gmra.mrb[0].mxu0 %v3131
        %v3361 = vpop.f32.mrb[0].mxu0
        %v3362 = vadd.f32 0.0, %v3361
        %v3363 = vpop.f32.mrb[0].mxu0
        %3364 = vmatprep.mubr.f32.mxu0 %v3135
        %3365 = vmatmul.mubr.f32.gmra.mrb[0].mxu0 %v3134
        %v3366 = vpop.f32.mrb[0].mxu0
        %v3367 = vadd.f32 0.0, %v3366
        %v3368 = vpop.f32.mrb[0].mxu0
        %3369 = vmatprep.mubr.f32.mxu0 %v3138
        %3370 = vmatmul.mubr.f32.gmra.mrb[0].mxu0 %v3137
        %v3371 = vpop.f32.mrb[0].mxu0
        %v3372 = vadd.f32 0.0, %v3371
        %v3373 = vpop.f32.mrb[0].mxu0
        %3374 = vmatprep.mubr.f32.mxu0 %v3141
        %3375 = vmatmul.mubr.f32.gmra.mrb[0].mxu0 %v3140
        %v3376 = vpop.f32.mrb[0].mxu0
        %v3377 = vadd.f32 0.0, %v3376
        %v3378 = vpop.f32.mrb[0].mxu0
        %3379 = vmatprep.mubr.f32.mxu0 %v3144
        %3380 = vmatmul.mubr.f32.gmra.mrb[0].mxu0 %v3143
        %v3381 = vpop.f32.mrb[0].mxu0
        %v3382 = vadd.f32 0.0, %v3381
        %v3383 = vpop.f32.mrb[0].mxu0
        %3384 = vmatprep.mubr.f32.mxu0 %v3147
        %3385 = vmatmul.mubr.f32.gmra.mrb[0].mxu0 %v3146
        %v3386 = vpop.f32.mrb[0].mxu0
        %v3387 = vadd.f32 0.0, %v3386
        %v3388 = vpop.f32.mrb[0].mxu0
        %3389 = vmatprep.mubr.f32.mxu0 %v3150
        %3390 = vmatmul.mubr.f32.gmra.mrb[0].mxu0 %v3149
        %v3391 = vpop.f32.mrb[0].mxu0
        %v3392 = vadd.f32 0.0, %v3391
        %v3393 = vpop.f32.mrb[0].mxu0
        %3394 = vmatprep.mubr.f32.mxu0 %v3153
        %3395 = vmatmul.mubr.f32.gmra.mrb[0].mxu0 %v3152
        %v3396 = vpop.f32.mrb[0].mxu0
        %v3397 = vadd.f32 0.0, %v3396
        %v3398 = vpop.f32.mrb[0].mxu0
        %3399 = vmatprep.mubr.f32.mxu0 %v3156
        %3400 = vmatmul.mubr.f32.gmra.mrb[0].mxu0 %v3155
        %v3401 = vpop.f32.mrb[0].mxu0
        %v3402 = vadd.f32 0.0, %v3401
        %v3403 = vpop.f32.mrb[0].mxu0
        %3404 = vmatprep.mubr.f32.mxu0 %v3159
        %3405 = vmatmul.mubr.f32.gmra.mrb[0].mxu0 %v3158
        %v3406 = vpop.f32.mrb[0].mxu0
        %v3407 = vadd.f32 0.0, %v3406
        %v3408 = vpop.f32.mrb[0].mxu0
        %3409 = vmatprep.mubr.f32.mxu0 %v3162
        %3410 = vmatmul.mubr.f32.gmra.mrb[0].mxu0 %v3161
        %v3411 = vpop.f32.mrb[0].mxu0
        %v3412 = vadd.f32 0.0, %v3411
        %v3413 = vpop.f32.mrb[0].mxu0
        %3414 = vmatprep.mubr.f32.mxu0 %v3165
        %3415 = vmatmul.mubr.f32.gmra.mrb[0].mxu0 %v3164
        %v3416 = vpop.f32.mrb[0].mxu0
        %v3417 = vadd.f32 0.0, %v3416
        %v3418 = vpop.f32.mrb[0].mxu0
        %3419 = vmatprep.mubr.f32.mxu0 %v3168
        %3420 = vmatmul.mubr.f32.gmra.mrb[0].mxu0 %v3167
        %v3421 = vpop.f32.mrb[0].mxu0
        %v3422 = vadd.f32 0.0, %v3421
        %v3423 = vpop.f32.mrb[0].mxu0
        %3424 = vmatprep.mubr.f32.mxu0 %v3171
        %3425 = vmatmul.mubr.f32.gmra.mrb[0].mxu0 %v3170
        %v3426 = vpop.f32.mrb[0].mxu0
        %v3427 = vadd.f32 0.0, %v3426
        %v3428 = vpop.f32.mrb[0].mxu0
        %3429 = vmatprep.mubr.f32.mxu0 %v3174
        %3430 = vmatmul.mubr.f32.gmra.mrb[0].mxu0 %v3173
        %v3431 = vpop.f32.mrb[0].mxu0
        %v3432 = vadd.f32 0.0, %v3431
        %v3433 = vpop.f32.mrb[0].mxu0
        %3434 = vmatprep.mubr.f32.mxu0 %v3177
        %3435 = vmatmul.mubr.f32.gmra.mrb[0].mxu0 %v3176
        %v3436 = vpop.f32.mrb[0].mxu0
        %v3437 = vadd.f32 0.0, %v3436
        %v3438 = vpop.f32.mrb[0].mxu0
        %3439 = vmatprep.mubr.f32.mxu0 %v3180
        %3440 = vmatmul.mubr.f32.gmra.mrb[0].mxu0 %v3179
        %v3441 = vpop.f32.mrb[0].mxu0
        %v3442 = vadd.f32 0.0, %v3441
        %v3443 = vpop.f32.mrb[0].mxu0
        %3444 = vmatprep.mubr.f32.mxu0 %v3183
        %3445 = vmatmul.mubr.f32.gmra.mrb[0].mxu0 %v3182
        %v3446 = vpop.f32.mrb[0].mxu0
        %v3447 = vadd.f32 0.0, %v3446
        %v3448 = vpop.f32.mrb[0].mxu0
        %3449 = vmatprep.mubr.f32.mxu0 %v3186
        %3450 = vmatmul.mubr.f32.gmra.mrb[0].mxu0 %v3185
        %v3451 = vpop.f32.mrb[0].mxu0
        %v3452 = vadd.f32 0.0, %v3451
        %v3453 = vpop.f32.mrb[0].mxu0
        %3454 = vmatprep.mubr.f32.mxu0 %v3189
        %3455 = vmatmul.mubr.f32.gmra.mrb[0].mxu0 %v3188
        %v3456 = vpop.f32.mrb[0].mxu0
        %v3457 = vadd.f32 0.0, %v3456
        %v3458 = vpop.f32.mrb[0].mxu0
        %3459 = vmatprep.mubr.f32.mxu0 %v3192
        %3460 = vmatmul.mubr.f32.gmra.mrb[0].mxu0 %v3191
        %v3461 = vpop.f32.mrb[0].mxu0
        %v3462 = vadd.f32 0.0, %v3461
        %v3463 = vpop.f32.mrb[0].mxu0
        %3464 = vmatprep.mubr.f32.mxu0 %v3195
        %3465 = vmatmul.mubr.f32.gmra.mrb[0].mxu0 %v3194
        %v3466 = vpop.f32.mrb[0].mxu0
        %v3467 = vadd.f32 0.0, %v3466
        %v3468 = vpop.f32.mrb[0].mxu0
        %3469 = vdwg.mxu0
        %3470 = vmatprep.subr.mxu0 0.0
        %3471 = vmatpush1.msra.mxu0 %v3229
        %3472 = vmatprep.subr.mxu0 0.0
        %3473 = vmatpush1.msra.mxu0 %v3230
        %3474 = vmatprep.subr.mxu0 0.0
        %3475 = vmatpush1.msra.mxu0 %v3231
        %3476 = vmatprep.subr.mxu0 0.0
        %3477 = vmatpush1.msra.mxu0 %v3232
        %3478 = vmatprep.subr.mxu0 0.0
        %3479 = vmatpush1.msra.mxu0 %v3233
        %3480 = vmatprep.subr.mxu0 0.0
        %3481 = vmatpush1.msra.mxu0 %v3234
        %3482 = vmatprep.subr.mxu0 0.0
        %3483 = vmatpush1.msra.mxu0 %v3235
        %3484 = vmatprep.subr.mxu0 0.0
        %3485 = vmatpush1.msra.mxu0 %v3236
        %3486 = vmatprep.subr.mxu0 0.0
        %3487 = vmatpush1.msra.mxu0 %v3237
        %3488 = vmatprep.subr.mxu0 0.0
        %3489 = vmatpush1.msra.mxu0 %v3238
        %3490 = vmatprep.subr.mxu0 0.0
        %3491 = vmatpush1.msra.mxu0 %v3239
        %3492 = vmatprep.subr.mxu0 0.0
        %3493 = vmatpush1.msra.mxu0 %v3240
        %3494 = vmatprep.subr.mxu0 0.0
        %3495 = vmatpush1.msra.mxu0 %v3241
        %3496 = vmatprep.subr.mxu0 0.0
        %3497 = vmatpush1.msra.mxu0 %v3242
        %3498 = vmatprep.subr.mxu0 0.0
        %3499 = vmatpush1.msra.mxu0 %v3243
        %3500 = vmatprep.subr.mxu0 0.0
        %3501 = vmatpush1.msra.mxu0 %v3244
        %3502 = vmatprep.subr.mxu0 0.0
        %3503 = vmatpush1.msra.mxu0 0.0
        %3504 = vmatprep.subr.mxu0 0.0
        %3505 = vmatpush1.msra.mxu0 0.0
        %3506 = vmatprep.subr.mxu0 0.0
        %3507 = vmatpush1.msra.mxu0 0.0
        %3508 = vmatprep.subr.mxu0 0.0
        %3509 = vmatpush1.msra.mxu0 0.0
        %3510 = vmatprep.subr.mxu0 0.0
        %3511 = vmatpush1.msra.mxu0 0.0
        %3512 = vmatprep.subr.mxu0 0.0
        %3513 = vmatpush1.msra.mxu0 0.0
        %3514 = vmatprep.subr.mxu0 0.0
        %3515 = vmatpush1.msra.mxu0 0.0
        %3516 = vmatprep.subr.mxu0 0.0
        %3517 = vmatpush1.msra.mxu0 0.0
        %3518 = vmatprep.subr.mxu0 0.0
        %3519 = vmatpush1.msra.mxu0 0.0
        %3520 = vmatprep.subr.mxu0 0.0
        %3521 = vmatpush1.msra.mxu0 0.0
        %3522 = vmatprep.subr.mxu0 0.0
        %3523 = vmatpush1.msra.mxu0 0.0
        %3524 = vmatprep.subr.mxu0 0.0
        %3525 = vmatpush1.msra.mxu0 0.0
        %3526 = vmatprep.subr.mxu0 0.0
        %3527 = vmatpush1.msra.mxu0 0.0
        %3528 = vmatprep.subr.mxu0 0.0
        %3529 = vmatpush1.msra.mxu0 0.0
        %3530 = vmatprep.subr.mxu0 0.0
        %3531 = vmatpush1.msra.mxu0 0.0
        %3532 = vmatprep.subr.mxu0 0.0
        %3533 = vmatpush1.msra.mxu0 0.0
        %3534 = vmatprep.mubr.f32.mxu0 0.0
        %3535 = vmatmul.mubr.f32.gmra.mrb[0].mxu0 %v3103
        %v3536 = vpop.f32.mrb[0].mxu0
        %v3537 = vadd.f32 %v3312, %v3536
        %v3538 = vpop.f32.mrb[0].mxu0
        %3539 = vmatprep.mubr.f32.mxu0 0.0
        %3540 = vmatmul.mubr.f32.gmra.mrb[0].mxu0 %v3106
        %v3541 = vpop.f32.mrb[0].mxu0
        %v3542 = vadd.f32 %v3317, %v3541
        %v3543 = vpop.f32.mrb[0].mxu0
        %3544 = vmatprep.mubr.f32.mxu0 0.0
        %3545 = vmatmul.mubr.f32.gmra.mrb[0].mxu0 %v3109
        %v3546 = vpop.f32.mrb[0].mxu0
        %v3547 = vadd.f32 %v3322, %v3546
        %v3548 = vpop.f32.mrb[0].mxu0
        %3549 = vmatprep.mubr.f32.mxu0 0.0
        %3550 = vmatmul.mubr.f32.gmra.mrb[0].mxu0 %v3112
        %v3551 = vpop.f32.mrb[0].mxu0
        %v3552 = vadd.f32 %v3327, %v3551
        %v3553 = vpop.f32.mrb[0].mxu0
        %3554 = vmatprep.mubr.f32.mxu0 0.0
        %3555 = vmatmul.mubr.f32.gmra.mrb[0].mxu0 %v3115
        %v3556 = vpop.f32.mrb[0].mxu0
        %v3557 = vadd.f32 %v3332, %v3556
        %v3558 = vpop.f32.mrb[0].mxu0
        %3559 = vmatprep.mubr.f32.mxu0 0.0
        %3560 = vmatmul.mubr.f32.gmra.mrb[0].mxu0 %v3118
        %v3561 = vpop.f32.mrb[0].mxu0
        %v3562 = vadd.f32 %v3337, %v3561
        %v3563 = vpop.f32.mrb[0].mxu0
        %3564 = vmatprep.mubr.f32.mxu0 0.0
        %3565 = vmatmul.mubr.f32.gmra.mrb[0].mxu0 %v3121
        %v3566 = vpop.f32.mrb[0].mxu0
        %v3567 = vadd.f32 %v3342, %v3566
        %v3568 = vpop.f32.mrb[0].mxu0
        %3569 = vmatprep.mubr.f32.mxu0 0.0
        %3570 = vmatmul.mubr.f32.gmra.mrb[0].mxu0 %v3124
        %v3571 = vpop.f32.mrb[0].mxu0
        %v3572 = vadd.f32 %v3347, %v3571
        %v3573 = vpop.f32.mrb[0].mxu0
        %3574 = vmatprep.mubr.f32.mxu0 0.0
        %3575 = vmatmul.mubr.f32.gmra.mrb[0].mxu0 %v3127
        %v3576 = vpop.f32.mrb[0].mxu0
        %v3577 = vadd.f32 %v3352, %v3576
        %v3578 = vpop.f32.mrb[0].mxu0
        %3579 = vmatprep.mubr.f32.mxu0 0.0
        %3580 = vmatmul.mubr.f32.gmra.mrb[0].mxu0 %v3130
        %v3581 = vpop.f32.mrb[0].mxu0
        %v3582 = vadd.f32 %v3357, %v3581
        %v3583 = vpop.f32.mrb[0].mxu0
        %3584 = vmatprep.mubr.f32.mxu0 0.0
        %3585 = vmatmul.mubr.f32.gmra.mrb[0].mxu0 %v3133
        %v3586 = vpop.f32.mrb[0].mxu0
        %v3587 = vadd.f32 %v3362, %v3586
        %v3588 = vpop.f32.mrb[0].mxu0
        %3589 = vmatprep.mubr.f32.mxu0 0.0
        %3590 = vmatmul.mubr.f32.gmra.mrb[0].mxu0 %v3136
        %v3591 = vpop.f32.mrb[0].mxu0
        %v3592 = vadd.f32 %v3367, %v3591
        %v3593 = vpop.f32.mrb[0].mxu0
        %3594 = vmatprep.mubr.f32.mxu0 0.0
        %3595 = vmatmul.mubr.f32.gmra.mrb[0].mxu0 %v3139
        %v3596 = vpop.f32.mrb[0].mxu0
        %v3597 = vadd.f32 %v3372, %v3596
        %v3598 = vpop.f32.mrb[0].mxu0
        %3599 = vmatprep.mubr.f32.mxu0 0.0
        %3600 = vmatmul.mubr.f32.gmra.mrb[0].mxu0 %v3142
        %v3601 = vpop.f32.mrb[0].mxu0
        %v3602 = vadd.f32 %v3377, %v3601
        %v3603 = vpop.f32.mrb[0].mxu0
        %3604 = vmatprep.mubr.f32.mxu0 0.0
        %3605 = vmatmul.mubr.f32.gmra.mrb[0].mxu0 %v3145
        %v3606 = vpop.f32.mrb[0].mxu0
        %v3607 = vadd.f32 %v3382, %v3606
        %v3608 = vpop.f32.mrb[0].mxu0
        %3609 = vmatprep.mubr.f32.mxu0 0.0
        %3610 = vmatmul.mubr.f32.gmra.mrb[0].mxu0 %v3148
        %v3611 = vpop.f32.mrb[0].mxu0
        %v3612 = vadd.f32 %v3387, %v3611
        %v3613 = vpop.f32.mrb[0].mxu0
        %3614 = vmatprep.mubr.f32.mxu0 0.0
        %3615 = vmatmul.mubr.f32.gmra.mrb[0].mxu0 %v3151
        %v3616 = vpop.f32.mrb[0].mxu0
        %v3617 = vadd.f32 %v3392, %v3616
        %v3618 = vpop.f32.mrb[0].mxu0
        %3619 = vmatprep.mubr.f32.mxu0 0.0
        %3620 = vmatmul.mubr.f32.gmra.mrb[0].mxu0 %v3154
        %v3621 = vpop.f32.mrb[0].mxu0
        %v3622 = vadd.f32 %v3397, %v3621
        %v3623 = vpop.f32.mrb[0].mxu0
        %3624 = vmatprep.mubr.f32.mxu0 0.0
        %3625 = vmatmul.mubr.f32.gmra.mrb[0].mxu0 %v3157
        %v3626 = vpop.f32.mrb[0].mxu0
        %v3627 = vadd.f32 %v3402, %v3626
        %v3628 = vpop.f32.mrb[0].mxu0
        %3629 = vmatprep.mubr.f32.mxu0 0.0
        %3630 = vmatmul.mubr.f32.gmra.mrb[0].mxu0 %v3160
        %v3631 = vpop.f32.mrb[0].mxu0
        %v3632 = vadd.f32 %v3407, %v3631
        %v3633 = vpop.f32.mrb[0].mxu0
        %3634 = vmatprep.mubr.f32.mxu0 0.0
        %3635 = vmatmul.mubr.f32.gmra.mrb[0].mxu0 %v3163
        %v3636 = vpop.f32.mrb[0].mxu0
        %v3637 = vadd.f32 %v3412, %v3636
        %v3638 = vpop.f32.mrb[0].mxu0
        %3639 = vmatprep.mubr.f32.mxu0 0.0
        %3640 = vmatmul.mubr.f32.gmra.mrb[0].mxu0 %v3166
        %v3641 = vpop.f32.mrb[0].mxu0
        %v3642 = vadd.f32 %v3417, %v3641
        %v3643 = vpop.f32.mrb[0].mxu0
        %3644 = vmatprep.mubr.f32.mxu0 0.0
        %3645 = vmatmul.mubr.f32.gmra.mrb[0].mxu0 %v3169
        %v3646 = vpop.f32.mrb[0].mxu0
        %v3647 = vadd.f32 %v3422, %v3646
        %v3648 = vpop.f32.mrb[0].mxu0
        %3649 = vmatprep.mubr.f32.mxu0 0.0
        %3650 = vmatmul.mubr.f32.gmra.mrb[0].mxu0 %v3172
        %v3651 = vpop.f32.mrb[0].mxu0
        %v3652 = vadd.f32 %v3427, %v3651
        %v3653 = vpop.f32.mrb[0].mxu0
        %3654 = vmatprep.mubr.f32.mxu0 0.0
        %3655 = vmatmul.mubr.f32.gmra.mrb[0].mxu0 %v3175
        %v3656 = vpop.f32.mrb[0].mxu0
        %v3657 = vadd.f32 %v3432, %v3656
        %v3658 = vpop.f32.mrb[0].mxu0
        %3659 = vmatprep.mubr.f32.mxu0 0.0
        %3660 = vmatmul.mubr.f32.gmra.mrb[0].mxu0 %v3178
        %v3661 = vpop.f32.mrb[0].mxu0
        %v3662 = vadd.f32 %v3437, %v3661
        %v3663 = vpop.f32.mrb[0].mxu0
        %3664 = vmatprep.mubr.f32.mxu0 0.0
        %3665 = vmatmul.mubr.f32.gmra.mrb[0].mxu0 %v3181
        %v3666 = vpop.f32.mrb[0].mxu0
        %v3667 = vadd.f32 %v3442, %v3666
        %v3668 = vpop.f32.mrb[0].mxu0
        %3669 = vmatprep.mubr.f32.mxu0 0.0
        %3670 = vmatmul.mubr.f32.gmra.mrb[0].mxu0 %v3184
        %v3671 = vpop.f32.mrb[0].mxu0
        %v3672 = vadd.f32 %v3447, %v3671
        %v3673 = vpop.f32.mrb[0].mxu0
        %3674 = vmatprep.mubr.f32.mxu0 0.0
        %3675 = vmatmul.mubr.f32.gmra.mrb[0].mxu0 %v3187
        %v3676 = vpop.f32.mrb[0].mxu0
        %v3677 = vadd.f32 %v3452, %v3676
        %v3678 = vpop.f32.mrb[0].mxu0
        %3679 = vmatprep.mubr.f32.mxu0 0.0
        %3680 = vmatmul.mubr.f32.gmra.mrb[0].mxu0 %v3190
        %v3681 = vpop.f32.mrb[0].mxu0
        %v3682 = vadd.f32 %v3457, %v3681
        %v3683 = vpop.f32.mrb[0].mxu0
        %3684 = vmatprep.mubr.f32.mxu0 0.0
        %3685 = vmatmul.mubr.f32.gmra.mrb[0].mxu0 %v3193
        %v3686 = vpop.f32.mrb[0].mxu0
        %v3687 = vadd.f32 %v3462, %v3686
        %v3688 = vpop.f32.mrb[0].mxu0
        %3689 = vmatprep.mubr.f32.mxu0 0.0
        %3690 = vmatmul.mubr.f32.gmra.mrb[0].mxu0 %v3196
        %v3691 = vpop.f32.mrb[0].mxu0
        %v3692 = vadd.f32 %v3467, %v3691
        %v3693 = vpop.f32.mrb[0].mxu0
        %3694 = vdwg.mxu0
        %v3696 = vlaneseq
        %v3697 = vshrl.u32 %v3696, 7
        %v3698 = vsub.s32 0, %v3697
        %v3699 = vrot.slane %v2812, %v3698
        %v3701 = vadd.f32 %v3699, %v3537
        %v3702 = vadd.f32 %v3699, %v3542
        %v3703 = vadd.f32 %v3699, %v3547
        %v3704 = vadd.f32 %v3699, %v3552
        %v3705 = vadd.f32 %v3699, %v3557
        %v3706 = vadd.f32 %v3699, %v3562
        %v3707 = vadd.f32 %v3699, %v3567
        %v3708 = vadd.f32 %v3699, %v3572
        %v3709 = vadd.f32 %v3699, %v3577
        %v3710 = vadd.f32 %v3699, %v3582
        %v3711 = vadd.f32 %v3699, %v3587
        %v3712 = vadd.f32 %v3699, %v3592
        %v3713 = vadd.f32 %v3699, %v3597
        %v3714 = vadd.f32 %v3699, %v3602
        %v3715 = vadd.f32 %v3699, %v3607
        %v3716 = vadd.f32 %v3699, %v3612
        %v3717 = vadd.f32 %v3699, %v3617
        %v3718 = vadd.f32 %v3699, %v3622
        %v3719 = vadd.f32 %v3699, %v3627
        %v3720 = vadd.f32 %v3699, %v3632
        %v3721 = vadd.f32 %v3699, %v3637
        %v3722 = vadd.f32 %v3699, %v3642
        %v3723 = vadd.f32 %v3699, %v3647
        %v3724 = vadd.f32 %v3699, %v3652
        %v3725 = vadd.f32 %v3699, %v3657
        %v3726 = vadd.f32 %v3699, %v3662
        %v3727 = vadd.f32 %v3699, %v3667
        %v3728 = vadd.f32 %v3699, %v3672
        %v3729 = vadd.f32 %v3699, %v3677
        %v3730 = vadd.f32 %v3699, %v3682
        %v3731 = vadd.f32 %v3699, %v3687
        %v3732 = vadd.f32 %v3699, %v3692
        %v3733 = vld [vmem:[%s796] sm:$0xff]
        %v3734 = vld [vmem:[%s796 + $0x8] sm:$0xff]
        %v3735 = vld [vmem:[%s796 + $0x10] sm:$0xff]
        %v3736 = vld [vmem:[%s796 + $0x18] sm:$0xff]
        %v3737 = vld [vmem:[%s796 + $0x20] sm:$0xff]
        %v3738 = vld [vmem:[%s796 + $0x28] sm:$0xff]
        %v3739 = vld [vmem:[%s796 + $0x30] sm:$0xff]
        %v3740 = vld [vmem:[%s796 + $0x38] sm:$0xff]
        %v3741 = vld [vmem:[%s796 + $0x40] sm:$0xff]
        %v3742 = vld [vmem:[%s796 + $0x48] sm:$0xff]
        %v3743 = vld [vmem:[%s796 + $0x50] sm:$0xff]
        %v3744 = vld [vmem:[%s796 + $0x58] sm:$0xff]
        %v3745 = vld [vmem:[%s796 + $0x60] sm:$0xff]
        %v3746 = vld [vmem:[%s796 + $0x68] sm:$0xff]
        %v3747 = vld [vmem:[%s796 + $0x70] sm:$0xff]
        %v3748 = vld [vmem:[%s796 + $0x78] sm:$0xff]
        %v3749 = vld [vmem:[%s796 + $0x80] sm:$0xff]
        %v3750 = vld [vmem:[%s796 + $0x88] sm:$0xff]
        %v3751 = vld [vmem:[%s796 + $0x90] sm:$0xff]
        %v3752 = vld [vmem:[%s796 + $0x98] sm:$0xff]
        %v3753 = vld [vmem:[%s796 + $0xa0] sm:$0xff]
        %v3754 = vld [vmem:[%s796 + $0xa8] sm:$0xff]
        %v3755 = vld [vmem:[%s796 + $0xb0] sm:$0xff]
        %v3756 = vld [vmem:[%s796 + $0xb8] sm:$0xff]
        %v3757 = vld [vmem:[%s796 + $0xc0] sm:$0xff]
        %v3758 = vld [vmem:[%s796 + $0xc8] sm:$0xff]
        %v3759 = vld [vmem:[%s796 + $0xd0] sm:$0xff]
        %v3760 = vld [vmem:[%s796 + $0xd8] sm:$0xff]
        %v3761 = vld [vmem:[%s796 + $0xe0] sm:$0xff]
        %v3762 = vld [vmem:[%s796 + $0xe8] sm:$0xff]
        %v3763 = vld [vmem:[%s796 + $0xf0] sm:$0xff]
        %v3764 = vld [vmem:[%s796 + $0xf8] sm:$0xff]
        %v3765 = vld [vmem:[%s796 + $0x100] sm:$0xff]
        %v3766 = vld [vmem:[%s796 + $0x108] sm:$0xff]
        %v3767 = vld [vmem:[%s796 + $0x110] sm:$0xff]
        %v3768 = vld [vmem:[%s796 + $0x118] sm:$0xff]
        %v3769 = vld [vmem:[%s796 + $0x120] sm:$0xff]
        %v3770 = vld [vmem:[%s796 + $0x128] sm:$0xff]
        %v3771 = vld [vmem:[%s796 + $0x130] sm:$0xff]
        %v3772 = vld [vmem:[%s796 + $0x138] sm:$0xff]
        %v3773 = vld [vmem:[%s796 + $0x140] sm:$0xff]
        %v3774 = vld [vmem:[%s796 + $0x148] sm:$0xff]
        %v3775 = vld [vmem:[%s796 + $0x150] sm:$0xff]
        %v3776 = vld [vmem:[%s796 + $0x158] sm:$0xff]
        %v3777 = vld [vmem:[%s796 + $0x160] sm:$0xff]
        %v3778 = vld [vmem:[%s796 + $0x168] sm:$0xff]
        %v3779 = vld [vmem:[%s796 + $0x170] sm:$0xff]
        %v3780 = vld [vmem:[%s796 + $0x178] sm:$0xff]
        %v3781 = vld [vmem:[%s796 + $0x180] sm:$0xff]
        %v3782 = vld [vmem:[%s796 + $0x188] sm:$0xff]
        %v3783 = vld [vmem:[%s796 + $0x190] sm:$0xff]
        %v3784 = vld [vmem:[%s796 + $0x198] sm:$0xff]
        %v3785 = vld [vmem:[%s796 + $0x1a0] sm:$0xff]
        %v3786 = vld [vmem:[%s796 + $0x1a8] sm:$0xff]
        %v3787 = vld [vmem:[%s796 + $0x1b0] sm:$0xff]
        %v3788 = vld [vmem:[%s796 + $0x1b8] sm:$0xff]
        %v3789 = vld [vmem:[%s796 + $0x1c0] sm:$0xff]
        %v3790 = vld [vmem:[%s796 + $0x1c8] sm:$0xff]
        %v3791 = vld [vmem:[%s796 + $0x1d0] sm:$0xff]
        %v3792 = vld [vmem:[%s796 + $0x1d8] sm:$0xff]
        %v3793 = vld [vmem:[%s796 + $0x1e0] sm:$0xff]
        %v3794 = vld [vmem:[%s796 + $0x1e8] sm:$0xff]
        %v3795 = vld [vmem:[%s796 + $0x1f0] sm:$0xff]
        %v3796 = vld [vmem:[%s796 + $0x1f8] sm:$0xff]
        %v3797 = vld [vmem:[%s796 + $0x200] sm:$0xff]
        %v3798 = vld [vmem:[%s796 + $0x208] sm:$0xff]
        %v3799 = vld [vmem:[%s796 + $0x210] sm:$0xff]
        %v3800 = vld [vmem:[%s796 + $0x218] sm:$0xff]
        %v3801 = vld [vmem:[%s796 + $0x220] sm:$0xff]
        %v3802 = vld [vmem:[%s796 + $0x228] sm:$0xff]
        %v3803 = vld [vmem:[%s796 + $0x230] sm:$0xff]
        %v3804 = vld [vmem:[%s796 + $0x238] sm:$0xff]
        %v3805 = vld [vmem:[%s796 + $0x240] sm:$0xff]
        %v3806 = vld [vmem:[%s796 + $0x248] sm:$0xff]
        %v3807 = vld [vmem:[%s796 + $0x250] sm:$0xff]
        %v3808 = vld [vmem:[%s796 + $0x258] sm:$0xff]
        %v3809 = vld [vmem:[%s796 + $0x260] sm:$0xff]
        %v3810 = vld [vmem:[%s796 + $0x268] sm:$0xff]
        %v3811 = vld [vmem:[%s796 + $0x270] sm:$0xff]
        %v3812 = vld [vmem:[%s796 + $0x278] sm:$0xff]
        %v3813 = vld [vmem:[%s796 + $0x280] sm:$0xff]
        %v3814 = vld [vmem:[%s796 + $0x288] sm:$0xff]
        %v3815 = vld [vmem:[%s796 + $0x290] sm:$0xff]
        %v3816 = vld [vmem:[%s796 + $0x298] sm:$0xff]
        %v3817 = vld [vmem:[%s796 + $0x2a0] sm:$0xff]
        %v3818 = vld [vmem:[%s796 + $0x2a8] sm:$0xff]
        %v3819 = vld [vmem:[%s796 + $0x2b0] sm:$0xff]
        %v3820 = vld [vmem:[%s796 + $0x2b8] sm:$0xff]
        %v3821 = vld [vmem:[%s796 + $0x2c0] sm:$0xff]
        %v3822 = vld [vmem:[%s796 + $0x2c8] sm:$0xff]
        %v3823 = vld [vmem:[%s796 + $0x2d0] sm:$0xff]
        %v3824 = vld [vmem:[%s796 + $0x2d8] sm:$0xff]
        %v3825 = vld [vmem:[%s796 + $0x2e0] sm:$0xff]
        %v3826 = vld [vmem:[%s796 + $0x2e8] sm:$0xff]
        %v3827 = vld [vmem:[%s796 + $0x2f0] sm:$0xff]
        %v3828 = vld [vmem:[%s796 + $0x2f8] sm:$0xff]
        %s3829 = scalar_lea.vmem [#allocation9], 384
        %v3830 = vld [vmem:[%s3829] sm:$0xff]
        %v3831 = vld [vmem:[%s3829 + $0x8] sm:$0xff]
        %v3832 = vld [vmem:[%s3829 + $0x10] sm:$0xff]
        %v3833 = vld [vmem:[%s3829 + $0x18] sm:$0xff]
        %v3834 = vld [vmem:[%s3829 + $0x20] sm:$0xff]
        %v3835 = vld [vmem:[%s3829 + $0x28] sm:$0xff]
        %v3836 = vld [vmem:[%s3829 + $0x30] sm:$0xff]
        %v3837 = vld [vmem:[%s3829 + $0x38] sm:$0xff]
        %v3838 = vld [vmem:[%s3829 + $0x40] sm:$0xff]
        %v3839 = vld [vmem:[%s3829 + $0x48] sm:$0xff]
        %v3840 = vld [vmem:[%s3829 + $0x50] sm:$0xff]
        %v3841 = vld [vmem:[%s3829 + $0x58] sm:$0xff]
        %v3842 = vld [vmem:[%s3829 + $0x60] sm:$0xff]
        %v3843 = vld [vmem:[%s3829 + $0x68] sm:$0xff]
        %v3844 = vld [vmem:[%s3829 + $0x70] sm:$0xff]
        %v3845 = vld [vmem:[%s3829 + $0x78] sm:$0xff]
        %v3846 = vld [vmem:[%s3829 + $0x80] sm:$0xff]
        %v3847 = vld [vmem:[%s3829 + $0x88] sm:$0xff]
        %v3848 = vld [vmem:[%s3829 + $0x90] sm:$0xff]
        %v3849 = vld [vmem:[%s3829 + $0x98] sm:$0xff]
        %v3850 = vld [vmem:[%s3829 + $0xa0] sm:$0xff]
        %v3851 = vld [vmem:[%s3829 + $0xa8] sm:$0xff]
        %v3852 = vld [vmem:[%s3829 + $0xb0] sm:$0xff]
        %v3853 = vld [vmem:[%s3829 + $0xb8] sm:$0xff]
        %v3854 = vld [vmem:[%s3829 + $0xc0] sm:$0xff]
        %v3855 = vld [vmem:[%s3829 + $0xc8] sm:$0xff]
        %v3856 = vld [vmem:[%s3829 + $0xd0] sm:$0xff]
        %v3857 = vld [vmem:[%s3829 + $0xd8] sm:$0xff]
        %v3858 = vld [vmem:[%s3829 + $0xe0] sm:$0xff]
        %v3859 = vld [vmem:[%s3829 + $0xe8] sm:$0xff]
        %v3860 = vld [vmem:[%s3829 + $0xf0] sm:$0xff]
        %v3861 = vld [vmem:[%s3829 + $0xf8] sm:$0xff]
        %v3862 = vld [vmem:[%s3829 + $0x100] sm:$0xff]
        %v3863 = vld [vmem:[%s3829 + $0x108] sm:$0xff]
        %v3864 = vld [vmem:[%s3829 + $0x110] sm:$0xff]
        %v3865 = vld [vmem:[%s3829 + $0x118] sm:$0xff]
        %v3866 = vld [vmem:[%s3829 + $0x120] sm:$0xff]
        %v3867 = vld [vmem:[%s3829 + $0x128] sm:$0xff]
        %v3868 = vld [vmem:[%s3829 + $0x130] sm:$0xff]
        %v3869 = vld [vmem:[%s3829 + $0x138] sm:$0xff]
        %v3870 = vld [vmem:[%s3829 + $0x140] sm:$0xff]
        %v3871 = vld [vmem:[%s3829 + $0x148] sm:$0xff]
        %v3872 = vld [vmem:[%s3829 + $0x150] sm:$0xff]
        %v3873 = vld [vmem:[%s3829 + $0x158] sm:$0xff]
        %v3874 = vld [vmem:[%s3829 + $0x160] sm:$0xff]
        %v3875 = vld [vmem:[%s3829 + $0x168] sm:$0xff]
        %v3876 = vld [vmem:[%s3829 + $0x170] sm:$0xff]
        %v3877 = vld [vmem:[%s3829 + $0x178] sm:$0xff]
        %3878 = vmatprep.subr.mxu0 0.0
        %3879 = vmatpush1.msra.mxu0 %v3830
        %3880 = vmatprep.subr.mxu0 0.0
        %3881 = vmatpush1.msra.mxu0 %v3831
        %3882 = vmatprep.subr.mxu0 0.0
        %3883 = vmatpush1.msra.mxu0 %v3832
        %3884 = vmatprep.subr.mxu0 0.0
        %3885 = vmatpush1.msra.mxu0 %v3833
        %3886 = vmatprep.subr.mxu0 0.0
        %3887 = vmatpush1.msra.mxu0 %v3834
        %3888 = vmatprep.subr.mxu0 0.0
        %3889 = vmatpush1.msra.mxu0 %v3835
        %3890 = vmatprep.subr.mxu0 0.0
        %3891 = vmatpush1.msra.mxu0 %v3836
        %3892 = vmatprep.subr.mxu0 0.0
        %3893 = vmatpush1.msra.mxu0 %v3837
        %3894 = vmatprep.subr.mxu0 0.0
        %3895 = vmatpush1.msra.mxu0 %v3838
        %3896 = vmatprep.subr.mxu0 0.0
        %3897 = vmatpush1.msra.mxu0 %v3839
        %3898 = vmatprep.subr.mxu0 0.0
        %3899 = vmatpush1.msra.mxu0 %v3840
        %3900 = vmatprep.subr.mxu0 0.0
        %3901 = vmatpush1.msra.mxu0 %v3841
        %3902 = vmatprep.subr.mxu0 0.0
        %3903 = vmatpush1.msra.mxu0 %v3842
        %3904 = vmatprep.subr.mxu0 0.0
        %3905 = vmatpush1.msra.mxu0 %v3843
        %3906 = vmatprep.subr.mxu0 0.0
        %3907 = vmatpush1.msra.mxu0 %v3844
        %3908 = vmatprep.subr.mxu0 0.0
        %3909 = vmatpush1.msra.mxu0 %v3845
        %3910 = vmatprep.subr.mxu0 0.0
        %3911 = vmatpush1.msra.mxu0 %v3846
        %3912 = vmatprep.subr.mxu0 0.0
        %3913 = vmatpush1.msra.mxu0 %v3847
        %3914 = vmatprep.subr.mxu0 0.0
        %3915 = vmatpush1.msra.mxu0 %v3848
        %3916 = vmatprep.subr.mxu0 0.0
        %3917 = vmatpush1.msra.mxu0 %v3849
        %3918 = vmatprep.subr.mxu0 0.0
        %3919 = vmatpush1.msra.mxu0 %v3850
        %3920 = vmatprep.subr.mxu0 0.0
        %3921 = vmatpush1.msra.mxu0 %v3851
        %3922 = vmatprep.subr.mxu0 0.0
        %3923 = vmatpush1.msra.mxu0 %v3852
        %3924 = vmatprep.subr.mxu0 0.0
        %3925 = vmatpush1.msra.mxu0 %v3853
        %3926 = vmatprep.subr.mxu0 0.0
        %3927 = vmatpush1.msra.mxu0 %v3854
        %3928 = vmatprep.subr.mxu0 0.0
        %3929 = vmatpush1.msra.mxu0 %v3855
        %3930 = vmatprep.subr.mxu0 0.0
        %3931 = vmatpush1.msra.mxu0 %v3856
        %3932 = vmatprep.subr.mxu0 0.0
        %3933 = vmatpush1.msra.mxu0 %v3857
        %3934 = vmatprep.subr.mxu0 0.0
        %3935 = vmatpush1.msra.mxu0 %v3858
        %3936 = vmatprep.subr.mxu0 0.0
        %3937 = vmatpush1.msra.mxu0 %v3859
        %3938 = vmatprep.subr.mxu0 0.0
        %3939 = vmatpush1.msra.mxu0 %v3860
        %3940 = vmatprep.subr.mxu0 0.0
        %3941 = vmatpush1.msra.mxu0 %v3861
        %3942 = vmatprep.mubr.f32.mxu0 %v3734
        %3943 = vmatmul.mubr.f32.gmra.mrb[0].mxu0 %v3733
        %v3944 = vpop.f32.mrb[0].mxu0
        %v3945 = vadd.f32 0.0, %v3944
        %v3946 = vpop.f32.mrb[0].mxu0
        %3947 = vmatprep.mubr.f32.mxu0 %v3737
        %3948 = vmatmul.mubr.f32.gmra.mrb[0].mxu0 %v3736
        %v3949 = vpop.f32.mrb[0].mxu0
        %v3950 = vadd.f32 0.0, %v3949
        %v3951 = vpop.f32.mrb[0].mxu0
        %3952 = vmatprep.mubr.f32.mxu0 %v3740
        %3953 = vmatmul.mubr.f32.gmra.mrb[0].mxu0 %v3739
        %v3954 = vpop.f32.mrb[0].mxu0
        %v3955 = vadd.f32 0.0, %v3954
        %v3956 = vpop.f32.mrb[0].mxu0
        %3957 = vmatprep.mubr.f32.mxu0 %v3743
        %3958 = vmatmul.mubr.f32.gmra.mrb[0].mxu0 %v3742
        %v3959 = vpop.f32.mrb[0].mxu0
        %v3960 = vadd.f32 0.0, %v3959
        %v3961 = vpop.f32.mrb[0].mxu0
        %3962 = vmatprep.mubr.f32.mxu0 %v3746
        %3963 = vmatmul.mubr.f32.gmra.mrb[0].mxu0 %v3745
        %v3964 = vpop.f32.mrb[0].mxu0
        %v3965 = vadd.f32 0.0, %v3964
        %v3966 = vpop.f32.mrb[0].mxu0
        %3967 = vmatprep.mubr.f32.mxu0 %v3749
        %3968 = vmatmul.mubr.f32.gmra.mrb[0].mxu0 %v3748
        %v3969 = vpop.f32.mrb[0].mxu0
        %v3970 = vadd.f32 0.0, %v3969
        %v3971 = vpop.f32.mrb[0].mxu0
        %3972 = vmatprep.mubr.f32.mxu0 %v3752
        %3973 = vmatmul.mubr.f32.gmra.mrb[0].mxu0 %v3751
        %v3974 = vpop.f32.mrb[0].mxu0
        %v3975 = vadd.f32 0.0, %v3974
        %v3976 = vpop.f32.mrb[0].mxu0
        %3977 = vmatprep.mubr.f32.mxu0 %v3755
        %3978 = vmatmul.mubr.f32.gmra.mrb[0].mxu0 %v3754
        %v3979 = vpop.f32.mrb[0].mxu0
        %v3980 = vadd.f32 0.0, %v3979
        %v3981 = vpop.f32.mrb[0].mxu0
        %3982 = vmatprep.mubr.f32.mxu0 %v3758
        %3983 = vmatmul.mubr.f32.gmra.mrb[0].mxu0 %v3757
        %v3984 = vpop.f32.mrb[0].mxu0
        %v3985 = vadd.f32 0.0, %v3984
        %v3986 = vpop.f32.mrb[0].mxu0
        %3987 = vmatprep.mubr.f32.mxu0 %v3761
        %3988 = vmatmul.mubr.f32.gmra.mrb[0].mxu0 %v3760
        %v3989 = vpop.f32.mrb[0].mxu0
        %v3990 = vadd.f32 0.0, %v3989
        %v3991 = vpop.f32.mrb[0].mxu0
        %3992 = vmatprep.mubr.f32.mxu0 %v3764
        %3993 = vmatmul.mubr.f32.gmra.mrb[0].mxu0 %v3763
        %v3994 = vpop.f32.mrb[0].mxu0
        %v3995 = vadd.f32 0.0, %v3994
        %v3996 = vpop.f32.mrb[0].mxu0
        %3997 = vmatprep.mubr.f32.mxu0 %v3767
        %3998 = vmatmul.mubr.f32.gmra.mrb[0].mxu0 %v3766
        %v3999 = vpop.f32.mrb[0].mxu0
        %v4000 = vadd.f32 0.0, %v3999
        %v4001 = vpop.f32.mrb[0].mxu0
        %4002 = vmatprep.mubr.f32.mxu0 %v3770
        %4003 = vmatmul.mubr.f32.gmra.mrb[0].mxu0 %v3769
        %v4004 = vpop.f32.mrb[0].mxu0
        %v4005 = vadd.f32 0.0, %v4004
        %v4006 = vpop.f32.mrb[0].mxu0
        %4007 = vmatprep.mubr.f32.mxu0 %v3773
        %4008 = vmatmul.mubr.f32.gmra.mrb[0].mxu0 %v3772
        %v4009 = vpop.f32.mrb[0].mxu0
        %v4010 = vadd.f32 0.0, %v4009
        %v4011 = vpop.f32.mrb[0].mxu0
        %4012 = vmatprep.mubr.f32.mxu0 %v3776
        %4013 = vmatmul.mubr.f32.gmra.mrb[0].mxu0 %v3775
        %v4014 = vpop.f32.mrb[0].mxu0
        %v4015 = vadd.f32 0.0, %v4014
        %v4016 = vpop.f32.mrb[0].mxu0
        %4017 = vmatprep.mubr.f32.mxu0 %v3779
        %4018 = vmatmul.mubr.f32.gmra.mrb[0].mxu0 %v3778
        %v4019 = vpop.f32.mrb[0].mxu0
        %v4020 = vadd.f32 0.0, %v4019
        %v4021 = vpop.f32.mrb[0].mxu0
        %4022 = vmatprep.mubr.f32.mxu0 %v3782
        %4023 = vmatmul.mubr.f32.gmra.mrb[0].mxu0 %v3781
        %v4024 = vpop.f32.mrb[0].mxu0
        %v4025 = vadd.f32 0.0, %v4024
        %v4026 = vpop.f32.mrb[0].mxu0
        %4027 = vmatprep.mubr.f32.mxu0 %v3785
        %4028 = vmatmul.mubr.f32.gmra.mrb[0].mxu0 %v3784
        %v4029 = vpop.f32.mrb[0].mxu0
        %v4030 = vadd.f32 0.0, %v4029
        %v4031 = vpop.f32.mrb[0].mxu0
        %4032 = vmatprep.mubr.f32.mxu0 %v3788
        %4033 = vmatmul.mubr.f32.gmra.mrb[0].mxu0 %v3787
        %v4034 = vpop.f32.mrb[0].mxu0
        %v4035 = vadd.f32 0.0, %v4034
        %v4036 = vpop.f32.mrb[0].mxu0
        %4037 = vmatprep.mubr.f32.mxu0 %v3791
        %4038 = vmatmul.mubr.f32.gmra.mrb[0].mxu0 %v3790
        %v4039 = vpop.f32.mrb[0].mxu0
        %v4040 = vadd.f32 0.0, %v4039
        %v4041 = vpop.f32.mrb[0].mxu0
        %4042 = vmatprep.mubr.f32.mxu0 %v3794
        %4043 = vmatmul.mubr.f32.gmra.mrb[0].mxu0 %v3793
        %v4044 = vpop.f32.mrb[0].mxu0
        %v4045 = vadd.f32 0.0, %v4044
        %v4046 = vpop.f32.mrb[0].mxu0
        %4047 = vmatprep.mubr.f32.mxu0 %v3797
        %4048 = vmatmul.mubr.f32.gmra.mrb[0].mxu0 %v3796
        %v4049 = vpop.f32.mrb[0].mxu0
        %v4050 = vadd.f32 0.0, %v4049
        %v4051 = vpop.f32.mrb[0].mxu0
        %4052 = vmatprep.mubr.f32.mxu0 %v3800
        %4053 = vmatmul.mubr.f32.gmra.mrb[0].mxu0 %v3799
        %v4054 = vpop.f32.mrb[0].mxu0
        %v4055 = vadd.f32 0.0, %v4054
        %v4056 = vpop.f32.mrb[0].mxu0
        %4057 = vmatprep.mubr.f32.mxu0 %v3803
        %4058 = vmatmul.mubr.f32.gmra.mrb[0].mxu0 %v3802
        %v4059 = vpop.f32.mrb[0].mxu0
        %v4060 = vadd.f32 0.0, %v4059
        %v4061 = vpop.f32.mrb[0].mxu0
        %4062 = vmatprep.mubr.f32.mxu0 %v3806
        %4063 = vmatmul.mubr.f32.gmra.mrb[0].mxu0 %v3805
        %v4064 = vpop.f32.mrb[0].mxu0
        %v4065 = vadd.f32 0.0, %v4064
        %v4066 = vpop.f32.mrb[0].mxu0
        %4067 = vmatprep.mubr.f32.mxu0 %v3809
        %4068 = vmatmul.mubr.f32.gmra.mrb[0].mxu0 %v3808
        %v4069 = vpop.f32.mrb[0].mxu0
        %v4070 = vadd.f32 0.0, %v4069
        %v4071 = vpop.f32.mrb[0].mxu0
        %4072 = vmatprep.mubr.f32.mxu0 %v3812
        %4073 = vmatmul.mubr.f32.gmra.mrb[0].mxu0 %v3811
        %v4074 = vpop.f32.mrb[0].mxu0
        %v4075 = vadd.f32 0.0, %v4074
        %v4076 = vpop.f32.mrb[0].mxu0
        %4077 = vmatprep.mubr.f32.mxu0 %v3815
        %4078 = vmatmul.mubr.f32.gmra.mrb[0].mxu0 %v3814
        %v4079 = vpop.f32.mrb[0].mxu0
        %v4080 = vadd.f32 0.0, %v4079
        %v4081 = vpop.f32.mrb[0].mxu0
        %4082 = vmatprep.mubr.f32.mxu0 %v3818
        %4083 = vmatmul.mubr.f32.gmra.mrb[0].mxu0 %v3817
        %v4084 = vpop.f32.mrb[0].mxu0
        %v4085 = vadd.f32 0.0, %v4084
        %v4086 = vpop.f32.mrb[0].mxu0
        %4087 = vmatprep.mubr.f32.mxu0 %v3821
        %4088 = vmatmul.mubr.f32.gmra.mrb[0].mxu0 %v3820
        %v4089 = vpop.f32.mrb[0].mxu0
        %v4090 = vadd.f32 0.0, %v4089
        %v4091 = vpop.f32.mrb[0].mxu0
        %4092 = vmatprep.mubr.f32.mxu0 %v3824
        %4093 = vmatmul.mubr.f32.gmra.mrb[0].mxu0 %v3823
        %v4094 = vpop.f32.mrb[0].mxu0
        %v4095 = vadd.f32 0.0, %v4094
        %v4096 = vpop.f32.mrb[0].mxu0
        %4097 = vmatprep.mubr.f32.mxu0 %v3827
        %4098 = vmatmul.mubr.f32.gmra.mrb[0].mxu0 %v3826
        %v4099 = vpop.f32.mrb[0].mxu0
        %v4100 = vadd.f32 0.0, %v4099
        %v4101 = vpop.f32.mrb[0].mxu0
        %4102 = vdwg.mxu0
        %4103 = vmatprep.subr.mxu0 0.0
        %4104 = vmatpush1.msra.mxu0 %v3862
        %4105 = vmatprep.subr.mxu0 0.0
        %4106 = vmatpush1.msra.mxu0 %v3863
        %4107 = vmatprep.subr.mxu0 0.0
        %4108 = vmatpush1.msra.mxu0 %v3864
        %4109 = vmatprep.subr.mxu0 0.0
        %4110 = vmatpush1.msra.mxu0 %v3865
        %4111 = vmatprep.subr.mxu0 0.0
        %4112 = vmatpush1.msra.mxu0 %v3866
        %4113 = vmatprep.subr.mxu0 0.0
        %4114 = vmatpush1.msra.mxu0 %v3867
        %4115 = vmatprep.subr.mxu0 0.0
        %4116 = vmatpush1.msra.mxu0 %v3868
        %4117 = vmatprep.subr.mxu0 0.0
        %4118 = vmatpush1.msra.mxu0 %v3869
        %4119 = vmatprep.subr.mxu0 0.0
        %4120 = vmatpush1.msra.mxu0 %v3870
        %4121 = vmatprep.subr.mxu0 0.0
        %4122 = vmatpush1.msra.mxu0 %v3871
        %4123 = vmatprep.subr.mxu0 0.0
        %4124 = vmatpush1.msra.mxu0 %v3872
        %4125 = vmatprep.subr.mxu0 0.0
        %4126 = vmatpush1.msra.mxu0 %v3873
        %4127 = vmatprep.subr.mxu0 0.0
        %4128 = vmatpush1.msra.mxu0 %v3874
        %4129 = vmatprep.subr.mxu0 0.0
        %4130 = vmatpush1.msra.mxu0 %v3875
        %4131 = vmatprep.subr.mxu0 0.0
        %4132 = vmatpush1.msra.mxu0 %v3876
        %4133 = vmatprep.subr.mxu0 0.0
        %4134 = vmatpush1.msra.mxu0 %v3877
        %4135 = vmatprep.subr.mxu0 0.0
        %4136 = vmatpush1.msra.mxu0 0.0
        %4137 = vmatprep.subr.mxu0 0.0
        %4138 = vmatpush1.msra.mxu0 0.0
        %4139 = vmatprep.subr.mxu0 0.0
        %4140 = vmatpush1.msra.mxu0 0.0
        %4141 = vmatprep.subr.mxu0 0.0
        %4142 = vmatpush1.msra.mxu0 0.0
        %4143 = vmatprep.subr.mxu0 0.0
        %4144 = vmatpush1.msra.mxu0 0.0
        %4145 = vmatprep.subr.mxu0 0.0
        %4146 = vmatpush1.msra.mxu0 0.0
        %4147 = vmatprep.subr.mxu0 0.0
        %4148 = vmatpush1.msra.mxu0 0.0
        %4149 = vmatprep.subr.mxu0 0.0
        %4150 = vmatpush1.msra.mxu0 0.0
        %4151 = vmatprep.subr.mxu0 0.0
        %4152 = vmatpush1.msra.mxu0 0.0
        %4153 = vmatprep.subr.mxu0 0.0
        %4154 = vmatpush1.msra.mxu0 0.0
        %4155 = vmatprep.subr.mxu0 0.0
        %4156 = vmatpush1.msra.mxu0 0.0
        %4157 = vmatprep.subr.mxu0 0.0
        %4158 = vmatpush1.msra.mxu0 0.0
        %4159 = vmatprep.subr.mxu0 0.0
        %4160 = vmatpush1.msra.mxu0 0.0
        %4161 = vmatprep.subr.mxu0 0.0
        %4162 = vmatpush1.msra.mxu0 0.0
        %4163 = vmatprep.subr.mxu0 0.0
        %4164 = vmatpush1.msra.mxu0 0.0
        %4165 = vmatprep.subr.mxu0 0.0
        %4166 = vmatpush1.msra.mxu0 0.0
        %4167 = vmatprep.mubr.f32.mxu0 0.0
        %4168 = vmatmul.mubr.f32.gmra.mrb[0].mxu0 %v3735
        %v4169 = vpop.f32.mrb[0].mxu0
        %v4170 = vadd.f32 %v3945, %v4169
        %v4171 = vpop.f32.mrb[0].mxu0
        %4172 = vmatprep.mubr.f32.mxu0 0.0
        %4173 = vmatmul.mubr.f32.gmra.mrb[0].mxu0 %v3738
        %v4174 = vpop.f32.mrb[0].mxu0
        %v4175 = vadd.f32 %v3950, %v4174
        %v4176 = vpop.f32.mrb[0].mxu0
        %4177 = vmatprep.mubr.f32.mxu0 0.0
        %4178 = vmatmul.mubr.f32.gmra.mrb[0].mxu0 %v3741
        %v4179 = vpop.f32.mrb[0].mxu0
        %v4180 = vadd.f32 %v3955, %v4179
        %v4181 = vpop.f32.mrb[0].mxu0
        %4182 = vmatprep.mubr.f32.mxu0 0.0
        %4183 = vmatmul.mubr.f32.gmra.mrb[0].mxu0 %v3744
        %v4184 = vpop.f32.mrb[0].mxu0
        %v4185 = vadd.f32 %v3960, %v4184
        %v4186 = vpop.f32.mrb[0].mxu0
        %4187 = vmatprep.mubr.f32.mxu0 0.0
        %4188 = vmatmul.mubr.f32.gmra.mrb[0].mxu0 %v3747
        %v4189 = vpop.f32.mrb[0].mxu0
        %v4190 = vadd.f32 %v3965, %v4189
        %v4191 = vpop.f32.mrb[0].mxu0
        %4192 = vmatprep.mubr.f32.mxu0 0.0
        %4193 = vmatmul.mubr.f32.gmra.mrb[0].mxu0 %v3750
        %v4194 = vpop.f32.mrb[0].mxu0
        %v4195 = vadd.f32 %v3970, %v4194
        %v4196 = vpop.f32.mrb[0].mxu0
        %4197 = vmatprep.mubr.f32.mxu0 0.0
        %4198 = vmatmul.mubr.f32.gmra.mrb[0].mxu0 %v3753
        %v4199 = vpop.f32.mrb[0].mxu0
        %v4200 = vadd.f32 %v3975, %v4199
        %v4201 = vpop.f32.mrb[0].mxu0
        %4202 = vmatprep.mubr.f32.mxu0 0.0
        %4203 = vmatmul.mubr.f32.gmra.mrb[0].mxu0 %v3756
        %v4204 = vpop.f32.mrb[0].mxu0
        %v4205 = vadd.f32 %v3980, %v4204
        %v4206 = vpop.f32.mrb[0].mxu0
        %4207 = vmatprep.mubr.f32.mxu0 0.0
        %4208 = vmatmul.mubr.f32.gmra.mrb[0].mxu0 %v3759
        %v4209 = vpop.f32.mrb[0].mxu0
        %v4210 = vadd.f32 %v3985, %v4209
        %v4211 = vpop.f32.mrb[0].mxu0
        %4212 = vmatprep.mubr.f32.mxu0 0.0
        %4213 = vmatmul.mubr.f32.gmra.mrb[0].mxu0 %v3762
        %v4214 = vpop.f32.mrb[0].mxu0
        %v4215 = vadd.f32 %v3990, %v4214
        %v4216 = vpop.f32.mrb[0].mxu0
        %4217 = vmatprep.mubr.f32.mxu0 0.0
        %4218 = vmatmul.mubr.f32.gmra.mrb[0].mxu0 %v3765
        %v4219 = vpop.f32.mrb[0].mxu0
        %v4220 = vadd.f32 %v3995, %v4219
        %v4221 = vpop.f32.mrb[0].mxu0
        %4222 = vmatprep.mubr.f32.mxu0 0.0
        %4223 = vmatmul.mubr.f32.gmra.mrb[0].mxu0 %v3768
        %v4224 = vpop.f32.mrb[0].mxu0
        %v4225 = vadd.f32 %v4000, %v4224
        %v4226 = vpop.f32.mrb[0].mxu0
        %4227 = vmatprep.mubr.f32.mxu0 0.0
        %4228 = vmatmul.mubr.f32.gmra.mrb[0].mxu0 %v3771
        %v4229 = vpop.f32.mrb[0].mxu0
        %v4230 = vadd.f32 %v4005, %v4229
        %v4231 = vpop.f32.mrb[0].mxu0
        %4232 = vmatprep.mubr.f32.mxu0 0.0
        %4233 = vmatmul.mubr.f32.gmra.mrb[0].mxu0 %v3774
        %v4234 = vpop.f32.mrb[0].mxu0
        %v4235 = vadd.f32 %v4010, %v4234
        %v4236 = vpop.f32.mrb[0].mxu0
        %4237 = vmatprep.mubr.f32.mxu0 0.0
        %4238 = vmatmul.mubr.f32.gmra.mrb[0].mxu0 %v3777
        %v4239 = vpop.f32.mrb[0].mxu0
        %v4240 = vadd.f32 %v4015, %v4239
        %v4241 = vpop.f32.mrb[0].mxu0
        %4242 = vmatprep.mubr.f32.mxu0 0.0
        %4243 = vmatmul.mubr.f32.gmra.mrb[0].mxu0 %v3780
        %v4244 = vpop.f32.mrb[0].mxu0
        %v4245 = vadd.f32 %v4020, %v4244
        %v4246 = vpop.f32.mrb[0].mxu0
        %4247 = vmatprep.mubr.f32.mxu0 0.0
        %4248 = vmatmul.mubr.f32.gmra.mrb[0].mxu0 %v3783
        %v4249 = vpop.f32.mrb[0].mxu0
        %v4250 = vadd.f32 %v4025, %v4249
        %v4251 = vpop.f32.mrb[0].mxu0
        %4252 = vmatprep.mubr.f32.mxu0 0.0
        %4253 = vmatmul.mubr.f32.gmra.mrb[0].mxu0 %v3786
        %v4254 = vpop.f32.mrb[0].mxu0
        %v4255 = vadd.f32 %v4030, %v4254
        %v4256 = vpop.f32.mrb[0].mxu0
        %4257 = vmatprep.mubr.f32.mxu0 0.0
        %4258 = vmatmul.mubr.f32.gmra.mrb[0].mxu0 %v3789
        %v4259 = vpop.f32.mrb[0].mxu0
        %v4260 = vadd.f32 %v4035, %v4259
        %v4261 = vpop.f32.mrb[0].mxu0
        %4262 = vmatprep.mubr.f32.mxu0 0.0
        %4263 = vmatmul.mubr.f32.gmra.mrb[0].mxu0 %v3792
        %v4264 = vpop.f32.mrb[0].mxu0
        %v4265 = vadd.f32 %v4040, %v4264
        %v4266 = vpop.f32.mrb[0].mxu0
        %4267 = vmatprep.mubr.f32.mxu0 0.0
        %4268 = vmatmul.mubr.f32.gmra.mrb[0].mxu0 %v3795
        %v4269 = vpop.f32.mrb[0].mxu0
        %v4270 = vadd.f32 %v4045, %v4269
        %v4271 = vpop.f32.mrb[0].mxu0
        %4272 = vmatprep.mubr.f32.mxu0 0.0
        %4273 = vmatmul.mubr.f32.gmra.mrb[0].mxu0 %v3798
        %v4274 = vpop.f32.mrb[0].mxu0
        %v4275 = vadd.f32 %v4050, %v4274
        %v4276 = vpop.f32.mrb[0].mxu0
        %4277 = vmatprep.mubr.f32.mxu0 0.0
        %4278 = vmatmul.mubr.f32.gmra.mrb[0].mxu0 %v3801
        %v4279 = vpop.f32.mrb[0].mxu0
        %v4280 = vadd.f32 %v4055, %v4279
        %v4281 = vpop.f32.mrb[0].mxu0
        %4282 = vmatprep.mubr.f32.mxu0 0.0
        %4283 = vmatmul.mubr.f32.gmra.mrb[0].mxu0 %v3804
        %v4284 = vpop.f32.mrb[0].mxu0
        %v4285 = vadd.f32 %v4060, %v4284
        %v4286 = vpop.f32.mrb[0].mxu0
        %4287 = vmatprep.mubr.f32.mxu0 0.0
        %4288 = vmatmul.mubr.f32.gmra.mrb[0].mxu0 %v3807
        %v4289 = vpop.f32.mrb[0].mxu0
        %v4290 = vadd.f32 %v4065, %v4289
        %v4291 = vpop.f32.mrb[0].mxu0
        %4292 = vmatprep.mubr.f32.mxu0 0.0
        %4293 = vmatmul.mubr.f32.gmra.mrb[0].mxu0 %v3810
        %v4294 = vpop.f32.mrb[0].mxu0
        %v4295 = vadd.f32 %v4070, %v4294
        %v4296 = vpop.f32.mrb[0].mxu0
        %4297 = vmatprep.mubr.f32.mxu0 0.0
        %4298 = vmatmul.mubr.f32.gmra.mrb[0].mxu0 %v3813
        %v4299 = vpop.f32.mrb[0].mxu0
        %v4300 = vadd.f32 %v4075, %v4299
        %v4301 = vpop.f32.mrb[0].mxu0
        %4302 = vmatprep.mubr.f32.mxu0 0.0
        %4303 = vmatmul.mubr.f32.gmra.mrb[0].mxu0 %v3816
        %v4304 = vpop.f32.mrb[0].mxu0
        %v4305 = vadd.f32 %v4080, %v4304
        %v4306 = vpop.f32.mrb[0].mxu0
        %4307 = vmatprep.mubr.f32.mxu0 0.0
        %4308 = vmatmul.mubr.f32.gmra.mrb[0].mxu0 %v3819
        %v4309 = vpop.f32.mrb[0].mxu0
        %v4310 = vadd.f32 %v4085, %v4309
        %v4311 = vpop.f32.mrb[0].mxu0
        %4312 = vmatprep.mubr.f32.mxu0 0.0
        %4313 = vmatmul.mubr.f32.gmra.mrb[0].mxu0 %v3822
        %v4314 = vpop.f32.mrb[0].mxu0
        %v4315 = vadd.f32 %v4090, %v4314
        %v4316 = vpop.f32.mrb[0].mxu0
        %4317 = vmatprep.mubr.f32.mxu0 0.0
        %4318 = vmatmul.mubr.f32.gmra.mrb[0].mxu0 %v3825
        %v4319 = vpop.f32.mrb[0].mxu0
        %v4320 = vadd.f32 %v4095, %v4319
        %v4321 = vpop.f32.mrb[0].mxu0
        %4322 = vmatprep.mubr.f32.mxu0 0.0
        %4323 = vmatmul.mubr.f32.gmra.mrb[0].mxu0 %v3828
        %v4324 = vpop.f32.mrb[0].mxu0
        %v4325 = vadd.f32 %v4100, %v4324
        %v4326 = vpop.f32.mrb[0].mxu0
        %4327 = vdwg.mxu0
        %v4328 = vadd.f32 %v3701, %v4170
        %v4329 = vadd.f32 %v3702, %v4175
        %v4330 = vadd.f32 %v3703, %v4180
        %v4331 = vadd.f32 %v3704, %v4185
        %v4332 = vadd.f32 %v3705, %v4190
        %v4333 = vadd.f32 %v3706, %v4195
        %v4334 = vadd.f32 %v3707, %v4200
        %v4335 = vadd.f32 %v3708, %v4205
        %v4336 = vadd.f32 %v3709, %v4210
        %v4337 = vadd.f32 %v3710, %v4215
        %v4338 = vadd.f32 %v3711, %v4220
        %v4339 = vadd.f32 %v3712, %v4225
        %v4340 = vadd.f32 %v3713, %v4230
        %v4341 = vadd.f32 %v3714, %v4235
        %v4342 = vadd.f32 %v3715, %v4240
        %v4343 = vadd.f32 %v3716, %v4245
        %v4344 = vadd.f32 %v3717, %v4250
        %v4345 = vadd.f32 %v3718, %v4255
        %v4346 = vadd.f32 %v3719, %v4260
        %v4347 = vadd.f32 %v3720, %v4265
        %v4348 = vadd.f32 %v3721, %v4270
        %v4349 = vadd.f32 %v3722, %v4275
        %v4350 = vadd.f32 %v3723, %v4280
        %v4351 = vadd.f32 %v3724, %v4285
        %v4352 = vadd.f32 %v3725, %v4290
        %v4353 = vadd.f32 %v3726, %v4295
        %v4354 = vadd.f32 %v3727, %v4300
        %v4355 = vadd.f32 %v3728, %v4305
        %v4356 = vadd.f32 %v3729, %v4310
        %v4357 = vadd.f32 %v3730, %v4315
        %v4358 = vadd.f32 %v3731, %v4320
        %v4359 = vadd.f32 %v3732, %v4325
        %v4360 = vld [vmem:[%s2152] sm:$0xff]
        %v4361 = vld [vmem:[%s2152 + $0x8] sm:$0xff]
        %v4362 = vld [vmem:[%s2152 + $0x10] sm:$0xff]
        %v4363 = vld [vmem:[%s2152 + $0x18] sm:$0xff]
        %v4364 = vld [vmem:[%s2152 + $0x20] sm:$0xff]
        %v4365 = vld [vmem:[%s2152 + $0x28] sm:$0xff]
        %v4366 = vld [vmem:[%s2152 + $0x30] sm:$0xff]
        %v4367 = vld [vmem:[%s2152 + $0x38] sm:$0xff]
        %v4368 = vld [vmem:[%s2152 + $0x40] sm:$0xff]
        %v4369 = vld [vmem:[%s2152 + $0x48] sm:$0xff]
        %v4370 = vld [vmem:[%s2152 + $0x50] sm:$0xff]
        %v4371 = vld [vmem:[%s2152 + $0x58] sm:$0xff]
        %v4372 = vld [vmem:[%s2152 + $0x60] sm:$0xff]
        %v4373 = vld [vmem:[%s2152 + $0x68] sm:$0xff]
        %v4374 = vld [vmem:[%s2152 + $0x70] sm:$0xff]
        %v4375 = vld [vmem:[%s2152 + $0x78] sm:$0xff]
        %v4376 = vld [vmem:[%s2152 + $0x80] sm:$0xff]
        %v4377 = vld [vmem:[%s2152 + $0x88] sm:$0xff]
        %v4378 = vld [vmem:[%s2152 + $0x90] sm:$0xff]
        %v4379 = vld [vmem:[%s2152 + $0x98] sm:$0xff]
        %v4380 = vld [vmem:[%s2152 + $0xa0] sm:$0xff]
        %v4381 = vld [vmem:[%s2152 + $0xa8] sm:$0xff]
        %v4382 = vld [vmem:[%s2152 + $0xb0] sm:$0xff]
        %v4383 = vld [vmem:[%s2152 + $0xb8] sm:$0xff]
        %v4384 = vld [vmem:[%s2152 + $0xc0] sm:$0xff]
        %v4385 = vld [vmem:[%s2152 + $0xc8] sm:$0xff]
        %v4386 = vld [vmem:[%s2152 + $0xd0] sm:$0xff]
        %v4387 = vld [vmem:[%s2152 + $0xd8] sm:$0xff]
        %v4388 = vld [vmem:[%s2152 + $0xe0] sm:$0xff]
        %v4389 = vld [vmem:[%s2152 + $0xe8] sm:$0xff]
        %v4390 = vld [vmem:[%s2152 + $0xf0] sm:$0xff]
        %v4391 = vld [vmem:[%s2152 + $0xf8] sm:$0xff]
        %v4392 = vld [vmem:[%s2152 + $0x100] sm:$0xff]
        %v4393 = vld [vmem:[%s2152 + $0x108] sm:$0xff]
        %v4394 = vld [vmem:[%s2152 + $0x110] sm:$0xff]
        %v4395 = vld [vmem:[%s2152 + $0x118] sm:$0xff]
        %v4396 = vld [vmem:[%s2152 + $0x120] sm:$0xff]
        %v4397 = vld [vmem:[%s2152 + $0x128] sm:$0xff]
        %v4398 = vld [vmem:[%s2152 + $0x130] sm:$0xff]
        %v4399 = vld [vmem:[%s2152 + $0x138] sm:$0xff]
        %v4400 = vld [vmem:[%s2152 + $0x140] sm:$0xff]
        %v4401 = vld [vmem:[%s2152 + $0x148] sm:$0xff]
        %v4402 = vld [vmem:[%s2152 + $0x150] sm:$0xff]
        %v4403 = vld [vmem:[%s2152 + $0x158] sm:$0xff]
        %v4404 = vld [vmem:[%s2152 + $0x160] sm:$0xff]
        %v4405 = vld [vmem:[%s2152 + $0x168] sm:$0xff]
        %v4406 = vld [vmem:[%s2152 + $0x170] sm:$0xff]
        %v4407 = vld [vmem:[%s2152 + $0x178] sm:$0xff]
        %v4408 = vld [vmem:[%s2152 + $0x180] sm:$0xff]
        %v4409 = vld [vmem:[%s2152 + $0x188] sm:$0xff]
        %v4410 = vld [vmem:[%s2152 + $0x190] sm:$0xff]
        %v4411 = vld [vmem:[%s2152 + $0x198] sm:$0xff]
        %v4412 = vld [vmem:[%s2152 + $0x1a0] sm:$0xff]
        %v4413 = vld [vmem:[%s2152 + $0x1a8] sm:$0xff]
        %v4414 = vld [vmem:[%s2152 + $0x1b0] sm:$0xff]
        %v4415 = vld [vmem:[%s2152 + $0x1b8] sm:$0xff]
        %v4416 = vld [vmem:[%s2152 + $0x1c0] sm:$0xff]
        %v4417 = vld [vmem:[%s2152 + $0x1c8] sm:$0xff]
        %v4418 = vld [vmem:[%s2152 + $0x1d0] sm:$0xff]
        %v4419 = vld [vmem:[%s2152 + $0x1d8] sm:$0xff]
        %v4420 = vld [vmem:[%s2152 + $0x1e0] sm:$0xff]
        %v4421 = vld [vmem:[%s2152 + $0x1e8] sm:$0xff]
        %v4422 = vld [vmem:[%s2152 + $0x1f0] sm:$0xff]
        %v4423 = vld [vmem:[%s2152 + $0x1f8] sm:$0xff]
        %v4424 = vld [vmem:[%s2152 + $0x200] sm:$0xff]
        %v4425 = vld [vmem:[%s2152 + $0x208] sm:$0xff]
        %v4426 = vld [vmem:[%s2152 + $0x210] sm:$0xff]
        %v4427 = vld [vmem:[%s2152 + $0x218] sm:$0xff]
        %v4428 = vld [vmem:[%s2152 + $0x220] sm:$0xff]
        %v4429 = vld [vmem:[%s2152 + $0x228] sm:$0xff]
        %v4430 = vld [vmem:[%s2152 + $0x230] sm:$0xff]
        %v4431 = vld [vmem:[%s2152 + $0x238] sm:$0xff]
        %v4432 = vld [vmem:[%s2152 + $0x240] sm:$0xff]
        %v4433 = vld [vmem:[%s2152 + $0x248] sm:$0xff]
        %v4434 = vld [vmem:[%s2152 + $0x250] sm:$0xff]
        %v4435 = vld [vmem:[%s2152 + $0x258] sm:$0xff]
        %v4436 = vld [vmem:[%s2152 + $0x260] sm:$0xff]
        %v4437 = vld [vmem:[%s2152 + $0x268] sm:$0xff]
        %v4438 = vld [vmem:[%s2152 + $0x270] sm:$0xff]
        %v4439 = vld [vmem:[%s2152 + $0x278] sm:$0xff]
        %v4440 = vld [vmem:[%s2152 + $0x280] sm:$0xff]
        %v4441 = vld [vmem:[%s2152 + $0x288] sm:$0xff]
        %v4442 = vld [vmem:[%s2152 + $0x290] sm:$0xff]
        %v4443 = vld [vmem:[%s2152 + $0x298] sm:$0xff]
        %v4444 = vld [vmem:[%s2152 + $0x2a0] sm:$0xff]
        %v4445 = vld [vmem:[%s2152 + $0x2a8] sm:$0xff]
        %v4446 = vld [vmem:[%s2152 + $0x2b0] sm:$0xff]
        %v4447 = vld [vmem:[%s2152 + $0x2b8] sm:$0xff]
        %v4448 = vld [vmem:[%s2152 + $0x2c0] sm:$0xff]
        %v4449 = vld [vmem:[%s2152 + $0x2c8] sm:$0xff]
        %v4450 = vld [vmem:[%s2152 + $0x2d0] sm:$0xff]
        %v4451 = vld [vmem:[%s2152 + $0x2d8] sm:$0xff]
        %v4452 = vld [vmem:[%s2152 + $0x2e0] sm:$0xff]
        %v4453 = vld [vmem:[%s2152 + $0x2e8] sm:$0xff]
        %v4454 = vld [vmem:[%s2152 + $0x2f0] sm:$0xff]
        %v4455 = vld [vmem:[%s2152 + $0x2f8] sm:$0xff]
        %s4456 = scalar_lea.vmem [#allocation9], 768
        %v4457 = vld [vmem:[%s4456] sm:$0xff]
        %v4458 = vld [vmem:[%s4456 + $0x8] sm:$0xff]
        %v4459 = vld [vmem:[%s4456 + $0x10] sm:$0xff]
        %v4460 = vld [vmem:[%s4456 + $0x18] sm:$0xff]
        %v4461 = vld [vmem:[%s4456 + $0x20] sm:$0xff]
        %v4462 = vld [vmem:[%s4456 + $0x28] sm:$0xff]
        %v4463 = vld [vmem:[%s4456 + $0x30] sm:$0xff]
        %v4464 = vld [vmem:[%s4456 + $0x38] sm:$0xff]
        %v4465 = vld [vmem:[%s4456 + $0x40] sm:$0xff]
        %v4466 = vld [vmem:[%s4456 + $0x48] sm:$0xff]
        %v4467 = vld [vmem:[%s4456 + $0x50] sm:$0xff]
        %v4468 = vld [vmem:[%s4456 + $0x58] sm:$0xff]
        %v4469 = vld [vmem:[%s4456 + $0x60] sm:$0xff]
        %v4470 = vld [vmem:[%s4456 + $0x68] sm:$0xff]
        %v4471 = vld [vmem:[%s4456 + $0x70] sm:$0xff]
        %v4472 = vld [vmem:[%s4456 + $0x78] sm:$0xff]
        %v4473 = vld [vmem:[%s4456 + $0x80] sm:$0xff]
        %v4474 = vld [vmem:[%s4456 + $0x88] sm:$0xff]
        %v4475 = vld [vmem:[%s4456 + $0x90] sm:$0xff]
        %v4476 = vld [vmem:[%s4456 + $0x98] sm:$0xff]
        %v4477 = vld [vmem:[%s4456 + $0xa0] sm:$0xff]
        %v4478 = vld [vmem:[%s4456 + $0xa8] sm:$0xff]
        %v4479 = vld [vmem:[%s4456 + $0xb0] sm:$0xff]
        %v4480 = vld [vmem:[%s4456 + $0xb8] sm:$0xff]
        %v4481 = vld [vmem:[%s4456 + $0xc0] sm:$0xff]
        %v4482 = vld [vmem:[%s4456 + $0xc8] sm:$0xff]
        %v4483 = vld [vmem:[%s4456 + $0xd0] sm:$0xff]
        %v4484 = vld [vmem:[%s4456 + $0xd8] sm:$0xff]
        %v4485 = vld [vmem:[%s4456 + $0xe0] sm:$0xff]
        %v4486 = vld [vmem:[%s4456 + $0xe8] sm:$0xff]
        %v4487 = vld [vmem:[%s4456 + $0xf0] sm:$0xff]
        %v4488 = vld [vmem:[%s4456 + $0xf8] sm:$0xff]
        %v4489 = vld [vmem:[%s4456 + $0x100] sm:$0xff]
        %v4490 = vld [vmem:[%s4456 + $0x108] sm:$0xff]
        %v4491 = vld [vmem:[%s4456 + $0x110] sm:$0xff]
        %v4492 = vld [vmem:[%s4456 + $0x118] sm:$0xff]
        %v4493 = vld [vmem:[%s4456 + $0x120] sm:$0xff]
        %v4494 = vld [vmem:[%s4456 + $0x128] sm:$0xff]
        %v4495 = vld [vmem:[%s4456 + $0x130] sm:$0xff]
        %v4496 = vld [vmem:[%s4456 + $0x138] sm:$0xff]
        %v4497 = vld [vmem:[%s4456 + $0x140] sm:$0xff]
        %v4498 = vld [vmem:[%s4456 + $0x148] sm:$0xff]
        %v4499 = vld [vmem:[%s4456 + $0x150] sm:$0xff]
        %v4500 = vld [vmem:[%s4456 + $0x158] sm:$0xff]
        %v4501 = vld [vmem:[%s4456 + $0x160] sm:$0xff]
        %v4502 = vld [vmem:[%s4456 + $0x168] sm:$0xff]
        %v4503 = vld [vmem:[%s4456 + $0x170] sm:$0xff]
        %v4504 = vld [vmem:[%s4456 + $0x178] sm:$0xff]
        %4505 = vmatprep.subr.mxu0 0.0
        %4506 = vmatpush1.msra.mxu0 %v4457
        %4507 = vmatprep.subr.mxu0 0.0
        %4508 = vmatpush1.msra.mxu0 %v4458
        %4509 = vmatprep.subr.mxu0 0.0
        %4510 = vmatpush1.msra.mxu0 %v4459
        %4511 = vmatprep.subr.mxu0 0.0
        %4512 = vmatpush1.msra.mxu0 %v4460
        %4513 = vmatprep.subr.mxu0 0.0
        %4514 = vmatpush1.msra.mxu0 %v4461
        %4515 = vmatprep.subr.mxu0 0.0
        %4516 = vmatpush1.msra.mxu0 %v4462
        %4517 = vmatprep.subr.mxu0 0.0
        %4518 = vmatpush1.msra.mxu0 %v4463
        %4519 = vmatprep.subr.mxu0 0.0
        %4520 = vmatpush1.msra.mxu0 %v4464
        %4521 = vmatprep.subr.mxu0 0.0
        %4522 = vmatpush1.msra.mxu0 %v4465
        %4523 = vmatprep.subr.mxu0 0.0
        %4524 = vmatpush1.msra.mxu0 %v4466
        %4525 = vmatprep.subr.mxu0 0.0
        %4526 = vmatpush1.msra.mxu0 %v4467
        %4527 = vmatprep.subr.mxu0 0.0
        %4528 = vmatpush1.msra.mxu0 %v4468
        %4529 = vmatprep.subr.mxu0 0.0
        %4530 = vmatpush1.msra.mxu0 %v4469
        %4531 = vmatprep.subr.mxu0 0.0
        %4532 = vmatpush1.msra.mxu0 %v4470
        %4533 = vmatprep.subr.mxu0 0.0
        %4534 = vmatpush1.msra.mxu0 %v4471
        %4535 = vmatprep.subr.mxu0 0.0
        %4536 = vmatpush1.msra.mxu0 %v4472
        %4537 = vmatprep.subr.mxu0 0.0
        %4538 = vmatpush1.msra.mxu0 %v4473
        %4539 = vmatprep.subr.mxu0 0.0
        %4540 = vmatpush1.msra.mxu0 %v4474
        %4541 = vmatprep.subr.mxu0 0.0
        %4542 = vmatpush1.msra.mxu0 %v4475
        %4543 = vmatprep.subr.mxu0 0.0
        %4544 = vmatpush1.msra.mxu0 %v4476
        %4545 = vmatprep.subr.mxu0 0.0
        %4546 = vmatpush1.msra.mxu0 %v4477
        %4547 = vmatprep.subr.mxu0 0.0
        %4548 = vmatpush1.msra.mxu0 %v4478
        %4549 = vmatprep.subr.mxu0 0.0
        %4550 = vmatpush1.msra.mxu0 %v4479
        %4551 = vmatprep.subr.mxu0 0.0
        %4552 = vmatpush1.msra.mxu0 %v4480
        %4553 = vmatprep.subr.mxu0 0.0
        %4554 = vmatpush1.msra.mxu0 %v4481
        %4555 = vmatprep.subr.mxu0 0.0
        %4556 = vmatpush1.msra.mxu0 %v4482
        %4557 = vmatprep.subr.mxu0 0.0
        %4558 = vmatpush1.msra.mxu0 %v4483
        %4559 = vmatprep.subr.mxu0 0.0
        %4560 = vmatpush1.msra.mxu0 %v4484
        %4561 = vmatprep.subr.mxu0 0.0
        %4562 = vmatpush1.msra.mxu0 %v4485
        %4563 = vmatprep.subr.mxu0 0.0
        %4564 = vmatpush1.msra.mxu0 %v4486
        %4565 = vmatprep.subr.mxu0 0.0
        %4566 = vmatpush1.msra.mxu0 %v4487
        %4567 = vmatprep.subr.mxu0 0.0
        %4568 = vmatpush1.msra.mxu0 %v4488
        %4569 = vmatprep.mubr.f32.mxu0 %v4361
        %4570 = vmatmul.mubr.f32.gmra.mrb[0].mxu0 %v4360
        %v4571 = vpop.f32.mrb[0].mxu0
        %v4572 = vadd.f32 0.0, %v4571
        %v4573 = vpop.f32.mrb[0].mxu0
        %4574 = vmatprep.mubr.f32.mxu0 %v4364
        %4575 = vmatmul.mubr.f32.gmra.mrb[0].mxu0 %v4363
        %v4576 = vpop.f32.mrb[0].mxu0
        %v4577 = vadd.f32 0.0, %v4576
        %v4578 = vpop.f32.mrb[0].mxu0
        %4579 = vmatprep.mubr.f32.mxu0 %v4367
        %4580 = vmatmul.mubr.f32.gmra.mrb[0].mxu0 %v4366
        %v4581 = vpop.f32.mrb[0].mxu0
        %v4582 = vadd.f32 0.0, %v4581
        %v4583 = vpop.f32.mrb[0].mxu0
        %4584 = vmatprep.mubr.f32.mxu0 %v4370
        %4585 = vmatmul.mubr.f32.gmra.mrb[0].mxu0 %v4369
        %v4586 = vpop.f32.mrb[0].mxu0
        %v4587 = vadd.f32 0.0, %v4586
        %v4588 = vpop.f32.mrb[0].mxu0
        %4589 = vmatprep.mubr.f32.mxu0 %v4373
        %4590 = vmatmul.mubr.f32.gmra.mrb[0].mxu0 %v4372
        %v4591 = vpop.f32.mrb[0].mxu0
        %v4592 = vadd.f32 0.0, %v4591
        %v4593 = vpop.f32.mrb[0].mxu0
        %4594 = vmatprep.mubr.f32.mxu0 %v4376
        %4595 = vmatmul.mubr.f32.gmra.mrb[0].mxu0 %v4375
        %v4596 = vpop.f32.mrb[0].mxu0
        %v4597 = vadd.f32 0.0, %v4596
        %v4598 = vpop.f32.mrb[0].mxu0
        %4599 = vmatprep.mubr.f32.mxu0 %v4379
        %4600 = vmatmul.mubr.f32.gmra.mrb[0].mxu0 %v4378
        %v4601 = vpop.f32.mrb[0].mxu0
        %v4602 = vadd.f32 0.0, %v4601
        %v4603 = vpop.f32.mrb[0].mxu0
        %4604 = vmatprep.mubr.f32.mxu0 %v4382
        %4605 = vmatmul.mubr.f32.gmra.mrb[0].mxu0 %v4381
        %v4606 = vpop.f32.mrb[0].mxu0
        %v4607 = vadd.f32 0.0, %v4606
        %v4608 = vpop.f32.mrb[0].mxu0
        %4609 = vmatprep.mubr.f32.mxu0 %v4385
        %4610 = vmatmul.mubr.f32.gmra.mrb[0].mxu0 %v4384
        %v4611 = vpop.f32.mrb[0].mxu0
        %v4612 = vadd.f32 0.0, %v4611
        %v4613 = vpop.f32.mrb[0].mxu0
        %4614 = vmatprep.mubr.f32.mxu0 %v4388
        %4615 = vmatmul.mubr.f32.gmra.mrb[0].mxu0 %v4387
        %v4616 = vpop.f32.mrb[0].mxu0
        %v4617 = vadd.f32 0.0, %v4616
        %v4618 = vpop.f32.mrb[0].mxu0
        %4619 = vmatprep.mubr.f32.mxu0 %v4391
        %4620 = vmatmul.mubr.f32.gmra.mrb[0].mxu0 %v4390
        %v4621 = vpop.f32.mrb[0].mxu0
        %v4622 = vadd.f32 0.0, %v4621
        %v4623 = vpop.f32.mrb[0].mxu0
        %4624 = vmatprep.mubr.f32.mxu0 %v4394
        %4625 = vmatmul.mubr.f32.gmra.mrb[0].mxu0 %v4393
        %v4626 = vpop.f32.mrb[0].mxu0
        %v4627 = vadd.f32 0.0, %v4626
        %v4628 = vpop.f32.mrb[0].mxu0
        %4629 = vmatprep.mubr.f32.mxu0 %v4397
        %4630 = vmatmul.mubr.f32.gmra.mrb[0].mxu0 %v4396
        %v4631 = vpop.f32.mrb[0].mxu0
        %v4632 = vadd.f32 0.0, %v4631
        %v4633 = vpop.f32.mrb[0].mxu0
        %4634 = vmatprep.mubr.f32.mxu0 %v4400
        %4635 = vmatmul.mubr.f32.gmra.mrb[0].mxu0 %v4399
        %v4636 = vpop.f32.mrb[0].mxu0
        %v4637 = vadd.f32 0.0, %v4636
        %v4638 = vpop.f32.mrb[0].mxu0
        %4639 = vmatprep.mubr.f32.mxu0 %v4403
        %4640 = vmatmul.mubr.f32.gmra.mrb[0].mxu0 %v4402
        %v4641 = vpop.f32.mrb[0].mxu0
        %v4642 = vadd.f32 0.0, %v4641
        %v4643 = vpop.f32.mrb[0].mxu0
        %4644 = vmatprep.mubr.f32.mxu0 %v4406
        %4645 = vmatmul.mubr.f32.gmra.mrb[0].mxu0 %v4405
        %v4646 = vpop.f32.mrb[0].mxu0
        %v4647 = vadd.f32 0.0, %v4646
        %v4648 = vpop.f32.mrb[0].mxu0
        %4649 = vmatprep.mubr.f32.mxu0 %v4409
        %4650 = vmatmul.mubr.f32.gmra.mrb[0].mxu0 %v4408
        %v4651 = vpop.f32.mrb[0].mxu0
        %v4652 = vadd.f32 0.0, %v4651
        %v4653 = vpop.f32.mrb[0].mxu0
        %4654 = vmatprep.mubr.f32.mxu0 %v4412
        %4655 = vmatmul.mubr.f32.gmra.mrb[0].mxu0 %v4411
        %v4656 = vpop.f32.mrb[0].mxu0
        %v4657 = vadd.f32 0.0, %v4656
        %v4658 = vpop.f32.mrb[0].mxu0
        %4659 = vmatprep.mubr.f32.mxu0 %v4415
        %4660 = vmatmul.mubr.f32.gmra.mrb[0].mxu0 %v4414
        %v4661 = vpop.f32.mrb[0].mxu0
        %v4662 = vadd.f32 0.0, %v4661
        %v4663 = vpop.f32.mrb[0].mxu0
        %4664 = vmatprep.mubr.f32.mxu0 %v4418
        %4665 = vmatmul.mubr.f32.gmra.mrb[0].mxu0 %v4417
        %v4666 = vpop.f32.mrb[0].mxu0
        %v4667 = vadd.f32 0.0, %v4666
        %v4668 = vpop.f32.mrb[0].mxu0
        %4669 = vmatprep.mubr.f32.mxu0 %v4421
        %4670 = vmatmul.mubr.f32.gmra.mrb[0].mxu0 %v4420
        %v4671 = vpop.f32.mrb[0].mxu0
        %v4672 = vadd.f32 0.0, %v4671
        %v4673 = vpop.f32.mrb[0].mxu0
        %4674 = vmatprep.mubr.f32.mxu0 %v4424
        %4675 = vmatmul.mubr.f32.gmra.mrb[0].mxu0 %v4423
        %v4676 = vpop.f32.mrb[0].mxu0
        %v4677 = vadd.f32 0.0, %v4676
        %v4678 = vpop.f32.mrb[0].mxu0
        %4679 = vmatprep.mubr.f32.mxu0 %v4427
        %4680 = vmatmul.mubr.f32.gmra.mrb[0].mxu0 %v4426
        %v4681 = vpop.f32.mrb[0].mxu0
        %v4682 = vadd.f32 0.0, %v4681
        %v4683 = vpop.f32.mrb[0].mxu0
        %4684 = vmatprep.mubr.f32.mxu0 %v4430
        %4685 = vmatmul.mubr.f32.gmra.mrb[0].mxu0 %v4429
        %v4686 = vpop.f32.mrb[0].mxu0
        %v4687 = vadd.f32 0.0, %v4686
        %v4688 = vpop.f32.mrb[0].mxu0
        %4689 = vmatprep.mubr.f32.mxu0 %v4433
        %4690 = vmatmul.mubr.f32.gmra.mrb[0].mxu0 %v4432
        %v4691 = vpop.f32.mrb[0].mxu0
        %v4692 = vadd.f32 0.0, %v4691
        %v4693 = vpop.f32.mrb[0].mxu0
        %4694 = vmatprep.mubr.f32.mxu0 %v4436
        %4695 = vmatmul.mubr.f32.gmra.mrb[0].mxu0 %v4435
        %v4696 = vpop.f32.mrb[0].mxu0
        %v4697 = vadd.f32 0.0, %v4696
        %v4698 = vpop.f32.mrb[0].mxu0
        %4699 = vmatprep.mubr.f32.mxu0 %v4439
        %4700 = vmatmul.mubr.f32.gmra.mrb[0].mxu0 %v4438
        %v4701 = vpop.f32.mrb[0].mxu0
        %v4702 = vadd.f32 0.0, %v4701
        %v4703 = vpop.f32.mrb[0].mxu0
        %4704 = vmatprep.mubr.f32.mxu0 %v4442
        %4705 = vmatmul.mubr.f32.gmra.mrb[0].mxu0 %v4441
        %v4706 = vpop.f32.mrb[0].mxu0
        %v4707 = vadd.f32 0.0, %v4706
        %v4708 = vpop.f32.mrb[0].mxu0
        %4709 = vmatprep.mubr.f32.mxu0 %v4445
        %4710 = vmatmul.mubr.f32.gmra.mrb[0].mxu0 %v4444
        %v4711 = vpop.f32.mrb[0].mxu0
        %v4712 = vadd.f32 0.0, %v4711
        %v4713 = vpop.f32.mrb[0].mxu0
        %4714 = vmatprep.mubr.f32.mxu0 %v4448
        %4715 = vmatmul.mubr.f32.gmra.mrb[0].mxu0 %v4447
        %v4716 = vpop.f32.mrb[0].mxu0
        %v4717 = vadd.f32 0.0, %v4716
        %v4718 = vpop.f32.mrb[0].mxu0
        %4719 = vmatprep.mubr.f32.mxu0 %v4451
        %4720 = vmatmul.mubr.f32.gmra.mrb[0].mxu0 %v4450
        %v4721 = vpop.f32.mrb[0].mxu0
        %v4722 = vadd.f32 0.0, %v4721
        %v4723 = vpop.f32.mrb[0].mxu0
        %4724 = vmatprep.mubr.f32.mxu0 %v4454
        %4725 = vmatmul.mubr.f32.gmra.mrb[0].mxu0 %v4453
        %v4726 = vpop.f32.mrb[0].mxu0
        %v4727 = vadd.f32 0.0, %v4726
        %v4728 = vpop.f32.mrb[0].mxu0
        %4729 = vdwg.mxu0
        %4730 = vmatprep.subr.mxu0 0.0
        %4731 = vmatpush1.msra.mxu0 %v4489
        %4732 = vmatprep.subr.mxu0 0.0
        %4733 = vmatpush1.msra.mxu0 %v4490
        %4734 = vmatprep.subr.mxu0 0.0
        %4735 = vmatpush1.msra.mxu0 %v4491
        %4736 = vmatprep.subr.mxu0 0.0
        %4737 = vmatpush1.msra.mxu0 %v4492
        %4738 = vmatprep.subr.mxu0 0.0
        %4739 = vmatpush1.msra.mxu0 %v4493
        %4740 = vmatprep.subr.mxu0 0.0
        %4741 = vmatpush1.msra.mxu0 %v4494
        %4742 = vmatprep.subr.mxu0 0.0
        %4743 = vmatpush1.msra.mxu0 %v4495
        %4744 = vmatprep.subr.mxu0 0.0
        %4745 = vmatpush1.msra.mxu0 %v4496
        %4746 = vmatprep.subr.mxu0 0.0
        %4747 = vmatpush1.msra.mxu0 %v4497
        %4748 = vmatprep.subr.mxu0 0.0
        %4749 = vmatpush1.msra.mxu0 %v4498
        %4750 = vmatprep.subr.mxu0 0.0
        %4751 = vmatpush1.msra.mxu0 %v4499
        %4752 = vmatprep.subr.mxu0 0.0
        %4753 = vmatpush1.msra.mxu0 %v4500
        %4754 = vmatprep.subr.mxu0 0.0
        %4755 = vmatpush1.msra.mxu0 %v4501
        %4756 = vmatprep.subr.mxu0 0.0
        %4757 = vmatpush1.msra.mxu0 %v4502
        %4758 = vmatprep.subr.mxu0 0.0
        %4759 = vmatpush1.msra.mxu0 %v4503
        %4760 = vmatprep.subr.mxu0 0.0
        %4761 = vmatpush1.msra.mxu0 %v4504
        %4762 = vmatprep.subr.mxu0 0.0
        %4763 = vmatpush1.msra.mxu0 0.0
        %4764 = vmatprep.subr.mxu0 0.0
        %4765 = vmatpush1.msra.mxu0 0.0
        %4766 = vmatprep.subr.mxu0 0.0
        %4767 = vmatpush1.msra.mxu0 0.0
        %4768 = vmatprep.subr.mxu0 0.0
        %4769 = vmatpush1.msra.mxu0 0.0
        %4770 = vmatprep.subr.mxu0 0.0
        %4771 = vmatpush1.msra.mxu0 0.0
        %4772 = vmatprep.subr.mxu0 0.0
        %4773 = vmatpush1.msra.mxu0 0.0
        %4774 = vmatprep.subr.mxu0 0.0
        %4775 = vmatpush1.msra.mxu0 0.0
        %4776 = vmatprep.subr.mxu0 0.0
        %4777 = vmatpush1.msra.mxu0 0.0
        %4778 = vmatprep.subr.mxu0 0.0
        %4779 = vmatpush1.msra.mxu0 0.0
        %4780 = vmatprep.subr.mxu0 0.0
        %4781 = vmatpush1.msra.mxu0 0.0
        %4782 = vmatprep.subr.mxu0 0.0
        %4783 = vmatpush1.msra.mxu0 0.0
        %4784 = vmatprep.subr.mxu0 0.0
        %4785 = vmatpush1.msra.mxu0 0.0
        %4786 = vmatprep.subr.mxu0 0.0
        %4787 = vmatpush1.msra.mxu0 0.0
        %4788 = vmatprep.subr.mxu0 0.0
        %4789 = vmatpush1.msra.mxu0 0.0
        %4790 = vmatprep.subr.mxu0 0.0
        %4791 = vmatpush1.msra.mxu0 0.0
        %4792 = vmatprep.subr.mxu0 0.0
        %4793 = vmatpush1.msra.mxu0 0.0
        %4794 = vmatprep.mubr.f32.mxu0 0.0
        %4795 = vmatmul.mubr.f32.gmra.mrb[0].mxu0 %v4362
        %v4796 = vpop.f32.mrb[0].mxu0
        %v4797 = vadd.f32 %v4572, %v4796
        %v4798 = vpop.f32.mrb[0].mxu0
        %4799 = vmatprep.mubr.f32.mxu0 0.0
        %4800 = vmatmul.mubr.f32.gmra.mrb[0].mxu0 %v4365
        %v4801 = vpop.f32.mrb[0].mxu0
        %v4802 = vadd.f32 %v4577, %v4801
        %v4803 = vpop.f32.mrb[0].mxu0
        %4804 = vmatprep.mubr.f32.mxu0 0.0
        %4805 = vmatmul.mubr.f32.gmra.mrb[0].mxu0 %v4368
        %v4806 = vpop.f32.mrb[0].mxu0
        %v4807 = vadd.f32 %v4582, %v4806
        %v4808 = vpop.f32.mrb[0].mxu0
        %4809 = vmatprep.mubr.f32.mxu0 0.0
        %4810 = vmatmul.mubr.f32.gmra.mrb[0].mxu0 %v4371
        %v4811 = vpop.f32.mrb[0].mxu0
        %v4812 = vadd.f32 %v4587, %v4811
        %v4813 = vpop.f32.mrb[0].mxu0
        %4814 = vmatprep.mubr.f32.mxu0 0.0
        %4815 = vmatmul.mubr.f32.gmra.mrb[0].mxu0 %v4374
        %v4816 = vpop.f32.mrb[0].mxu0
        %v4817 = vadd.f32 %v4592, %v4816
        %v4818 = vpop.f32.mrb[0].mxu0
        %4819 = vmatprep.mubr.f32.mxu0 0.0
        %4820 = vmatmul.mubr.f32.gmra.mrb[0].mxu0 %v4377
        %v4821 = vpop.f32.mrb[0].mxu0
        %v4822 = vadd.f32 %v4597, %v4821
        %v4823 = vpop.f32.mrb[0].mxu0
        %4824 = vmatprep.mubr.f32.mxu0 0.0
        %4825 = vmatmul.mubr.f32.gmra.mrb[0].mxu0 %v4380
        %v4826 = vpop.f32.mrb[0].mxu0
        %v4827 = vadd.f32 %v4602, %v4826
        %v4828 = vpop.f32.mrb[0].mxu0
        %4829 = vmatprep.mubr.f32.mxu0 0.0
        %4830 = vmatmul.mubr.f32.gmra.mrb[0].mxu0 %v4383
        %v4831 = vpop.f32.mrb[0].mxu0
        %v4832 = vadd.f32 %v4607, %v4831
        %v4833 = vpop.f32.mrb[0].mxu0
        %4834 = vmatprep.mubr.f32.mxu0 0.0
        %4835 = vmatmul.mubr.f32.gmra.mrb[0].mxu0 %v4386
        %v4836 = vpop.f32.mrb[0].mxu0
        %v4837 = vadd.f32 %v4612, %v4836
        %v4838 = vpop.f32.mrb[0].mxu0
        %4839 = vmatprep.mubr.f32.mxu0 0.0
        %4840 = vmatmul.mubr.f32.gmra.mrb[0].mxu0 %v4389
        %v4841 = vpop.f32.mrb[0].mxu0
        %v4842 = vadd.f32 %v4617, %v4841
        %v4843 = vpop.f32.mrb[0].mxu0
        %4844 = vmatprep.mubr.f32.mxu0 0.0
        %4845 = vmatmul.mubr.f32.gmra.mrb[0].mxu0 %v4392
        %v4846 = vpop.f32.mrb[0].mxu0
        %v4847 = vadd.f32 %v4622, %v4846
        %v4848 = vpop.f32.mrb[0].mxu0
        %4849 = vmatprep.mubr.f32.mxu0 0.0
        %4850 = vmatmul.mubr.f32.gmra.mrb[0].mxu0 %v4395
        %v4851 = vpop.f32.mrb[0].mxu0
        %v4852 = vadd.f32 %v4627, %v4851
        %v4853 = vpop.f32.mrb[0].mxu0
        %4854 = vmatprep.mubr.f32.mxu0 0.0
        %4855 = vmatmul.mubr.f32.gmra.mrb[0].mxu0 %v4398
        %v4856 = vpop.f32.mrb[0].mxu0
        %v4857 = vadd.f32 %v4632, %v4856
        %v4858 = vpop.f32.mrb[0].mxu0
        %4859 = vmatprep.mubr.f32.mxu0 0.0
        %4860 = vmatmul.mubr.f32.gmra.mrb[0].mxu0 %v4401
        %v4861 = vpop.f32.mrb[0].mxu0
        %v4862 = vadd.f32 %v4637, %v4861
        %v4863 = vpop.f32.mrb[0].mxu0
        %4864 = vmatprep.mubr.f32.mxu0 0.0
        %4865 = vmatmul.mubr.f32.gmra.mrb[0].mxu0 %v4404
        %v4866 = vpop.f32.mrb[0].mxu0
        %v4867 = vadd.f32 %v4642, %v4866
        %v4868 = vpop.f32.mrb[0].mxu0
        %4869 = vmatprep.mubr.f32.mxu0 0.0
        %4870 = vmatmul.mubr.f32.gmra.mrb[0].mxu0 %v4407
        %v4871 = vpop.f32.mrb[0].mxu0
        %v4872 = vadd.f32 %v4647, %v4871
        %v4873 = vpop.f32.mrb[0].mxu0
        %4874 = vmatprep.mubr.f32.mxu0 0.0
        %4875 = vmatmul.mubr.f32.gmra.mrb[0].mxu0 %v4410
        %v4876 = vpop.f32.mrb[0].mxu0
        %v4877 = vadd.f32 %v4652, %v4876
        %v4878 = vpop.f32.mrb[0].mxu0
        %4879 = vmatprep.mubr.f32.mxu0 0.0
        %4880 = vmatmul.mubr.f32.gmra.mrb[0].mxu0 %v4413
        %v4881 = vpop.f32.mrb[0].mxu0
        %v4882 = vadd.f32 %v4657, %v4881
        %v4883 = vpop.f32.mrb[0].mxu0
        %4884 = vmatprep.mubr.f32.mxu0 0.0
        %4885 = vmatmul.mubr.f32.gmra.mrb[0].mxu0 %v4416
        %v4886 = vpop.f32.mrb[0].mxu0
        %v4887 = vadd.f32 %v4662, %v4886
        %v4888 = vpop.f32.mrb[0].mxu0
        %4889 = vmatprep.mubr.f32.mxu0 0.0
        %4890 = vmatmul.mubr.f32.gmra.mrb[0].mxu0 %v4419
        %v4891 = vpop.f32.mrb[0].mxu0
        %v4892 = vadd.f32 %v4667, %v4891
        %v4893 = vpop.f32.mrb[0].mxu0
        %4894 = vmatprep.mubr.f32.mxu0 0.0
        %4895 = vmatmul.mubr.f32.gmra.mrb[0].mxu0 %v4422
        %v4896 = vpop.f32.mrb[0].mxu0
        %v4897 = vadd.f32 %v4672, %v4896
        %v4898 = vpop.f32.mrb[0].mxu0
        %4899 = vmatprep.mubr.f32.mxu0 0.0
        %4900 = vmatmul.mubr.f32.gmra.mrb[0].mxu0 %v4425
        %v4901 = vpop.f32.mrb[0].mxu0
        %v4902 = vadd.f32 %v4677, %v4901
        %v4903 = vpop.f32.mrb[0].mxu0
        %4904 = vmatprep.mubr.f32.mxu0 0.0
        %4905 = vmatmul.mubr.f32.gmra.mrb[0].mxu0 %v4428
        %v4906 = vpop.f32.mrb[0].mxu0
        %v4907 = vadd.f32 %v4682, %v4906
        %v4908 = vpop.f32.mrb[0].mxu0
        %4909 = vmatprep.mubr.f32.mxu0 0.0
        %4910 = vmatmul.mubr.f32.gmra.mrb[0].mxu0 %v4431
        %v4911 = vpop.f32.mrb[0].mxu0
        %v4912 = vadd.f32 %v4687, %v4911
        %v4913 = vpop.f32.mrb[0].mxu0
        %4914 = vmatprep.mubr.f32.mxu0 0.0
        %4915 = vmatmul.mubr.f32.gmra.mrb[0].mxu0 %v4434
        %v4916 = vpop.f32.mrb[0].mxu0
        %v4917 = vadd.f32 %v4692, %v4916
        %v4918 = vpop.f32.mrb[0].mxu0
        %4919 = vmatprep.mubr.f32.mxu0 0.0
        %4920 = vmatmul.mubr.f32.gmra.mrb[0].mxu0 %v4437
        %v4921 = vpop.f32.mrb[0].mxu0
        %v4922 = vadd.f32 %v4697, %v4921
        %v4923 = vpop.f32.mrb[0].mxu0
        %4924 = vmatprep.mubr.f32.mxu0 0.0
        %4925 = vmatmul.mubr.f32.gmra.mrb[0].mxu0 %v4440
        %v4926 = vpop.f32.mrb[0].mxu0
        %v4927 = vadd.f32 %v4702, %v4926
        %v4928 = vpop.f32.mrb[0].mxu0
        %4929 = vmatprep.mubr.f32.mxu0 0.0
        %4930 = vmatmul.mubr.f32.gmra.mrb[0].mxu0 %v4443
        %v4931 = vpop.f32.mrb[0].mxu0
        %v4932 = vadd.f32 %v4707, %v4931
        %v4933 = vpop.f32.mrb[0].mxu0
        %4934 = vmatprep.mubr.f32.mxu0 0.0
        %4935 = vmatmul.mubr.f32.gmra.mrb[0].mxu0 %v4446
        %v4936 = vpop.f32.mrb[0].mxu0
        %v4937 = vadd.f32 %v4712, %v4936
        %v4938 = vpop.f32.mrb[0].mxu0
        %4939 = vmatprep.mubr.f32.mxu0 0.0
        %4940 = vmatmul.mubr.f32.gmra.mrb[0].mxu0 %v4449
        %v4941 = vpop.f32.mrb[0].mxu0
        %v4942 = vadd.f32 %v4717, %v4941
        %v4943 = vpop.f32.mrb[0].mxu0
        %4944 = vmatprep.mubr.f32.mxu0 0.0
        %4945 = vmatmul.mubr.f32.gmra.mrb[0].mxu0 %v4452
        %v4946 = vpop.f32.mrb[0].mxu0
        %v4947 = vadd.f32 %v4722, %v4946
        %v4948 = vpop.f32.mrb[0].mxu0
        %4949 = vmatprep.mubr.f32.mxu0 0.0
        %4950 = vmatmul.mubr.f32.gmra.mrb[0].mxu0 %v4455
        %v4951 = vpop.f32.mrb[0].mxu0
        %v4952 = vadd.f32 %v4727, %v4951
        %v4953 = vpop.f32.mrb[0].mxu0
        %4954 = vdwg.mxu0
        %v4955 = vadd.f32 %v4328, %v4797
        %v4956 = vadd.f32 %v4329, %v4802
        %v4957 = vadd.f32 %v4330, %v4807
        %v4958 = vadd.f32 %v4331, %v4812
        %v4959 = vadd.f32 %v4332, %v4817
        %v4960 = vadd.f32 %v4333, %v4822
        %v4961 = vadd.f32 %v4334, %v4827
        %v4962 = vadd.f32 %v4335, %v4832
        %v4963 = vadd.f32 %v4336, %v4837
        %v4964 = vadd.f32 %v4337, %v4842
        %v4965 = vadd.f32 %v4338, %v4847
        %v4966 = vadd.f32 %v4339, %v4852
        %v4967 = vadd.f32 %v4340, %v4857
        %v4968 = vadd.f32 %v4341, %v4862
        %v4969 = vadd.f32 %v4342, %v4867
        %v4970 = vadd.f32 %v4343, %v4872
        %v4971 = vadd.f32 %v4344, %v4877
        %v4972 = vadd.f32 %v4345, %v4882
        %v4973 = vadd.f32 %v4346, %v4887
        %v4974 = vadd.f32 %v4347, %v4892
        %v4975 = vadd.f32 %v4348, %v4897
        %v4976 = vadd.f32 %v4349, %v4902
        %v4977 = vadd.f32 %v4350, %v4907
        %v4978 = vadd.f32 %v4351, %v4912
        %v4979 = vadd.f32 %v4352, %v4917
        %v4980 = vadd.f32 %v4353, %v4922
        %v4981 = vadd.f32 %v4354, %v4927
        %v4982 = vadd.f32 %v4355, %v4932
        %v4983 = vadd.f32 %v4356, %v4937
        %v4984 = vadd.f32 %v4357, %v4942
        %v4985 = vadd.f32 %v4358, %v4947
        %v4986 = vadd.f32 %v4359, %v4952
        %v4987 = vadd.f32 %v4955, %v537
        %v4988 = vadd.f32 %v4956, %v538
        %v4989 = vadd.f32 %v4957, %v539
        %v4990 = vadd.f32 %v4958, %v540
        %v4991 = vadd.f32 %v4959, %v541
        %v4992 = vadd.f32 %v4960, %v542
        %v4993 = vadd.f32 %v4961, %v543
        %v4994 = vadd.f32 %v4962, %v544
        %v4995 = vadd.f32 %v4963, %v545
        %v4996 = vadd.f32 %v4964, %v546
        %v4997 = vadd.f32 %v4965, %v547
        %v4998 = vadd.f32 %v4966, %v548
        %v4999 = vadd.f32 %v4967, %v549
        %v5000 = vadd.f32 %v4968, %v550
        %v5001 = vadd.f32 %v4969, %v551
        %v5002 = vadd.f32 %v4970, %v552
        %v5003 = vadd.f32 %v4971, %v553
        %v5004 = vadd.f32 %v4972, %v554
        %v5005 = vadd.f32 %v4973, %v555
        %v5006 = vadd.f32 %v4974, %v556
        %v5007 = vadd.f32 %v4975, %v557
        %v5008 = vadd.f32 %v4976, %v558
        %v5009 = vadd.f32 %v4977, %v559
        %v5010 = vadd.f32 %v4978, %v560
        %v5011 = vadd.f32 %v4979, %v561
        %v5012 = vadd.f32 %v4980, %v562
        %v5013 = vadd.f32 %v4981, %v563
        %v5014 = vadd.f32 %v4982, %v564
        %v5015 = vadd.f32 %v4983, %v565
        %v5016 = vadd.f32 %v4984, %v566
        %v5017 = vadd.f32 %v4985, %v567
        %v5018 = vadd.f32 %v4986, %v568
        %v5019 = vld [vmem:[%s444] sm:$0xff]
        %v5020 = vld [vmem:[%s444 + $0x8] sm:$0xff]
        %v5021 = vld [vmem:[%s444 + $0x10] sm:$0xff]
        %v5022 = vld [vmem:[%s444 + $0x18] sm:$0xff]
        %v5023 = vld [vmem:[%s444 + $0x20] sm:$0xff]
        %v5024 = vld [vmem:[%s444 + $0x28] sm:$0xff]
        %v5025 = vld [vmem:[%s444 + $0x30] sm:$0xff]
        %v5026 = vld [vmem:[%s444 + $0x38] sm:$0xff]
        %v5027 = vld [vmem:[%s444 + $0x40] sm:$0xff]
        %v5028 = vld [vmem:[%s444 + $0x48] sm:$0xff]
        %v5029 = vld [vmem:[%s444 + $0x50] sm:$0xff]
        %v5030 = vld [vmem:[%s444 + $0x58] sm:$0xff]
        %v5031 = vld [vmem:[%s444 + $0x60] sm:$0xff]
        %v5032 = vld [vmem:[%s444 + $0x68] sm:$0xff]
        %v5033 = vld [vmem:[%s444 + $0x70] sm:$0xff]
        %v5034 = vld [vmem:[%s444 + $0x78] sm:$0xff]
        %v5035 = vld [vmem:[%s444 + $0x80] sm:$0xff]
        %v5036 = vld [vmem:[%s444 + $0x88] sm:$0xff]
        %v5037 = vld [vmem:[%s444 + $0x90] sm:$0xff]
        %v5038 = vld [vmem:[%s444 + $0x98] sm:$0xff]
        %v5039 = vld [vmem:[%s444 + $0xa0] sm:$0xff]
        %v5040 = vld [vmem:[%s444 + $0xa8] sm:$0xff]
        %v5041 = vld [vmem:[%s444 + $0xb0] sm:$0xff]
        %v5042 = vld [vmem:[%s444 + $0xb8] sm:$0xff]
        %v5043 = vld [vmem:[%s444 + $0xc0] sm:$0xff]
        %v5044 = vld [vmem:[%s444 + $0xc8] sm:$0xff]
        %v5045 = vld [vmem:[%s444 + $0xd0] sm:$0xff]
        %v5046 = vld [vmem:[%s444 + $0xd8] sm:$0xff]
        %v5047 = vld [vmem:[%s444 + $0xe0] sm:$0xff]
        %v5048 = vld [vmem:[%s444 + $0xe8] sm:$0xff]
        %v5049 = vld [vmem:[%s444 + $0xf0] sm:$0xff]
        %v5050 = vld [vmem:[%s444 + $0xf8] sm:$0xff]
        %v5051 = vadd.f32 %v4987, %v5019
        %v5052 = vadd.f32 %v4988, %v5020
        %v5053 = vadd.f32 %v4989, %v5021
        %v5054 = vadd.f32 %v4990, %v5022
        %v5055 = vadd.f32 %v4991, %v5023
        %v5056 = vadd.f32 %v4992, %v5024
        %v5057 = vadd.f32 %v4993, %v5025
        %v5058 = vadd.f32 %v4994, %v5026
        %v5059 = vadd.f32 %v4995, %v5027
        %v5060 = vadd.f32 %v4996, %v5028
        %v5061 = vadd.f32 %v4997, %v5029
        %v5062 = vadd.f32 %v4998, %v5030
        %v5063 = vadd.f32 %v4999, %v5031
        %v5064 = vadd.f32 %v5000, %v5032
        %v5065 = vadd.f32 %v5001, %v5033
        %v5066 = vadd.f32 %v5002, %v5034
        %v5067 = vadd.f32 %v5003, %v5035
        %v5068 = vadd.f32 %v5004, %v5036
        %v5069 = vadd.f32 %v5005, %v5037
        %v5070 = vadd.f32 %v5006, %v5038
        %v5071 = vadd.f32 %v5007, %v5039
        %v5072 = vadd.f32 %v5008, %v5040
        %v5073 = vadd.f32 %v5009, %v5041
        %v5074 = vadd.f32 %v5010, %v5042
        %v5075 = vadd.f32 %v5011, %v5043
        %v5076 = vadd.f32 %v5012, %v5044
        %v5077 = vadd.f32 %v5013, %v5045
        %v5078 = vadd.f32 %v5014, %v5046
        %v5079 = vadd.f32 %v5015, %v5047
        %v5080 = vadd.f32 %v5016, %v5048
        %v5081 = vadd.f32 %v5017, %v5049
        %v5082 = vadd.f32 %v5018, %v5050
        %v5083 = vmax.f32 %v5051, 0.0
        %v5084 = vmax.f32 %v5052, 0.0
        %v5085 = vmax.f32 %v5053, 0.0
        %v5086 = vmax.f32 %v5054, 0.0
        %v5087 = vmax.f32 %v5055, 0.0
        %v5088 = vmax.f32 %v5056, 0.0
        %v5089 = vmax.f32 %v5057, 0.0
        %v5090 = vmax.f32 %v5058, 0.0
        %v5091 = vmax.f32 %v5059, 0.0
        %v5092 = vmax.f32 %v5060, 0.0
        %v5093 = vmax.f32 %v5061, 0.0
        %v5094 = vmax.f32 %v5062, 0.0
        %v5095 = vmax.f32 %v5063, 0.0
        %v5096 = vmax.f32 %v5064, 0.0
        %v5097 = vmax.f32 %v5065, 0.0
        %v5098 = vmax.f32 %v5066, 0.0
        %v5099 = vmax.f32 %v5067, 0.0
        %v5100 = vmax.f32 %v5068, 0.0
        %v5101 = vmax.f32 %v5069, 0.0
        %v5102 = vmax.f32 %v5070, 0.0
        %v5103 = vmax.f32 %v5071, 0.0
        %v5104 = vmax.f32 %v5072, 0.0
        %v5105 = vmax.f32 %v5073, 0.0
        %v5106 = vmax.f32 %v5074, 0.0
        %v5107 = vmax.f32 %v5075, 0.0
        %v5108 = vmax.f32 %v5076, 0.0
        %v5109 = vmax.f32 %v5077, 0.0
        %v5110 = vmax.f32 %v5078, 0.0
        %v5111 = vmax.f32 %v5079, 0.0
        %v5112 = vmax.f32 %v5080, 0.0
        %v5113 = vmax.f32 %v5081, 0.0
        %v5114 = vmax.f32 %v5082, 0.0
        %v5115 = vld [vmem:[%s7] sm:$0x1]
        %v5116 = vrot.slane %v5083, 7
        %v5117 = vrot.slane %v5084, 7
        %v5118 = vrot.slane %v5085, 7
        %v5119 = vrot.slane %v5086, 7
        %v5120 = vrot.slane %v5087, 7
        %v5121 = vrot.slane %v5088, 7
        %v5122 = vrot.slane %v5089, 7
        %v5123 = vrot.slane %v5090, 7
        %v5124 = vrot.slane %v5091, 7
        %v5125 = vrot.slane %v5092, 7
        %v5126 = vrot.slane %v5093, 7
        %v5127 = vrot.slane %v5094, 7
        %v5128 = vrot.slane %v5095, 7
        %v5129 = vrot.slane %v5096, 7
        %v5130 = vrot.slane %v5097, 7
        %v5131 = vrot.slane %v5098, 7
        %v5132 = vrot.slane %v5099, 7
        %v5133 = vrot.slane %v5100, 7
        %v5134 = vrot.slane %v5101, 7
        %v5135 = vrot.slane %v5102, 7
        %v5136 = vrot.slane %v5103, 7
        %v5137 = vrot.slane %v5104, 7
        %v5138 = vrot.slane %v5105, 7
        %v5139 = vrot.slane %v5106, 7
        %v5140 = vrot.slane %v5107, 7
        %v5141 = vrot.slane %v5108, 7
        %v5142 = vrot.slane %v5109, 7
        %v5143 = vrot.slane %v5110, 7
        %v5144 = vrot.slane %v5111, 7
        %v5145 = vrot.slane %v5112, 7
        %v5146 = vrot.slane %v5113, 7
        %v5147 = vrot.slane %v5114, 7
        %v5148 = vsel %vm634, %v5146, %v5147
        %v5149 = vsel %vm634, %v5145, %v5146
        %v5150 = vsel %vm634, %v5144, %v5145
        %v5151 = vsel %vm634, %v5143, %v5144
        %v5152 = vsel %vm634, %v5142, %v5143
        %v5153 = vsel %vm634, %v5141, %v5142
        %v5154 = vsel %vm634, %v5140, %v5141
        %v5155 = vsel %vm634, %v5139, %v5140
        %v5156 = vsel %vm634, %v5138, %v5139
        %v5157 = vsel %vm634, %v5137, %v5138
        %v5158 = vsel %vm634, %v5136, %v5137
        %v5159 = vsel %vm634, %v5135, %v5136
        %v5160 = vsel %vm634, %v5134, %v5135
        %v5161 = vsel %vm634, %v5133, %v5134
        %v5162 = vsel %vm634, %v5132, %v5133
        %v5163 = vsel %vm634, %v5131, %v5132
        %v5164 = vsel %vm634, %v5130, %v5131
        %v5165 = vsel %vm634, %v5129, %v5130
        %v5166 = vsel %vm634, %v5128, %v5129
        %v5167 = vsel %vm634, %v5127, %v5128
        %v5168 = vsel %vm634, %v5126, %v5127
        %v5169 = vsel %vm634, %v5125, %v5126
        %v5170 = vsel %vm634, %v5124, %v5125
        %v5171 = vsel %vm634, %v5123, %v5124
        %v5172 = vsel %vm634, %v5122, %v5123
        %v5173 = vsel %vm634, %v5121, %v5122
        %v5174 = vsel %vm634, %v5120, %v5121
        %v5175 = vsel %vm634, %v5119, %v5120
        %v5176 = vsel %vm634, %v5118, %v5119
        %v5177 = vsel %vm634, %v5117, %v5118
        %v5178 = vsel %vm634, %v5116, %v5117
        %v5179 = vsel %vm634, %v5147, %v5116
        %v5180 = vrot.slane %v5083, 1
        %v5181 = vrot.slane %v5084, 1
        %v5182 = vrot.slane %v5085, 1
        %v5183 = vrot.slane %v5086, 1
        %v5184 = vrot.slane %v5087, 1
        %v5185 = vrot.slane %v5088, 1
        %v5186 = vrot.slane %v5089, 1
        %v5187 = vrot.slane %v5090, 1
        %v5188 = vrot.slane %v5091, 1
        %v5189 = vrot.slane %v5092, 1
        %v5190 = vrot.slane %v5093, 1
        %v5191 = vrot.slane %v5094, 1
        %v5192 = vrot.slane %v5095, 1
        %v5193 = vrot.slane %v5096, 1
        %v5194 = vrot.slane %v5097, 1
        %v5195 = vrot.slane %v5098, 1
        %v5196 = vrot.slane %v5099, 1
        %v5197 = vrot.slane %v5100, 1
        %v5198 = vrot.slane %v5101, 1
        %v5199 = vrot.slane %v5102, 1
        %v5200 = vrot.slane %v5103, 1
        %v5201 = vrot.slane %v5104, 1
        %v5202 = vrot.slane %v5105, 1
        %v5203 = vrot.slane %v5106, 1
        %v5204 = vrot.slane %v5107, 1
        %v5205 = vrot.slane %v5108, 1
        %v5206 = vrot.slane %v5109, 1
        %v5207 = vrot.slane %v5110, 1
        %v5208 = vrot.slane %v5111, 1
        %v5209 = vrot.slane %v5112, 1
        %v5210 = vrot.slane %v5113, 1
        %v5211 = vrot.slane %v5114, 1
        %v5212 = vsel %vm699, %v5210, %v5211
        %v5213 = vsel %vm699, %v5209, %v5210
        %v5214 = vsel %vm699, %v5208, %v5209
        %v5215 = vsel %vm699, %v5207, %v5208
        %v5216 = vsel %vm699, %v5206, %v5207
        %v5217 = vsel %vm699, %v5205, %v5206
        %v5218 = vsel %vm699, %v5204, %v5205
        %v5219 = vsel %vm699, %v5203, %v5204
        %v5220 = vsel %vm699, %v5202, %v5203
        %v5221 = vsel %vm699, %v5201, %v5202
        %v5222 = vsel %vm699, %v5200, %v5201
        %v5223 = vsel %vm699, %v5199, %v5200
        %v5224 = vsel %vm699, %v5198, %v5199
        %v5225 = vsel %vm699, %v5197, %v5198
        %v5226 = vsel %vm699, %v5196, %v5197
        %v5227 = vsel %vm699, %v5195, %v5196
        %v5228 = vsel %vm699, %v5194, %v5195
        %v5229 = vsel %vm699, %v5193, %v5194
        %v5230 = vsel %vm699, %v5192, %v5193
        %v5231 = vsel %vm699, %v5191, %v5192
        %v5232 = vsel %vm699, %v5190, %v5191
        %v5233 = vsel %vm699, %v5189, %v5190
        %v5234 = vsel %vm699, %v5188, %v5189
        %v5235 = vsel %vm699, %v5187, %v5188
        %v5236 = vsel %vm699, %v5186, %v5187
        %v5237 = vsel %vm699, %v5185, %v5186
        %v5238 = vsel %vm699, %v5184, %v5185
        %v5239 = vsel %vm699, %v5183, %v5184
        %v5240 = vsel %vm699, %v5182, %v5183
        %v5241 = vsel %vm699, %v5181, %v5182
        %v5242 = vsel %vm699, %v5180, %v5181
        %v5243 = vsel %vm699, %v5211, %v5180
        %v5244 = vsel %vm533, %v5179, 0.0
        %v5245 = vsel %vm534, %v5178, 0.0
        %v5246 = vsel %vm533, %v5177, 0.0
        %v5247 = vsel %vm534, %v5176, 0.0
        %v5248 = vsel %vm533, %v5175, 0.0
        %v5249 = vsel %vm534, %v5174, 0.0
        %v5250 = vsel %vm533, %v5173, 0.0
        %v5251 = vsel %vm534, %v5172, 0.0
        %v5252 = vsel %vm533, %v5171, 0.0
        %v5253 = vsel %vm534, %v5170, 0.0
        %v5254 = vsel %vm533, %v5169, 0.0
        %v5255 = vsel %vm534, %v5168, 0.0
        %v5256 = vsel %vm533, %v5167, 0.0
        %v5257 = vsel %vm534, %v5166, 0.0
        %v5258 = vsel %vm533, %v5165, 0.0
        %v5259 = vsel %vm534, %v5164, 0.0
        %v5260 = vsel %vm533, %v5163, 0.0
        %v5261 = vsel %vm534, %v5162, 0.0
        %v5262 = vsel %vm533, %v5161, 0.0
        %v5263 = vsel %vm534, %v5160, 0.0
        %v5264 = vsel %vm533, %v5159, 0.0
        %v5265 = vsel %vm534, %v5158, 0.0
        %v5266 = vsel %vm533, %v5157, 0.0
        %v5267 = vsel %vm534, %v5156, 0.0
        %v5268 = vsel %vm533, %v5155, 0.0
        %v5269 = vsel %vm534, %v5154, 0.0
        %v5270 = vsel %vm533, %v5153, 0.0
        %v5271 = vsel %vm534, %v5152, 0.0
        %v5272 = vsel %vm533, %v5151, 0.0
        %v5273 = vsel %vm534, %v5150, 0.0
        %v5274 = vsel %vm533, %v5149, 0.0
        %v5275 = vsel %vm534, %v5148, 0.0
        %v5276 = vsel %vm535, %v5242, 0.0
        %v5277 = vsel %vm536, %v5241, 0.0
        %v5278 = vsel %vm535, %v5240, 0.0
        %v5279 = vsel %vm536, %v5239, 0.0
        %v5280 = vsel %vm535, %v5238, 0.0
        %v5281 = vsel %vm536, %v5237, 0.0
        %v5282 = vsel %vm535, %v5236, 0.0
        %v5283 = vsel %vm536, %v5235, 0.0
        %v5284 = vsel %vm535, %v5234, 0.0
        %v5285 = vsel %vm536, %v5233, 0.0
        %v5286 = vsel %vm535, %v5232, 0.0
        %v5287 = vsel %vm536, %v5231, 0.0
        %v5288 = vsel %vm535, %v5230, 0.0
        %v5289 = vsel %vm536, %v5229, 0.0
        %v5290 = vsel %vm535, %v5228, 0.0
        %v5291 = vsel %vm536, %v5227, 0.0
        %v5292 = vsel %vm535, %v5226, 0.0
        %v5293 = vsel %vm536, %v5225, 0.0
        %v5294 = vsel %vm535, %v5224, 0.0
        %v5295 = vsel %vm536, %v5223, 0.0
        %v5296 = vsel %vm535, %v5222, 0.0
        %v5297 = vsel %vm536, %v5221, 0.0
        %v5298 = vsel %vm535, %v5220, 0.0
        %v5299 = vsel %vm536, %v5219, 0.0
        %v5300 = vsel %vm535, %v5218, 0.0
        %v5301 = vsel %vm536, %v5217, 0.0
        %v5302 = vsel %vm535, %v5216, 0.0
        %v5303 = vsel %vm536, %v5215, 0.0
        %v5304 = vsel %vm535, %v5214, 0.0
        %v5305 = vsel %vm536, %v5213, 0.0
        %v5306 = vsel %vm535, %v5212, 0.0
        %v5307 = vsel %vm536, %v5243, 0.0
        %5308 = vst [vmem:[%s796] sm:$0xff] %v5244
        %5309 = vst [vmem:[%s796 + $0x8] sm:$0xff] %v5083
        %5310 = vst [vmem:[%s796 + $0x10] sm:$0xff] %v5276
        %5311 = vst [vmem:[%s796 + $0x18] sm:$0xff] %v5245
        %5312 = vst [vmem:[%s796 + $0x20] sm:$0xff] %v5084
        %5313 = vst [vmem:[%s796 + $0x28] sm:$0xff] %v5277
        %5314 = vst [vmem:[%s796 + $0x30] sm:$0xff] %v5246
        %5315 = vst [vmem:[%s796 + $0x38] sm:$0xff] %v5085
        %5316 = vst [vmem:[%s796 + $0x40] sm:$0xff] %v5278
        %5317 = vst [vmem:[%s796 + $0x48] sm:$0xff] %v5247
        %5318 = vst [vmem:[%s796 + $0x50] sm:$0xff] %v5086
        %5319 = vst [vmem:[%s796 + $0x58] sm:$0xff] %v5279
        %5320 = vst [vmem:[%s796 + $0x60] sm:$0xff] %v5248
        %5321 = vst [vmem:[%s796 + $0x68] sm:$0xff] %v5087
        %5322 = vst [vmem:[%s796 + $0x70] sm:$0xff] %v5280
        %5323 = vst [vmem:[%s796 + $0x78] sm:$0xff] %v5249
        %5324 = vst [vmem:[%s796 + $0x80] sm:$0xff] %v5088
        %5325 = vst [vmem:[%s796 + $0x88] sm:$0xff] %v5281
        %5326 = vst [vmem:[%s796 + $0x90] sm:$0xff] %v5250
        %5327 = vst [vmem:[%s796 + $0x98] sm:$0xff] %v5089
        %5328 = vst [vmem:[%s796 + $0xa0] sm:$0xff] %v5282
        %5329 = vst [vmem:[%s796 + $0xa8] sm:$0xff] %v5251
        %5330 = vst [vmem:[%s796 + $0xb0] sm:$0xff] %v5090
        %5331 = vst [vmem:[%s796 + $0xb8] sm:$0xff] %v5283
        %5332 = vst [vmem:[%s796 + $0xc0] sm:$0xff] %v5252
        %5333 = vst [vmem:[%s796 + $0xc8] sm:$0xff] %v5091
        %5334 = vst [vmem:[%s796 + $0xd0] sm:$0xff] %v5284
        %5335 = vst [vmem:[%s796 + $0xd8] sm:$0xff] %v5253
        %5336 = vst [vmem:[%s796 + $0xe0] sm:$0xff] %v5092
        %5337 = vst [vmem:[%s796 + $0xe8] sm:$0xff] %v5285
        %5338 = vst [vmem:[%s796 + $0xf0] sm:$0xff] %v5254
        %5339 = vst [vmem:[%s796 + $0xf8] sm:$0xff] %v5093
        %5340 = vst [vmem:[%s796 + $0x100] sm:$0xff] %v5286
        %5341 = vst [vmem:[%s796 + $0x108] sm:$0xff] %v5255
        %5342 = vst [vmem:[%s796 + $0x110] sm:$0xff] %v5094
        %5343 = vst [vmem:[%s796 + $0x118] sm:$0xff] %v5287
        %5344 = vst [vmem:[%s796 + $0x120] sm:$0xff] %v5256
        %5345 = vst [vmem:[%s796 + $0x128] sm:$0xff] %v5095
        %5346 = vst [vmem:[%s796 + $0x130] sm:$0xff] %v5288
        %5347 = vst [vmem:[%s796 + $0x138] sm:$0xff] %v5257
        %5348 = vst [vmem:[%s796 + $0x140] sm:$0xff] %v5096
        %5349 = vst [vmem:[%s796 + $0x148] sm:$0xff] %v5289
        %5350 = vst [vmem:[%s796 + $0x150] sm:$0xff] %v5258
        %5351 = vst [vmem:[%s796 + $0x158] sm:$0xff] %v5097
        %5352 = vst [vmem:[%s796 + $0x160] sm:$0xff] %v5290
        %5353 = vst [vmem:[%s796 + $0x168] sm:$0xff] %v5259
        %5354 = vst [vmem:[%s796 + $0x170] sm:$0xff] %v5098
        %5355 = vst [vmem:[%s796 + $0x178] sm:$0xff] %v5291
        %5356 = vst [vmem:[%s796 + $0x180] sm:$0xff] %v5260
        %5357 = vst [vmem:[%s796 + $0x188] sm:$0xff] %v5099
        %5358 = vst [vmem:[%s796 + $0x190] sm:$0xff] %v5292
        %5359 = vst [vmem:[%s796 + $0x198] sm:$0xff] %v5261
        %5360 = vst [vmem:[%s796 + $0x1a0] sm:$0xff] %v5100
        %5361 = vst [vmem:[%s796 + $0x1a8] sm:$0xff] %v5293
        %5362 = vst [vmem:[%s796 + $0x1b0] sm:$0xff] %v5262
        %5363 = vst [vmem:[%s796 + $0x1b8] sm:$0xff] %v5101
        %5364 = vst [vmem:[%s796 + $0x1c0] sm:$0xff] %v5294
        %5365 = vst [vmem:[%s796 + $0x1c8] sm:$0xff] %v5263
        %5366 = vst [vmem:[%s796 + $0x1d0] sm:$0xff] %v5102
        %5367 = vst [vmem:[%s796 + $0x1d8] sm:$0xff] %v5295
        %5368 = vst [vmem:[%s796 + $0x1e0] sm:$0xff] %v5264
        %5369 = vst [vmem:[%s796 + $0x1e8] sm:$0xff] %v5103
        %5370 = vst [vmem:[%s796 + $0x1f0] sm:$0xff] %v5296
        %5371 = vst [vmem:[%s796 + $0x1f8] sm:$0xff] %v5265
        %5372 = vst [vmem:[%s796 + $0x200] sm:$0xff] %v5104
        %5373 = vst [vmem:[%s796 + $0x208] sm:$0xff] %v5297
        %5374 = vst [vmem:[%s796 + $0x210] sm:$0xff] %v5266
        %5375 = vst [vmem:[%s796 + $0x218] sm:$0xff] %v5105
        %5376 = vst [vmem:[%s796 + $0x220] sm:$0xff] %v5298
        %5377 = vst [vmem:[%s796 + $0x228] sm:$0xff] %v5267
        %5378 = vst [vmem:[%s796 + $0x230] sm:$0xff] %v5106
        %5379 = vst [vmem:[%s796 + $0x238] sm:$0xff] %v5299
        %5380 = vst [vmem:[%s796 + $0x240] sm:$0xff] %v5268
        %5381 = vst [vmem:[%s796 + $0x248] sm:$0xff] %v5107
        %5382 = vst [vmem:[%s796 + $0x250] sm:$0xff] %v5300
        %5383 = vst [vmem:[%s796 + $0x258] sm:$0xff] %v5269
        %5384 = vst [vmem:[%s796 + $0x260] sm:$0xff] %v5108
        %5385 = vst [vmem:[%s796 + $0x268] sm:$0xff] %v5301
        %5386 = vst [vmem:[%s796 + $0x270] sm:$0xff] %v5270
        %5387 = vst [vmem:[%s796 + $0x278] sm:$0xff] %v5109
        %5388 = vst [vmem:[%s796 + $0x280] sm:$0xff] %v5302
        %5389 = vst [vmem:[%s796 + $0x288] sm:$0xff] %v5271
        %5390 = vst [vmem:[%s796 + $0x290] sm:$0xff] %v5110
        %5391 = vst [vmem:[%s796 + $0x298] sm:$0xff] %v5303
        %5392 = vst [vmem:[%s796 + $0x2a0] sm:$0xff] %v5272
        %5393 = vst [vmem:[%s796 + $0x2a8] sm:$0xff] %v5111
        %5394 = vst [vmem:[%s796 + $0x2b0] sm:$0xff] %v5304
        %5395 = vst [vmem:[%s796 + $0x2b8] sm:$0xff] %v5273
        %5396 = vst [vmem:[%s796 + $0x2c0] sm:$0xff] %v5112
        %5397 = vst [vmem:[%s796 + $0x2c8] sm:$0xff] %v5305
        %5398 = vst [vmem:[%s796 + $0x2d0] sm:$0xff] %v5274
        %5399 = vst [vmem:[%s796 + $0x2d8] sm:$0xff] %v5113
        %5400 = vst [vmem:[%s796 + $0x2e0] sm:$0xff] %v5306
        %5401 = vst [vmem:[%s796 + $0x2e8] sm:$0xff] %v5275
        %5402 = vst [vmem:[%s796 + $0x2f0] sm:$0xff] %v5114
        %5403 = vst [vmem:[%s796 + $0x2f8] sm:$0xff] %v5307
        %v5404 = vld [vmem:[#allocation2] sm:$0xff]
        %v5405 = vld [vmem:[#allocation2 + $0x8] sm:$0xff]
        %v5406 = vld [vmem:[#allocation2 + $0x10] sm:$0xff]
        %v5407 = vld [vmem:[#allocation2 + $0x18] sm:$0xff]
        %v5408 = vld [vmem:[#allocation2 + $0x20] sm:$0xff]
        %v5409 = vld [vmem:[#allocation2 + $0x28] sm:$0xff]
        %v5410 = vld [vmem:[#allocation2 + $0x30] sm:$0xff]
        %v5411 = vld [vmem:[#allocation2 + $0x38] sm:$0xff]
        %v5412 = vld [vmem:[#allocation2 + $0x40] sm:$0xff]
        %v5413 = vld [vmem:[#allocation2 + $0x48] sm:$0xff]
        %v5414 = vld [vmem:[#allocation2 + $0x50] sm:$0xff]
        %v5415 = vld [vmem:[#allocation2 + $0x58] sm:$0xff]
        %v5416 = vld [vmem:[#allocation2 + $0x60] sm:$0xff]
        %v5417 = vld [vmem:[#allocation2 + $0x68] sm:$0xff]
        %v5418 = vld [vmem:[#allocation2 + $0x70] sm:$0xff]
        %v5419 = vld [vmem:[#allocation2 + $0x78] sm:$0xff]
        %v5420 = vld [vmem:[#allocation2 + $0x80] sm:$0xff]
        %v5421 = vld [vmem:[#allocation2 + $0x88] sm:$0xff]
        %v5422 = vld [vmem:[#allocation2 + $0x90] sm:$0xff]
        %v5423 = vld [vmem:[#allocation2 + $0x98] sm:$0xff]
        %v5424 = vld [vmem:[#allocation2 + $0xa0] sm:$0xff]
        %v5425 = vld [vmem:[#allocation2 + $0xa8] sm:$0xff]
        %v5426 = vld [vmem:[#allocation2 + $0xb0] sm:$0xff]
        %v5427 = vld [vmem:[#allocation2 + $0xb8] sm:$0xff]
        %v5428 = vld [vmem:[#allocation2 + $0xc0] sm:$0xff]
        %v5429 = vld [vmem:[#allocation2 + $0xc8] sm:$0xff]
        %v5430 = vld [vmem:[#allocation2 + $0xd0] sm:$0xff]
        %v5431 = vld [vmem:[#allocation2 + $0xd8] sm:$0xff]
        %v5432 = vld [vmem:[#allocation2 + $0xe0] sm:$0xff]
        %v5433 = vld [vmem:[#allocation2 + $0xe8] sm:$0xff]
        %v5434 = vld [vmem:[#allocation2 + $0xf0] sm:$0xff]
        %v5435 = vld [vmem:[#allocation2 + $0xf8] sm:$0xff]
        %v5436 = vld [vmem:[#allocation2 + $0x100] sm:$0xff]
        %v5437 = vld [vmem:[#allocation2 + $0x108] sm:$0xff]
        %v5438 = vld [vmem:[#allocation2 + $0x110] sm:$0xff]
        %v5439 = vld [vmem:[#allocation2 + $0x118] sm:$0xff]
        %v5440 = vld [vmem:[#allocation2 + $0x120] sm:$0xff]
        %v5441 = vld [vmem:[#allocation2 + $0x128] sm:$0xff]
        %v5442 = vld [vmem:[#allocation2 + $0x130] sm:$0xff]
        %v5443 = vld [vmem:[#allocation2 + $0x138] sm:$0xff]
        %v5444 = vld [vmem:[#allocation2 + $0x140] sm:$0xff]
        %v5445 = vld [vmem:[#allocation2 + $0x148] sm:$0xff]
        %v5446 = vld [vmem:[#allocation2 + $0x150] sm:$0xff]
        %v5447 = vld [vmem:[#allocation2 + $0x158] sm:$0xff]
        %v5448 = vld [vmem:[#allocation2 + $0x160] sm:$0xff]
        %v5449 = vld [vmem:[#allocation2 + $0x168] sm:$0xff]
        %v5450 = vld [vmem:[#allocation2 + $0x170] sm:$0xff]
        %v5451 = vld [vmem:[#allocation2 + $0x178] sm:$0xff]
        %v5452 = vld [vmem:[#allocation2 + $0x180] sm:$0xff]
        %v5453 = vld [vmem:[#allocation2 + $0x188] sm:$0xff]
        %v5454 = vld [vmem:[#allocation2 + $0x190] sm:$0xff]
        %v5455 = vld [vmem:[#allocation2 + $0x198] sm:$0xff]
        %v5456 = vld [vmem:[#allocation2 + $0x1a0] sm:$0xff]
        %v5457 = vld [vmem:[#allocation2 + $0x1a8] sm:$0xff]
        %v5458 = vld [vmem:[#allocation2 + $0x1b0] sm:$0xff]
        %v5459 = vld [vmem:[#allocation2 + $0x1b8] sm:$0xff]
        %v5460 = vld [vmem:[#allocation2 + $0x1c0] sm:$0xff]
        %v5461 = vld [vmem:[#allocation2 + $0x1c8] sm:$0xff]
        %v5462 = vld [vmem:[#allocation2 + $0x1d0] sm:$0xff]
        %v5463 = vld [vmem:[#allocation2 + $0x1d8] sm:$0xff]
        %v5464 = vld [vmem:[#allocation2 + $0x1e0] sm:$0xff]
        %v5465 = vld [vmem:[#allocation2 + $0x1e8] sm:$0xff]
        %v5466 = vld [vmem:[#allocation2 + $0x1f0] sm:$0xff]
        %v5467 = vld [vmem:[#allocation2 + $0x1f8] sm:$0xff]
        %v5468 = vld [vmem:[#allocation2 + $0x200] sm:$0xff]
        %v5469 = vld [vmem:[#allocation2 + $0x208] sm:$0xff]
        %v5470 = vld [vmem:[#allocation2 + $0x210] sm:$0xff]
        %v5471 = vld [vmem:[#allocation2 + $0x218] sm:$0xff]
        %v5472 = vld [vmem:[#allocation2 + $0x220] sm:$0xff]
        %v5473 = vld [vmem:[#allocation2 + $0x228] sm:$0xff]
        %v5474 = vld [vmem:[#allocation2 + $0x230] sm:$0xff]
        %v5475 = vld [vmem:[#allocation2 + $0x238] sm:$0xff]
        %v5476 = vld [vmem:[#allocation2 + $0x240] sm:$0xff]
        %v5477 = vld [vmem:[#allocation2 + $0x248] sm:$0xff]
        %v5478 = vld [vmem:[#allocation2 + $0x250] sm:$0xff]
        %v5479 = vld [vmem:[#allocation2 + $0x258] sm:$0xff]
        %v5480 = vld [vmem:[#allocation2 + $0x260] sm:$0xff]
        %v5481 = vld [vmem:[#allocation2 + $0x268] sm:$0xff]
        %v5482 = vld [vmem:[#allocation2 + $0x270] sm:$0xff]
        %v5483 = vld [vmem:[#allocation2 + $0x278] sm:$0xff]
        %v5484 = vld [vmem:[#allocation2 + $0x280] sm:$0xff]
        %v5485 = vld [vmem:[#allocation2 + $0x288] sm:$0xff]
        %v5486 = vld [vmem:[#allocation2 + $0x290] sm:$0xff]
        %v5487 = vld [vmem:[#allocation2 + $0x298] sm:$0xff]
        %v5488 = vld [vmem:[#allocation2 + $0x2a0] sm:$0xff]
        %v5489 = vld [vmem:[#allocation2 + $0x2a8] sm:$0xff]
        %v5490 = vld [vmem:[#allocation2 + $0x2b0] sm:$0xff]
        %v5491 = vld [vmem:[#allocation2 + $0x2b8] sm:$0xff]
        %v5492 = vld [vmem:[#allocation2 + $0x2c0] sm:$0xff]
        %v5493 = vld [vmem:[#allocation2 + $0x2c8] sm:$0xff]
        %v5494 = vld [vmem:[#allocation2 + $0x2d0] sm:$0xff]
        %v5495 = vld [vmem:[#allocation2 + $0x2d8] sm:$0xff]
        %v5496 = vld [vmem:[#allocation2 + $0x2e0] sm:$0xff]
        %v5497 = vld [vmem:[#allocation2 + $0x2e8] sm:$0xff]
        %v5498 = vld [vmem:[#allocation2 + $0x2f0] sm:$0xff]
        %v5499 = vld [vmem:[#allocation2 + $0x2f8] sm:$0xff]
        %v5500 = vld [vmem:[#allocation11] sm:$0xff]
        %v5501 = vld [vmem:[#allocation11 + $0x8] sm:$0xff]
        %v5502 = vld [vmem:[#allocation11 + $0x10] sm:$0xff]
        %v5503 = vld [vmem:[#allocation11 + $0x18] sm:$0xff]
        %v5504 = vld [vmem:[#allocation11 + $0x20] sm:$0xff]
        %v5505 = vld [vmem:[#allocation11 + $0x28] sm:$0xff]
        %v5506 = vld [vmem:[#allocation11 + $0x30] sm:$0xff]
        %v5507 = vld [vmem:[#allocation11 + $0x38] sm:$0xff]
        %v5508 = vld [vmem:[#allocation11 + $0x40] sm:$0xff]
        %v5509 = vld [vmem:[#allocation11 + $0x48] sm:$0xff]
        %v5510 = vld [vmem:[#allocation11 + $0x50] sm:$0xff]
        %v5511 = vld [vmem:[#allocation11 + $0x58] sm:$0xff]
        %v5512 = vld [vmem:[#allocation11 + $0x60] sm:$0xff]
        %v5513 = vld [vmem:[#allocation11 + $0x68] sm:$0xff]
        %v5514 = vld [vmem:[#allocation11 + $0x70] sm:$0xff]
        %v5515 = vld [vmem:[#allocation11 + $0x78] sm:$0xff]
        %v5516 = vld [vmem:[#allocation11 + $0x80] sm:$0xff]
        %v5517 = vld [vmem:[#allocation11 + $0x88] sm:$0xff]
        %v5518 = vld [vmem:[#allocation11 + $0x90] sm:$0xff]
        %v5519 = vld [vmem:[#allocation11 + $0x98] sm:$0xff]
        %v5520 = vld [vmem:[#allocation11 + $0xa0] sm:$0xff]
        %v5521 = vld [vmem:[#allocation11 + $0xa8] sm:$0xff]
        %v5522 = vld [vmem:[#allocation11 + $0xb0] sm:$0xff]
        %v5523 = vld [vmem:[#allocation11 + $0xb8] sm:$0xff]
        %v5524 = vld [vmem:[#allocation11 + $0xc0] sm:$0xff]
        %v5525 = vld [vmem:[#allocation11 + $0xc8] sm:$0xff]
        %v5526 = vld [vmem:[#allocation11 + $0xd0] sm:$0xff]
        %v5527 = vld [vmem:[#allocation11 + $0xd8] sm:$0xff]
        %v5528 = vld [vmem:[#allocation11 + $0xe0] sm:$0xff]
        %v5529 = vld [vmem:[#allocation11 + $0xe8] sm:$0xff]
        %v5530 = vld [vmem:[#allocation11 + $0xf0] sm:$0xff]
        %v5531 = vld [vmem:[#allocation11 + $0xf8] sm:$0xff]
        %v5532 = vld [vmem:[#allocation11 + $0x100] sm:$0xff]
        %v5533 = vld [vmem:[#allocation11 + $0x108] sm:$0xff]
        %v5534 = vld [vmem:[#allocation11 + $0x110] sm:$0xff]
        %v5535 = vld [vmem:[#allocation11 + $0x118] sm:$0xff]
        %v5536 = vld [vmem:[#allocation11 + $0x120] sm:$0xff]
        %v5537 = vld [vmem:[#allocation11 + $0x128] sm:$0xff]
        %v5538 = vld [vmem:[#allocation11 + $0x130] sm:$0xff]
        %v5539 = vld [vmem:[#allocation11 + $0x138] sm:$0xff]
        %v5540 = vld [vmem:[#allocation11 + $0x140] sm:$0xff]
        %v5541 = vld [vmem:[#allocation11 + $0x148] sm:$0xff]
        %v5542 = vld [vmem:[#allocation11 + $0x150] sm:$0xff]
        %v5543 = vld [vmem:[#allocation11 + $0x158] sm:$0xff]
        %v5544 = vld [vmem:[#allocation11 + $0x160] sm:$0xff]
        %v5545 = vld [vmem:[#allocation11 + $0x168] sm:$0xff]
        %v5546 = vld [vmem:[#allocation11 + $0x170] sm:$0xff]
        %v5547 = vld [vmem:[#allocation11 + $0x178] sm:$0xff]
        %5548 = vmatprep.subr.mxu0 0.0
        %5549 = vmatpush1.msra.mxu0 %v5500
        %5550 = vmatprep.subr.mxu0 0.0
        %5551 = vmatpush1.msra.mxu0 %v5501
        %5552 = vmatprep.subr.mxu0 0.0
        %5553 = vmatpush1.msra.mxu0 %v5502
        %5554 = vmatprep.subr.mxu0 0.0
        %5555 = vmatpush1.msra.mxu0 %v5503
        %5556 = vmatprep.subr.mxu0 0.0
        %5557 = vmatpush1.msra.mxu0 %v5504
        %5558 = vmatprep.subr.mxu0 0.0
        %5559 = vmatpush1.msra.mxu0 %v5505
        %5560 = vmatprep.subr.mxu0 0.0
        %5561 = vmatpush1.msra.mxu0 %v5506
        %5562 = vmatprep.subr.mxu0 0.0
        %5563 = vmatpush1.msra.mxu0 %v5507
        %5564 = vmatprep.subr.mxu0 0.0
        %5565 = vmatpush1.msra.mxu0 %v5508
        %5566 = vmatprep.subr.mxu0 0.0
        %5567 = vmatpush1.msra.mxu0 %v5509
        %5568 = vmatprep.subr.mxu0 0.0
        %5569 = vmatpush1.msra.mxu0 %v5510
        %5570 = vmatprep.subr.mxu0 0.0
        %5571 = vmatpush1.msra.mxu0 %v5511
        %5572 = vmatprep.subr.mxu0 0.0
        %5573 = vmatpush1.msra.mxu0 %v5512
        %5574 = vmatprep.subr.mxu0 0.0
        %5575 = vmatpush1.msra.mxu0 %v5513
        %5576 = vmatprep.subr.mxu0 0.0
        %5577 = vmatpush1.msra.mxu0 %v5514
        %5578 = vmatprep.subr.mxu0 0.0
        %5579 = vmatpush1.msra.mxu0 %v5515
        %5580 = vmatprep.subr.mxu0 0.0
        %5581 = vmatpush1.msra.mxu0 %v5516
        %5582 = vmatprep.subr.mxu0 0.0
        %5583 = vmatpush1.msra.mxu0 %v5517
        %5584 = vmatprep.subr.mxu0 0.0
        %5585 = vmatpush1.msra.mxu0 %v5518
        %5586 = vmatprep.subr.mxu0 0.0
        %5587 = vmatpush1.msra.mxu0 %v5519
        %5588 = vmatprep.subr.mxu0 0.0
        %5589 = vmatpush1.msra.mxu0 %v5520
        %5590 = vmatprep.subr.mxu0 0.0
        %5591 = vmatpush1.msra.mxu0 %v5521
        %5592 = vmatprep.subr.mxu0 0.0
        %5593 = vmatpush1.msra.mxu0 %v5522
        %5594 = vmatprep.subr.mxu0 0.0
        %5595 = vmatpush1.msra.mxu0 %v5523
        %5596 = vmatprep.subr.mxu0 0.0
        %5597 = vmatpush1.msra.mxu0 %v5524
        %5598 = vmatprep.subr.mxu0 0.0
        %5599 = vmatpush1.msra.mxu0 %v5525
        %5600 = vmatprep.subr.mxu0 0.0
        %5601 = vmatpush1.msra.mxu0 %v5526
        %5602 = vmatprep.subr.mxu0 0.0
        %5603 = vmatpush1.msra.mxu0 %v5527
        %5604 = vmatprep.subr.mxu0 0.0
        %5605 = vmatpush1.msra.mxu0 %v5528
        %5606 = vmatprep.subr.mxu0 0.0
        %5607 = vmatpush1.msra.mxu0 %v5529
        %5608 = vmatprep.subr.mxu0 0.0
        %5609 = vmatpush1.msra.mxu0 %v5530
        %5610 = vmatprep.subr.mxu0 0.0
        %5611 = vmatpush1.msra.mxu0 %v5531
        %5612 = vmatprep.mubr.f32.mxu0 %v5405
        %5613 = vmatmul.mubr.f32.gmra.mrb[0].mxu0 %v5404
        %v5614 = vpop.f32.mrb[0].mxu0
        %v5615 = vadd.f32 0.0, %v5614
        %v5616 = vpop.f32.mrb[0].mxu0
        %5617 = vmatprep.mubr.f32.mxu0 %v5408
        %5618 = vmatmul.mubr.f32.gmra.mrb[0].mxu0 %v5407
        %v5619 = vpop.f32.mrb[0].mxu0
        %v5620 = vadd.f32 0.0, %v5619
        %v5621 = vpop.f32.mrb[0].mxu0
        %5622 = vmatprep.mubr.f32.mxu0 %v5411
        %5623 = vmatmul.mubr.f32.gmra.mrb[0].mxu0 %v5410
        %v5624 = vpop.f32.mrb[0].mxu0
        %v5625 = vadd.f32 0.0, %v5624
        %v5626 = vpop.f32.mrb[0].mxu0
        %5627 = vmatprep.mubr.f32.mxu0 %v5414
        %5628 = vmatmul.mubr.f32.gmra.mrb[0].mxu0 %v5413
        %v5629 = vpop.f32.mrb[0].mxu0
        %v5630 = vadd.f32 0.0, %v5629
        %v5631 = vpop.f32.mrb[0].mxu0
        %5632 = vmatprep.mubr.f32.mxu0 %v5417
        %5633 = vmatmul.mubr.f32.gmra.mrb[0].mxu0 %v5416
        %v5634 = vpop.f32.mrb[0].mxu0
        %v5635 = vadd.f32 0.0, %v5634
        %v5636 = vpop.f32.mrb[0].mxu0
        %5637 = vmatprep.mubr.f32.mxu0 %v5420
        %5638 = vmatmul.mubr.f32.gmra.mrb[0].mxu0 %v5419
        %v5639 = vpop.f32.mrb[0].mxu0
        %v5640 = vadd.f32 0.0, %v5639
        %v5641 = vpop.f32.mrb[0].mxu0
        %5642 = vmatprep.mubr.f32.mxu0 %v5423
        %5643 = vmatmul.mubr.f32.gmra.mrb[0].mxu0 %v5422
        %v5644 = vpop.f32.mrb[0].mxu0
        %v5645 = vadd.f32 0.0, %v5644
        %v5646 = vpop.f32.mrb[0].mxu0
        %5647 = vmatprep.mubr.f32.mxu0 %v5426
        %5648 = vmatmul.mubr.f32.gmra.mrb[0].mxu0 %v5425
        %v5649 = vpop.f32.mrb[0].mxu0
        %v5650 = vadd.f32 0.0, %v5649
        %v5651 = vpop.f32.mrb[0].mxu0
        %5652 = vmatprep.mubr.f32.mxu0 %v5429
        %5653 = vmatmul.mubr.f32.gmra.mrb[0].mxu0 %v5428
        %v5654 = vpop.f32.mrb[0].mxu0
        %v5655 = vadd.f32 0.0, %v5654
        %v5656 = vpop.f32.mrb[0].mxu0
        %5657 = vmatprep.mubr.f32.mxu0 %v5432
        %5658 = vmatmul.mubr.f32.gmra.mrb[0].mxu0 %v5431
        %v5659 = vpop.f32.mrb[0].mxu0
        %v5660 = vadd.f32 0.0, %v5659
        %v5661 = vpop.f32.mrb[0].mxu0
        %5662 = vmatprep.mubr.f32.mxu0 %v5435
        %5663 = vmatmul.mubr.f32.gmra.mrb[0].mxu0 %v5434
        %v5664 = vpop.f32.mrb[0].mxu0
        %v5665 = vadd.f32 0.0, %v5664
        %v5666 = vpop.f32.mrb[0].mxu0
        %5667 = vmatprep.mubr.f32.mxu0 %v5438
        %5668 = vmatmul.mubr.f32.gmra.mrb[0].mxu0 %v5437
        %v5669 = vpop.f32.mrb[0].mxu0
        %v5670 = vadd.f32 0.0, %v5669
        %v5671 = vpop.f32.mrb[0].mxu0
        %5672 = vmatprep.mubr.f32.mxu0 %v5441
        %5673 = vmatmul.mubr.f32.gmra.mrb[0].mxu0 %v5440
        %v5674 = vpop.f32.mrb[0].mxu0
        %v5675 = vadd.f32 0.0, %v5674
        %v5676 = vpop.f32.mrb[0].mxu0
        %5677 = vmatprep.mubr.f32.mxu0 %v5444
        %5678 = vmatmul.mubr.f32.gmra.mrb[0].mxu0 %v5443
        %v5679 = vpop.f32.mrb[0].mxu0
        %v5680 = vadd.f32 0.0, %v5679
        %v5681 = vpop.f32.mrb[0].mxu0
        %5682 = vmatprep.mubr.f32.mxu0 %v5447
        %5683 = vmatmul.mubr.f32.gmra.mrb[0].mxu0 %v5446
        %v5684 = vpop.f32.mrb[0].mxu0
        %v5685 = vadd.f32 0.0, %v5684
        %v5686 = vpop.f32.mrb[0].mxu0
        %5687 = vmatprep.mubr.f32.mxu0 %v5450
        %5688 = vmatmul.mubr.f32.gmra.mrb[0].mxu0 %v5449
        %v5689 = vpop.f32.mrb[0].mxu0
        %v5690 = vadd.f32 0.0, %v5689
        %v5691 = vpop.f32.mrb[0].mxu0
        %5692 = vmatprep.mubr.f32.mxu0 %v5453
        %5693 = vmatmul.mubr.f32.gmra.mrb[0].mxu0 %v5452
        %v5694 = vpop.f32.mrb[0].mxu0
        %v5695 = vadd.f32 0.0, %v5694
        %v5696 = vpop.f32.mrb[0].mxu0
        %5697 = vmatprep.mubr.f32.mxu0 %v5456
        %5698 = vmatmul.mubr.f32.gmra.mrb[0].mxu0 %v5455
        %v5699 = vpop.f32.mrb[0].mxu0
        %v5700 = vadd.f32 0.0, %v5699
        %v5701 = vpop.f32.mrb[0].mxu0
        %5702 = vmatprep.mubr.f32.mxu0 %v5459
        %5703 = vmatmul.mubr.f32.gmra.mrb[0].mxu0 %v5458
        %v5704 = vpop.f32.mrb[0].mxu0
        %v5705 = vadd.f32 0.0, %v5704
        %v5706 = vpop.f32.mrb[0].mxu0
        %5707 = vmatprep.mubr.f32.mxu0 %v5462
        %5708 = vmatmul.mubr.f32.gmra.mrb[0].mxu0 %v5461
        %v5709 = vpop.f32.mrb[0].mxu0
        %v5710 = vadd.f32 0.0, %v5709
        %v5711 = vpop.f32.mrb[0].mxu0
        %5712 = vmatprep.mubr.f32.mxu0 %v5465
        %5713 = vmatmul.mubr.f32.gmra.mrb[0].mxu0 %v5464
        %v5714 = vpop.f32.mrb[0].mxu0
        %v5715 = vadd.f32 0.0, %v5714
        %v5716 = vpop.f32.mrb[0].mxu0
        %5717 = vmatprep.mubr.f32.mxu0 %v5468
        %5718 = vmatmul.mubr.f32.gmra.mrb[0].mxu0 %v5467
        %v5719 = vpop.f32.mrb[0].mxu0
        %v5720 = vadd.f32 0.0, %v5719
        %v5721 = vpop.f32.mrb[0].mxu0
        %5722 = vmatprep.mubr.f32.mxu0 %v5471
        %5723 = vmatmul.mubr.f32.gmra.mrb[0].mxu0 %v5470
        %v5724 = vpop.f32.mrb[0].mxu0
        %v5725 = vadd.f32 0.0, %v5724
        %v5726 = vpop.f32.mrb[0].mxu0
        %5727 = vmatprep.mubr.f32.mxu0 %v5474
        %5728 = vmatmul.mubr.f32.gmra.mrb[0].mxu0 %v5473
        %v5729 = vpop.f32.mrb[0].mxu0
        %v5730 = vadd.f32 0.0, %v5729
        %v5731 = vpop.f32.mrb[0].mxu0
        %5732 = vmatprep.mubr.f32.mxu0 %v5477
        %5733 = vmatmul.mubr.f32.gmra.mrb[0].mxu0 %v5476
        %v5734 = vpop.f32.mrb[0].mxu0
        %v5735 = vadd.f32 0.0, %v5734
        %v5736 = vpop.f32.mrb[0].mxu0
        %5737 = vmatprep.mubr.f32.mxu0 %v5480
        %5738 = vmatmul.mubr.f32.gmra.mrb[0].mxu0 %v5479
        %v5739 = vpop.f32.mrb[0].mxu0
        %v5740 = vadd.f32 0.0, %v5739
        %v5741 = vpop.f32.mrb[0].mxu0
        %5742 = vmatprep.mubr.f32.mxu0 %v5483
        %5743 = vmatmul.mubr.f32.gmra.mrb[0].mxu0 %v5482
        %v5744 = vpop.f32.mrb[0].mxu0
        %v5745 = vadd.f32 0.0, %v5744
        %v5746 = vpop.f32.mrb[0].mxu0
        %5747 = vmatprep.mubr.f32.mxu0 %v5486
        %5748 = vmatmul.mubr.f32.gmra.mrb[0].mxu0 %v5485
        %v5749 = vpop.f32.mrb[0].mxu0
        %v5750 = vadd.f32 0.0, %v5749
        %v5751 = vpop.f32.mrb[0].mxu0
        %5752 = vmatprep.mubr.f32.mxu0 %v5489
        %5753 = vmatmul.mubr.f32.gmra.mrb[0].mxu0 %v5488
        %v5754 = vpop.f32.mrb[0].mxu0
        %v5755 = vadd.f32 0.0, %v5754
        %v5756 = vpop.f32.mrb[0].mxu0
        %5757 = vmatprep.mubr.f32.mxu0 %v5492
        %5758 = vmatmul.mubr.f32.gmra.mrb[0].mxu0 %v5491
        %v5759 = vpop.f32.mrb[0].mxu0
        %v5760 = vadd.f32 0.0, %v5759
        %v5761 = vpop.f32.mrb[0].mxu0
        %5762 = vmatprep.mubr.f32.mxu0 %v5495
        %5763 = vmatmul.mubr.f32.gmra.mrb[0].mxu0 %v5494
        %v5764 = vpop.f32.mrb[0].mxu0
        %v5765 = vadd.f32 0.0, %v5764
        %v5766 = vpop.f32.mrb[0].mxu0
        %5767 = vmatprep.mubr.f32.mxu0 %v5498
        %5768 = vmatmul.mubr.f32.gmra.mrb[0].mxu0 %v5497
        %v5769 = vpop.f32.mrb[0].mxu0
        %v5770 = vadd.f32 0.0, %v5769
        %v5771 = vpop.f32.mrb[0].mxu0
        %5772 = vdwg.mxu0
        %5773 = vmatprep.subr.mxu0 0.0
        %5774 = vmatpush1.msra.mxu0 %v5532
        %5775 = vmatprep.subr.mxu0 0.0
        %5776 = vmatpush1.msra.mxu0 %v5533
        %5777 = vmatprep.subr.mxu0 0.0
        %5778 = vmatpush1.msra.mxu0 %v5534
        %5779 = vmatprep.subr.mxu0 0.0
        %5780 = vmatpush1.msra.mxu0 %v5535
        %5781 = vmatprep.subr.mxu0 0.0
        %5782 = vmatpush1.msra.mxu0 %v5536
        %5783 = vmatprep.subr.mxu0 0.0
        %5784 = vmatpush1.msra.mxu0 %v5537
        %5785 = vmatprep.subr.mxu0 0.0
        %5786 = vmatpush1.msra.mxu0 %v5538
        %5787 = vmatprep.subr.mxu0 0.0
        %5788 = vmatpush1.msra.mxu0 %v5539
        %5789 = vmatprep.subr.mxu0 0.0
        %5790 = vmatpush1.msra.mxu0 %v5540
        %5791 = vmatprep.subr.mxu0 0.0
        %5792 = vmatpush1.msra.mxu0 %v5541
        %5793 = vmatprep.subr.mxu0 0.0
        %5794 = vmatpush1.msra.mxu0 %v5542
        %5795 = vmatprep.subr.mxu0 0.0
        %5796 = vmatpush1.msra.mxu0 %v5543
        %5797 = vmatprep.subr.mxu0 0.0
        %5798 = vmatpush1.msra.mxu0 %v5544
        %5799 = vmatprep.subr.mxu0 0.0
        %5800 = vmatpush1.msra.mxu0 %v5545
        %5801 = vmatprep.subr.mxu0 0.0
        %5802 = vmatpush1.msra.mxu0 %v5546
        %5803 = vmatprep.subr.mxu0 0.0
        %5804 = vmatpush1.msra.mxu0 %v5547
        %5805 = vmatprep.subr.mxu0 0.0
        %5806 = vmatpush1.msra.mxu0 0.0
        %5807 = vmatprep.subr.mxu0 0.0
        %5808 = vmatpush1.msra.mxu0 0.0
        %5809 = vmatprep.subr.mxu0 0.0
        %5810 = vmatpush1.msra.mxu0 0.0
        %5811 = vmatprep.subr.mxu0 0.0
        %5812 = vmatpush1.msra.mxu0 0.0
        %5813 = vmatprep.subr.mxu0 0.0
        %5814 = vmatpush1.msra.mxu0 0.0
        %5815 = vmatprep.subr.mxu0 0.0
        %5816 = vmatpush1.msra.mxu0 0.0
        %5817 = vmatprep.subr.mxu0 0.0
        %5818 = vmatpush1.msra.mxu0 0.0
        %5819 = vmatprep.subr.mxu0 0.0
        %5820 = vmatpush1.msra.mxu0 0.0
        %5821 = vmatprep.subr.mxu0 0.0
        %5822 = vmatpush1.msra.mxu0 0.0
        %5823 = vmatprep.subr.mxu0 0.0
        %5824 = vmatpush1.msra.mxu0 0.0
        %5825 = vmatprep.subr.mxu0 0.0
        %5826 = vmatpush1.msra.mxu0 0.0
        %5827 = vmatprep.subr.mxu0 0.0
        %5828 = vmatpush1.msra.mxu0 0.0
        %5829 = vmatprep.subr.mxu0 0.0
        %5830 = vmatpush1.msra.mxu0 0.0
        %5831 = vmatprep.subr.mxu0 0.0
        %5832 = vmatpush1.msra.mxu0 0.0
        %5833 = vmatprep.subr.mxu0 0.0
        %5834 = vmatpush1.msra.mxu0 0.0
        %5835 = vmatprep.subr.mxu0 0.0
        %5836 = vmatpush1.msra.mxu0 0.0
        %5837 = vmatprep.mubr.f32.mxu0 0.0
        %5838 = vmatmul.mubr.f32.gmra.mrb[0].mxu0 %v5406
        %v5839 = vpop.f32.mrb[0].mxu0
        %v5840 = vadd.f32 %v5615, %v5839
        %v5841 = vpop.f32.mrb[0].mxu0
        %5842 = vmatprep.mubr.f32.mxu0 0.0
        %5843 = vmatmul.mubr.f32.gmra.mrb[0].mxu0 %v5409
        %v5844 = vpop.f32.mrb[0].mxu0
        %v5845 = vadd.f32 %v5620, %v5844
        %v5846 = vpop.f32.mrb[0].mxu0
        %5847 = vmatprep.mubr.f32.mxu0 0.0
        %5848 = vmatmul.mubr.f32.gmra.mrb[0].mxu0 %v5412
        %v5849 = vpop.f32.mrb[0].mxu0
        %v5850 = vadd.f32 %v5625, %v5849
        %v5851 = vpop.f32.mrb[0].mxu0
        %5852 = vmatprep.mubr.f32.mxu0 0.0
        %5853 = vmatmul.mubr.f32.gmra.mrb[0].mxu0 %v5415
        %v5854 = vpop.f32.mrb[0].mxu0
        %v5855 = vadd.f32 %v5630, %v5854
        %v5856 = vpop.f32.mrb[0].mxu0
        %5857 = vmatprep.mubr.f32.mxu0 0.0
        %5858 = vmatmul.mubr.f32.gmra.mrb[0].mxu0 %v5418
        %v5859 = vpop.f32.mrb[0].mxu0
        %v5860 = vadd.f32 %v5635, %v5859
        %v5861 = vpop.f32.mrb[0].mxu0
        %5862 = vmatprep.mubr.f32.mxu0 0.0
        %5863 = vmatmul.mubr.f32.gmra.mrb[0].mxu0 %v5421
        %v5864 = vpop.f32.mrb[0].mxu0
        %v5865 = vadd.f32 %v5640, %v5864
        %v5866 = vpop.f32.mrb[0].mxu0
        %5867 = vmatprep.mubr.f32.mxu0 0.0
        %5868 = vmatmul.mubr.f32.gmra.mrb[0].mxu0 %v5424
        %v5869 = vpop.f32.mrb[0].mxu0
        %v5870 = vadd.f32 %v5645, %v5869
        %v5871 = vpop.f32.mrb[0].mxu0
        %5872 = vmatprep.mubr.f32.mxu0 0.0
        %5873 = vmatmul.mubr.f32.gmra.mrb[0].mxu0 %v5427
        %v5874 = vpop.f32.mrb[0].mxu0
        %v5875 = vadd.f32 %v5650, %v5874
        %v5876 = vpop.f32.mrb[0].mxu0
        %5877 = vmatprep.mubr.f32.mxu0 0.0
        %5878 = vmatmul.mubr.f32.gmra.mrb[0].mxu0 %v5430
        %v5879 = vpop.f32.mrb[0].mxu0
        %v5880 = vadd.f32 %v5655, %v5879
        %v5881 = vpop.f32.mrb[0].mxu0
        %5882 = vmatprep.mubr.f32.mxu0 0.0
        %5883 = vmatmul.mubr.f32.gmra.mrb[0].mxu0 %v5433
        %v5884 = vpop.f32.mrb[0].mxu0
        %v5885 = vadd.f32 %v5660, %v5884
        %v5886 = vpop.f32.mrb[0].mxu0
        %5887 = vmatprep.mubr.f32.mxu0 0.0
        %5888 = vmatmul.mubr.f32.gmra.mrb[0].mxu0 %v5436
        %v5889 = vpop.f32.mrb[0].mxu0
        %v5890 = vadd.f32 %v5665, %v5889
        %v5891 = vpop.f32.mrb[0].mxu0
        %5892 = vmatprep.mubr.f32.mxu0 0.0
        %5893 = vmatmul.mubr.f32.gmra.mrb[0].mxu0 %v5439
        %v5894 = vpop.f32.mrb[0].mxu0
        %v5895 = vadd.f32 %v5670, %v5894
        %v5896 = vpop.f32.mrb[0].mxu0
        %5897 = vmatprep.mubr.f32.mxu0 0.0
        %5898 = vmatmul.mubr.f32.gmra.mrb[0].mxu0 %v5442
        %v5899 = vpop.f32.mrb[0].mxu0
        %v5900 = vadd.f32 %v5675, %v5899
        %v5901 = vpop.f32.mrb[0].mxu0
        %5902 = vmatprep.mubr.f32.mxu0 0.0
        %5903 = vmatmul.mubr.f32.gmra.mrb[0].mxu0 %v5445
        %v5904 = vpop.f32.mrb[0].mxu0
        %v5905 = vadd.f32 %v5680, %v5904
        %v5906 = vpop.f32.mrb[0].mxu0
        %5907 = vmatprep.mubr.f32.mxu0 0.0
        %5908 = vmatmul.mubr.f32.gmra.mrb[0].mxu0 %v5448
        %v5909 = vpop.f32.mrb[0].mxu0
        %v5910 = vadd.f32 %v5685, %v5909
        %v5911 = vpop.f32.mrb[0].mxu0
        %5912 = vmatprep.mubr.f32.mxu0 0.0
        %5913 = vmatmul.mubr.f32.gmra.mrb[0].mxu0 %v5451
        %v5914 = vpop.f32.mrb[0].mxu0
        %v5915 = vadd.f32 %v5690, %v5914
        %v5916 = vpop.f32.mrb[0].mxu0
        %5917 = vmatprep.mubr.f32.mxu0 0.0
        %5918 = vmatmul.mubr.f32.gmra.mrb[0].mxu0 %v5454
        %v5919 = vpop.f32.mrb[0].mxu0
        %v5920 = vadd.f32 %v5695, %v5919
        %v5921 = vpop.f32.mrb[0].mxu0
        %5922 = vmatprep.mubr.f32.mxu0 0.0
        %5923 = vmatmul.mubr.f32.gmra.mrb[0].mxu0 %v5457
        %v5924 = vpop.f32.mrb[0].mxu0
        %v5925 = vadd.f32 %v5700, %v5924
        %v5926 = vpop.f32.mrb[0].mxu0
        %5927 = vmatprep.mubr.f32.mxu0 0.0
        %5928 = vmatmul.mubr.f32.gmra.mrb[0].mxu0 %v5460
        %v5929 = vpop.f32.mrb[0].mxu0
        %v5930 = vadd.f32 %v5705, %v5929
        %v5931 = vpop.f32.mrb[0].mxu0
        %5932 = vmatprep.mubr.f32.mxu0 0.0
        %5933 = vmatmul.mubr.f32.gmra.mrb[0].mxu0 %v5463
        %v5934 = vpop.f32.mrb[0].mxu0
        %v5935 = vadd.f32 %v5710, %v5934
        %v5936 = vpop.f32.mrb[0].mxu0
        %5937 = vmatprep.mubr.f32.mxu0 0.0
        %5938 = vmatmul.mubr.f32.gmra.mrb[0].mxu0 %v5466
        %v5939 = vpop.f32.mrb[0].mxu0
        %v5940 = vadd.f32 %v5715, %v5939
        %v5941 = vpop.f32.mrb[0].mxu0
        %5942 = vmatprep.mubr.f32.mxu0 0.0
        %5943 = vmatmul.mubr.f32.gmra.mrb[0].mxu0 %v5469
        %v5944 = vpop.f32.mrb[0].mxu0
        %v5945 = vadd.f32 %v5720, %v5944
        %v5946 = vpop.f32.mrb[0].mxu0
        %5947 = vmatprep.mubr.f32.mxu0 0.0
        %5948 = vmatmul.mubr.f32.gmra.mrb[0].mxu0 %v5472
        %v5949 = vpop.f32.mrb[0].mxu0
        %v5950 = vadd.f32 %v5725, %v5949
        %v5951 = vpop.f32.mrb[0].mxu0
        %5952 = vmatprep.mubr.f32.mxu0 0.0
        %5953 = vmatmul.mubr.f32.gmra.mrb[0].mxu0 %v5475
        %v5954 = vpop.f32.mrb[0].mxu0
        %v5955 = vadd.f32 %v5730, %v5954
        %v5956 = vpop.f32.mrb[0].mxu0
        %5957 = vmatprep.mubr.f32.mxu0 0.0
        %5958 = vmatmul.mubr.f32.gmra.mrb[0].mxu0 %v5478
        %v5959 = vpop.f32.mrb[0].mxu0
        %v5960 = vadd.f32 %v5735, %v5959
        %v5961 = vpop.f32.mrb[0].mxu0
        %5962 = vmatprep.mubr.f32.mxu0 0.0
        %5963 = vmatmul.mubr.f32.gmra.mrb[0].mxu0 %v5481
        %v5964 = vpop.f32.mrb[0].mxu0
        %v5965 = vadd.f32 %v5740, %v5964
        %v5966 = vpop.f32.mrb[0].mxu0
        %5967 = vmatprep.mubr.f32.mxu0 0.0
        %5968 = vmatmul.mubr.f32.gmra.mrb[0].mxu0 %v5484
        %v5969 = vpop.f32.mrb[0].mxu0
        %v5970 = vadd.f32 %v5745, %v5969
        %v5971 = vpop.f32.mrb[0].mxu0
        %5972 = vmatprep.mubr.f32.mxu0 0.0
        %5973 = vmatmul.mubr.f32.gmra.mrb[0].mxu0 %v5487
        %v5974 = vpop.f32.mrb[0].mxu0
        %v5975 = vadd.f32 %v5750, %v5974
        %v5976 = vpop.f32.mrb[0].mxu0
        %5977 = vmatprep.mubr.f32.mxu0 0.0
        %5978 = vmatmul.mubr.f32.gmra.mrb[0].mxu0 %v5490
        %v5979 = vpop.f32.mrb[0].mxu0
        %v5980 = vadd.f32 %v5755, %v5979
        %v5981 = vpop.f32.mrb[0].mxu0
        %5982 = vmatprep.mubr.f32.mxu0 0.0
        %5983 = vmatmul.mubr.f32.gmra.mrb[0].mxu0 %v5493
        %v5984 = vpop.f32.mrb[0].mxu0
        %v5985 = vadd.f32 %v5760, %v5984
        %v5986 = vpop.f32.mrb[0].mxu0
        %5987 = vmatprep.mubr.f32.mxu0 0.0
        %5988 = vmatmul.mubr.f32.gmra.mrb[0].mxu0 %v5496
        %v5989 = vpop.f32.mrb[0].mxu0
        %v5990 = vadd.f32 %v5765, %v5989
        %v5991 = vpop.f32.mrb[0].mxu0
        %5992 = vmatprep.mubr.f32.mxu0 0.0
        %5993 = vmatmul.mubr.f32.gmra.mrb[0].mxu0 %v5499
        %v5994 = vpop.f32.mrb[0].mxu0
        %v5995 = vadd.f32 %v5770, %v5994
        %v5996 = vpop.f32.mrb[0].mxu0
        %5997 = vdwg.mxu0
        %v5999 = vlaneseq
        %v6000 = vshrl.u32 %v5999, 7
        %v6001 = vsub.s32 0, %v6000
        %v6002 = vrot.slane %v5115, %v6001
        %v6004 = vadd.f32 %v6002, %v5840
        %v6005 = vadd.f32 %v6002, %v5845
        %v6006 = vadd.f32 %v6002, %v5850
        %v6007 = vadd.f32 %v6002, %v5855
        %v6008 = vadd.f32 %v6002, %v5860
        %v6009 = vadd.f32 %v6002, %v5865
        %v6010 = vadd.f32 %v6002, %v5870
        %v6011 = vadd.f32 %v6002, %v5875
        %v6012 = vadd.f32 %v6002, %v5880
        %v6013 = vadd.f32 %v6002, %v5885
        %v6014 = vadd.f32 %v6002, %v5890
        %v6015 = vadd.f32 %v6002, %v5895
        %v6016 = vadd.f32 %v6002, %v5900
        %v6017 = vadd.f32 %v6002, %v5905
        %v6018 = vadd.f32 %v6002, %v5910
        %v6019 = vadd.f32 %v6002, %v5915
        %v6020 = vadd.f32 %v6002, %v5920
        %v6021 = vadd.f32 %v6002, %v5925
        %v6022 = vadd.f32 %v6002, %v5930
        %v6023 = vadd.f32 %v6002, %v5935
        %v6024 = vadd.f32 %v6002, %v5940
        %v6025 = vadd.f32 %v6002, %v5945
        %v6026 = vadd.f32 %v6002, %v5950
        %v6027 = vadd.f32 %v6002, %v5955
        %v6028 = vadd.f32 %v6002, %v5960
        %v6029 = vadd.f32 %v6002, %v5965
        %v6030 = vadd.f32 %v6002, %v5970
        %v6031 = vadd.f32 %v6002, %v5975
        %v6032 = vadd.f32 %v6002, %v5980
        %v6033 = vadd.f32 %v6002, %v5985
        %v6034 = vadd.f32 %v6002, %v5990
        %v6035 = vadd.f32 %v6002, %v5995
        %v6036 = vld [vmem:[%s796] sm:$0xff]
        %v6037 = vld [vmem:[%s796 + $0x8] sm:$0xff]
        %v6038 = vld [vmem:[%s796 + $0x10] sm:$0xff]
        %v6039 = vld [vmem:[%s796 + $0x18] sm:$0xff]
        %v6040 = vld [vmem:[%s796 + $0x20] sm:$0xff]
        %v6041 = vld [vmem:[%s796 + $0x28] sm:$0xff]
        %v6042 = vld [vmem:[%s796 + $0x30] sm:$0xff]
        %v6043 = vld [vmem:[%s796 + $0x38] sm:$0xff]
        %v6044 = vld [vmem:[%s796 + $0x40] sm:$0xff]
        %v6045 = vld [vmem:[%s796 + $0x48] sm:$0xff]
        %v6046 = vld [vmem:[%s796 + $0x50] sm:$0xff]
        %v6047 = vld [vmem:[%s796 + $0x58] sm:$0xff]
        %v6048 = vld [vmem:[%s796 + $0x60] sm:$0xff]
        %v6049 = vld [vmem:[%s796 + $0x68] sm:$0xff]
        %v6050 = vld [vmem:[%s796 + $0x70] sm:$0xff]
        %v6051 = vld [vmem:[%s796 + $0x78] sm:$0xff]
        %v6052 = vld [vmem:[%s796 + $0x80] sm:$0xff]
        %v6053 = vld [vmem:[%s796 + $0x88] sm:$0xff]
        %v6054 = vld [vmem:[%s796 + $0x90] sm:$0xff]
        %v6055 = vld [vmem:[%s796 + $0x98] sm:$0xff]
        %v6056 = vld [vmem:[%s796 + $0xa0] sm:$0xff]
        %v6057 = vld [vmem:[%s796 + $0xa8] sm:$0xff]
        %v6058 = vld [vmem:[%s796 + $0xb0] sm:$0xff]
        %v6059 = vld [vmem:[%s796 + $0xb8] sm:$0xff]
        %v6060 = vld [vmem:[%s796 + $0xc0] sm:$0xff]
        %v6061 = vld [vmem:[%s796 + $0xc8] sm:$0xff]
        %v6062 = vld [vmem:[%s796 + $0xd0] sm:$0xff]
        %v6063 = vld [vmem:[%s796 + $0xd8] sm:$0xff]
        %v6064 = vld [vmem:[%s796 + $0xe0] sm:$0xff]
        %v6065 = vld [vmem:[%s796 + $0xe8] sm:$0xff]
        %v6066 = vld [vmem:[%s796 + $0xf0] sm:$0xff]
        %v6067 = vld [vmem:[%s796 + $0xf8] sm:$0xff]
        %v6068 = vld [vmem:[%s796 + $0x100] sm:$0xff]
        %v6069 = vld [vmem:[%s796 + $0x108] sm:$0xff]
        %v6070 = vld [vmem:[%s796 + $0x110] sm:$0xff]
        %v6071 = vld [vmem:[%s796 + $0x118] sm:$0xff]
        %v6072 = vld [vmem:[%s796 + $0x120] sm:$0xff]
        %v6073 = vld [vmem:[%s796 + $0x128] sm:$0xff]
        %v6074 = vld [vmem:[%s796 + $0x130] sm:$0xff]
        %v6075 = vld [vmem:[%s796 + $0x138] sm:$0xff]
        %v6076 = vld [vmem:[%s796 + $0x140] sm:$0xff]
        %v6077 = vld [vmem:[%s796 + $0x148] sm:$0xff]
        %v6078 = vld [vmem:[%s796 + $0x150] sm:$0xff]
        %v6079 = vld [vmem:[%s796 + $0x158] sm:$0xff]
        %v6080 = vld [vmem:[%s796 + $0x160] sm:$0xff]
        %v6081 = vld [vmem:[%s796 + $0x168] sm:$0xff]
        %v6082 = vld [vmem:[%s796 + $0x170] sm:$0xff]
        %v6083 = vld [vmem:[%s796 + $0x178] sm:$0xff]
        %v6084 = vld [vmem:[%s796 + $0x180] sm:$0xff]
        %v6085 = vld [vmem:[%s796 + $0x188] sm:$0xff]
        %v6086 = vld [vmem:[%s796 + $0x190] sm:$0xff]
        %v6087 = vld [vmem:[%s796 + $0x198] sm:$0xff]
        %v6088 = vld [vmem:[%s796 + $0x1a0] sm:$0xff]
        %v6089 = vld [vmem:[%s796 + $0x1a8] sm:$0xff]
        %v6090 = vld [vmem:[%s796 + $0x1b0] sm:$0xff]
        %v6091 = vld [vmem:[%s796 + $0x1b8] sm:$0xff]
        %v6092 = vld [vmem:[%s796 + $0x1c0] sm:$0xff]
        %v6093 = vld [vmem:[%s796 + $0x1c8] sm:$0xff]
        %v6094 = vld [vmem:[%s796 + $0x1d0] sm:$0xff]
        %v6095 = vld [vmem:[%s796 + $0x1d8] sm:$0xff]
        %v6096 = vld [vmem:[%s796 + $0x1e0] sm:$0xff]
        %v6097 = vld [vmem:[%s796 + $0x1e8] sm:$0xff]
        %v6098 = vld [vmem:[%s796 + $0x1f0] sm:$0xff]
        %v6099 = vld [vmem:[%s796 + $0x1f8] sm:$0xff]
        %v6100 = vld [vmem:[%s796 + $0x200] sm:$0xff]
        %v6101 = vld [vmem:[%s796 + $0x208] sm:$0xff]
        %v6102 = vld [vmem:[%s796 + $0x210] sm:$0xff]
        %v6103 = vld [vmem:[%s796 + $0x218] sm:$0xff]
        %v6104 = vld [vmem:[%s796 + $0x220] sm:$0xff]
        %v6105 = vld [vmem:[%s796 + $0x228] sm:$0xff]
        %v6106 = vld [vmem:[%s796 + $0x230] sm:$0xff]
        %v6107 = vld [vmem:[%s796 + $0x238] sm:$0xff]
        %v6108 = vld [vmem:[%s796 + $0x240] sm:$0xff]
        %v6109 = vld [vmem:[%s796 + $0x248] sm:$0xff]
        %v6110 = vld [vmem:[%s796 + $0x250] sm:$0xff]
        %v6111 = vld [vmem:[%s796 + $0x258] sm:$0xff]
        %v6112 = vld [vmem:[%s796 + $0x260] sm:$0xff]
        %v6113 = vld [vmem:[%s796 + $0x268] sm:$0xff]
        %v6114 = vld [vmem:[%s796 + $0x270] sm:$0xff]
        %v6115 = vld [vmem:[%s796 + $0x278] sm:$0xff]
        %v6116 = vld [vmem:[%s796 + $0x280] sm:$0xff]
        %v6117 = vld [vmem:[%s796 + $0x288] sm:$0xff]
        %v6118 = vld [vmem:[%s796 + $0x290] sm:$0xff]
        %v6119 = vld [vmem:[%s796 + $0x298] sm:$0xff]
        %v6120 = vld [vmem:[%s796 + $0x2a0] sm:$0xff]
        %v6121 = vld [vmem:[%s796 + $0x2a8] sm:$0xff]
        %v6122 = vld [vmem:[%s796 + $0x2b0] sm:$0xff]
        %v6123 = vld [vmem:[%s796 + $0x2b8] sm:$0xff]
        %v6124 = vld [vmem:[%s796 + $0x2c0] sm:$0xff]
        %v6125 = vld [vmem:[%s796 + $0x2c8] sm:$0xff]
        %v6126 = vld [vmem:[%s796 + $0x2d0] sm:$0xff]
        %v6127 = vld [vmem:[%s796 + $0x2d8] sm:$0xff]
        %v6128 = vld [vmem:[%s796 + $0x2e0] sm:$0xff]
        %v6129 = vld [vmem:[%s796 + $0x2e8] sm:$0xff]
        %v6130 = vld [vmem:[%s796 + $0x2f0] sm:$0xff]
        %v6131 = vld [vmem:[%s796 + $0x2f8] sm:$0xff]
        %s6132 = scalar_lea.vmem [#allocation11], 384
        %v6133 = vld [vmem:[%s6132] sm:$0xff]
        %v6134 = vld [vmem:[%s6132 + $0x8] sm:$0xff]
        %v6135 = vld [vmem:[%s6132 + $0x10] sm:$0xff]
        %v6136 = vld [vmem:[%s6132 + $0x18] sm:$0xff]
        %v6137 = vld [vmem:[%s6132 + $0x20] sm:$0xff]
        %v6138 = vld [vmem:[%s6132 + $0x28] sm:$0xff]
        %v6139 = vld [vmem:[%s6132 + $0x30] sm:$0xff]
        %v6140 = vld [vmem:[%s6132 + $0x38] sm:$0xff]
        %v6141 = vld [vmem:[%s6132 + $0x40] sm:$0xff]
        %v6142 = vld [vmem:[%s6132 + $0x48] sm:$0xff]
        %v6143 = vld [vmem:[%s6132 + $0x50] sm:$0xff]
        %v6144 = vld [vmem:[%s6132 + $0x58] sm:$0xff]
        %v6145 = vld [vmem:[%s6132 + $0x60] sm:$0xff]
        %v6146 = vld [vmem:[%s6132 + $0x68] sm:$0xff]
        %v6147 = vld [vmem:[%s6132 + $0x70] sm:$0xff]
        %v6148 = vld [vmem:[%s6132 + $0x78] sm:$0xff]
        %v6149 = vld [vmem:[%s6132 + $0x80] sm:$0xff]
        %v6150 = vld [vmem:[%s6132 + $0x88] sm:$0xff]
        %v6151 = vld [vmem:[%s6132 + $0x90] sm:$0xff]
        %v6152 = vld [vmem:[%s6132 + $0x98] sm:$0xff]
        %v6153 = vld [vmem:[%s6132 + $0xa0] sm:$0xff]
        %v6154 = vld [vmem:[%s6132 + $0xa8] sm:$0xff]
        %v6155 = vld [vmem:[%s6132 + $0xb0] sm:$0xff]
        %v6156 = vld [vmem:[%s6132 + $0xb8] sm:$0xff]
        %v6157 = vld [vmem:[%s6132 + $0xc0] sm:$0xff]
        %v6158 = vld [vmem:[%s6132 + $0xc8] sm:$0xff]
        %v6159 = vld [vmem:[%s6132 + $0xd0] sm:$0xff]
        %v6160 = vld [vmem:[%s6132 + $0xd8] sm:$0xff]
        %v6161 = vld [vmem:[%s6132 + $0xe0] sm:$0xff]
        %v6162 = vld [vmem:[%s6132 + $0xe8] sm:$0xff]
        %v6163 = vld [vmem:[%s6132 + $0xf0] sm:$0xff]
        %v6164 = vld [vmem:[%s6132 + $0xf8] sm:$0xff]
        %v6165 = vld [vmem:[%s6132 + $0x100] sm:$0xff]
        %v6166 = vld [vmem:[%s6132 + $0x108] sm:$0xff]
        %v6167 = vld [vmem:[%s6132 + $0x110] sm:$0xff]
        %v6168 = vld [vmem:[%s6132 + $0x118] sm:$0xff]
        %v6169 = vld [vmem:[%s6132 + $0x120] sm:$0xff]
        %v6170 = vld [vmem:[%s6132 + $0x128] sm:$0xff]
        %v6171 = vld [vmem:[%s6132 + $0x130] sm:$0xff]
        %v6172 = vld [vmem:[%s6132 + $0x138] sm:$0xff]
        %v6173 = vld [vmem:[%s6132 + $0x140] sm:$0xff]
        %v6174 = vld [vmem:[%s6132 + $0x148] sm:$0xff]
        %v6175 = vld [vmem:[%s6132 + $0x150] sm:$0xff]
        %v6176 = vld [vmem:[%s6132 + $0x158] sm:$0xff]
        %v6177 = vld [vmem:[%s6132 + $0x160] sm:$0xff]
        %v6178 = vld [vmem:[%s6132 + $0x168] sm:$0xff]
        %v6179 = vld [vmem:[%s6132 + $0x170] sm:$0xff]
        %v6180 = vld [vmem:[%s6132 + $0x178] sm:$0xff]
        %6181 = vmatprep.subr.mxu0 0.0
        %6182 = vmatpush1.msra.mxu0 %v6133
        %6183 = vmatprep.subr.mxu0 0.0
        %6184 = vmatpush1.msra.mxu0 %v6134
        %6185 = vmatprep.subr.mxu0 0.0
        %6186 = vmatpush1.msra.mxu0 %v6135
        %6187 = vmatprep.subr.mxu0 0.0
        %6188 = vmatpush1.msra.mxu0 %v6136
        %6189 = vmatprep.subr.mxu0 0.0
        %6190 = vmatpush1.msra.mxu0 %v6137
        %6191 = vmatprep.subr.mxu0 0.0
        %6192 = vmatpush1.msra.mxu0 %v6138
        %6193 = vmatprep.subr.mxu0 0.0
        %6194 = vmatpush1.msra.mxu0 %v6139
        %6195 = vmatprep.subr.mxu0 0.0
        %6196 = vmatpush1.msra.mxu0 %v6140
        %6197 = vmatprep.subr.mxu0 0.0
        %6198 = vmatpush1.msra.mxu0 %v6141
        %6199 = vmatprep.subr.mxu0 0.0
        %6200 = vmatpush1.msra.mxu0 %v6142
        %6201 = vmatprep.subr.mxu0 0.0
        %6202 = vmatpush1.msra.mxu0 %v6143
        %6203 = vmatprep.subr.mxu0 0.0
        %6204 = vmatpush1.msra.mxu0 %v6144
        %6205 = vmatprep.subr.mxu0 0.0
        %6206 = vmatpush1.msra.mxu0 %v6145
        %6207 = vmatprep.subr.mxu0 0.0
        %6208 = vmatpush1.msra.mxu0 %v6146
        %6209 = vmatprep.subr.mxu0 0.0
        %6210 = vmatpush1.msra.mxu0 %v6147
        %6211 = vmatprep.subr.mxu0 0.0
        %6212 = vmatpush1.msra.mxu0 %v6148
        %6213 = vmatprep.subr.mxu0 0.0
        %6214 = vmatpush1.msra.mxu0 %v6149
        %6215 = vmatprep.subr.mxu0 0.0
        %6216 = vmatpush1.msra.mxu0 %v6150
        %6217 = vmatprep.subr.mxu0 0.0
        %6218 = vmatpush1.msra.mxu0 %v6151
        %6219 = vmatprep.subr.mxu0 0.0
        %6220 = vmatpush1.msra.mxu0 %v6152
        %6221 = vmatprep.subr.mxu0 0.0
        %6222 = vmatpush1.msra.mxu0 %v6153
        %6223 = vmatprep.subr.mxu0 0.0
        %6224 = vmatpush1.msra.mxu0 %v6154
        %6225 = vmatprep.subr.mxu0 0.0
        %6226 = vmatpush1.msra.mxu0 %v6155
        %6227 = vmatprep.subr.mxu0 0.0
        %6228 = vmatpush1.msra.mxu0 %v6156
        %6229 = vmatprep.subr.mxu0 0.0
        %6230 = vmatpush1.msra.mxu0 %v6157
        %6231 = vmatprep.subr.mxu0 0.0
        %6232 = vmatpush1.msra.mxu0 %v6158
        %6233 = vmatprep.subr.mxu0 0.0
        %6234 = vmatpush1.msra.mxu0 %v6159
        %6235 = vmatprep.subr.mxu0 0.0
        %6236 = vmatpush1.msra.mxu0 %v6160
        %6237 = vmatprep.subr.mxu0 0.0
        %6238 = vmatpush1.msra.mxu0 %v6161
        %6239 = vmatprep.subr.mxu0 0.0
        %6240 = vmatpush1.msra.mxu0 %v6162
        %6241 = vmatprep.subr.mxu0 0.0
        %6242 = vmatpush1.msra.mxu0 %v6163
        %6243 = vmatprep.subr.mxu0 0.0
        %6244 = vmatpush1.msra.mxu0 %v6164
        %6245 = vmatprep.mubr.f32.mxu0 %v6037
        %6246 = vmatmul.mubr.f32.gmra.mrb[0].mxu0 %v6036
        %v6247 = vpop.f32.mrb[0].mxu0
        %v6248 = vadd.f32 0.0, %v6247
        %v6249 = vpop.f32.mrb[0].mxu0
        %6250 = vmatprep.mubr.f32.mxu0 %v6040
        %6251 = vmatmul.mubr.f32.gmra.mrb[0].mxu0 %v6039
        %v6252 = vpop.f32.mrb[0].mxu0
        %v6253 = vadd.f32 0.0, %v6252
        %v6254 = vpop.f32.mrb[0].mxu0
        %6255 = vmatprep.mubr.f32.mxu0 %v6043
        %6256 = vmatmul.mubr.f32.gmra.mrb[0].mxu0 %v6042
        %v6257 = vpop.f32.mrb[0].mxu0
        %v6258 = vadd.f32 0.0, %v6257
        %v6259 = vpop.f32.mrb[0].mxu0
        %6260 = vmatprep.mubr.f32.mxu0 %v6046
        %6261 = vmatmul.mubr.f32.gmra.mrb[0].mxu0 %v6045
        %v6262 = vpop.f32.mrb[0].mxu0
        %v6263 = vadd.f32 0.0, %v6262
        %v6264 = vpop.f32.mrb[0].mxu0
        %6265 = vmatprep.mubr.f32.mxu0 %v6049
        %6266 = vmatmul.mubr.f32.gmra.mrb[0].mxu0 %v6048
        %v6267 = vpop.f32.mrb[0].mxu0
        %v6268 = vadd.f32 0.0, %v6267
        %v6269 = vpop.f32.mrb[0].mxu0
        %6270 = vmatprep.mubr.f32.mxu0 %v6052
        %6271 = vmatmul.mubr.f32.gmra.mrb[0].mxu0 %v6051
        %v6272 = vpop.f32.mrb[0].mxu0
        %v6273 = vadd.f32 0.0, %v6272
        %v6274 = vpop.f32.mrb[0].mxu0
        %6275 = vmatprep.mubr.f32.mxu0 %v6055
        %6276 = vmatmul.mubr.f32.gmra.mrb[0].mxu0 %v6054
        %v6277 = vpop.f32.mrb[0].mxu0
        %v6278 = vadd.f32 0.0, %v6277
        %v6279 = vpop.f32.mrb[0].mxu0
        %6280 = vmatprep.mubr.f32.mxu0 %v6058
        %6281 = vmatmul.mubr.f32.gmra.mrb[0].mxu0 %v6057
        %v6282 = vpop.f32.mrb[0].mxu0
        %v6283 = vadd.f32 0.0, %v6282
        %v6284 = vpop.f32.mrb[0].mxu0
        %6285 = vmatprep.mubr.f32.mxu0 %v6061
        %6286 = vmatmul.mubr.f32.gmra.mrb[0].mxu0 %v6060
        %v6287 = vpop.f32.mrb[0].mxu0
        %v6288 = vadd.f32 0.0, %v6287
        %v6289 = vpop.f32.mrb[0].mxu0
        %6290 = vmatprep.mubr.f32.mxu0 %v6064
        %6291 = vmatmul.mubr.f32.gmra.mrb[0].mxu0 %v6063
        %v6292 = vpop.f32.mrb[0].mxu0
        %v6293 = vadd.f32 0.0, %v6292
        %v6294 = vpop.f32.mrb[0].mxu0
        %6295 = vmatprep.mubr.f32.mxu0 %v6067
        %6296 = vmatmul.mubr.f32.gmra.mrb[0].mxu0 %v6066
        %v6297 = vpop.f32.mrb[0].mxu0
        %v6298 = vadd.f32 0.0, %v6297
        %v6299 = vpop.f32.mrb[0].mxu0
        %6300 = vmatprep.mubr.f32.mxu0 %v6070
        %6301 = vmatmul.mubr.f32.gmra.mrb[0].mxu0 %v6069
        %v6302 = vpop.f32.mrb[0].mxu0
        %v6303 = vadd.f32 0.0, %v6302
        %v6304 = vpop.f32.mrb[0].mxu0
        %6305 = vmatprep.mubr.f32.mxu0 %v6073
        %6306 = vmatmul.mubr.f32.gmra.mrb[0].mxu0 %v6072
        %v6307 = vpop.f32.mrb[0].mxu0
        %v6308 = vadd.f32 0.0, %v6307
        %v6309 = vpop.f32.mrb[0].mxu0
        %6310 = vmatprep.mubr.f32.mxu0 %v6076
        %6311 = vmatmul.mubr.f32.gmra.mrb[0].mxu0 %v6075
        %v6312 = vpop.f32.mrb[0].mxu0
        %v6313 = vadd.f32 0.0, %v6312
        %v6314 = vpop.f32.mrb[0].mxu0
        %6315 = vmatprep.mubr.f32.mxu0 %v6079
        %6316 = vmatmul.mubr.f32.gmra.mrb[0].mxu0 %v6078
        %v6317 = vpop.f32.mrb[0].mxu0
        %v6318 = vadd.f32 0.0, %v6317
        %v6319 = vpop.f32.mrb[0].mxu0
        %6320 = vmatprep.mubr.f32.mxu0 %v6082
        %6321 = vmatmul.mubr.f32.gmra.mrb[0].mxu0 %v6081
        %v6322 = vpop.f32.mrb[0].mxu0
        %v6323 = vadd.f32 0.0, %v6322
        %v6324 = vpop.f32.mrb[0].mxu0
        %6325 = vmatprep.mubr.f32.mxu0 %v6085
        %6326 = vmatmul.mubr.f32.gmra.mrb[0].mxu0 %v6084
        %v6327 = vpop.f32.mrb[0].mxu0
        %v6328 = vadd.f32 0.0, %v6327
        %v6329 = vpop.f32.mrb[0].mxu0
        %6330 = vmatprep.mubr.f32.mxu0 %v6088
        %6331 = vmatmul.mubr.f32.gmra.mrb[0].mxu0 %v6087
        %v6332 = vpop.f32.mrb[0].mxu0
        %v6333 = vadd.f32 0.0, %v6332
        %v6334 = vpop.f32.mrb[0].mxu0
        %6335 = vmatprep.mubr.f32.mxu0 %v6091
        %6336 = vmatmul.mubr.f32.gmra.mrb[0].mxu0 %v6090
        %v6337 = vpop.f32.mrb[0].mxu0
        %v6338 = vadd.f32 0.0, %v6337
        %v6339 = vpop.f32.mrb[0].mxu0
        %6340 = vmatprep.mubr.f32.mxu0 %v6094
        %6341 = vmatmul.mubr.f32.gmra.mrb[0].mxu0 %v6093
        %v6342 = vpop.f32.mrb[0].mxu0
        %v6343 = vadd.f32 0.0, %v6342
        %v6344 = vpop.f32.mrb[0].mxu0
        %6345 = vmatprep.mubr.f32.mxu0 %v6097
        %6346 = vmatmul.mubr.f32.gmra.mrb[0].mxu0 %v6096
        %v6347 = vpop.f32.mrb[0].mxu0
        %v6348 = vadd.f32 0.0, %v6347
        %v6349 = vpop.f32.mrb[0].mxu0
        %6350 = vmatprep.mubr.f32.mxu0 %v6100
        %6351 = vmatmul.mubr.f32.gmra.mrb[0].mxu0 %v6099
        %v6352 = vpop.f32.mrb[0].mxu0
        %v6353 = vadd.f32 0.0, %v6352
        %v6354 = vpop.f32.mrb[0].mxu0
        %6355 = vmatprep.mubr.f32.mxu0 %v6103
        %6356 = vmatmul.mubr.f32.gmra.mrb[0].mxu0 %v6102
        %v6357 = vpop.f32.mrb[0].mxu0
        %v6358 = vadd.f32 0.0, %v6357
        %v6359 = vpop.f32.mrb[0].mxu0
        %6360 = vmatprep.mubr.f32.mxu0 %v6106
        %6361 = vmatmul.mubr.f32.gmra.mrb[0].mxu0 %v6105
        %v6362 = vpop.f32.mrb[0].mxu0
        %v6363 = vadd.f32 0.0, %v6362
        %v6364 = vpop.f32.mrb[0].mxu0
        %6365 = vmatprep.mubr.f32.mxu0 %v6109
        %6366 = vmatmul.mubr.f32.gmra.mrb[0].mxu0 %v6108
        %v6367 = vpop.f32.mrb[0].mxu0
        %v6368 = vadd.f32 0.0, %v6367
        %v6369 = vpop.f32.mrb[0].mxu0
        %6370 = vmatprep.mubr.f32.mxu0 %v6112
        %6371 = vmatmul.mubr.f32.gmra.mrb[0].mxu0 %v6111
        %v6372 = vpop.f32.mrb[0].mxu0
        %v6373 = vadd.f32 0.0, %v6372
        %v6374 = vpop.f32.mrb[0].mxu0
        %6375 = vmatprep.mubr.f32.mxu0 %v6115
        %6376 = vmatmul.mubr.f32.gmra.mrb[0].mxu0 %v6114
        %v6377 = vpop.f32.mrb[0].mxu0
        %v6378 = vadd.f32 0.0, %v6377
        %v6379 = vpop.f32.mrb[0].mxu0
        %6380 = vmatprep.mubr.f32.mxu0 %v6118
        %6381 = vmatmul.mubr.f32.gmra.mrb[0].mxu0 %v6117
        %v6382 = vpop.f32.mrb[0].mxu0
        %v6383 = vadd.f32 0.0, %v6382
        %v6384 = vpop.f32.mrb[0].mxu0
        %6385 = vmatprep.mubr.f32.mxu0 %v6121
        %6386 = vmatmul.mubr.f32.gmra.mrb[0].mxu0 %v6120
        %v6387 = vpop.f32.mrb[0].mxu0
        %v6388 = vadd.f32 0.0, %v6387
        %v6389 = vpop.f32.mrb[0].mxu0
        %6390 = vmatprep.mubr.f32.mxu0 %v6124
        %6391 = vmatmul.mubr.f32.gmra.mrb[0].mxu0 %v6123
        %v6392 = vpop.f32.mrb[0].mxu0
        %v6393 = vadd.f32 0.0, %v6392
        %v6394 = vpop.f32.mrb[0].mxu0
        %6395 = vmatprep.mubr.f32.mxu0 %v6127
        %6396 = vmatmul.mubr.f32.gmra.mrb[0].mxu0 %v6126
        %v6397 = vpop.f32.mrb[0].mxu0
        %v6398 = vadd.f32 0.0, %v6397
        %v6399 = vpop.f32.mrb[0].mxu0
        %6400 = vmatprep.mubr.f32.mxu0 %v6130
        %6401 = vmatmul.mubr.f32.gmra.mrb[0].mxu0 %v6129
        %v6402 = vpop.f32.mrb[0].mxu0
        %v6403 = vadd.f32 0.0, %v6402
        %v6404 = vpop.f32.mrb[0].mxu0
        %6405 = vdwg.mxu0
        %6406 = vmatprep.subr.mxu0 0.0
        %6407 = vmatpush1.msra.mxu0 %v6165
        %6408 = vmatprep.subr.mxu0 0.0
        %6409 = vmatpush1.msra.mxu0 %v6166
        %6410 = vmatprep.subr.mxu0 0.0
        %6411 = vmatpush1.msra.mxu0 %v6167
        %6412 = vmatprep.subr.mxu0 0.0
        %6413 = vmatpush1.msra.mxu0 %v6168
        %6414 = vmatprep.subr.mxu0 0.0
        %6415 = vmatpush1.msra.mxu0 %v6169
        %6416 = vmatprep.subr.mxu0 0.0
        %6417 = vmatpush1.msra.mxu0 %v6170
        %6418 = vmatprep.subr.mxu0 0.0
        %6419 = vmatpush1.msra.mxu0 %v6171
        %6420 = vmatprep.subr.mxu0 0.0
        %6421 = vmatpush1.msra.mxu0 %v6172
        %6422 = vmatprep.subr.mxu0 0.0
        %6423 = vmatpush1.msra.mxu0 %v6173
        %6424 = vmatprep.subr.mxu0 0.0
        %6425 = vmatpush1.msra.mxu0 %v6174
        %6426 = vmatprep.subr.mxu0 0.0
        %6427 = vmatpush1.msra.mxu0 %v6175
        %6428 = vmatprep.subr.mxu0 0.0
        %6429 = vmatpush1.msra.mxu0 %v6176
        %6430 = vmatprep.subr.mxu0 0.0
        %6431 = vmatpush1.msra.mxu0 %v6177
        %6432 = vmatprep.subr.mxu0 0.0
        %6433 = vmatpush1.msra.mxu0 %v6178
        %6434 = vmatprep.subr.mxu0 0.0
        %6435 = vmatpush1.msra.mxu0 %v6179
        %6436 = vmatprep.subr.mxu0 0.0
        %6437 = vmatpush1.msra.mxu0 %v6180
        %6438 = vmatprep.subr.mxu0 0.0
        %6439 = vmatpush1.msra.mxu0 0.0
        %6440 = vmatprep.subr.mxu0 0.0
        %6441 = vmatpush1.msra.mxu0 0.0
        %6442 = vmatprep.subr.mxu0 0.0
        %6443 = vmatpush1.msra.mxu0 0.0
        %6444 = vmatprep.subr.mxu0 0.0
        %6445 = vmatpush1.msra.mxu0 0.0
        %6446 = vmatprep.subr.mxu0 0.0
        %6447 = vmatpush1.msra.mxu0 0.0
        %6448 = vmatprep.subr.mxu0 0.0
        %6449 = vmatpush1.msra.mxu0 0.0
        %6450 = vmatprep.subr.mxu0 0.0
        %6451 = vmatpush1.msra.mxu0 0.0
        %6452 = vmatprep.subr.mxu0 0.0
        %6453 = vmatpush1.msra.mxu0 0.0
        %6454 = vmatprep.subr.mxu0 0.0
        %6455 = vmatpush1.msra.mxu0 0.0
        %6456 = vmatprep.subr.mxu0 0.0
        %6457 = vmatpush1.msra.mxu0 0.0
        %6458 = vmatprep.subr.mxu0 0.0
        %6459 = vmatpush1.msra.mxu0 0.0
        %6460 = vmatprep.subr.mxu0 0.0
        %6461 = vmatpush1.msra.mxu0 0.0
        %6462 = vmatprep.subr.mxu0 0.0
        %6463 = vmatpush1.msra.mxu0 0.0
        %6464 = vmatprep.subr.mxu0 0.0
        %6465 = vmatpush1.msra.mxu0 0.0
        %6466 = vmatprep.subr.mxu0 0.0
        %6467 = vmatpush1.msra.mxu0 0.0
        %6468 = vmatprep.subr.mxu0 0.0
        %6469 = vmatpush1.msra.mxu0 0.0
        %6470 = vmatprep.mubr.f32.mxu0 0.0
        %6471 = vmatmul.mubr.f32.gmra.mrb[0].mxu0 %v6038
        %v6472 = vpop.f32.mrb[0].mxu0
        %v6473 = vadd.f32 %v6248, %v6472
        %v6474 = vpop.f32.mrb[0].mxu0
        %6475 = vmatprep.mubr.f32.mxu0 0.0
        %6476 = vmatmul.mubr.f32.gmra.mrb[0].mxu0 %v6041
        %v6477 = vpop.f32.mrb[0].mxu0
        %v6478 = vadd.f32 %v6253, %v6477
        %v6479 = vpop.f32.mrb[0].mxu0
        %6480 = vmatprep.mubr.f32.mxu0 0.0
        %6481 = vmatmul.mubr.f32.gmra.mrb[0].mxu0 %v6044
        %v6482 = vpop.f32.mrb[0].mxu0
        %v6483 = vadd.f32 %v6258, %v6482
        %v6484 = vpop.f32.mrb[0].mxu0
        %6485 = vmatprep.mubr.f32.mxu0 0.0
        %6486 = vmatmul.mubr.f32.gmra.mrb[0].mxu0 %v6047
        %v6487 = vpop.f32.mrb[0].mxu0
        %v6488 = vadd.f32 %v6263, %v6487
        %v6489 = vpop.f32.mrb[0].mxu0
        %6490 = vmatprep.mubr.f32.mxu0 0.0
        %6491 = vmatmul.mubr.f32.gmra.mrb[0].mxu0 %v6050
        %v6492 = vpop.f32.mrb[0].mxu0
        %v6493 = vadd.f32 %v6268, %v6492
        %v6494 = vpop.f32.mrb[0].mxu0
        %6495 = vmatprep.mubr.f32.mxu0 0.0
        %6496 = vmatmul.mubr.f32.gmra.mrb[0].mxu0 %v6053
        %v6497 = vpop.f32.mrb[0].mxu0
        %v6498 = vadd.f32 %v6273, %v6497
        %v6499 = vpop.f32.mrb[0].mxu0
        %6500 = vmatprep.mubr.f32.mxu0 0.0
        %6501 = vmatmul.mubr.f32.gmra.mrb[0].mxu0 %v6056
        %v6502 = vpop.f32.mrb[0].mxu0
        %v6503 = vadd.f32 %v6278, %v6502
        %v6504 = vpop.f32.mrb[0].mxu0
        %6505 = vmatprep.mubr.f32.mxu0 0.0
        %6506 = vmatmul.mubr.f32.gmra.mrb[0].mxu0 %v6059
        %v6507 = vpop.f32.mrb[0].mxu0
        %v6508 = vadd.f32 %v6283, %v6507
        %v6509 = vpop.f32.mrb[0].mxu0
        %6510 = vmatprep.mubr.f32.mxu0 0.0
        %6511 = vmatmul.mubr.f32.gmra.mrb[0].mxu0 %v6062
        %v6512 = vpop.f32.mrb[0].mxu0
        %v6513 = vadd.f32 %v6288, %v6512
        %v6514 = vpop.f32.mrb[0].mxu0
        %6515 = vmatprep.mubr.f32.mxu0 0.0
        %6516 = vmatmul.mubr.f32.gmra.mrb[0].mxu0 %v6065
        %v6517 = vpop.f32.mrb[0].mxu0
        %v6518 = vadd.f32 %v6293, %v6517
        %v6519 = vpop.f32.mrb[0].mxu0
        %6520 = vmatprep.mubr.f32.mxu0 0.0
        %6521 = vmatmul.mubr.f32.gmra.mrb[0].mxu0 %v6068
        %v6522 = vpop.f32.mrb[0].mxu0
        %v6523 = vadd.f32 %v6298, %v6522
        %v6524 = vpop.f32.mrb[0].mxu0
        %6525 = vmatprep.mubr.f32.mxu0 0.0
        %6526 = vmatmul.mubr.f32.gmra.mrb[0].mxu0 %v6071
        %v6527 = vpop.f32.mrb[0].mxu0
        %v6528 = vadd.f32 %v6303, %v6527
        %v6529 = vpop.f32.mrb[0].mxu0
        %6530 = vmatprep.mubr.f32.mxu0 0.0
        %6531 = vmatmul.mubr.f32.gmra.mrb[0].mxu0 %v6074
        %v6532 = vpop.f32.mrb[0].mxu0
        %v6533 = vadd.f32 %v6308, %v6532
        %v6534 = vpop.f32.mrb[0].mxu0
        %6535 = vmatprep.mubr.f32.mxu0 0.0
        %6536 = vmatmul.mubr.f32.gmra.mrb[0].mxu0 %v6077
        %v6537 = vpop.f32.mrb[0].mxu0
        %v6538 = vadd.f32 %v6313, %v6537
        %v6539 = vpop.f32.mrb[0].mxu0
        %6540 = vmatprep.mubr.f32.mxu0 0.0
        %6541 = vmatmul.mubr.f32.gmra.mrb[0].mxu0 %v6080
        %v6542 = vpop.f32.mrb[0].mxu0
        %v6543 = vadd.f32 %v6318, %v6542
        %v6544 = vpop.f32.mrb[0].mxu0
        %6545 = vmatprep.mubr.f32.mxu0 0.0
        %6546 = vmatmul.mubr.f32.gmra.mrb[0].mxu0 %v6083
        %v6547 = vpop.f32.mrb[0].mxu0
        %v6548 = vadd.f32 %v6323, %v6547
        %v6549 = vpop.f32.mrb[0].mxu0
        %6550 = vmatprep.mubr.f32.mxu0 0.0
        %6551 = vmatmul.mubr.f32.gmra.mrb[0].mxu0 %v6086
        %v6552 = vpop.f32.mrb[0].mxu0
        %v6553 = vadd.f32 %v6328, %v6552
        %v6554 = vpop.f32.mrb[0].mxu0
        %6555 = vmatprep.mubr.f32.mxu0 0.0
        %6556 = vmatmul.mubr.f32.gmra.mrb[0].mxu0 %v6089
        %v6557 = vpop.f32.mrb[0].mxu0
        %v6558 = vadd.f32 %v6333, %v6557
        %v6559 = vpop.f32.mrb[0].mxu0
        %6560 = vmatprep.mubr.f32.mxu0 0.0
        %6561 = vmatmul.mubr.f32.gmra.mrb[0].mxu0 %v6092
        %v6562 = vpop.f32.mrb[0].mxu0
        %v6563 = vadd.f32 %v6338, %v6562
        %v6564 = vpop.f32.mrb[0].mxu0
        %6565 = vmatprep.mubr.f32.mxu0 0.0
        %6566 = vmatmul.mubr.f32.gmra.mrb[0].mxu0 %v6095
        %v6567 = vpop.f32.mrb[0].mxu0
        %v6568 = vadd.f32 %v6343, %v6567
        %v6569 = vpop.f32.mrb[0].mxu0
        %6570 = vmatprep.mubr.f32.mxu0 0.0
        %6571 = vmatmul.mubr.f32.gmra.mrb[0].mxu0 %v6098
        %v6572 = vpop.f32.mrb[0].mxu0
        %v6573 = vadd.f32 %v6348, %v6572
        %v6574 = vpop.f32.mrb[0].mxu0
        %6575 = vmatprep.mubr.f32.mxu0 0.0
        %6576 = vmatmul.mubr.f32.gmra.mrb[0].mxu0 %v6101
        %v6577 = vpop.f32.mrb[0].mxu0
        %v6578 = vadd.f32 %v6353, %v6577
        %v6579 = vpop.f32.mrb[0].mxu0
        %6580 = vmatprep.mubr.f32.mxu0 0.0
        %6581 = vmatmul.mubr.f32.gmra.mrb[0].mxu0 %v6104
        %v6582 = vpop.f32.mrb[0].mxu0
        %v6583 = vadd.f32 %v6358, %v6582
        %v6584 = vpop.f32.mrb[0].mxu0
        %6585 = vmatprep.mubr.f32.mxu0 0.0
        %6586 = vmatmul.mubr.f32.gmra.mrb[0].mxu0 %v6107
        %v6587 = vpop.f32.mrb[0].mxu0
        %v6588 = vadd.f32 %v6363, %v6587
        %v6589 = vpop.f32.mrb[0].mxu0
        %6590 = vmatprep.mubr.f32.mxu0 0.0
        %6591 = vmatmul.mubr.f32.gmra.mrb[0].mxu0 %v6110
        %v6592 = vpop.f32.mrb[0].mxu0
        %v6593 = vadd.f32 %v6368, %v6592
        %v6594 = vpop.f32.mrb[0].mxu0
        %6595 = vmatprep.mubr.f32.mxu0 0.0
        %6596 = vmatmul.mubr.f32.gmra.mrb[0].mxu0 %v6113
        %v6597 = vpop.f32.mrb[0].mxu0
        %v6598 = vadd.f32 %v6373, %v6597
        %v6599 = vpop.f32.mrb[0].mxu0
        %6600 = vmatprep.mubr.f32.mxu0 0.0
        %6601 = vmatmul.mubr.f32.gmra.mrb[0].mxu0 %v6116
        %v6602 = vpop.f32.mrb[0].mxu0
        %v6603 = vadd.f32 %v6378, %v6602
        %v6604 = vpop.f32.mrb[0].mxu0
        %6605 = vmatprep.mubr.f32.mxu0 0.0
        %6606 = vmatmul.mubr.f32.gmra.mrb[0].mxu0 %v6119
        %v6607 = vpop.f32.mrb[0].mxu0
        %v6608 = vadd.f32 %v6383, %v6607
        %v6609 = vpop.f32.mrb[0].mxu0
        %6610 = vmatprep.mubr.f32.mxu0 0.0
        %6611 = vmatmul.mubr.f32.gmra.mrb[0].mxu0 %v6122
        %v6612 = vpop.f32.mrb[0].mxu0
        %v6613 = vadd.f32 %v6388, %v6612
        %v6614 = vpop.f32.mrb[0].mxu0
        %6615 = vmatprep.mubr.f32.mxu0 0.0
        %6616 = vmatmul.mubr.f32.gmra.mrb[0].mxu0 %v6125
        %v6617 = vpop.f32.mrb[0].mxu0
        %v6618 = vadd.f32 %v6393, %v6617
        %v6619 = vpop.f32.mrb[0].mxu0
        %6620 = vmatprep.mubr.f32.mxu0 0.0
        %6621 = vmatmul.mubr.f32.gmra.mrb[0].mxu0 %v6128
        %v6622 = vpop.f32.mrb[0].mxu0
        %v6623 = vadd.f32 %v6398, %v6622
        %v6624 = vpop.f32.mrb[0].mxu0
        %6625 = vmatprep.mubr.f32.mxu0 0.0
        %6626 = vmatmul.mubr.f32.gmra.mrb[0].mxu0 %v6131
        %v6627 = vpop.f32.mrb[0].mxu0
        %v6628 = vadd.f32 %v6403, %v6627
        %v6629 = vpop.f32.mrb[0].mxu0
        %6630 = vdwg.mxu0
        %v6631 = vadd.f32 %v6004, %v6473
        %v6632 = vadd.f32 %v6005, %v6478
        %v6633 = vadd.f32 %v6006, %v6483
        %v6634 = vadd.f32 %v6007, %v6488
        %v6635 = vadd.f32 %v6008, %v6493
        %v6636 = vadd.f32 %v6009, %v6498
        %v6637 = vadd.f32 %v6010, %v6503
        %v6638 = vadd.f32 %v6011, %v6508
        %v6639 = vadd.f32 %v6012, %v6513
        %v6640 = vadd.f32 %v6013, %v6518
        %v6641 = vadd.f32 %v6014, %v6523
        %v6642 = vadd.f32 %v6015, %v6528
        %v6643 = vadd.f32 %v6016, %v6533
        %v6644 = vadd.f32 %v6017, %v6538
        %v6645 = vadd.f32 %v6018, %v6543
        %v6646 = vadd.f32 %v6019, %v6548
        %v6647 = vadd.f32 %v6020, %v6553
        %v6648 = vadd.f32 %v6021, %v6558
        %v6649 = vadd.f32 %v6022, %v6563
        %v6650 = vadd.f32 %v6023, %v6568
        %v6651 = vadd.f32 %v6024, %v6573
        %v6652 = vadd.f32 %v6025, %v6578
        %v6653 = vadd.f32 %v6026, %v6583
        %v6654 = vadd.f32 %v6027, %v6588
        %v6655 = vadd.f32 %v6028, %v6593
        %v6656 = vadd.f32 %v6029, %v6598
        %v6657 = vadd.f32 %v6030, %v6603
        %v6658 = vadd.f32 %v6031, %v6608
        %v6659 = vadd.f32 %v6032, %v6613
        %v6660 = vadd.f32 %v6033, %v6618
        %v6661 = vadd.f32 %v6034, %v6623
        %v6662 = vadd.f32 %v6035, %v6628
        %v6663 = vld [vmem:[%s2152] sm:$0xff]
        %v6664 = vld [vmem:[%s2152 + $0x8] sm:$0xff]
        %v6665 = vld [vmem:[%s2152 + $0x10] sm:$0xff]
        %v6666 = vld [vmem:[%s2152 + $0x18] sm:$0xff]
        %v6667 = vld [vmem:[%s2152 + $0x20] sm:$0xff]
        %v6668 = vld [vmem:[%s2152 + $0x28] sm:$0xff]
        %v6669 = vld [vmem:[%s2152 + $0x30] sm:$0xff]
        %v6670 = vld [vmem:[%s2152 + $0x38] sm:$0xff]
        %v6671 = vld [vmem:[%s2152 + $0x40] sm:$0xff]
        %v6672 = vld [vmem:[%s2152 + $0x48] sm:$0xff]
        %v6673 = vld [vmem:[%s2152 + $0x50] sm:$0xff]
        %v6674 = vld [vmem:[%s2152 + $0x58] sm:$0xff]
        %v6675 = vld [vmem:[%s2152 + $0x60] sm:$0xff]
        %v6676 = vld [vmem:[%s2152 + $0x68] sm:$0xff]
        %v6677 = vld [vmem:[%s2152 + $0x70] sm:$0xff]
        %v6678 = vld [vmem:[%s2152 + $0x78] sm:$0xff]
        %v6679 = vld [vmem:[%s2152 + $0x80] sm:$0xff]
        %v6680 = vld [vmem:[%s2152 + $0x88] sm:$0xff]
        %v6681 = vld [vmem:[%s2152 + $0x90] sm:$0xff]
        %v6682 = vld [vmem:[%s2152 + $0x98] sm:$0xff]
        %v6683 = vld [vmem:[%s2152 + $0xa0] sm:$0xff]
        %v6684 = vld [vmem:[%s2152 + $0xa8] sm:$0xff]
        %v6685 = vld [vmem:[%s2152 + $0xb0] sm:$0xff]
        %v6686 = vld [vmem:[%s2152 + $0xb8] sm:$0xff]
        %v6687 = vld [vmem:[%s2152 + $0xc0] sm:$0xff]
        %v6688 = vld [vmem:[%s2152 + $0xc8] sm:$0xff]
        %v6689 = vld [vmem:[%s2152 + $0xd0] sm:$0xff]
        %v6690 = vld [vmem:[%s2152 + $0xd8] sm:$0xff]
        %v6691 = vld [vmem:[%s2152 + $0xe0] sm:$0xff]
        %v6692 = vld [vmem:[%s2152 + $0xe8] sm:$0xff]
        %v6693 = vld [vmem:[%s2152 + $0xf0] sm:$0xff]
        %v6694 = vld [vmem:[%s2152 + $0xf8] sm:$0xff]
        %v6695 = vld [vmem:[%s2152 + $0x100] sm:$0xff]
        %v6696 = vld [vmem:[%s2152 + $0x108] sm:$0xff]
        %v6697 = vld [vmem:[%s2152 + $0x110] sm:$0xff]
        %v6698 = vld [vmem:[%s2152 + $0x118] sm:$0xff]
        %v6699 = vld [vmem:[%s2152 + $0x120] sm:$0xff]
        %v6700 = vld [vmem:[%s2152 + $0x128] sm:$0xff]
        %v6701 = vld [vmem:[%s2152 + $0x130] sm:$0xff]
        %v6702 = vld [vmem:[%s2152 + $0x138] sm:$0xff]
        %v6703 = vld [vmem:[%s2152 + $0x140] sm:$0xff]
        %v6704 = vld [vmem:[%s2152 + $0x148] sm:$0xff]
        %v6705 = vld [vmem:[%s2152 + $0x150] sm:$0xff]
        %v6706 = vld [vmem:[%s2152 + $0x158] sm:$0xff]
        %v6707 = vld [vmem:[%s2152 + $0x160] sm:$0xff]
        %v6708 = vld [vmem:[%s2152 + $0x168] sm:$0xff]
        %v6709 = vld [vmem:[%s2152 + $0x170] sm:$0xff]
        %v6710 = vld [vmem:[%s2152 + $0x178] sm:$0xff]
        %v6711 = vld [vmem:[%s2152 + $0x180] sm:$0xff]
        %v6712 = vld [vmem:[%s2152 + $0x188] sm:$0xff]
        %v6713 = vld [vmem:[%s2152 + $0x190] sm:$0xff]
        %v6714 = vld [vmem:[%s2152 + $0x198] sm:$0xff]
        %v6715 = vld [vmem:[%s2152 + $0x1a0] sm:$0xff]
        %v6716 = vld [vmem:[%s2152 + $0x1a8] sm:$0xff]
        %v6717 = vld [vmem:[%s2152 + $0x1b0] sm:$0xff]
        %v6718 = vld [vmem:[%s2152 + $0x1b8] sm:$0xff]
        %v6719 = vld [vmem:[%s2152 + $0x1c0] sm:$0xff]
        %v6720 = vld [vmem:[%s2152 + $0x1c8] sm:$0xff]
        %v6721 = vld [vmem:[%s2152 + $0x1d0] sm:$0xff]
        %v6722 = vld [vmem:[%s2152 + $0x1d8] sm:$0xff]
        %v6723 = vld [vmem:[%s2152 + $0x1e0] sm:$0xff]
        %v6724 = vld [vmem:[%s2152 + $0x1e8] sm:$0xff]
        %v6725 = vld [vmem:[%s2152 + $0x1f0] sm:$0xff]
        %v6726 = vld [vmem:[%s2152 + $0x1f8] sm:$0xff]
        %v6727 = vld [vmem:[%s2152 + $0x200] sm:$0xff]
        %v6728 = vld [vmem:[%s2152 + $0x208] sm:$0xff]
        %v6729 = vld [vmem:[%s2152 + $0x210] sm:$0xff]
        %v6730 = vld [vmem:[%s2152 + $0x218] sm:$0xff]
        %v6731 = vld [vmem:[%s2152 + $0x220] sm:$0xff]
        %v6732 = vld [vmem:[%s2152 + $0x228] sm:$0xff]
        %v6733 = vld [vmem:[%s2152 + $0x230] sm:$0xff]
        %v6734 = vld [vmem:[%s2152 + $0x238] sm:$0xff]
        %v6735 = vld [vmem:[%s2152 + $0x240] sm:$0xff]
        %v6736 = vld [vmem:[%s2152 + $0x248] sm:$0xff]
        %v6737 = vld [vmem:[%s2152 + $0x250] sm:$0xff]
        %v6738 = vld [vmem:[%s2152 + $0x258] sm:$0xff]
        %v6739 = vld [vmem:[%s2152 + $0x260] sm:$0xff]
        %v6740 = vld [vmem:[%s2152 + $0x268] sm:$0xff]
        %v6741 = vld [vmem:[%s2152 + $0x270] sm:$0xff]
        %v6742 = vld [vmem:[%s2152 + $0x278] sm:$0xff]
        %v6743 = vld [vmem:[%s2152 + $0x280] sm:$0xff]
        %v6744 = vld [vmem:[%s2152 + $0x288] sm:$0xff]
        %v6745 = vld [vmem:[%s2152 + $0x290] sm:$0xff]
        %v6746 = vld [vmem:[%s2152 + $0x298] sm:$0xff]
        %v6747 = vld [vmem:[%s2152 + $0x2a0] sm:$0xff]
        %v6748 = vld [vmem:[%s2152 + $0x2a8] sm:$0xff]
        %v6749 = vld [vmem:[%s2152 + $0x2b0] sm:$0xff]
        %v6750 = vld [vmem:[%s2152 + $0x2b8] sm:$0xff]
        %v6751 = vld [vmem:[%s2152 + $0x2c0] sm:$0xff]
        %v6752 = vld [vmem:[%s2152 + $0x2c8] sm:$0xff]
        %v6753 = vld [vmem:[%s2152 + $0x2d0] sm:$0xff]
        %v6754 = vld [vmem:[%s2152 + $0x2d8] sm:$0xff]
        %v6755 = vld [vmem:[%s2152 + $0x2e0] sm:$0xff]
        %v6756 = vld [vmem:[%s2152 + $0x2e8] sm:$0xff]
        %v6757 = vld [vmem:[%s2152 + $0x2f0] sm:$0xff]
        %v6758 = vld [vmem:[%s2152 + $0x2f8] sm:$0xff]
        %s6759 = scalar_lea.vmem [#allocation11], 768
        %v6760 = vld [vmem:[%s6759] sm:$0xff]
        %v6761 = vld [vmem:[%s6759 + $0x8] sm:$0xff]
        %v6762 = vld [vmem:[%s6759 + $0x10] sm:$0xff]
        %v6763 = vld [vmem:[%s6759 + $0x18] sm:$0xff]
        %v6764 = vld [vmem:[%s6759 + $0x20] sm:$0xff]
        %v6765 = vld [vmem:[%s6759 + $0x28] sm:$0xff]
        %v6766 = vld [vmem:[%s6759 + $0x30] sm:$0xff]
        %v6767 = vld [vmem:[%s6759 + $0x38] sm:$0xff]
        %v6768 = vld [vmem:[%s6759 + $0x40] sm:$0xff]
        %v6769 = vld [vmem:[%s6759 + $0x48] sm:$0xff]
        %v6770 = vld [vmem:[%s6759 + $0x50] sm:$0xff]
        %v6771 = vld [vmem:[%s6759 + $0x58] sm:$0xff]
        %v6772 = vld [vmem:[%s6759 + $0x60] sm:$0xff]
        %v6773 = vld [vmem:[%s6759 + $0x68] sm:$0xff]
        %v6774 = vld [vmem:[%s6759 + $0x70] sm:$0xff]
        %v6775 = vld [vmem:[%s6759 + $0x78] sm:$0xff]
        %v6776 = vld [vmem:[%s6759 + $0x80] sm:$0xff]
        %v6777 = vld [vmem:[%s6759 + $0x88] sm:$0xff]
        %v6778 = vld [vmem:[%s6759 + $0x90] sm:$0xff]
        %v6779 = vld [vmem:[%s6759 + $0x98] sm:$0xff]
        %v6780 = vld [vmem:[%s6759 + $0xa0] sm:$0xff]
        %v6781 = vld [vmem:[%s6759 + $0xa8] sm:$0xff]
        %v6782 = vld [vmem:[%s6759 + $0xb0] sm:$0xff]
        %v6783 = vld [vmem:[%s6759 + $0xb8] sm:$0xff]
        %v6784 = vld [vmem:[%s6759 + $0xc0] sm:$0xff]
        %v6785 = vld [vmem:[%s6759 + $0xc8] sm:$0xff]
        %v6786 = vld [vmem:[%s6759 + $0xd0] sm:$0xff]
        %v6787 = vld [vmem:[%s6759 + $0xd8] sm:$0xff]
        %v6788 = vld [vmem:[%s6759 + $0xe0] sm:$0xff]
        %v6789 = vld [vmem:[%s6759 + $0xe8] sm:$0xff]
        %v6790 = vld [vmem:[%s6759 + $0xf0] sm:$0xff]
        %v6791 = vld [vmem:[%s6759 + $0xf8] sm:$0xff]
        %v6792 = vld [vmem:[%s6759 + $0x100] sm:$0xff]
        %v6793 = vld [vmem:[%s6759 + $0x108] sm:$0xff]
        %v6794 = vld [vmem:[%s6759 + $0x110] sm:$0xff]
        %v6795 = vld [vmem:[%s6759 + $0x118] sm:$0xff]
        %v6796 = vld [vmem:[%s6759 + $0x120] sm:$0xff]
        %v6797 = vld [vmem:[%s6759 + $0x128] sm:$0xff]
        %v6798 = vld [vmem:[%s6759 + $0x130] sm:$0xff]
        %v6799 = vld [vmem:[%s6759 + $0x138] sm:$0xff]
        %v6800 = vld [vmem:[%s6759 + $0x140] sm:$0xff]
        %v6801 = vld [vmem:[%s6759 + $0x148] sm:$0xff]
        %v6802 = vld [vmem:[%s6759 + $0x150] sm:$0xff]
        %v6803 = vld [vmem:[%s6759 + $0x158] sm:$0xff]
        %v6804 = vld [vmem:[%s6759 + $0x160] sm:$0xff]
        %v6805 = vld [vmem:[%s6759 + $0x168] sm:$0xff]
        %v6806 = vld [vmem:[%s6759 + $0x170] sm:$0xff]
        %v6807 = vld [vmem:[%s6759 + $0x178] sm:$0xff]
        %6808 = vmatprep.subr.mxu0 0.0
        %6809 = vmatpush1.msra.mxu0 %v6760
        %6810 = vmatprep.subr.mxu0 0.0
        %6811 = vmatpush1.msra.mxu0 %v6761
        %6812 = vmatprep.subr.mxu0 0.0
        %6813 = vmatpush1.msra.mxu0 %v6762
        %6814 = vmatprep.subr.mxu0 0.0
        %6815 = vmatpush1.msra.mxu0 %v6763
        %6816 = vmatprep.subr.mxu0 0.0
        %6817 = vmatpush1.msra.mxu0 %v6764
        %6818 = vmatprep.subr.mxu0 0.0
        %6819 = vmatpush1.msra.mxu0 %v6765
        %6820 = vmatprep.subr.mxu0 0.0
        %6821 = vmatpush1.msra.mxu0 %v6766
        %6822 = vmatprep.subr.mxu0 0.0
        %6823 = vmatpush1.msra.mxu0 %v6767
        %6824 = vmatprep.subr.mxu0 0.0
        %6825 = vmatpush1.msra.mxu0 %v6768
        %6826 = vmatprep.subr.mxu0 0.0
        %6827 = vmatpush1.msra.mxu0 %v6769
        %6828 = vmatprep.subr.mxu0 0.0
        %6829 = vmatpush1.msra.mxu0 %v6770
        %6830 = vmatprep.subr.mxu0 0.0
        %6831 = vmatpush1.msra.mxu0 %v6771
        %6832 = vmatprep.subr.mxu0 0.0
        %6833 = vmatpush1.msra.mxu0 %v6772
        %6834 = vmatprep.subr.mxu0 0.0
        %6835 = vmatpush1.msra.mxu0 %v6773
        %6836 = vmatprep.subr.mxu0 0.0
        %6837 = vmatpush1.msra.mxu0 %v6774
        %6838 = vmatprep.subr.mxu0 0.0
        %6839 = vmatpush1.msra.mxu0 %v6775
        %6840 = vmatprep.subr.mxu0 0.0
        %6841 = vmatpush1.msra.mxu0 %v6776
        %6842 = vmatprep.subr.mxu0 0.0
        %6843 = vmatpush1.msra.mxu0 %v6777
        %6844 = vmatprep.subr.mxu0 0.0
        %6845 = vmatpush1.msra.mxu0 %v6778
        %6846 = vmatprep.subr.mxu0 0.0
        %6847 = vmatpush1.msra.mxu0 %v6779
        %6848 = vmatprep.subr.mxu0 0.0
        %6849 = vmatpush1.msra.mxu0 %v6780
        %6850 = vmatprep.subr.mxu0 0.0
        %6851 = vmatpush1.msra.mxu0 %v6781
        %6852 = vmatprep.subr.mxu0 0.0
        %6853 = vmatpush1.msra.mxu0 %v6782
        %6854 = vmatprep.subr.mxu0 0.0
        %6855 = vmatpush1.msra.mxu0 %v6783
        %6856 = vmatprep.subr.mxu0 0.0
        %6857 = vmatpush1.msra.mxu0 %v6784
        %6858 = vmatprep.subr.mxu0 0.0
        %6859 = vmatpush1.msra.mxu0 %v6785
        %6860 = vmatprep.subr.mxu0 0.0
        %6861 = vmatpush1.msra.mxu0 %v6786
        %6862 = vmatprep.subr.mxu0 0.0
        %6863 = vmatpush1.msra.mxu0 %v6787
        %6864 = vmatprep.subr.mxu0 0.0
        %6865 = vmatpush1.msra.mxu0 %v6788
        %6866 = vmatprep.subr.mxu0 0.0
        %6867 = vmatpush1.msra.mxu0 %v6789
        %6868 = vmatprep.subr.mxu0 0.0
        %6869 = vmatpush1.msra.mxu0 %v6790
        %6870 = vmatprep.subr.mxu0 0.0
        %6871 = vmatpush1.msra.mxu0 %v6791
        %6872 = vmatprep.mubr.f32.mxu0 %v6664
        %6873 = vmatmul.mubr.f32.gmra.mrb[0].mxu0 %v6663
        %v6874 = vpop.f32.mrb[0].mxu0
        %v6875 = vadd.f32 0.0, %v6874
        %v6876 = vpop.f32.mrb[0].mxu0
        %6877 = vmatprep.mubr.f32.mxu0 %v6667
        %6878 = vmatmul.mubr.f32.gmra.mrb[0].mxu0 %v6666
        %v6879 = vpop.f32.mrb[0].mxu0
        %v6880 = vadd.f32 0.0, %v6879
        %v6881 = vpop.f32.mrb[0].mxu0
        %6882 = vmatprep.mubr.f32.mxu0 %v6670
        %6883 = vmatmul.mubr.f32.gmra.mrb[0].mxu0 %v6669
        %v6884 = vpop.f32.mrb[0].mxu0
        %v6885 = vadd.f32 0.0, %v6884
        %v6886 = vpop.f32.mrb[0].mxu0
        %6887 = vmatprep.mubr.f32.mxu0 %v6673
        %6888 = vmatmul.mubr.f32.gmra.mrb[0].mxu0 %v6672
        %v6889 = vpop.f32.mrb[0].mxu0
        %v6890 = vadd.f32 0.0, %v6889
        %v6891 = vpop.f32.mrb[0].mxu0
        %6892 = vmatprep.mubr.f32.mxu0 %v6676
        %6893 = vmatmul.mubr.f32.gmra.mrb[0].mxu0 %v6675
        %v6894 = vpop.f32.mrb[0].mxu0
        %v6895 = vadd.f32 0.0, %v6894
        %v6896 = vpop.f32.mrb[0].mxu0
        %6897 = vmatprep.mubr.f32.mxu0 %v6679
        %6898 = vmatmul.mubr.f32.gmra.mrb[0].mxu0 %v6678
        %v6899 = vpop.f32.mrb[0].mxu0
        %v6900 = vadd.f32 0.0, %v6899
        %v6901 = vpop.f32.mrb[0].mxu0
        %6902 = vmatprep.mubr.f32.mxu0 %v6682
        %6903 = vmatmul.mubr.f32.gmra.mrb[0].mxu0 %v6681
        %v6904 = vpop.f32.mrb[0].mxu0
        %v6905 = vadd.f32 0.0, %v6904
        %v6906 = vpop.f32.mrb[0].mxu0
        %6907 = vmatprep.mubr.f32.mxu0 %v6685
        %6908 = vmatmul.mubr.f32.gmra.mrb[0].mxu0 %v6684
        %v6909 = vpop.f32.mrb[0].mxu0
        %v6910 = vadd.f32 0.0, %v6909
        %v6911 = vpop.f32.mrb[0].mxu0
        %6912 = vmatprep.mubr.f32.mxu0 %v6688
        %6913 = vmatmul.mubr.f32.gmra.mrb[0].mxu0 %v6687
        %v6914 = vpop.f32.mrb[0].mxu0
        %v6915 = vadd.f32 0.0, %v6914
        %v6916 = vpop.f32.mrb[0].mxu0
        %6917 = vmatprep.mubr.f32.mxu0 %v6691
        %6918 = vmatmul.mubr.f32.gmra.mrb[0].mxu0 %v6690
        %v6919 = vpop.f32.mrb[0].mxu0
        %v6920 = vadd.f32 0.0, %v6919
        %v6921 = vpop.f32.mrb[0].mxu0
        %6922 = vmatprep.mubr.f32.mxu0 %v6694
        %6923 = vmatmul.mubr.f32.gmra.mrb[0].mxu0 %v6693
        %v6924 = vpop.f32.mrb[0].mxu0
        %v6925 = vadd.f32 0.0, %v6924
        %v6926 = vpop.f32.mrb[0].mxu0
        %6927 = vmatprep.mubr.f32.mxu0 %v6697
        %6928 = vmatmul.mubr.f32.gmra.mrb[0].mxu0 %v6696
        %v6929 = vpop.f32.mrb[0].mxu0
        %v6930 = vadd.f32 0.0, %v6929
        %v6931 = vpop.f32.mrb[0].mxu0
        %6932 = vmatprep.mubr.f32.mxu0 %v6700
        %6933 = vmatmul.mubr.f32.gmra.mrb[0].mxu0 %v6699
        %v6934 = vpop.f32.mrb[0].mxu0
        %v6935 = vadd.f32 0.0, %v6934
        %v6936 = vpop.f32.mrb[0].mxu0
        %6937 = vmatprep.mubr.f32.mxu0 %v6703
        %6938 = vmatmul.mubr.f32.gmra.mrb[0].mxu0 %v6702
        %v6939 = vpop.f32.mrb[0].mxu0
        %v6940 = vadd.f32 0.0, %v6939
        %v6941 = vpop.f32.mrb[0].mxu0
        %6942 = vmatprep.mubr.f32.mxu0 %v6706
        %6943 = vmatmul.mubr.f32.gmra.mrb[0].mxu0 %v6705
        %v6944 = vpop.f32.mrb[0].mxu0
        %v6945 = vadd.f32 0.0, %v6944
        %v6946 = vpop.f32.mrb[0].mxu0
        %6947 = vmatprep.mubr.f32.mxu0 %v6709
        %6948 = vmatmul.mubr.f32.gmra.mrb[0].mxu0 %v6708
        %v6949 = vpop.f32.mrb[0].mxu0
        %v6950 = vadd.f32 0.0, %v6949
        %v6951 = vpop.f32.mrb[0].mxu0
        %6952 = vmatprep.mubr.f32.mxu0 %v6712
        %6953 = vmatmul.mubr.f32.gmra.mrb[0].mxu0 %v6711
        %v6954 = vpop.f32.mrb[0].mxu0
        %v6955 = vadd.f32 0.0, %v6954
        %v6956 = vpop.f32.mrb[0].mxu0
        %6957 = vmatprep.mubr.f32.mxu0 %v6715
        %6958 = vmatmul.mubr.f32.gmra.mrb[0].mxu0 %v6714
        %v6959 = vpop.f32.mrb[0].mxu0
        %v6960 = vadd.f32 0.0, %v6959
        %v6961 = vpop.f32.mrb[0].mxu0
        %6962 = vmatprep.mubr.f32.mxu0 %v6718
        %6963 = vmatmul.mubr.f32.gmra.mrb[0].mxu0 %v6717
        %v6964 = vpop.f32.mrb[0].mxu0
        %v6965 = vadd.f32 0.0, %v6964
        %v6966 = vpop.f32.mrb[0].mxu0
        %6967 = vmatprep.mubr.f32.mxu0 %v6721
        %6968 = vmatmul.mubr.f32.gmra.mrb[0].mxu0 %v6720
        %v6969 = vpop.f32.mrb[0].mxu0
        %v6970 = vadd.f32 0.0, %v6969
        %v6971 = vpop.f32.mrb[0].mxu0
        %6972 = vmatprep.mubr.f32.mxu0 %v6724
        %6973 = vmatmul.mubr.f32.gmra.mrb[0].mxu0 %v6723
        %v6974 = vpop.f32.mrb[0].mxu0
        %v6975 = vadd.f32 0.0, %v6974
        %v6976 = vpop.f32.mrb[0].mxu0
        %6977 = vmatprep.mubr.f32.mxu0 %v6727
        %6978 = vmatmul.mubr.f32.gmra.mrb[0].mxu0 %v6726
        %v6979 = vpop.f32.mrb[0].mxu0
        %v6980 = vadd.f32 0.0, %v6979
        %v6981 = vpop.f32.mrb[0].mxu0
        %6982 = vmatprep.mubr.f32.mxu0 %v6730
        %6983 = vmatmul.mubr.f32.gmra.mrb[0].mxu0 %v6729
        %v6984 = vpop.f32.mrb[0].mxu0
        %v6985 = vadd.f32 0.0, %v6984
        %v6986 = vpop.f32.mrb[0].mxu0
        %6987 = vmatprep.mubr.f32.mxu0 %v6733
        %6988 = vmatmul.mubr.f32.gmra.mrb[0].mxu0 %v6732
        %v6989 = vpop.f32.mrb[0].mxu0
        %v6990 = vadd.f32 0.0, %v6989
        %v6991 = vpop.f32.mrb[0].mxu0
        %6992 = vmatprep.mubr.f32.mxu0 %v6736
        %6993 = vmatmul.mubr.f32.gmra.mrb[0].mxu0 %v6735
        %v6994 = vpop.f32.mrb[0].mxu0
        %v6995 = vadd.f32 0.0, %v6994
        %v6996 = vpop.f32.mrb[0].mxu0
        %6997 = vmatprep.mubr.f32.mxu0 %v6739
        %6998 = vmatmul.mubr.f32.gmra.mrb[0].mxu0 %v6738
        %v6999 = vpop.f32.mrb[0].mxu0
        %v7000 = vadd.f32 0.0, %v6999
        %v7001 = vpop.f32.mrb[0].mxu0
        %7002 = vmatprep.mubr.f32.mxu0 %v6742
        %7003 = vmatmul.mubr.f32.gmra.mrb[0].mxu0 %v6741
        %v7004 = vpop.f32.mrb[0].mxu0
        %v7005 = vadd.f32 0.0, %v7004
        %v7006 = vpop.f32.mrb[0].mxu0
        %7007 = vmatprep.mubr.f32.mxu0 %v6745
        %7008 = vmatmul.mubr.f32.gmra.mrb[0].mxu0 %v6744
        %v7009 = vpop.f32.mrb[0].mxu0
        %v7010 = vadd.f32 0.0, %v7009
        %v7011 = vpop.f32.mrb[0].mxu0
        %7012 = vmatprep.mubr.f32.mxu0 %v6748
        %7013 = vmatmul.mubr.f32.gmra.mrb[0].mxu0 %v6747
        %v7014 = vpop.f32.mrb[0].mxu0
        %v7015 = vadd.f32 0.0, %v7014
        %v7016 = vpop.f32.mrb[0].mxu0
        %7017 = vmatprep.mubr.f32.mxu0 %v6751
        %7018 = vmatmul.mubr.f32.gmra.mrb[0].mxu0 %v6750
        %v7019 = vpop.f32.mrb[0].mxu0
        %v7020 = vadd.f32 0.0, %v7019
        %v7021 = vpop.f32.mrb[0].mxu0
        %7022 = vmatprep.mubr.f32.mxu0 %v6754
        %7023 = vmatmul.mubr.f32.gmra.mrb[0].mxu0 %v6753
        %v7024 = vpop.f32.mrb[0].mxu0
        %v7025 = vadd.f32 0.0, %v7024
        %v7026 = vpop.f32.mrb[0].mxu0
        %7027 = vmatprep.mubr.f32.mxu0 %v6757
        %7028 = vmatmul.mubr.f32.gmra.mrb[0].mxu0 %v6756
        %v7029 = vpop.f32.mrb[0].mxu0
        %v7030 = vadd.f32 0.0, %v7029
        %v7031 = vpop.f32.mrb[0].mxu0
        %7032 = vdwg.mxu0
        %7033 = vmatprep.subr.mxu0 0.0
        %7034 = vmatpush1.msra.mxu0 %v6792
        %7035 = vmatprep.subr.mxu0 0.0
        %7036 = vmatpush1.msra.mxu0 %v6793
        %7037 = vmatprep.subr.mxu0 0.0
        %7038 = vmatpush1.msra.mxu0 %v6794
        %7039 = vmatprep.subr.mxu0 0.0
        %7040 = vmatpush1.msra.mxu0 %v6795
        %7041 = vmatprep.subr.mxu0 0.0
        %7042 = vmatpush1.msra.mxu0 %v6796
        %7043 = vmatprep.subr.mxu0 0.0
        %7044 = vmatpush1.msra.mxu0 %v6797
        %7045 = vmatprep.subr.mxu0 0.0
        %7046 = vmatpush1.msra.mxu0 %v6798
        %7047 = vmatprep.subr.mxu0 0.0
        %7048 = vmatpush1.msra.mxu0 %v6799
        %7049 = vmatprep.subr.mxu0 0.0
        %7050 = vmatpush1.msra.mxu0 %v6800
        %7051 = vmatprep.subr.mxu0 0.0
        %7052 = vmatpush1.msra.mxu0 %v6801
        %7053 = vmatprep.subr.mxu0 0.0
        %7054 = vmatpush1.msra.mxu0 %v6802
        %7055 = vmatprep.subr.mxu0 0.0
        %7056 = vmatpush1.msra.mxu0 %v6803
        %7057 = vmatprep.subr.mxu0 0.0
        %7058 = vmatpush1.msra.mxu0 %v6804
        %7059 = vmatprep.subr.mxu0 0.0
        %7060 = vmatpush1.msra.mxu0 %v6805
        %7061 = vmatprep.subr.mxu0 0.0
        %7062 = vmatpush1.msra.mxu0 %v6806
        %7063 = vmatprep.subr.mxu0 0.0
        %7064 = vmatpush1.msra.mxu0 %v6807
        %7065 = vmatprep.subr.mxu0 0.0
        %7066 = vmatpush1.msra.mxu0 0.0
        %7067 = vmatprep.subr.mxu0 0.0
        %7068 = vmatpush1.msra.mxu0 0.0
        %7069 = vmatprep.subr.mxu0 0.0
        %7070 = vmatpush1.msra.mxu0 0.0
        %7071 = vmatprep.subr.mxu0 0.0
        %7072 = vmatpush1.msra.mxu0 0.0
        %7073 = vmatprep.subr.mxu0 0.0
        %7074 = vmatpush1.msra.mxu0 0.0
        %7075 = vmatprep.subr.mxu0 0.0
        %7076 = vmatpush1.msra.mxu0 0.0
        %7077 = vmatprep.subr.mxu0 0.0
        %7078 = vmatpush1.msra.mxu0 0.0
        %7079 = vmatprep.subr.mxu0 0.0
        %7080 = vmatpush1.msra.mxu0 0.0
        %7081 = vmatprep.subr.mxu0 0.0
        %7082 = vmatpush1.msra.mxu0 0.0
        %7083 = vmatprep.subr.mxu0 0.0
        %7084 = vmatpush1.msra.mxu0 0.0
        %7085 = vmatprep.subr.mxu0 0.0
        %7086 = vmatpush1.msra.mxu0 0.0
        %7087 = vmatprep.subr.mxu0 0.0
        %7088 = vmatpush1.msra.mxu0 0.0
        %7089 = vmatprep.subr.mxu0 0.0
        %7090 = vmatpush1.msra.mxu0 0.0
        %7091 = vmatprep.subr.mxu0 0.0
        %7092 = vmatpush1.msra.mxu0 0.0
        %7093 = vmatprep.subr.mxu0 0.0
        %7094 = vmatpush1.msra.mxu0 0.0
        %7095 = vmatprep.subr.mxu0 0.0
        %7096 = vmatpush1.msra.mxu0 0.0
        %7097 = vmatprep.mubr.f32.mxu0 0.0
        %7098 = vmatmul.mubr.f32.gmra.mrb[0].mxu0 %v6665
        %v7099 = vpop.f32.mrb[0].mxu0
        %v7100 = vadd.f32 %v6875, %v7099
        %v7101 = vpop.f32.mrb[0].mxu0
        %7102 = vmatprep.mubr.f32.mxu0 0.0
        %7103 = vmatmul.mubr.f32.gmra.mrb[0].mxu0 %v6668
        %v7104 = vpop.f32.mrb[0].mxu0
        %v7105 = vadd.f32 %v6880, %v7104
        %v7106 = vpop.f32.mrb[0].mxu0
        %7107 = vmatprep.mubr.f32.mxu0 0.0
        %7108 = vmatmul.mubr.f32.gmra.mrb[0].mxu0 %v6671
        %v7109 = vpop.f32.mrb[0].mxu0
        %v7110 = vadd.f32 %v6885, %v7109
        %v7111 = vpop.f32.mrb[0].mxu0
        %7112 = vmatprep.mubr.f32.mxu0 0.0
        %7113 = vmatmul.mubr.f32.gmra.mrb[0].mxu0 %v6674
        %v7114 = vpop.f32.mrb[0].mxu0
        %v7115 = vadd.f32 %v6890, %v7114
        %v7116 = vpop.f32.mrb[0].mxu0
        %7117 = vmatprep.mubr.f32.mxu0 0.0
        %7118 = vmatmul.mubr.f32.gmra.mrb[0].mxu0 %v6677
        %v7119 = vpop.f32.mrb[0].mxu0
        %v7120 = vadd.f32 %v6895, %v7119
        %v7121 = vpop.f32.mrb[0].mxu0
        %7122 = vmatprep.mubr.f32.mxu0 0.0
        %7123 = vmatmul.mubr.f32.gmra.mrb[0].mxu0 %v6680
        %v7124 = vpop.f32.mrb[0].mxu0
        %v7125 = vadd.f32 %v6900, %v7124
        %v7126 = vpop.f32.mrb[0].mxu0
        %7127 = vmatprep.mubr.f32.mxu0 0.0
        %7128 = vmatmul.mubr.f32.gmra.mrb[0].mxu0 %v6683
        %v7129 = vpop.f32.mrb[0].mxu0
        %v7130 = vadd.f32 %v6905, %v7129
        %v7131 = vpop.f32.mrb[0].mxu0
        %7132 = vmatprep.mubr.f32.mxu0 0.0
        %7133 = vmatmul.mubr.f32.gmra.mrb[0].mxu0 %v6686
        %v7134 = vpop.f32.mrb[0].mxu0
        %v7135 = vadd.f32 %v6910, %v7134
        %v7136 = vpop.f32.mrb[0].mxu0
        %7137 = vmatprep.mubr.f32.mxu0 0.0
        %7138 = vmatmul.mubr.f32.gmra.mrb[0].mxu0 %v6689
        %v7139 = vpop.f32.mrb[0].mxu0
        %v7140 = vadd.f32 %v6915, %v7139
        %v7141 = vpop.f32.mrb[0].mxu0
        %7142 = vmatprep.mubr.f32.mxu0 0.0
        %7143 = vmatmul.mubr.f32.gmra.mrb[0].mxu0 %v6692
        %v7144 = vpop.f32.mrb[0].mxu0
        %v7145 = vadd.f32 %v6920, %v7144
        %v7146 = vpop.f32.mrb[0].mxu0
        %7147 = vmatprep.mubr.f32.mxu0 0.0
        %7148 = vmatmul.mubr.f32.gmra.mrb[0].mxu0 %v6695
        %v7149 = vpop.f32.mrb[0].mxu0
        %v7150 = vadd.f32 %v6925, %v7149
        %v7151 = vpop.f32.mrb[0].mxu0
        %7152 = vmatprep.mubr.f32.mxu0 0.0
        %7153 = vmatmul.mubr.f32.gmra.mrb[0].mxu0 %v6698
        %v7154 = vpop.f32.mrb[0].mxu0
        %v7155 = vadd.f32 %v6930, %v7154
        %v7156 = vpop.f32.mrb[0].mxu0
        %7157 = vmatprep.mubr.f32.mxu0 0.0
        %7158 = vmatmul.mubr.f32.gmra.mrb[0].mxu0 %v6701
        %v7159 = vpop.f32.mrb[0].mxu0
        %v7160 = vadd.f32 %v6935, %v7159
        %v7161 = vpop.f32.mrb[0].mxu0
        %7162 = vmatprep.mubr.f32.mxu0 0.0
        %7163 = vmatmul.mubr.f32.gmra.mrb[0].mxu0 %v6704
        %v7164 = vpop.f32.mrb[0].mxu0
        %v7165 = vadd.f32 %v6940, %v7164
        %v7166 = vpop.f32.mrb[0].mxu0
        %7167 = vmatprep.mubr.f32.mxu0 0.0
        %7168 = vmatmul.mubr.f32.gmra.mrb[0].mxu0 %v6707
        %v7169 = vpop.f32.mrb[0].mxu0
        %v7170 = vadd.f32 %v6945, %v7169
        %v7171 = vpop.f32.mrb[0].mxu0
        %7172 = vmatprep.mubr.f32.mxu0 0.0
        %7173 = vmatmul.mubr.f32.gmra.mrb[0].mxu0 %v6710
        %v7174 = vpop.f32.mrb[0].mxu0
        %v7175 = vadd.f32 %v6950, %v7174
        %v7176 = vpop.f32.mrb[0].mxu0
        %7177 = vmatprep.mubr.f32.mxu0 0.0
        %7178 = vmatmul.mubr.f32.gmra.mrb[0].mxu0 %v6713
        %v7179 = vpop.f32.mrb[0].mxu0
        %v7180 = vadd.f32 %v6955, %v7179
        %v7181 = vpop.f32.mrb[0].mxu0
        %7182 = vmatprep.mubr.f32.mxu0 0.0
        %7183 = vmatmul.mubr.f32.gmra.mrb[0].mxu0 %v6716
        %v7184 = vpop.f32.mrb[0].mxu0
        %v7185 = vadd.f32 %v6960, %v7184
        %v7186 = vpop.f32.mrb[0].mxu0
        %7187 = vmatprep.mubr.f32.mxu0 0.0
        %7188 = vmatmul.mubr.f32.gmra.mrb[0].mxu0 %v6719
        %v7189 = vpop.f32.mrb[0].mxu0
        %v7190 = vadd.f32 %v6965, %v7189
        %v7191 = vpop.f32.mrb[0].mxu0
        %7192 = vmatprep.mubr.f32.mxu0 0.0
        %7193 = vmatmul.mubr.f32.gmra.mrb[0].mxu0 %v6722
        %v7194 = vpop.f32.mrb[0].mxu0
        %v7195 = vadd.f32 %v6970, %v7194
        %v7196 = vpop.f32.mrb[0].mxu0
        %7197 = vmatprep.mubr.f32.mxu0 0.0
        %7198 = vmatmul.mubr.f32.gmra.mrb[0].mxu0 %v6725
        %v7199 = vpop.f32.mrb[0].mxu0
        %v7200 = vadd.f32 %v6975, %v7199
        %v7201 = vpop.f32.mrb[0].mxu0
        %7202 = vmatprep.mubr.f32.mxu0 0.0
        %7203 = vmatmul.mubr.f32.gmra.mrb[0].mxu0 %v6728
        %v7204 = vpop.f32.mrb[0].mxu0
        %v7205 = vadd.f32 %v6980, %v7204
        %v7206 = vpop.f32.mrb[0].mxu0
        %7207 = vmatprep.mubr.f32.mxu0 0.0
        %7208 = vmatmul.mubr.f32.gmra.mrb[0].mxu0 %v6731
        %v7209 = vpop.f32.mrb[0].mxu0
        %v7210 = vadd.f32 %v6985, %v7209
        %v7211 = vpop.f32.mrb[0].mxu0
        %7212 = vmatprep.mubr.f32.mxu0 0.0
        %7213 = vmatmul.mubr.f32.gmra.mrb[0].mxu0 %v6734
        %v7214 = vpop.f32.mrb[0].mxu0
        %v7215 = vadd.f32 %v6990, %v7214
        %v7216 = vpop.f32.mrb[0].mxu0
        %7217 = vmatprep.mubr.f32.mxu0 0.0
        %7218 = vmatmul.mubr.f32.gmra.mrb[0].mxu0 %v6737
        %v7219 = vpop.f32.mrb[0].mxu0
        %v7220 = vadd.f32 %v6995, %v7219
        %v7221 = vpop.f32.mrb[0].mxu0
        %7222 = vmatprep.mubr.f32.mxu0 0.0
        %7223 = vmatmul.mubr.f32.gmra.mrb[0].mxu0 %v6740
        %v7224 = vpop.f32.mrb[0].mxu0
        %v7225 = vadd.f32 %v7000, %v7224
        %v7226 = vpop.f32.mrb[0].mxu0
        %7227 = vmatprep.mubr.f32.mxu0 0.0
        %7228 = vmatmul.mubr.f32.gmra.mrb[0].mxu0 %v6743
        %v7229 = vpop.f32.mrb[0].mxu0
        %v7230 = vadd.f32 %v7005, %v7229
        %v7231 = vpop.f32.mrb[0].mxu0
        %7232 = vmatprep.mubr.f32.mxu0 0.0
        %7233 = vmatmul.mubr.f32.gmra.mrb[0].mxu0 %v6746
        %v7234 = vpop.f32.mrb[0].mxu0
        %v7235 = vadd.f32 %v7010, %v7234
        %v7236 = vpop.f32.mrb[0].mxu0
        %7237 = vmatprep.mubr.f32.mxu0 0.0
        %7238 = vmatmul.mubr.f32.gmra.mrb[0].mxu0 %v6749
        %v7239 = vpop.f32.mrb[0].mxu0
        %v7240 = vadd.f32 %v7015, %v7239
        %v7241 = vpop.f32.mrb[0].mxu0
        %7242 = vmatprep.mubr.f32.mxu0 0.0
        %7243 = vmatmul.mubr.f32.gmra.mrb[0].mxu0 %v6752
        %v7244 = vpop.f32.mrb[0].mxu0
        %v7245 = vadd.f32 %v7020, %v7244
        %v7246 = vpop.f32.mrb[0].mxu0
        %7247 = vmatprep.mubr.f32.mxu0 0.0
        %7248 = vmatmul.mubr.f32.gmra.mrb[0].mxu0 %v6755
        %v7249 = vpop.f32.mrb[0].mxu0
        %v7250 = vadd.f32 %v7025, %v7249
        %v7251 = vpop.f32.mrb[0].mxu0
        %7252 = vmatprep.mubr.f32.mxu0 0.0
        %7253 = vmatmul.mubr.f32.gmra.mrb[0].mxu0 %v6758
        %v7254 = vpop.f32.mrb[0].mxu0
        %v7255 = vadd.f32 %v7030, %v7254
        %v7256 = vpop.f32.mrb[0].mxu0
        %7257 = vdwg.mxu0
        %v7258 = vadd.f32 %v6631, %v7100
        %v7259 = vadd.f32 %v6632, %v7105
        %v7260 = vadd.f32 %v6633, %v7110
        %v7261 = vadd.f32 %v6634, %v7115
        %v7262 = vadd.f32 %v6635, %v7120
        %v7263 = vadd.f32 %v6636, %v7125
        %v7264 = vadd.f32 %v6637, %v7130
        %v7265 = vadd.f32 %v6638, %v7135
        %v7266 = vadd.f32 %v6639, %v7140
        %v7267 = vadd.f32 %v6640, %v7145
        %v7268 = vadd.f32 %v6641, %v7150
        %v7269 = vadd.f32 %v6642, %v7155
        %v7270 = vadd.f32 %v6643, %v7160
        %v7271 = vadd.f32 %v6644, %v7165
        %v7272 = vadd.f32 %v6645, %v7170
        %v7273 = vadd.f32 %v6646, %v7175
        %v7274 = vadd.f32 %v6647, %v7180
        %v7275 = vadd.f32 %v6648, %v7185
        %v7276 = vadd.f32 %v6649, %v7190
        %v7277 = vadd.f32 %v6650, %v7195
        %v7278 = vadd.f32 %v6651, %v7200
        %v7279 = vadd.f32 %v6652, %v7205
        %v7280 = vadd.f32 %v6653, %v7210
        %v7281 = vadd.f32 %v6654, %v7215
        %v7282 = vadd.f32 %v6655, %v7220
        %v7283 = vadd.f32 %v6656, %v7225
        %v7284 = vadd.f32 %v6657, %v7230
        %v7285 = vadd.f32 %v6658, %v7235
        %v7286 = vadd.f32 %v6659, %v7240
        %v7287 = vadd.f32 %v6660, %v7245
        %v7288 = vadd.f32 %v6661, %v7250
        %v7289 = vadd.f32 %v6662, %v7255
        %v7290 = vmax.f32 %v7258, 0.0
        %v7291 = vmax.f32 %v7259, 0.0
        %v7292 = vmax.f32 %v7260, 0.0
        %v7293 = vmax.f32 %v7261, 0.0
        %v7294 = vmax.f32 %v7262, 0.0
        %v7295 = vmax.f32 %v7263, 0.0
        %v7296 = vmax.f32 %v7264, 0.0
        %v7297 = vmax.f32 %v7265, 0.0
        %v7298 = vmax.f32 %v7266, 0.0
        %v7299 = vmax.f32 %v7267, 0.0
        %v7300 = vmax.f32 %v7268, 0.0
        %v7301 = vmax.f32 %v7269, 0.0
        %v7302 = vmax.f32 %v7270, 0.0
        %v7303 = vmax.f32 %v7271, 0.0
        %v7304 = vmax.f32 %v7272, 0.0
        %v7305 = vmax.f32 %v7273, 0.0
        %v7306 = vmax.f32 %v7274, 0.0
        %v7307 = vmax.f32 %v7275, 0.0
        %v7308 = vmax.f32 %v7276, 0.0
        %v7309 = vmax.f32 %v7277, 0.0
        %v7310 = vmax.f32 %v7278, 0.0
        %v7311 = vmax.f32 %v7279, 0.0
        %v7312 = vmax.f32 %v7280, 0.0
        %v7313 = vmax.f32 %v7281, 0.0
        %v7314 = vmax.f32 %v7282, 0.0
        %v7315 = vmax.f32 %v7283, 0.0
        %v7316 = vmax.f32 %v7284, 0.0
        %v7317 = vmax.f32 %v7285, 0.0
        %v7318 = vmax.f32 %v7286, 0.0
        %v7319 = vmax.f32 %v7287, 0.0
        %v7320 = vmax.f32 %v7288, 0.0
        %v7321 = vmax.f32 %v7289, 0.0
        %v7322 = vld [vmem:[%s9] sm:$0x1]
        %v7323 = vrot.slane %v7290, 7
        %v7324 = vrot.slane %v7291, 7
        %v7325 = vrot.slane %v7292, 7
        %v7326 = vrot.slane %v7293, 7
        %v7327 = vrot.slane %v7294, 7
        %v7328 = vrot.slane %v7295, 7
        %v7329 = vrot.slane %v7296, 7
        %v7330 = vrot.slane %v7297, 7
        %v7331 = vrot.slane %v7298, 7
        %v7332 = vrot.slane %v7299, 7
        %v7333 = vrot.slane %v7300, 7
        %v7334 = vrot.slane %v7301, 7
        %v7335 = vrot.slane %v7302, 7
        %v7336 = vrot.slane %v7303, 7
        %v7337 = vrot.slane %v7304, 7
        %v7338 = vrot.slane %v7305, 7
        %v7339 = vrot.slane %v7306, 7
        %v7340 = vrot.slane %v7307, 7
        %v7341 = vrot.slane %v7308, 7
        %v7342 = vrot.slane %v7309, 7
        %v7343 = vrot.slane %v7310, 7
        %v7344 = vrot.slane %v7311, 7
        %v7345 = vrot.slane %v7312, 7
        %v7346 = vrot.slane %v7313, 7
        %v7347 = vrot.slane %v7314, 7
        %v7348 = vrot.slane %v7315, 7
        %v7349 = vrot.slane %v7316, 7
        %v7350 = vrot.slane %v7317, 7
        %v7351 = vrot.slane %v7318, 7
        %v7352 = vrot.slane %v7319, 7
        %v7353 = vrot.slane %v7320, 7
        %v7354 = vrot.slane %v7321, 7
        %v7355 = vsel %vm634, %v7353, %v7354
        %v7356 = vsel %vm634, %v7352, %v7353
        %v7357 = vsel %vm634, %v7351, %v7352
        %v7358 = vsel %vm634, %v7350, %v7351
        %v7359 = vsel %vm634, %v7349, %v7350
        %v7360 = vsel %vm634, %v7348, %v7349
        %v7361 = vsel %vm634, %v7347, %v7348
        %v7362 = vsel %vm634, %v7346, %v7347
        %v7363 = vsel %vm634, %v7345, %v7346
        %v7364 = vsel %vm634, %v7344, %v7345
        %v7365 = vsel %vm634, %v7343, %v7344
        %v7366 = vsel %vm634, %v7342, %v7343
        %v7367 = vsel %vm634, %v7341, %v7342
        %v7368 = vsel %vm634, %v7340, %v7341
        %v7369 = vsel %vm634, %v7339, %v7340
        %v7370 = vsel %vm634, %v7338, %v7339
        %v7371 = vsel %vm634, %v7337, %v7338
        %v7372 = vsel %vm634, %v7336, %v7337
        %v7373 = vsel %vm634, %v7335, %v7336
        %v7374 = vsel %vm634, %v7334, %v7335
        %v7375 = vsel %vm634, %v7333, %v7334
        %v7376 = vsel %vm634, %v7332, %v7333
        %v7377 = vsel %vm634, %v7331, %v7332
        %v7378 = vsel %vm634, %v7330, %v7331
        %v7379 = vsel %vm634, %v7329, %v7330
        %v7380 = vsel %vm634, %v7328, %v7329
        %v7381 = vsel %vm634, %v7327, %v7328
        %v7382 = vsel %vm634, %v7326, %v7327
        %v7383 = vsel %vm634, %v7325, %v7326
        %v7384 = vsel %vm634, %v7324, %v7325
        %v7385 = vsel %vm634, %v7323, %v7324
        %v7386 = vsel %vm634, %v7354, %v7323
        %v7387 = vrot.slane %v7290, 1
        %v7388 = vrot.slane %v7291, 1
        %v7389 = vrot.slane %v7292, 1
        %v7390 = vrot.slane %v7293, 1
        %v7391 = vrot.slane %v7294, 1
        %v7392 = vrot.slane %v7295, 1
        %v7393 = vrot.slane %v7296, 1
        %v7394 = vrot.slane %v7297, 1
        %v7395 = vrot.slane %v7298, 1
        %v7396 = vrot.slane %v7299, 1
        %v7397 = vrot.slane %v7300, 1
        %v7398 = vrot.slane %v7301, 1
        %v7399 = vrot.slane %v7302, 1
        %v7400 = vrot.slane %v7303, 1
        %v7401 = vrot.slane %v7304, 1
        %v7402 = vrot.slane %v7305, 1
        %v7403 = vrot.slane %v7306, 1
        %v7404 = vrot.slane %v7307, 1
        %v7405 = vrot.slane %v7308, 1
        %v7406 = vrot.slane %v7309, 1
        %v7407 = vrot.slane %v7310, 1
        %v7408 = vrot.slane %v7311, 1
        %v7409 = vrot.slane %v7312, 1
        %v7410 = vrot.slane %v7313, 1
        %v7411 = vrot.slane %v7314, 1
        %v7412 = vrot.slane %v7315, 1
        %v7413 = vrot.slane %v7316, 1
        %v7414 = vrot.slane %v7317, 1
        %v7415 = vrot.slane %v7318, 1
        %v7416 = vrot.slane %v7319, 1
        %v7417 = vrot.slane %v7320, 1
        %v7418 = vrot.slane %v7321, 1
        %v7419 = vsel %vm699, %v7417, %v7418
        %v7420 = vsel %vm699, %v7416, %v7417
        %v7421 = vsel %vm699, %v7415, %v7416
        %v7422 = vsel %vm699, %v7414, %v7415
        %v7423 = vsel %vm699, %v7413, %v7414
        %v7424 = vsel %vm699, %v7412, %v7413
        %v7425 = vsel %vm699, %v7411, %v7412
        %v7426 = vsel %vm699, %v7410, %v7411
        %v7427 = vsel %vm699, %v7409, %v7410
        %v7428 = vsel %vm699, %v7408, %v7409
        %v7429 = vsel %vm699, %v7407, %v7408
        %v7430 = vsel %vm699, %v7406, %v7407
        %v7431 = vsel %vm699, %v7405, %v7406
        %v7432 = vsel %vm699, %v7404, %v7405
        %v7433 = vsel %vm699, %v7403, %v7404
        %v7434 = vsel %vm699, %v7402, %v7403
        %v7435 = vsel %vm699, %v7401, %v7402
        %v7436 = vsel %vm699, %v7400, %v7401
        %v7437 = vsel %vm699, %v7399, %v7400
        %v7438 = vsel %vm699, %v7398, %v7399
        %v7439 = vsel %vm699, %v7397, %v7398
        %v7440 = vsel %vm699, %v7396, %v7397
        %v7441 = vsel %vm699, %v7395, %v7396
        %v7442 = vsel %vm699, %v7394, %v7395
        %v7443 = vsel %vm699, %v7393, %v7394
        %v7444 = vsel %vm699, %v7392, %v7393
        %v7445 = vsel %vm699, %v7391, %v7392
        %v7446 = vsel %vm699, %v7390, %v7391
        %v7447 = vsel %vm699, %v7389, %v7390
        %v7448 = vsel %vm699, %v7388, %v7389
        %v7449 = vsel %vm699, %v7387, %v7388
        %v7450 = vsel %vm699, %v7418, %v7387
        %v7451 = vsel %vm533, %v7386, 0.0
        %v7452 = vsel %vm534, %v7385, 0.0
        %v7453 = vsel %vm533, %v7384, 0.0
        %v7454 = vsel %vm534, %v7383, 0.0
        %v7455 = vsel %vm533, %v7382, 0.0
        %v7456 = vsel %vm534, %v7381, 0.0
        %v7457 = vsel %vm533, %v7380, 0.0
        %v7458 = vsel %vm534, %v7379, 0.0
        %v7459 = vsel %vm533, %v7378, 0.0
        %v7460 = vsel %vm534, %v7377, 0.0
        %v7461 = vsel %vm533, %v7376, 0.0
        %v7462 = vsel %vm534, %v7375, 0.0
        %v7463 = vsel %vm533, %v7374, 0.0
        %v7464 = vsel %vm534, %v7373, 0.0
        %v7465 = vsel %vm533, %v7372, 0.0
        %v7466 = vsel %vm534, %v7371, 0.0
        %v7467 = vsel %vm533, %v7370, 0.0
        %v7468 = vsel %vm534, %v7369, 0.0
        %v7469 = vsel %vm533, %v7368, 0.0
        %v7470 = vsel %vm534, %v7367, 0.0
        %v7471 = vsel %vm533, %v7366, 0.0
        %v7472 = vsel %vm534, %v7365, 0.0
        %v7473 = vsel %vm533, %v7364, 0.0
        %v7474 = vsel %vm534, %v7363, 0.0
        %v7475 = vsel %vm533, %v7362, 0.0
        %v7476 = vsel %vm534, %v7361, 0.0
        %v7477 = vsel %vm533, %v7360, 0.0
        %v7478 = vsel %vm534, %v7359, 0.0
        %v7479 = vsel %vm533, %v7358, 0.0
        %v7480 = vsel %vm534, %v7357, 0.0
        %v7481 = vsel %vm533, %v7356, 0.0
        %v7482 = vsel %vm534, %v7355, 0.0
        %v7483 = vsel %vm535, %v7449, 0.0
        %v7484 = vsel %vm536, %v7448, 0.0
        %v7485 = vsel %vm535, %v7447, 0.0
        %v7486 = vsel %vm536, %v7446, 0.0
        %v7487 = vsel %vm535, %v7445, 0.0
        %v7488 = vsel %vm536, %v7444, 0.0
        %v7489 = vsel %vm535, %v7443, 0.0
        %v7490 = vsel %vm536, %v7442, 0.0
        %v7491 = vsel %vm535, %v7441, 0.0
        %v7492 = vsel %vm536, %v7440, 0.0
        %v7493 = vsel %vm535, %v7439, 0.0
        %v7494 = vsel %vm536, %v7438, 0.0
        %v7495 = vsel %vm535, %v7437, 0.0
        %v7496 = vsel %vm536, %v7436, 0.0
        %v7497 = vsel %vm535, %v7435, 0.0
        %v7498 = vsel %vm536, %v7434, 0.0
        %v7499 = vsel %vm535, %v7433, 0.0
        %v7500 = vsel %vm536, %v7432, 0.0
        %v7501 = vsel %vm535, %v7431, 0.0
        %v7502 = vsel %vm536, %v7430, 0.0
        %v7503 = vsel %vm535, %v7429, 0.0
        %v7504 = vsel %vm536, %v7428, 0.0
        %v7505 = vsel %vm535, %v7427, 0.0
        %v7506 = vsel %vm536, %v7426, 0.0
        %v7507 = vsel %vm535, %v7425, 0.0
        %v7508 = vsel %vm536, %v7424, 0.0
        %v7509 = vsel %vm535, %v7423, 0.0
        %v7510 = vsel %vm536, %v7422, 0.0
        %v7511 = vsel %vm535, %v7421, 0.0
        %v7512 = vsel %vm536, %v7420, 0.0
        %v7513 = vsel %vm535, %v7419, 0.0
        %v7514 = vsel %vm536, %v7450, 0.0
        %7515 = vst [vmem:[%s796] sm:$0xff] %v7451
        %7516 = vst [vmem:[%s796 + $0x8] sm:$0xff] %v7290
        %7517 = vst [vmem:[%s796 + $0x10] sm:$0xff] %v7483
        %7518 = vst [vmem:[%s796 + $0x18] sm:$0xff] %v7452
        %7519 = vst [vmem:[%s796 + $0x20] sm:$0xff] %v7291
        %7520 = vst [vmem:[%s796 + $0x28] sm:$0xff] %v7484
        %7521 = vst [vmem:[%s796 + $0x30] sm:$0xff] %v7453
        %7522 = vst [vmem:[%s796 + $0x38] sm:$0xff] %v7292
        %7523 = vst [vmem:[%s796 + $0x40] sm:$0xff] %v7485
        %7524 = vst [vmem:[%s796 + $0x48] sm:$0xff] %v7454
        %7525 = vst [vmem:[%s796 + $0x50] sm:$0xff] %v7293
        %7526 = vst [vmem:[%s796 + $0x58] sm:$0xff] %v7486
        %7527 = vst [vmem:[%s796 + $0x60] sm:$0xff] %v7455
        %7528 = vst [vmem:[%s796 + $0x68] sm:$0xff] %v7294
        %7529 = vst [vmem:[%s796 + $0x70] sm:$0xff] %v7487
        %7530 = vst [vmem:[%s796 + $0x78] sm:$0xff] %v7456
        %7531 = vst [vmem:[%s796 + $0x80] sm:$0xff] %v7295
        %7532 = vst [vmem:[%s796 + $0x88] sm:$0xff] %v7488
        %7533 = vst [vmem:[%s796 + $0x90] sm:$0xff] %v7457
        %7534 = vst [vmem:[%s796 + $0x98] sm:$0xff] %v7296
        %7535 = vst [vmem:[%s796 + $0xa0] sm:$0xff] %v7489
        %7536 = vst [vmem:[%s796 + $0xa8] sm:$0xff] %v7458
        %7537 = vst [vmem:[%s796 + $0xb0] sm:$0xff] %v7297
        %7538 = vst [vmem:[%s796 + $0xb8] sm:$0xff] %v7490
        %7539 = vst [vmem:[%s796 + $0xc0] sm:$0xff] %v7459
        %7540 = vst [vmem:[%s796 + $0xc8] sm:$0xff] %v7298
        %7541 = vst [vmem:[%s796 + $0xd0] sm:$0xff] %v7491
        %7542 = vst [vmem:[%s796 + $0xd8] sm:$0xff] %v7460
        %7543 = vst [vmem:[%s796 + $0xe0] sm:$0xff] %v7299
        %7544 = vst [vmem:[%s796 + $0xe8] sm:$0xff] %v7492
        %7545 = vst [vmem:[%s796 + $0xf0] sm:$0xff] %v7461
        %7546 = vst [vmem:[%s796 + $0xf8] sm:$0xff] %v7300
        %7547 = vst [vmem:[%s796 + $0x100] sm:$0xff] %v7493
        %7548 = vst [vmem:[%s796 + $0x108] sm:$0xff] %v7462
        %7549 = vst [vmem:[%s796 + $0x110] sm:$0xff] %v7301
        %7550 = vst [vmem:[%s796 + $0x118] sm:$0xff] %v7494
        %7551 = vst [vmem:[%s796 + $0x120] sm:$0xff] %v7463
        %7552 = vst [vmem:[%s796 + $0x128] sm:$0xff] %v7302
        %7553 = vst [vmem:[%s796 + $0x130] sm:$0xff] %v7495
        %7554 = vst [vmem:[%s796 + $0x138] sm:$0xff] %v7464
        %7555 = vst [vmem:[%s796 + $0x140] sm:$0xff] %v7303
        %7556 = vst [vmem:[%s796 + $0x148] sm:$0xff] %v7496
        %7557 = vst [vmem:[%s796 + $0x150] sm:$0xff] %v7465
        %7558 = vst [vmem:[%s796 + $0x158] sm:$0xff] %v7304
        %7559 = vst [vmem:[%s796 + $0x160] sm:$0xff] %v7497
        %7560 = vst [vmem:[%s796 + $0x168] sm:$0xff] %v7466
        %7561 = vst [vmem:[%s796 + $0x170] sm:$0xff] %v7305
        %7562 = vst [vmem:[%s796 + $0x178] sm:$0xff] %v7498
        %7563 = vst [vmem:[%s796 + $0x180] sm:$0xff] %v7467
        %7564 = vst [vmem:[%s796 + $0x188] sm:$0xff] %v7306
        %7565 = vst [vmem:[%s796 + $0x190] sm:$0xff] %v7499
        %7566 = vst [vmem:[%s796 + $0x198] sm:$0xff] %v7468
        %7567 = vst [vmem:[%s796 + $0x1a0] sm:$0xff] %v7307
        %7568 = vst [vmem:[%s796 + $0x1a8] sm:$0xff] %v7500
        %7569 = vst [vmem:[%s796 + $0x1b0] sm:$0xff] %v7469
        %7570 = vst [vmem:[%s796 + $0x1b8] sm:$0xff] %v7308
        %7571 = vst [vmem:[%s796 + $0x1c0] sm:$0xff] %v7501
        %7572 = vst [vmem:[%s796 + $0x1c8] sm:$0xff] %v7470
        %7573 = vst [vmem:[%s796 + $0x1d0] sm:$0xff] %v7309
        %7574 = vst [vmem:[%s796 + $0x1d8] sm:$0xff] %v7502
        %7575 = vst [vmem:[%s796 + $0x1e0] sm:$0xff] %v7471
        %7576 = vst [vmem:[%s796 + $0x1e8] sm:$0xff] %v7310
        %7577 = vst [vmem:[%s796 + $0x1f0] sm:$0xff] %v7503
        %7578 = vst [vmem:[%s796 + $0x1f8] sm:$0xff] %v7472
        %7579 = vst [vmem:[%s796 + $0x200] sm:$0xff] %v7311
        %7580 = vst [vmem:[%s796 + $0x208] sm:$0xff] %v7504
        %7581 = vst [vmem:[%s796 + $0x210] sm:$0xff] %v7473
        %7582 = vst [vmem:[%s796 + $0x218] sm:$0xff] %v7312
        %7583 = vst [vmem:[%s796 + $0x220] sm:$0xff] %v7505
        %7584 = vst [vmem:[%s796 + $0x228] sm:$0xff] %v7474
        %7585 = vst [vmem:[%s796 + $0x230] sm:$0xff] %v7313
        %7586 = vst [vmem:[%s796 + $0x238] sm:$0xff] %v7506
        %7587 = vst [vmem:[%s796 + $0x240] sm:$0xff] %v7475
        %7588 = vst [vmem:[%s796 + $0x248] sm:$0xff] %v7314
        %7589 = vst [vmem:[%s796 + $0x250] sm:$0xff] %v7507
        %7590 = vst [vmem:[%s796 + $0x258] sm:$0xff] %v7476
        %7591 = vst [vmem:[%s796 + $0x260] sm:$0xff] %v7315
        %7592 = vst [vmem:[%s796 + $0x268] sm:$0xff] %v7508
        %7593 = vst [vmem:[%s796 + $0x270] sm:$0xff] %v7477
        %7594 = vst [vmem:[%s796 + $0x278] sm:$0xff] %v7316
        %7595 = vst [vmem:[%s796 + $0x280] sm:$0xff] %v7509
        %7596 = vst [vmem:[%s796 + $0x288] sm:$0xff] %v7478
        %7597 = vst [vmem:[%s796 + $0x290] sm:$0xff] %v7317
        %7598 = vst [vmem:[%s796 + $0x298] sm:$0xff] %v7510
        %7599 = vst [vmem:[%s796 + $0x2a0] sm:$0xff] %v7479
        %7600 = vst [vmem:[%s796 + $0x2a8] sm:$0xff] %v7318
        %7601 = vst [vmem:[%s796 + $0x2b0] sm:$0xff] %v7511
        %7602 = vst [vmem:[%s796 + $0x2b8] sm:$0xff] %v7480
        %7603 = vst [vmem:[%s796 + $0x2c0] sm:$0xff] %v7319
        %7604 = vst [vmem:[%s796 + $0x2c8] sm:$0xff] %v7512
        %7605 = vst [vmem:[%s796 + $0x2d0] sm:$0xff] %v7481
        %7606 = vst [vmem:[%s796 + $0x2d8] sm:$0xff] %v7320
        %7607 = vst [vmem:[%s796 + $0x2e0] sm:$0xff] %v7513
        %7608 = vst [vmem:[%s796 + $0x2e8] sm:$0xff] %v7482
        %7609 = vst [vmem:[%s796 + $0x2f0] sm:$0xff] %v7321
        %7610 = vst [vmem:[%s796 + $0x2f8] sm:$0xff] %v7514
        %v7611 = vld [vmem:[#allocation2] sm:$0xff]
        %v7612 = vld [vmem:[#allocation2 + $0x8] sm:$0xff]
        %v7613 = vld [vmem:[#allocation2 + $0x10] sm:$0xff]
        %v7614 = vld [vmem:[#allocation2 + $0x18] sm:$0xff]
        %v7615 = vld [vmem:[#allocation2 + $0x20] sm:$0xff]
        %v7616 = vld [vmem:[#allocation2 + $0x28] sm:$0xff]
        %v7617 = vld [vmem:[#allocation2 + $0x30] sm:$0xff]
        %v7618 = vld [vmem:[#allocation2 + $0x38] sm:$0xff]
        %v7619 = vld [vmem:[#allocation2 + $0x40] sm:$0xff]
        %v7620 = vld [vmem:[#allocation2 + $0x48] sm:$0xff]
        %v7621 = vld [vmem:[#allocation2 + $0x50] sm:$0xff]
        %v7622 = vld [vmem:[#allocation2 + $0x58] sm:$0xff]
        %v7623 = vld [vmem:[#allocation2 + $0x60] sm:$0xff]
        %v7624 = vld [vmem:[#allocation2 + $0x68] sm:$0xff]
        %v7625 = vld [vmem:[#allocation2 + $0x70] sm:$0xff]
        %v7626 = vld [vmem:[#allocation2 + $0x78] sm:$0xff]
        %v7627 = vld [vmem:[#allocation2 + $0x80] sm:$0xff]
        %v7628 = vld [vmem:[#allocation2 + $0x88] sm:$0xff]
        %v7629 = vld [vmem:[#allocation2 + $0x90] sm:$0xff]
        %v7630 = vld [vmem:[#allocation2 + $0x98] sm:$0xff]
        %v7631 = vld [vmem:[#allocation2 + $0xa0] sm:$0xff]
        %v7632 = vld [vmem:[#allocation2 + $0xa8] sm:$0xff]
        %v7633 = vld [vmem:[#allocation2 + $0xb0] sm:$0xff]
        %v7634 = vld [vmem:[#allocation2 + $0xb8] sm:$0xff]
        %v7635 = vld [vmem:[#allocation2 + $0xc0] sm:$0xff]
        %v7636 = vld [vmem:[#allocation2 + $0xc8] sm:$0xff]
        %v7637 = vld [vmem:[#allocation2 + $0xd0] sm:$0xff]
        %v7638 = vld [vmem:[#allocation2 + $0xd8] sm:$0xff]
        %v7639 = vld [vmem:[#allocation2 + $0xe0] sm:$0xff]
        %v7640 = vld [vmem:[#allocation2 + $0xe8] sm:$0xff]
        %v7641 = vld [vmem:[#allocation2 + $0xf0] sm:$0xff]
        %v7642 = vld [vmem:[#allocation2 + $0xf8] sm:$0xff]
        %v7643 = vld [vmem:[#allocation2 + $0x100] sm:$0xff]
        %v7644 = vld [vmem:[#allocation2 + $0x108] sm:$0xff]
        %v7645 = vld [vmem:[#allocation2 + $0x110] sm:$0xff]
        %v7646 = vld [vmem:[#allocation2 + $0x118] sm:$0xff]
        %v7647 = vld [vmem:[#allocation2 + $0x120] sm:$0xff]
        %v7648 = vld [vmem:[#allocation2 + $0x128] sm:$0xff]
        %v7649 = vld [vmem:[#allocation2 + $0x130] sm:$0xff]
        %v7650 = vld [vmem:[#allocation2 + $0x138] sm:$0xff]
        %v7651 = vld [vmem:[#allocation2 + $0x140] sm:$0xff]
        %v7652 = vld [vmem:[#allocation2 + $0x148] sm:$0xff]
        %v7653 = vld [vmem:[#allocation2 + $0x150] sm:$0xff]
        %v7654 = vld [vmem:[#allocation2 + $0x158] sm:$0xff]
        %v7655 = vld [vmem:[#allocation2 + $0x160] sm:$0xff]
        %v7656 = vld [vmem:[#allocation2 + $0x168] sm:$0xff]
        %v7657 = vld [vmem:[#allocation2 + $0x170] sm:$0xff]
        %v7658 = vld [vmem:[#allocation2 + $0x178] sm:$0xff]
        %v7659 = vld [vmem:[#allocation2 + $0x180] sm:$0xff]
        %v7660 = vld [vmem:[#allocation2 + $0x188] sm:$0xff]
        %v7661 = vld [vmem:[#allocation2 + $0x190] sm:$0xff]
        %v7662 = vld [vmem:[#allocation2 + $0x198] sm:$0xff]
        %v7663 = vld [vmem:[#allocation2 + $0x1a0] sm:$0xff]
        %v7664 = vld [vmem:[#allocation2 + $0x1a8] sm:$0xff]
        %v7665 = vld [vmem:[#allocation2 + $0x1b0] sm:$0xff]
        %v7666 = vld [vmem:[#allocation2 + $0x1b8] sm:$0xff]
        %v7667 = vld [vmem:[#allocation2 + $0x1c0] sm:$0xff]
        %v7668 = vld [vmem:[#allocation2 + $0x1c8] sm:$0xff]
        %v7669 = vld [vmem:[#allocation2 + $0x1d0] sm:$0xff]
        %v7670 = vld [vmem:[#allocation2 + $0x1d8] sm:$0xff]
        %v7671 = vld [vmem:[#allocation2 + $0x1e0] sm:$0xff]
        %v7672 = vld [vmem:[#allocation2 + $0x1e8] sm:$0xff]
        %v7673 = vld [vmem:[#allocation2 + $0x1f0] sm:$0xff]
        %v7674 = vld [vmem:[#allocation2 + $0x1f8] sm:$0xff]
        %v7675 = vld [vmem:[#allocation2 + $0x200] sm:$0xff]
        %v7676 = vld [vmem:[#allocation2 + $0x208] sm:$0xff]
        %v7677 = vld [vmem:[#allocation2 + $0x210] sm:$0xff]
        %v7678 = vld [vmem:[#allocation2 + $0x218] sm:$0xff]
        %v7679 = vld [vmem:[#allocation2 + $0x220] sm:$0xff]
        %v7680 = vld [vmem:[#allocation2 + $0x228] sm:$0xff]
        %v7681 = vld [vmem:[#allocation2 + $0x230] sm:$0xff]
        %v7682 = vld [vmem:[#allocation2 + $0x238] sm:$0xff]
        %v7683 = vld [vmem:[#allocation2 + $0x240] sm:$0xff]
        %v7684 = vld [vmem:[#allocation2 + $0x248] sm:$0xff]
        %v7685 = vld [vmem:[#allocation2 + $0x250] sm:$0xff]
        %v7686 = vld [vmem:[#allocation2 + $0x258] sm:$0xff]
        %v7687 = vld [vmem:[#allocation2 + $0x260] sm:$0xff]
        %v7688 = vld [vmem:[#allocation2 + $0x268] sm:$0xff]
        %v7689 = vld [vmem:[#allocation2 + $0x270] sm:$0xff]
        %v7690 = vld [vmem:[#allocation2 + $0x278] sm:$0xff]
        %v7691 = vld [vmem:[#allocation2 + $0x280] sm:$0xff]
        %v7692 = vld [vmem:[#allocation2 + $0x288] sm:$0xff]
        %v7693 = vld [vmem:[#allocation2 + $0x290] sm:$0xff]
        %v7694 = vld [vmem:[#allocation2 + $0x298] sm:$0xff]
        %v7695 = vld [vmem:[#allocation2 + $0x2a0] sm:$0xff]
        %v7696 = vld [vmem:[#allocation2 + $0x2a8] sm:$0xff]
        %v7697 = vld [vmem:[#allocation2 + $0x2b0] sm:$0xff]
        %v7698 = vld [vmem:[#allocation2 + $0x2b8] sm:$0xff]
        %v7699 = vld [vmem:[#allocation2 + $0x2c0] sm:$0xff]
        %v7700 = vld [vmem:[#allocation2 + $0x2c8] sm:$0xff]
        %v7701 = vld [vmem:[#allocation2 + $0x2d0] sm:$0xff]
        %v7702 = vld [vmem:[#allocation2 + $0x2d8] sm:$0xff]
        %v7703 = vld [vmem:[#allocation2 + $0x2e0] sm:$0xff]
        %v7704 = vld [vmem:[#allocation2 + $0x2e8] sm:$0xff]
        %v7705 = vld [vmem:[#allocation2 + $0x2f0] sm:$0xff]
        %v7706 = vld [vmem:[#allocation2 + $0x2f8] sm:$0xff]
        %v7707 = vld [vmem:[#allocation12] sm:$0xff]
        %v7708 = vld [vmem:[#allocation12 + $0x8] sm:$0xff]
        %v7709 = vld [vmem:[#allocation12 + $0x10] sm:$0xff]
        %v7710 = vld [vmem:[#allocation12 + $0x18] sm:$0xff]
        %v7711 = vld [vmem:[#allocation12 + $0x20] sm:$0xff]
        %v7712 = vld [vmem:[#allocation12 + $0x28] sm:$0xff]
        %v7713 = vld [vmem:[#allocation12 + $0x30] sm:$0xff]
        %v7714 = vld [vmem:[#allocation12 + $0x38] sm:$0xff]
        %v7715 = vld [vmem:[#allocation12 + $0x40] sm:$0xff]
        %v7716 = vld [vmem:[#allocation12 + $0x48] sm:$0xff]
        %v7717 = vld [vmem:[#allocation12 + $0x50] sm:$0xff]
        %v7718 = vld [vmem:[#allocation12 + $0x58] sm:$0xff]
        %v7719 = vld [vmem:[#allocation12 + $0x60] sm:$0xff]
        %v7720 = vld [vmem:[#allocation12 + $0x68] sm:$0xff]
        %v7721 = vld [vmem:[#allocation12 + $0x70] sm:$0xff]
        %v7722 = vld [vmem:[#allocation12 + $0x78] sm:$0xff]
        %v7723 = vld [vmem:[#allocation12 + $0x80] sm:$0xff]
        %v7724 = vld [vmem:[#allocation12 + $0x88] sm:$0xff]
        %v7725 = vld [vmem:[#allocation12 + $0x90] sm:$0xff]
        %v7726 = vld [vmem:[#allocation12 + $0x98] sm:$0xff]
        %v7727 = vld [vmem:[#allocation12 + $0xa0] sm:$0xff]
        %v7728 = vld [vmem:[#allocation12 + $0xa8] sm:$0xff]
        %v7729 = vld [vmem:[#allocation12 + $0xb0] sm:$0xff]
        %v7730 = vld [vmem:[#allocation12 + $0xb8] sm:$0xff]
        %v7731 = vld [vmem:[#allocation12 + $0xc0] sm:$0xff]
        %v7732 = vld [vmem:[#allocation12 + $0xc8] sm:$0xff]
        %v7733 = vld [vmem:[#allocation12 + $0xd0] sm:$0xff]
        %v7734 = vld [vmem:[#allocation12 + $0xd8] sm:$0xff]
        %v7735 = vld [vmem:[#allocation12 + $0xe0] sm:$0xff]
        %v7736 = vld [vmem:[#allocation12 + $0xe8] sm:$0xff]
        %v7737 = vld [vmem:[#allocation12 + $0xf0] sm:$0xff]
        %v7738 = vld [vmem:[#allocation12 + $0xf8] sm:$0xff]
        %v7739 = vld [vmem:[#allocation12 + $0x100] sm:$0xff]
        %v7740 = vld [vmem:[#allocation12 + $0x108] sm:$0xff]
        %v7741 = vld [vmem:[#allocation12 + $0x110] sm:$0xff]
        %v7742 = vld [vmem:[#allocation12 + $0x118] sm:$0xff]
        %v7743 = vld [vmem:[#allocation12 + $0x120] sm:$0xff]
        %v7744 = vld [vmem:[#allocation12 + $0x128] sm:$0xff]
        %v7745 = vld [vmem:[#allocation12 + $0x130] sm:$0xff]
        %v7746 = vld [vmem:[#allocation12 + $0x138] sm:$0xff]
        %v7747 = vld [vmem:[#allocation12 + $0x140] sm:$0xff]
        %v7748 = vld [vmem:[#allocation12 + $0x148] sm:$0xff]
        %v7749 = vld [vmem:[#allocation12 + $0x150] sm:$0xff]
        %v7750 = vld [vmem:[#allocation12 + $0x158] sm:$0xff]
        %v7751 = vld [vmem:[#allocation12 + $0x160] sm:$0xff]
        %v7752 = vld [vmem:[#allocation12 + $0x168] sm:$0xff]
        %v7753 = vld [vmem:[#allocation12 + $0x170] sm:$0xff]
        %v7754 = vld [vmem:[#allocation12 + $0x178] sm:$0xff]
        %7755 = vmatprep.subr.mxu0 0.0
        %7756 = vmatpush1.msra.mxu0 %v7707
        %7757 = vmatprep.subr.mxu0 0.0
        %7758 = vmatpush1.msra.mxu0 %v7708
        %7759 = vmatprep.subr.mxu0 0.0
        %7760 = vmatpush1.msra.mxu0 %v7709
        %7761 = vmatprep.subr.mxu0 0.0
        %7762 = vmatpush1.msra.mxu0 %v7710
        %7763 = vmatprep.subr.mxu0 0.0
        %7764 = vmatpush1.msra.mxu0 %v7711
        %7765 = vmatprep.subr.mxu0 0.0
        %7766 = vmatpush1.msra.mxu0 %v7712
        %7767 = vmatprep.subr.mxu0 0.0
        %7768 = vmatpush1.msra.mxu0 %v7713
        %7769 = vmatprep.subr.mxu0 0.0
        %7770 = vmatpush1.msra.mxu0 %v7714
        %7771 = vmatprep.subr.mxu0 0.0
        %7772 = vmatpush1.msra.mxu0 %v7715
        %7773 = vmatprep.subr.mxu0 0.0
        %7774 = vmatpush1.msra.mxu0 %v7716
        %7775 = vmatprep.subr.mxu0 0.0
        %7776 = vmatpush1.msra.mxu0 %v7717
        %7777 = vmatprep.subr.mxu0 0.0
        %7778 = vmatpush1.msra.mxu0 %v7718
        %7779 = vmatprep.subr.mxu0 0.0
        %7780 = vmatpush1.msra.mxu0 %v7719
        %7781 = vmatprep.subr.mxu0 0.0
        %7782 = vmatpush1.msra.mxu0 %v7720
        %7783 = vmatprep.subr.mxu0 0.0
        %7784 = vmatpush1.msra.mxu0 %v7721
        %7785 = vmatprep.subr.mxu0 0.0
        %7786 = vmatpush1.msra.mxu0 %v7722
        %7787 = vmatprep.subr.mxu0 0.0
        %7788 = vmatpush1.msra.mxu0 %v7723
        %7789 = vmatprep.subr.mxu0 0.0
        %7790 = vmatpush1.msra.mxu0 %v7724
        %7791 = vmatprep.subr.mxu0 0.0
        %7792 = vmatpush1.msra.mxu0 %v7725
        %7793 = vmatprep.subr.mxu0 0.0
        %7794 = vmatpush1.msra.mxu0 %v7726
        %7795 = vmatprep.subr.mxu0 0.0
        %7796 = vmatpush1.msra.mxu0 %v7727
        %7797 = vmatprep.subr.mxu0 0.0
        %7798 = vmatpush1.msra.mxu0 %v7728
        %7799 = vmatprep.subr.mxu0 0.0
        %7800 = vmatpush1.msra.mxu0 %v7729
        %7801 = vmatprep.subr.mxu0 0.0
        %7802 = vmatpush1.msra.mxu0 %v7730
        %7803 = vmatprep.subr.mxu0 0.0
        %7804 = vmatpush1.msra.mxu0 %v7731
        %7805 = vmatprep.subr.mxu0 0.0
        %7806 = vmatpush1.msra.mxu0 %v7732
        %7807 = vmatprep.subr.mxu0 0.0
        %7808 = vmatpush1.msra.mxu0 %v7733
        %7809 = vmatprep.subr.mxu0 0.0
        %7810 = vmatpush1.msra.mxu0 %v7734
        %7811 = vmatprep.subr.mxu0 0.0
        %7812 = vmatpush1.msra.mxu0 %v7735
        %7813 = vmatprep.subr.mxu0 0.0
        %7814 = vmatpush1.msra.mxu0 %v7736
        %7815 = vmatprep.subr.mxu0 0.0
        %7816 = vmatpush1.msra.mxu0 %v7737
        %7817 = vmatprep.subr.mxu0 0.0
        %7818 = vmatpush1.msra.mxu0 %v7738
        %7819 = vmatprep.mubr.f32.mxu0 %v7612
        %7820 = vmatmul.mubr.f32.gmra.mrb[0].mxu0 %v7611
        %v7821 = vpop.f32.mrb[0].mxu0
        %v7822 = vadd.f32 0.0, %v7821
        %v7823 = vpop.f32.mrb[0].mxu0
        %7824 = vmatprep.mubr.f32.mxu0 %v7615
        %7825 = vmatmul.mubr.f32.gmra.mrb[0].mxu0 %v7614
        %v7826 = vpop.f32.mrb[0].mxu0
        %v7827 = vadd.f32 0.0, %v7826
        %v7828 = vpop.f32.mrb[0].mxu0
        %7829 = vmatprep.mubr.f32.mxu0 %v7618
        %7830 = vmatmul.mubr.f32.gmra.mrb[0].mxu0 %v7617
        %v7831 = vpop.f32.mrb[0].mxu0
        %v7832 = vadd.f32 0.0, %v7831
        %v7833 = vpop.f32.mrb[0].mxu0
        %7834 = vmatprep.mubr.f32.mxu0 %v7621
        %7835 = vmatmul.mubr.f32.gmra.mrb[0].mxu0 %v7620
        %v7836 = vpop.f32.mrb[0].mxu0
        %v7837 = vadd.f32 0.0, %v7836
        %v7838 = vpop.f32.mrb[0].mxu0
        %7839 = vmatprep.mubr.f32.mxu0 %v7624
        %7840 = vmatmul.mubr.f32.gmra.mrb[0].mxu0 %v7623
        %v7841 = vpop.f32.mrb[0].mxu0
        %v7842 = vadd.f32 0.0, %v7841
        %v7843 = vpop.f32.mrb[0].mxu0
        %7844 = vmatprep.mubr.f32.mxu0 %v7627
        %7845 = vmatmul.mubr.f32.gmra.mrb[0].mxu0 %v7626
        %v7846 = vpop.f32.mrb[0].mxu0
        %v7847 = vadd.f32 0.0, %v7846
        %v7848 = vpop.f32.mrb[0].mxu0
        %7849 = vmatprep.mubr.f32.mxu0 %v7630
        %7850 = vmatmul.mubr.f32.gmra.mrb[0].mxu0 %v7629
        %v7851 = vpop.f32.mrb[0].mxu0
        %v7852 = vadd.f32 0.0, %v7851
        %v7853 = vpop.f32.mrb[0].mxu0
        %7854 = vmatprep.mubr.f32.mxu0 %v7633
        %7855 = vmatmul.mubr.f32.gmra.mrb[0].mxu0 %v7632
        %v7856 = vpop.f32.mrb[0].mxu0
        %v7857 = vadd.f32 0.0, %v7856
        %v7858 = vpop.f32.mrb[0].mxu0
        %7859 = vmatprep.mubr.f32.mxu0 %v7636
        %7860 = vmatmul.mubr.f32.gmra.mrb[0].mxu0 %v7635
        %v7861 = vpop.f32.mrb[0].mxu0
        %v7862 = vadd.f32 0.0, %v7861
        %v7863 = vpop.f32.mrb[0].mxu0
        %7864 = vmatprep.mubr.f32.mxu0 %v7639
        %7865 = vmatmul.mubr.f32.gmra.mrb[0].mxu0 %v7638
        %v7866 = vpop.f32.mrb[0].mxu0
        %v7867 = vadd.f32 0.0, %v7866
        %v7868 = vpop.f32.mrb[0].mxu0
        %7869 = vmatprep.mubr.f32.mxu0 %v7642
        %7870 = vmatmul.mubr.f32.gmra.mrb[0].mxu0 %v7641
        %v7871 = vpop.f32.mrb[0].mxu0
        %v7872 = vadd.f32 0.0, %v7871
        %v7873 = vpop.f32.mrb[0].mxu0
        %7874 = vmatprep.mubr.f32.mxu0 %v7645
        %7875 = vmatmul.mubr.f32.gmra.mrb[0].mxu0 %v7644
        %v7876 = vpop.f32.mrb[0].mxu0
        %v7877 = vadd.f32 0.0, %v7876
        %v7878 = vpop.f32.mrb[0].mxu0
        %7879 = vmatprep.mubr.f32.mxu0 %v7648
        %7880 = vmatmul.mubr.f32.gmra.mrb[0].mxu0 %v7647
        %v7881 = vpop.f32.mrb[0].mxu0
        %v7882 = vadd.f32 0.0, %v7881
        %v7883 = vpop.f32.mrb[0].mxu0
        %7884 = vmatprep.mubr.f32.mxu0 %v7651
        %7885 = vmatmul.mubr.f32.gmra.mrb[0].mxu0 %v7650
        %v7886 = vpop.f32.mrb[0].mxu0
        %v7887 = vadd.f32 0.0, %v7886
        %v7888 = vpop.f32.mrb[0].mxu0
        %7889 = vmatprep.mubr.f32.mxu0 %v7654
        %7890 = vmatmul.mubr.f32.gmra.mrb[0].mxu0 %v7653
        %v7891 = vpop.f32.mrb[0].mxu0
        %v7892 = vadd.f32 0.0, %v7891
        %v7893 = vpop.f32.mrb[0].mxu0
        %7894 = vmatprep.mubr.f32.mxu0 %v7657
        %7895 = vmatmul.mubr.f32.gmra.mrb[0].mxu0 %v7656
        %v7896 = vpop.f32.mrb[0].mxu0
        %v7897 = vadd.f32 0.0, %v7896
        %v7898 = vpop.f32.mrb[0].mxu0
        %7899 = vmatprep.mubr.f32.mxu0 %v7660
        %7900 = vmatmul.mubr.f32.gmra.mrb[0].mxu0 %v7659
        %v7901 = vpop.f32.mrb[0].mxu0
        %v7902 = vadd.f32 0.0, %v7901
        %v7903 = vpop.f32.mrb[0].mxu0
        %7904 = vmatprep.mubr.f32.mxu0 %v7663
        %7905 = vmatmul.mubr.f32.gmra.mrb[0].mxu0 %v7662
        %v7906 = vpop.f32.mrb[0].mxu0
        %v7907 = vadd.f32 0.0, %v7906
        %v7908 = vpop.f32.mrb[0].mxu0
        %7909 = vmatprep.mubr.f32.mxu0 %v7666
        %7910 = vmatmul.mubr.f32.gmra.mrb[0].mxu0 %v7665
        %v7911 = vpop.f32.mrb[0].mxu0
        %v7912 = vadd.f32 0.0, %v7911
        %v7913 = vpop.f32.mrb[0].mxu0
        %7914 = vmatprep.mubr.f32.mxu0 %v7669
        %7915 = vmatmul.mubr.f32.gmra.mrb[0].mxu0 %v7668
        %v7916 = vpop.f32.mrb[0].mxu0
        %v7917 = vadd.f32 0.0, %v7916
        %v7918 = vpop.f32.mrb[0].mxu0
        %7919 = vmatprep.mubr.f32.mxu0 %v7672
        %7920 = vmatmul.mubr.f32.gmra.mrb[0].mxu0 %v7671
        %v7921 = vpop.f32.mrb[0].mxu0
        %v7922 = vadd.f32 0.0, %v7921
        %v7923 = vpop.f32.mrb[0].mxu0
        %7924 = vmatprep.mubr.f32.mxu0 %v7675
        %7925 = vmatmul.mubr.f32.gmra.mrb[0].mxu0 %v7674
        %v7926 = vpop.f32.mrb[0].mxu0
        %v7927 = vadd.f32 0.0, %v7926
        %v7928 = vpop.f32.mrb[0].mxu0
        %7929 = vmatprep.mubr.f32.mxu0 %v7678
        %7930 = vmatmul.mubr.f32.gmra.mrb[0].mxu0 %v7677
        %v7931 = vpop.f32.mrb[0].mxu0
        %v7932 = vadd.f32 0.0, %v7931
        %v7933 = vpop.f32.mrb[0].mxu0
        %7934 = vmatprep.mubr.f32.mxu0 %v7681
        %7935 = vmatmul.mubr.f32.gmra.mrb[0].mxu0 %v7680
        %v7936 = vpop.f32.mrb[0].mxu0
        %v7937 = vadd.f32 0.0, %v7936
        %v7938 = vpop.f32.mrb[0].mxu0
        %7939 = vmatprep.mubr.f32.mxu0 %v7684
        %7940 = vmatmul.mubr.f32.gmra.mrb[0].mxu0 %v7683
        %v7941 = vpop.f32.mrb[0].mxu0
        %v7942 = vadd.f32 0.0, %v7941
        %v7943 = vpop.f32.mrb[0].mxu0
        %7944 = vmatprep.mubr.f32.mxu0 %v7687
        %7945 = vmatmul.mubr.f32.gmra.mrb[0].mxu0 %v7686
        %v7946 = vpop.f32.mrb[0].mxu0
        %v7947 = vadd.f32 0.0, %v7946
        %v7948 = vpop.f32.mrb[0].mxu0
        %7949 = vmatprep.mubr.f32.mxu0 %v7690
        %7950 = vmatmul.mubr.f32.gmra.mrb[0].mxu0 %v7689
        %v7951 = vpop.f32.mrb[0].mxu0
        %v7952 = vadd.f32 0.0, %v7951
        %v7953 = vpop.f32.mrb[0].mxu0
        %7954 = vmatprep.mubr.f32.mxu0 %v7693
        %7955 = vmatmul.mubr.f32.gmra.mrb[0].mxu0 %v7692
        %v7956 = vpop.f32.mrb[0].mxu0
        %v7957 = vadd.f32 0.0, %v7956
        %v7958 = vpop.f32.mrb[0].mxu0
        %7959 = vmatprep.mubr.f32.mxu0 %v7696
        %7960 = vmatmul.mubr.f32.gmra.mrb[0].mxu0 %v7695
        %v7961 = vpop.f32.mrb[0].mxu0
        %v7962 = vadd.f32 0.0, %v7961
        %v7963 = vpop.f32.mrb[0].mxu0
        %7964 = vmatprep.mubr.f32.mxu0 %v7699
        %7965 = vmatmul.mubr.f32.gmra.mrb[0].mxu0 %v7698
        %v7966 = vpop.f32.mrb[0].mxu0
        %v7967 = vadd.f32 0.0, %v7966
        %v7968 = vpop.f32.mrb[0].mxu0
        %7969 = vmatprep.mubr.f32.mxu0 %v7702
        %7970 = vmatmul.mubr.f32.gmra.mrb[0].mxu0 %v7701
        %v7971 = vpop.f32.mrb[0].mxu0
        %v7972 = vadd.f32 0.0, %v7971
        %v7973 = vpop.f32.mrb[0].mxu0
        %7974 = vmatprep.mubr.f32.mxu0 %v7705
        %7975 = vmatmul.mubr.f32.gmra.mrb[0].mxu0 %v7704
        %v7976 = vpop.f32.mrb[0].mxu0
        %v7977 = vadd.f32 0.0, %v7976
        %v7978 = vpop.f32.mrb[0].mxu0
        %7979 = vdwg.mxu0
        %7980 = vmatprep.subr.mxu0 0.0
        %7981 = vmatpush1.msra.mxu0 %v7739
        %7982 = vmatprep.subr.mxu0 0.0
        %7983 = vmatpush1.msra.mxu0 %v7740
        %7984 = vmatprep.subr.mxu0 0.0
        %7985 = vmatpush1.msra.mxu0 %v7741
        %7986 = vmatprep.subr.mxu0 0.0
        %7987 = vmatpush1.msra.mxu0 %v7742
        %7988 = vmatprep.subr.mxu0 0.0
        %7989 = vmatpush1.msra.mxu0 %v7743
        %7990 = vmatprep.subr.mxu0 0.0
        %7991 = vmatpush1.msra.mxu0 %v7744
        %7992 = vmatprep.subr.mxu0 0.0
        %7993 = vmatpush1.msra.mxu0 %v7745
        %7994 = vmatprep.subr.mxu0 0.0
        %7995 = vmatpush1.msra.mxu0 %v7746
        %7996 = vmatprep.subr.mxu0 0.0
        %7997 = vmatpush1.msra.mxu0 %v7747
        %7998 = vmatprep.subr.mxu0 0.0
        %7999 = vmatpush1.msra.mxu0 %v7748
        %8000 = vmatprep.subr.mxu0 0.0
        %8001 = vmatpush1.msra.mxu0 %v7749
        %8002 = vmatprep.subr.mxu0 0.0
        %8003 = vmatpush1.msra.mxu0 %v7750
        %8004 = vmatprep.subr.mxu0 0.0
        %8005 = vmatpush1.msra.mxu0 %v7751
        %8006 = vmatprep.subr.mxu0 0.0
        %8007 = vmatpush1.msra.mxu0 %v7752
        %8008 = vmatprep.subr.mxu0 0.0
        %8009 = vmatpush1.msra.mxu0 %v7753
        %8010 = vmatprep.subr.mxu0 0.0
        %8011 = vmatpush1.msra.mxu0 %v7754
        %8012 = vmatprep.subr.mxu0 0.0
        %8013 = vmatpush1.msra.mxu0 0.0
        %8014 = vmatprep.subr.mxu0 0.0
        %8015 = vmatpush1.msra.mxu0 0.0
        %8016 = vmatprep.subr.mxu0 0.0
        %8017 = vmatpush1.msra.mxu0 0.0
        %8018 = vmatprep.subr.mxu0 0.0
        %8019 = vmatpush1.msra.mxu0 0.0
        %8020 = vmatprep.subr.mxu0 0.0
        %8021 = vmatpush1.msra.mxu0 0.0
        %8022 = vmatprep.subr.mxu0 0.0
        %8023 = vmatpush1.msra.mxu0 0.0
        %8024 = vmatprep.subr.mxu0 0.0
        %8025 = vmatpush1.msra.mxu0 0.0
        %8026 = vmatprep.subr.mxu0 0.0
        %8027 = vmatpush1.msra.mxu0 0.0
        %8028 = vmatprep.subr.mxu0 0.0
        %8029 = vmatpush1.msra.mxu0 0.0
        %8030 = vmatprep.subr.mxu0 0.0
        %8031 = vmatpush1.msra.mxu0 0.0
        %8032 = vmatprep.subr.mxu0 0.0
        %8033 = vmatpush1.msra.mxu0 0.0
        %8034 = vmatprep.subr.mxu0 0.0
        %8035 = vmatpush1.msra.mxu0 0.0
        %8036 = vmatprep.subr.mxu0 0.0
        %8037 = vmatpush1.msra.mxu0 0.0
        %8038 = vmatprep.subr.mxu0 0.0
        %8039 = vmatpush1.msra.mxu0 0.0
        %8040 = vmatprep.subr.mxu0 0.0
        %8041 = vmatpush1.msra.mxu0 0.0
        %8042 = vmatprep.subr.mxu0 0.0
        %8043 = vmatpush1.msra.mxu0 0.0
        %8044 = vmatprep.mubr.f32.mxu0 0.0
        %8045 = vmatmul.mubr.f32.gmra.mrb[0].mxu0 %v7613
        %v8046 = vpop.f32.mrb[0].mxu0
        %v8047 = vadd.f32 %v7822, %v8046
        %v8048 = vpop.f32.mrb[0].mxu0
        %8049 = vmatprep.mubr.f32.mxu0 0.0
        %8050 = vmatmul.mubr.f32.gmra.mrb[0].mxu0 %v7616
        %v8051 = vpop.f32.mrb[0].mxu0
        %v8052 = vadd.f32 %v7827, %v8051
        %v8053 = vpop.f32.mrb[0].mxu0
        %8054 = vmatprep.mubr.f32.mxu0 0.0
        %8055 = vmatmul.mubr.f32.gmra.mrb[0].mxu0 %v7619
        %v8056 = vpop.f32.mrb[0].mxu0
        %v8057 = vadd.f32 %v7832, %v8056
        %v8058 = vpop.f32.mrb[0].mxu0
        %8059 = vmatprep.mubr.f32.mxu0 0.0
        %8060 = vmatmul.mubr.f32.gmra.mrb[0].mxu0 %v7622
        %v8061 = vpop.f32.mrb[0].mxu0
        %v8062 = vadd.f32 %v7837, %v8061
        %v8063 = vpop.f32.mrb[0].mxu0
        %8064 = vmatprep.mubr.f32.mxu0 0.0
        %8065 = vmatmul.mubr.f32.gmra.mrb[0].mxu0 %v7625
        %v8066 = vpop.f32.mrb[0].mxu0
        %v8067 = vadd.f32 %v7842, %v8066
        %v8068 = vpop.f32.mrb[0].mxu0
        %8069 = vmatprep.mubr.f32.mxu0 0.0
        %8070 = vmatmul.mubr.f32.gmra.mrb[0].mxu0 %v7628
        %v8071 = vpop.f32.mrb[0].mxu0
        %v8072 = vadd.f32 %v7847, %v8071
        %v8073 = vpop.f32.mrb[0].mxu0
        %8074 = vmatprep.mubr.f32.mxu0 0.0
        %8075 = vmatmul.mubr.f32.gmra.mrb[0].mxu0 %v7631
        %v8076 = vpop.f32.mrb[0].mxu0
        %v8077 = vadd.f32 %v7852, %v8076
        %v8078 = vpop.f32.mrb[0].mxu0
        %8079 = vmatprep.mubr.f32.mxu0 0.0
        %8080 = vmatmul.mubr.f32.gmra.mrb[0].mxu0 %v7634
        %v8081 = vpop.f32.mrb[0].mxu0
        %v8082 = vadd.f32 %v7857, %v8081
        %v8083 = vpop.f32.mrb[0].mxu0
        %8084 = vmatprep.mubr.f32.mxu0 0.0
        %8085 = vmatmul.mubr.f32.gmra.mrb[0].mxu0 %v7637
        %v8086 = vpop.f32.mrb[0].mxu0
        %v8087 = vadd.f32 %v7862, %v8086
        %v8088 = vpop.f32.mrb[0].mxu0
        %8089 = vmatprep.mubr.f32.mxu0 0.0
        %8090 = vmatmul.mubr.f32.gmra.mrb[0].mxu0 %v7640
        %v8091 = vpop.f32.mrb[0].mxu0
        %v8092 = vadd.f32 %v7867, %v8091
        %v8093 = vpop.f32.mrb[0].mxu0
        %8094 = vmatprep.mubr.f32.mxu0 0.0
        %8095 = vmatmul.mubr.f32.gmra.mrb[0].mxu0 %v7643
        %v8096 = vpop.f32.mrb[0].mxu0
        %v8097 = vadd.f32 %v7872, %v8096
        %v8098 = vpop.f32.mrb[0].mxu0
        %8099 = vmatprep.mubr.f32.mxu0 0.0
        %8100 = vmatmul.mubr.f32.gmra.mrb[0].mxu0 %v7646
        %v8101 = vpop.f32.mrb[0].mxu0
        %v8102 = vadd.f32 %v7877, %v8101
        %v8103 = vpop.f32.mrb[0].mxu0
        %8104 = vmatprep.mubr.f32.mxu0 0.0
        %8105 = vmatmul.mubr.f32.gmra.mrb[0].mxu0 %v7649
        %v8106 = vpop.f32.mrb[0].mxu0
        %v8107 = vadd.f32 %v7882, %v8106
        %v8108 = vpop.f32.mrb[0].mxu0
        %8109 = vmatprep.mubr.f32.mxu0 0.0
        %8110 = vmatmul.mubr.f32.gmra.mrb[0].mxu0 %v7652
        %v8111 = vpop.f32.mrb[0].mxu0
        %v8112 = vadd.f32 %v7887, %v8111
        %v8113 = vpop.f32.mrb[0].mxu0
        %8114 = vmatprep.mubr.f32.mxu0 0.0
        %8115 = vmatmul.mubr.f32.gmra.mrb[0].mxu0 %v7655
        %v8116 = vpop.f32.mrb[0].mxu0
        %v8117 = vadd.f32 %v7892, %v8116
        %v8118 = vpop.f32.mrb[0].mxu0
        %8119 = vmatprep.mubr.f32.mxu0 0.0
        %8120 = vmatmul.mubr.f32.gmra.mrb[0].mxu0 %v7658
        %v8121 = vpop.f32.mrb[0].mxu0
        %v8122 = vadd.f32 %v7897, %v8121
        %v8123 = vpop.f32.mrb[0].mxu0
        %8124 = vmatprep.mubr.f32.mxu0 0.0
        %8125 = vmatmul.mubr.f32.gmra.mrb[0].mxu0 %v7661
        %v8126 = vpop.f32.mrb[0].mxu0
        %v8127 = vadd.f32 %v7902, %v8126
        %v8128 = vpop.f32.mrb[0].mxu0
        %8129 = vmatprep.mubr.f32.mxu0 0.0
        %8130 = vmatmul.mubr.f32.gmra.mrb[0].mxu0 %v7664
        %v8131 = vpop.f32.mrb[0].mxu0
        %v8132 = vadd.f32 %v7907, %v8131
        %v8133 = vpop.f32.mrb[0].mxu0
        %8134 = vmatprep.mubr.f32.mxu0 0.0
        %8135 = vmatmul.mubr.f32.gmra.mrb[0].mxu0 %v7667
        %v8136 = vpop.f32.mrb[0].mxu0
        %v8137 = vadd.f32 %v7912, %v8136
        %v8138 = vpop.f32.mrb[0].mxu0
        %8139 = vmatprep.mubr.f32.mxu0 0.0
        %8140 = vmatmul.mubr.f32.gmra.mrb[0].mxu0 %v7670
        %v8141 = vpop.f32.mrb[0].mxu0
        %v8142 = vadd.f32 %v7917, %v8141
        %v8143 = vpop.f32.mrb[0].mxu0
        %8144 = vmatprep.mubr.f32.mxu0 0.0
        %8145 = vmatmul.mubr.f32.gmra.mrb[0].mxu0 %v7673
        %v8146 = vpop.f32.mrb[0].mxu0
        %v8147 = vadd.f32 %v7922, %v8146
        %v8148 = vpop.f32.mrb[0].mxu0
        %8149 = vmatprep.mubr.f32.mxu0 0.0
        %8150 = vmatmul.mubr.f32.gmra.mrb[0].mxu0 %v7676
        %v8151 = vpop.f32.mrb[0].mxu0
        %v8152 = vadd.f32 %v7927, %v8151
        %v8153 = vpop.f32.mrb[0].mxu0
        %8154 = vmatprep.mubr.f32.mxu0 0.0
        %8155 = vmatmul.mubr.f32.gmra.mrb[0].mxu0 %v7679
        %v8156 = vpop.f32.mrb[0].mxu0
        %v8157 = vadd.f32 %v7932, %v8156
        %v8158 = vpop.f32.mrb[0].mxu0
        %8159 = vmatprep.mubr.f32.mxu0 0.0
        %8160 = vmatmul.mubr.f32.gmra.mrb[0].mxu0 %v7682
        %v8161 = vpop.f32.mrb[0].mxu0
        %v8162 = vadd.f32 %v7937, %v8161
        %v8163 = vpop.f32.mrb[0].mxu0
        %8164 = vmatprep.mubr.f32.mxu0 0.0
        %8165 = vmatmul.mubr.f32.gmra.mrb[0].mxu0 %v7685
        %v8166 = vpop.f32.mrb[0].mxu0
        %v8167 = vadd.f32 %v7942, %v8166
        %v8168 = vpop.f32.mrb[0].mxu0
        %8169 = vmatprep.mubr.f32.mxu0 0.0
        %8170 = vmatmul.mubr.f32.gmra.mrb[0].mxu0 %v7688
        %v8171 = vpop.f32.mrb[0].mxu0
        %v8172 = vadd.f32 %v7947, %v8171
        %v8173 = vpop.f32.mrb[0].mxu0
        %8174 = vmatprep.mubr.f32.mxu0 0.0
        %8175 = vmatmul.mubr.f32.gmra.mrb[0].mxu0 %v7691
        %v8176 = vpop.f32.mrb[0].mxu0
        %v8177 = vadd.f32 %v7952, %v8176
        %v8178 = vpop.f32.mrb[0].mxu0
        %8179 = vmatprep.mubr.f32.mxu0 0.0
        %8180 = vmatmul.mubr.f32.gmra.mrb[0].mxu0 %v7694
        %v8181 = vpop.f32.mrb[0].mxu0
        %v8182 = vadd.f32 %v7957, %v8181
        %v8183 = vpop.f32.mrb[0].mxu0
        %8184 = vmatprep.mubr.f32.mxu0 0.0
        %8185 = vmatmul.mubr.f32.gmra.mrb[0].mxu0 %v7697
        %v8186 = vpop.f32.mrb[0].mxu0
        %v8187 = vadd.f32 %v7962, %v8186
        %v8188 = vpop.f32.mrb[0].mxu0
        %8189 = vmatprep.mubr.f32.mxu0 0.0
        %8190 = vmatmul.mubr.f32.gmra.mrb[0].mxu0 %v7700
        %v8191 = vpop.f32.mrb[0].mxu0
        %v8192 = vadd.f32 %v7967, %v8191
        %v8193 = vpop.f32.mrb[0].mxu0
        %8194 = vmatprep.mubr.f32.mxu0 0.0
        %8195 = vmatmul.mubr.f32.gmra.mrb[0].mxu0 %v7703
        %v8196 = vpop.f32.mrb[0].mxu0
        %v8197 = vadd.f32 %v7972, %v8196
        %v8198 = vpop.f32.mrb[0].mxu0
        %8199 = vmatprep.mubr.f32.mxu0 0.0
        %8200 = vmatmul.mubr.f32.gmra.mrb[0].mxu0 %v7706
        %v8201 = vpop.f32.mrb[0].mxu0
        %v8202 = vadd.f32 %v7977, %v8201
        %v8203 = vpop.f32.mrb[0].mxu0
        %8204 = vdwg.mxu0
        %v8206 = vlaneseq
        %v8207 = vshrl.u32 %v8206, 7
        %v8208 = vsub.s32 0, %v8207
        %v8209 = vrot.slane %v7322, %v8208
        %v8211 = vadd.f32 %v8209, %v8047
        %v8212 = vadd.f32 %v8209, %v8052
        %v8213 = vadd.f32 %v8209, %v8057
        %v8214 = vadd.f32 %v8209, %v8062
        %v8215 = vadd.f32 %v8209, %v8067
        %v8216 = vadd.f32 %v8209, %v8072
        %v8217 = vadd.f32 %v8209, %v8077
        %v8218 = vadd.f32 %v8209, %v8082
        %v8219 = vadd.f32 %v8209, %v8087
        %v8220 = vadd.f32 %v8209, %v8092
        %v8221 = vadd.f32 %v8209, %v8097
        %v8222 = vadd.f32 %v8209, %v8102
        %v8223 = vadd.f32 %v8209, %v8107
        %v8224 = vadd.f32 %v8209, %v8112
        %v8225 = vadd.f32 %v8209, %v8117
        %v8226 = vadd.f32 %v8209, %v8122
        %v8227 = vadd.f32 %v8209, %v8127
        %v8228 = vadd.f32 %v8209, %v8132
        %v8229 = vadd.f32 %v8209, %v8137
        %v8230 = vadd.f32 %v8209, %v8142
        %v8231 = vadd.f32 %v8209, %v8147
        %v8232 = vadd.f32 %v8209, %v8152
        %v8233 = vadd.f32 %v8209, %v8157
        %v8234 = vadd.f32 %v8209, %v8162
        %v8235 = vadd.f32 %v8209, %v8167
        %v8236 = vadd.f32 %v8209, %v8172
        %v8237 = vadd.f32 %v8209, %v8177
        %v8238 = vadd.f32 %v8209, %v8182
        %v8239 = vadd.f32 %v8209, %v8187
        %v8240 = vadd.f32 %v8209, %v8192
        %v8241 = vadd.f32 %v8209, %v8197
        %v8242 = vadd.f32 %v8209, %v8202
        %v8243 = vld [vmem:[%s796] sm:$0xff]
        %v8244 = vld [vmem:[%s796 + $0x8] sm:$0xff]
        %v8245 = vld [vmem:[%s796 + $0x10] sm:$0xff]
        %v8246 = vld [vmem:[%s796 + $0x18] sm:$0xff]
        %v8247 = vld [vmem:[%s796 + $0x20] sm:$0xff]
        %v8248 = vld [vmem:[%s796 + $0x28] sm:$0xff]
        %v8249 = vld [vmem:[%s796 + $0x30] sm:$0xff]
        %v8250 = vld [vmem:[%s796 + $0x38] sm:$0xff]
        %v8251 = vld [vmem:[%s796 + $0x40] sm:$0xff]
        %v8252 = vld [vmem:[%s796 + $0x48] sm:$0xff]
        %v8253 = vld [vmem:[%s796 + $0x50] sm:$0xff]
        %v8254 = vld [vmem:[%s796 + $0x58] sm:$0xff]
        %v8255 = vld [vmem:[%s796 + $0x60] sm:$0xff]
        %v8256 = vld [vmem:[%s796 + $0x68] sm:$0xff]
        %v8257 = vld [vmem:[%s796 + $0x70] sm:$0xff]
        %v8258 = vld [vmem:[%s796 + $0x78] sm:$0xff]
        %v8259 = vld [vmem:[%s796 + $0x80] sm:$0xff]
        %v8260 = vld [vmem:[%s796 + $0x88] sm:$0xff]
        %v8261 = vld [vmem:[%s796 + $0x90] sm:$0xff]
        %v8262 = vld [vmem:[%s796 + $0x98] sm:$0xff]
        %v8263 = vld [vmem:[%s796 + $0xa0] sm:$0xff]
        %v8264 = vld [vmem:[%s796 + $0xa8] sm:$0xff]
        %v8265 = vld [vmem:[%s796 + $0xb0] sm:$0xff]
        %v8266 = vld [vmem:[%s796 + $0xb8] sm:$0xff]
        %v8267 = vld [vmem:[%s796 + $0xc0] sm:$0xff]
        %v8268 = vld [vmem:[%s796 + $0xc8] sm:$0xff]
        %v8269 = vld [vmem:[%s796 + $0xd0] sm:$0xff]
        %v8270 = vld [vmem:[%s796 + $0xd8] sm:$0xff]
        %v8271 = vld [vmem:[%s796 + $0xe0] sm:$0xff]
        %v8272 = vld [vmem:[%s796 + $0xe8] sm:$0xff]
        %v8273 = vld [vmem:[%s796 + $0xf0] sm:$0xff]
        %v8274 = vld [vmem:[%s796 + $0xf8] sm:$0xff]
        %v8275 = vld [vmem:[%s796 + $0x100] sm:$0xff]
        %v8276 = vld [vmem:[%s796 + $0x108] sm:$0xff]
        %v8277 = vld [vmem:[%s796 + $0x110] sm:$0xff]
        %v8278 = vld [vmem:[%s796 + $0x118] sm:$0xff]
        %v8279 = vld [vmem:[%s796 + $0x120] sm:$0xff]
        %v8280 = vld [vmem:[%s796 + $0x128] sm:$0xff]
        %v8281 = vld [vmem:[%s796 + $0x130] sm:$0xff]
        %v8282 = vld [vmem:[%s796 + $0x138] sm:$0xff]
        %v8283 = vld [vmem:[%s796 + $0x140] sm:$0xff]
        %v8284 = vld [vmem:[%s796 + $0x148] sm:$0xff]
        %v8285 = vld [vmem:[%s796 + $0x150] sm:$0xff]
        %v8286 = vld [vmem:[%s796 + $0x158] sm:$0xff]
        %v8287 = vld [vmem:[%s796 + $0x160] sm:$0xff]
        %v8288 = vld [vmem:[%s796 + $0x168] sm:$0xff]
        %v8289 = vld [vmem:[%s796 + $0x170] sm:$0xff]
        %v8290 = vld [vmem:[%s796 + $0x178] sm:$0xff]
        %v8291 = vld [vmem:[%s796 + $0x180] sm:$0xff]
        %v8292 = vld [vmem:[%s796 + $0x188] sm:$0xff]
        %v8293 = vld [vmem:[%s796 + $0x190] sm:$0xff]
        %v8294 = vld [vmem:[%s796 + $0x198] sm:$0xff]
        %v8295 = vld [vmem:[%s796 + $0x1a0] sm:$0xff]
        %v8296 = vld [vmem:[%s796 + $0x1a8] sm:$0xff]
        %v8297 = vld [vmem:[%s796 + $0x1b0] sm:$0xff]
        %v8298 = vld [vmem:[%s796 + $0x1b8] sm:$0xff]
        %v8299 = vld [vmem:[%s796 + $0x1c0] sm:$0xff]
        %v8300 = vld [vmem:[%s796 + $0x1c8] sm:$0xff]
        %v8301 = vld [vmem:[%s796 + $0x1d0] sm:$0xff]
        %v8302 = vld [vmem:[%s796 + $0x1d8] sm:$0xff]
        %v8303 = vld [vmem:[%s796 + $0x1e0] sm:$0xff]
        %v8304 = vld [vmem:[%s796 + $0x1e8] sm:$0xff]
        %v8305 = vld [vmem:[%s796 + $0x1f0] sm:$0xff]
        %v8306 = vld [vmem:[%s796 + $0x1f8] sm:$0xff]
        %v8307 = vld [vmem:[%s796 + $0x200] sm:$0xff]
        %v8308 = vld [vmem:[%s796 + $0x208] sm:$0xff]
        %v8309 = vld [vmem:[%s796 + $0x210] sm:$0xff]
        %v8310 = vld [vmem:[%s796 + $0x218] sm:$0xff]
        %v8311 = vld [vmem:[%s796 + $0x220] sm:$0xff]
        %v8312 = vld [vmem:[%s796 + $0x228] sm:$0xff]
        %v8313 = vld [vmem:[%s796 + $0x230] sm:$0xff]
        %v8314 = vld [vmem:[%s796 + $0x238] sm:$0xff]
        %v8315 = vld [vmem:[%s796 + $0x240] sm:$0xff]
        %v8316 = vld [vmem:[%s796 + $0x248] sm:$0xff]
        %v8317 = vld [vmem:[%s796 + $0x250] sm:$0xff]
        %v8318 = vld [vmem:[%s796 + $0x258] sm:$0xff]
        %v8319 = vld [vmem:[%s796 + $0x260] sm:$0xff]
        %v8320 = vld [vmem:[%s796 + $0x268] sm:$0xff]
        %v8321 = vld [vmem:[%s796 + $0x270] sm:$0xff]
        %v8322 = vld [vmem:[%s796 + $0x278] sm:$0xff]
        %v8323 = vld [vmem:[%s796 + $0x280] sm:$0xff]
        %v8324 = vld [vmem:[%s796 + $0x288] sm:$0xff]
        %v8325 = vld [vmem:[%s796 + $0x290] sm:$0xff]
        %v8326 = vld [vmem:[%s796 + $0x298] sm:$0xff]
        %v8327 = vld [vmem:[%s796 + $0x2a0] sm:$0xff]
        %v8328 = vld [vmem:[%s796 + $0x2a8] sm:$0xff]
        %v8329 = vld [vmem:[%s796 + $0x2b0] sm:$0xff]
        %v8330 = vld [vmem:[%s796 + $0x2b8] sm:$0xff]
        %v8331 = vld [vmem:[%s796 + $0x2c0] sm:$0xff]
        %v8332 = vld [vmem:[%s796 + $0x2c8] sm:$0xff]
        %v8333 = vld [vmem:[%s796 + $0x2d0] sm:$0xff]
        %v8334 = vld [vmem:[%s796 + $0x2d8] sm:$0xff]
        %v8335 = vld [vmem:[%s796 + $0x2e0] sm:$0xff]
        %v8336 = vld [vmem:[%s796 + $0x2e8] sm:$0xff]
        %v8337 = vld [vmem:[%s796 + $0x2f0] sm:$0xff]
        %v8338 = vld [vmem:[%s796 + $0x2f8] sm:$0xff]
        %s8339 = scalar_lea.vmem [#allocation12], 384
        %v8340 = vld [vmem:[%s8339] sm:$0xff]
        %v8341 = vld [vmem:[%s8339 + $0x8] sm:$0xff]
        %v8342 = vld [vmem:[%s8339 + $0x10] sm:$0xff]
        %v8343 = vld [vmem:[%s8339 + $0x18] sm:$0xff]
        %v8344 = vld [vmem:[%s8339 + $0x20] sm:$0xff]
        %v8345 = vld [vmem:[%s8339 + $0x28] sm:$0xff]
        %v8346 = vld [vmem:[%s8339 + $0x30] sm:$0xff]
        %v8347 = vld [vmem:[%s8339 + $0x38] sm:$0xff]
        %v8348 = vld [vmem:[%s8339 + $0x40] sm:$0xff]
        %v8349 = vld [vmem:[%s8339 + $0x48] sm:$0xff]
        %v8350 = vld [vmem:[%s8339 + $0x50] sm:$0xff]
        %v8351 = vld [vmem:[%s8339 + $0x58] sm:$0xff]
        %v8352 = vld [vmem:[%s8339 + $0x60] sm:$0xff]
        %v8353 = vld [vmem:[%s8339 + $0x68] sm:$0xff]
        %v8354 = vld [vmem:[%s8339 + $0x70] sm:$0xff]
        %v8355 = vld [vmem:[%s8339 + $0x78] sm:$0xff]
        %v8356 = vld [vmem:[%s8339 + $0x80] sm:$0xff]
        %v8357 = vld [vmem:[%s8339 + $0x88] sm:$0xff]
        %v8358 = vld [vmem:[%s8339 + $0x90] sm:$0xff]
        %v8359 = vld [vmem:[%s8339 + $0x98] sm:$0xff]
        %v8360 = vld [vmem:[%s8339 + $0xa0] sm:$0xff]
        %v8361 = vld [vmem:[%s8339 + $0xa8] sm:$0xff]
        %v8362 = vld [vmem:[%s8339 + $0xb0] sm:$0xff]
        %v8363 = vld [vmem:[%s8339 + $0xb8] sm:$0xff]
        %v8364 = vld [vmem:[%s8339 + $0xc0] sm:$0xff]
        %v8365 = vld [vmem:[%s8339 + $0xc8] sm:$0xff]
        %v8366 = vld [vmem:[%s8339 + $0xd0] sm:$0xff]
        %v8367 = vld [vmem:[%s8339 + $0xd8] sm:$0xff]
        %v8368 = vld [vmem:[%s8339 + $0xe0] sm:$0xff]
        %v8369 = vld [vmem:[%s8339 + $0xe8] sm:$0xff]
        %v8370 = vld [vmem:[%s8339 + $0xf0] sm:$0xff]
        %v8371 = vld [vmem:[%s8339 + $0xf8] sm:$0xff]
        %v8372 = vld [vmem:[%s8339 + $0x100] sm:$0xff]
        %v8373 = vld [vmem:[%s8339 + $0x108] sm:$0xff]
        %v8374 = vld [vmem:[%s8339 + $0x110] sm:$0xff]
        %v8375 = vld [vmem:[%s8339 + $0x118] sm:$0xff]
        %v8376 = vld [vmem:[%s8339 + $0x120] sm:$0xff]
        %v8377 = vld [vmem:[%s8339 + $0x128] sm:$0xff]
        %v8378 = vld [vmem:[%s8339 + $0x130] sm:$0xff]
        %v8379 = vld [vmem:[%s8339 + $0x138] sm:$0xff]
        %v8380 = vld [vmem:[%s8339 + $0x140] sm:$0xff]
        %v8381 = vld [vmem:[%s8339 + $0x148] sm:$0xff]
        %v8382 = vld [vmem:[%s8339 + $0x150] sm:$0xff]
        %v8383 = vld [vmem:[%s8339 + $0x158] sm:$0xff]
        %v8384 = vld [vmem:[%s8339 + $0x160] sm:$0xff]
        %v8385 = vld [vmem:[%s8339 + $0x168] sm:$0xff]
        %v8386 = vld [vmem:[%s8339 + $0x170] sm:$0xff]
        %v8387 = vld [vmem:[%s8339 + $0x178] sm:$0xff]
        %8388 = vmatprep.subr.mxu0 0.0
        %8389 = vmatpush1.msra.mxu0 %v8340
        %8390 = vmatprep.subr.mxu0 0.0
        %8391 = vmatpush1.msra.mxu0 %v8341
        %8392 = vmatprep.subr.mxu0 0.0
        %8393 = vmatpush1.msra.mxu0 %v8342
        %8394 = vmatprep.subr.mxu0 0.0
        %8395 = vmatpush1.msra.mxu0 %v8343
        %8396 = vmatprep.subr.mxu0 0.0
        %8397 = vmatpush1.msra.mxu0 %v8344
        %8398 = vmatprep.subr.mxu0 0.0
        %8399 = vmatpush1.msra.mxu0 %v8345
        %8400 = vmatprep.subr.mxu0 0.0
        %8401 = vmatpush1.msra.mxu0 %v8346
        %8402 = vmatprep.subr.mxu0 0.0
        %8403 = vmatpush1.msra.mxu0 %v8347
        %8404 = vmatprep.subr.mxu0 0.0
        %8405 = vmatpush1.msra.mxu0 %v8348
        %8406 = vmatprep.subr.mxu0 0.0
        %8407 = vmatpush1.msra.mxu0 %v8349
        %8408 = vmatprep.subr.mxu0 0.0
        %8409 = vmatpush1.msra.mxu0 %v8350
        %8410 = vmatprep.subr.mxu0 0.0
        %8411 = vmatpush1.msra.mxu0 %v8351
        %8412 = vmatprep.subr.mxu0 0.0
        %8413 = vmatpush1.msra.mxu0 %v8352
        %8414 = vmatprep.subr.mxu0 0.0
        %8415 = vmatpush1.msra.mxu0 %v8353
        %8416 = vmatprep.subr.mxu0 0.0
        %8417 = vmatpush1.msra.mxu0 %v8354
        %8418 = vmatprep.subr.mxu0 0.0
        %8419 = vmatpush1.msra.mxu0 %v8355
        %8420 = vmatprep.subr.mxu0 0.0
        %8421 = vmatpush1.msra.mxu0 %v8356
        %8422 = vmatprep.subr.mxu0 0.0
        %8423 = vmatpush1.msra.mxu0 %v8357
        %8424 = vmatprep.subr.mxu0 0.0
        %8425 = vmatpush1.msra.mxu0 %v8358
        %8426 = vmatprep.subr.mxu0 0.0
        %8427 = vmatpush1.msra.mxu0 %v8359
        %8428 = vmatprep.subr.mxu0 0.0
        %8429 = vmatpush1.msra.mxu0 %v8360
        %8430 = vmatprep.subr.mxu0 0.0
        %8431 = vmatpush1.msra.mxu0 %v8361
        %8432 = vmatprep.subr.mxu0 0.0
        %8433 = vmatpush1.msra.mxu0 %v8362
        %8434 = vmatprep.subr.mxu0 0.0
        %8435 = vmatpush1.msra.mxu0 %v8363
        %8436 = vmatprep.subr.mxu0 0.0
        %8437 = vmatpush1.msra.mxu0 %v8364
        %8438 = vmatprep.subr.mxu0 0.0
        %8439 = vmatpush1.msra.mxu0 %v8365
        %8440 = vmatprep.subr.mxu0 0.0
        %8441 = vmatpush1.msra.mxu0 %v8366
        %8442 = vmatprep.subr.mxu0 0.0
        %8443 = vmatpush1.msra.mxu0 %v8367
        %8444 = vmatprep.subr.mxu0 0.0
        %8445 = vmatpush1.msra.mxu0 %v8368
        %8446 = vmatprep.subr.mxu0 0.0
        %8447 = vmatpush1.msra.mxu0 %v8369
        %8448 = vmatprep.subr.mxu0 0.0
        %8449 = vmatpush1.msra.mxu0 %v8370
        %8450 = vmatprep.subr.mxu0 0.0
        %8451 = vmatpush1.msra.mxu0 %v8371
        %8452 = vmatprep.mubr.f32.mxu0 %v8244
        %8453 = vmatmul.mubr.f32.gmra.mrb[0].mxu0 %v8243
        %v8454 = vpop.f32.mrb[0].mxu0
        %v8455 = vadd.f32 0.0, %v8454
        %v8456 = vpop.f32.mrb[0].mxu0
        %8457 = vmatprep.mubr.f32.mxu0 %v8247
        %8458 = vmatmul.mubr.f32.gmra.mrb[0].mxu0 %v8246
        %v8459 = vpop.f32.mrb[0].mxu0
        %v8460 = vadd.f32 0.0, %v8459
        %v8461 = vpop.f32.mrb[0].mxu0
        %8462 = vmatprep.mubr.f32.mxu0 %v8250
        %8463 = vmatmul.mubr.f32.gmra.mrb[0].mxu0 %v8249
        %v8464 = vpop.f32.mrb[0].mxu0
        %v8465 = vadd.f32 0.0, %v8464
        %v8466 = vpop.f32.mrb[0].mxu0
        %8467 = vmatprep.mubr.f32.mxu0 %v8253
        %8468 = vmatmul.mubr.f32.gmra.mrb[0].mxu0 %v8252
        %v8469 = vpop.f32.mrb[0].mxu0
        %v8470 = vadd.f32 0.0, %v8469
        %v8471 = vpop.f32.mrb[0].mxu0
        %8472 = vmatprep.mubr.f32.mxu0 %v8256
        %8473 = vmatmul.mubr.f32.gmra.mrb[0].mxu0 %v8255
        %v8474 = vpop.f32.mrb[0].mxu0
        %v8475 = vadd.f32 0.0, %v8474
        %v8476 = vpop.f32.mrb[0].mxu0
        %8477 = vmatprep.mubr.f32.mxu0 %v8259
        %8478 = vmatmul.mubr.f32.gmra.mrb[0].mxu0 %v8258
        %v8479 = vpop.f32.mrb[0].mxu0
        %v8480 = vadd.f32 0.0, %v8479
        %v8481 = vpop.f32.mrb[0].mxu0
        %8482 = vmatprep.mubr.f32.mxu0 %v8262
        %8483 = vmatmul.mubr.f32.gmra.mrb[0].mxu0 %v8261
        %v8484 = vpop.f32.mrb[0].mxu0
        %v8485 = vadd.f32 0.0, %v8484
        %v8486 = vpop.f32.mrb[0].mxu0
        %8487 = vmatprep.mubr.f32.mxu0 %v8265
        %8488 = vmatmul.mubr.f32.gmra.mrb[0].mxu0 %v8264
        %v8489 = vpop.f32.mrb[0].mxu0
        %v8490 = vadd.f32 0.0, %v8489
        %v8491 = vpop.f32.mrb[0].mxu0
        %8492 = vmatprep.mubr.f32.mxu0 %v8268
        %8493 = vmatmul.mubr.f32.gmra.mrb[0].mxu0 %v8267
        %v8494 = vpop.f32.mrb[0].mxu0
        %v8495 = vadd.f32 0.0, %v8494
        %v8496 = vpop.f32.mrb[0].mxu0
        %8497 = vmatprep.mubr.f32.mxu0 %v8271
        %8498 = vmatmul.mubr.f32.gmra.mrb[0].mxu0 %v8270
        %v8499 = vpop.f32.mrb[0].mxu0
        %v8500 = vadd.f32 0.0, %v8499
        %v8501 = vpop.f32.mrb[0].mxu0
        %8502 = vmatprep.mubr.f32.mxu0 %v8274
        %8503 = vmatmul.mubr.f32.gmra.mrb[0].mxu0 %v8273
        %v8504 = vpop.f32.mrb[0].mxu0
        %v8505 = vadd.f32 0.0, %v8504
        %v8506 = vpop.f32.mrb[0].mxu0
        %8507 = vmatprep.mubr.f32.mxu0 %v8277
        %8508 = vmatmul.mubr.f32.gmra.mrb[0].mxu0 %v8276
        %v8509 = vpop.f32.mrb[0].mxu0
        %v8510 = vadd.f32 0.0, %v8509
        %v8511 = vpop.f32.mrb[0].mxu0
        %8512 = vmatprep.mubr.f32.mxu0 %v8280
        %8513 = vmatmul.mubr.f32.gmra.mrb[0].mxu0 %v8279
        %v8514 = vpop.f32.mrb[0].mxu0
        %v8515 = vadd.f32 0.0, %v8514
        %v8516 = vpop.f32.mrb[0].mxu0
        %8517 = vmatprep.mubr.f32.mxu0 %v8283
        %8518 = vmatmul.mubr.f32.gmra.mrb[0].mxu0 %v8282
        %v8519 = vpop.f32.mrb[0].mxu0
        %v8520 = vadd.f32 0.0, %v8519
        %v8521 = vpop.f32.mrb[0].mxu0
        %8522 = vmatprep.mubr.f32.mxu0 %v8286
        %8523 = vmatmul.mubr.f32.gmra.mrb[0].mxu0 %v8285
        %v8524 = vpop.f32.mrb[0].mxu0
        %v8525 = vadd.f32 0.0, %v8524
        %v8526 = vpop.f32.mrb[0].mxu0
        %8527 = vmatprep.mubr.f32.mxu0 %v8289
        %8528 = vmatmul.mubr.f32.gmra.mrb[0].mxu0 %v8288
        %v8529 = vpop.f32.mrb[0].mxu0
        %v8530 = vadd.f32 0.0, %v8529
        %v8531 = vpop.f32.mrb[0].mxu0
        %8532 = vmatprep.mubr.f32.mxu0 %v8292
        %8533 = vmatmul.mubr.f32.gmra.mrb[0].mxu0 %v8291
        %v8534 = vpop.f32.mrb[0].mxu0
        %v8535 = vadd.f32 0.0, %v8534
        %v8536 = vpop.f32.mrb[0].mxu0
        %8537 = vmatprep.mubr.f32.mxu0 %v8295
        %8538 = vmatmul.mubr.f32.gmra.mrb[0].mxu0 %v8294
        %v8539 = vpop.f32.mrb[0].mxu0
        %v8540 = vadd.f32 0.0, %v8539
        %v8541 = vpop.f32.mrb[0].mxu0
        %8542 = vmatprep.mubr.f32.mxu0 %v8298
        %8543 = vmatmul.mubr.f32.gmra.mrb[0].mxu0 %v8297
        %v8544 = vpop.f32.mrb[0].mxu0
        %v8545 = vadd.f32 0.0, %v8544
        %v8546 = vpop.f32.mrb[0].mxu0
        %8547 = vmatprep.mubr.f32.mxu0 %v8301
        %8548 = vmatmul.mubr.f32.gmra.mrb[0].mxu0 %v8300
        %v8549 = vpop.f32.mrb[0].mxu0
        %v8550 = vadd.f32 0.0, %v8549
        %v8551 = vpop.f32.mrb[0].mxu0
        %8552 = vmatprep.mubr.f32.mxu0 %v8304
        %8553 = vmatmul.mubr.f32.gmra.mrb[0].mxu0 %v8303
        %v8554 = vpop.f32.mrb[0].mxu0
        %v8555 = vadd.f32 0.0, %v8554
        %v8556 = vpop.f32.mrb[0].mxu0
        %8557 = vmatprep.mubr.f32.mxu0 %v8307
        %8558 = vmatmul.mubr.f32.gmra.mrb[0].mxu0 %v8306
        %v8559 = vpop.f32.mrb[0].mxu0
        %v8560 = vadd.f32 0.0, %v8559
        %v8561 = vpop.f32.mrb[0].mxu0
        %8562 = vmatprep.mubr.f32.mxu0 %v8310
        %8563 = vmatmul.mubr.f32.gmra.mrb[0].mxu0 %v8309
        %v8564 = vpop.f32.mrb[0].mxu0
        %v8565 = vadd.f32 0.0, %v8564
        %v8566 = vpop.f32.mrb[0].mxu0
        %8567 = vmatprep.mubr.f32.mxu0 %v8313
        %8568 = vmatmul.mubr.f32.gmra.mrb[0].mxu0 %v8312
        %v8569 = vpop.f32.mrb[0].mxu0
        %v8570 = vadd.f32 0.0, %v8569
        %v8571 = vpop.f32.mrb[0].mxu0
        %8572 = vmatprep.mubr.f32.mxu0 %v8316
        %8573 = vmatmul.mubr.f32.gmra.mrb[0].mxu0 %v8315
        %v8574 = vpop.f32.mrb[0].mxu0
        %v8575 = vadd.f32 0.0, %v8574
        %v8576 = vpop.f32.mrb[0].mxu0
        %8577 = vmatprep.mubr.f32.mxu0 %v8319
        %8578 = vmatmul.mubr.f32.gmra.mrb[0].mxu0 %v8318
        %v8579 = vpop.f32.mrb[0].mxu0
        %v8580 = vadd.f32 0.0, %v8579
        %v8581 = vpop.f32.mrb[0].mxu0
        %8582 = vmatprep.mubr.f32.mxu0 %v8322
        %8583 = vmatmul.mubr.f32.gmra.mrb[0].mxu0 %v8321
        %v8584 = vpop.f32.mrb[0].mxu0
        %v8585 = vadd.f32 0.0, %v8584
        %v8586 = vpop.f32.mrb[0].mxu0
        %8587 = vmatprep.mubr.f32.mxu0 %v8325
        %8588 = vmatmul.mubr.f32.gmra.mrb[0].mxu0 %v8324
        %v8589 = vpop.f32.mrb[0].mxu0
        %v8590 = vadd.f32 0.0, %v8589
        %v8591 = vpop.f32.mrb[0].mxu0
        %8592 = vmatprep.mubr.f32.mxu0 %v8328
        %8593 = vmatmul.mubr.f32.gmra.mrb[0].mxu0 %v8327
        %v8594 = vpop.f32.mrb[0].mxu0
        %v8595 = vadd.f32 0.0, %v8594
        %v8596 = vpop.f32.mrb[0].mxu0
        %8597 = vmatprep.mubr.f32.mxu0 %v8331
        %8598 = vmatmul.mubr.f32.gmra.mrb[0].mxu0 %v8330
        %v8599 = vpop.f32.mrb[0].mxu0
        %v8600 = vadd.f32 0.0, %v8599
        %v8601 = vpop.f32.mrb[0].mxu0
        %8602 = vmatprep.mubr.f32.mxu0 %v8334
        %8603 = vmatmul.mubr.f32.gmra.mrb[0].mxu0 %v8333
        %v8604 = vpop.f32.mrb[0].mxu0
        %v8605 = vadd.f32 0.0, %v8604
        %v8606 = vpop.f32.mrb[0].mxu0
        %8607 = vmatprep.mubr.f32.mxu0 %v8337
        %8608 = vmatmul.mubr.f32.gmra.mrb[0].mxu0 %v8336
        %v8609 = vpop.f32.mrb[0].mxu0
        %v8610 = vadd.f32 0.0, %v8609
        %v8611 = vpop.f32.mrb[0].mxu0
        %8612 = vdwg.mxu0
        %8613 = vmatprep.subr.mxu0 0.0
        %8614 = vmatpush1.msra.mxu0 %v8372
        %8615 = vmatprep.subr.mxu0 0.0
        %8616 = vmatpush1.msra.mxu0 %v8373
        %8617 = vmatprep.subr.mxu0 0.0
        %8618 = vmatpush1.msra.mxu0 %v8374
        %8619 = vmatprep.subr.mxu0 0.0
        %8620 = vmatpush1.msra.mxu0 %v8375
        %8621 = vmatprep.subr.mxu0 0.0
        %8622 = vmatpush1.msra.mxu0 %v8376
        %8623 = vmatprep.subr.mxu0 0.0
        %8624 = vmatpush1.msra.mxu0 %v8377
        %8625 = vmatprep.subr.mxu0 0.0
        %8626 = vmatpush1.msra.mxu0 %v8378
        %8627 = vmatprep.subr.mxu0 0.0
        %8628 = vmatpush1.msra.mxu0 %v8379
        %8629 = vmatprep.subr.mxu0 0.0
        %8630 = vmatpush1.msra.mxu0 %v8380
        %8631 = vmatprep.subr.mxu0 0.0
        %8632 = vmatpush1.msra.mxu0 %v8381
        %8633 = vmatprep.subr.mxu0 0.0
        %8634 = vmatpush1.msra.mxu0 %v8382
        %8635 = vmatprep.subr.mxu0 0.0
        %8636 = vmatpush1.msra.mxu0 %v8383
        %8637 = vmatprep.subr.mxu0 0.0
        %8638 = vmatpush1.msra.mxu0 %v8384
        %8639 = vmatprep.subr.mxu0 0.0
        %8640 = vmatpush1.msra.mxu0 %v8385
        %8641 = vmatprep.subr.mxu0 0.0
        %8642 = vmatpush1.msra.mxu0 %v8386
        %8643 = vmatprep.subr.mxu0 0.0
        %8644 = vmatpush1.msra.mxu0 %v8387
        %8645 = vmatprep.subr.mxu0 0.0
        %8646 = vmatpush1.msra.mxu0 0.0
        %8647 = vmatprep.subr.mxu0 0.0
        %8648 = vmatpush1.msra.mxu0 0.0
        %8649 = vmatprep.subr.mxu0 0.0
        %8650 = vmatpush1.msra.mxu0 0.0
        %8651 = vmatprep.subr.mxu0 0.0
        %8652 = vmatpush1.msra.mxu0 0.0
        %8653 = vmatprep.subr.mxu0 0.0
        %8654 = vmatpush1.msra.mxu0 0.0
        %8655 = vmatprep.subr.mxu0 0.0
        %8656 = vmatpush1.msra.mxu0 0.0
        %8657 = vmatprep.subr.mxu0 0.0
        %8658 = vmatpush1.msra.mxu0 0.0
        %8659 = vmatprep.subr.mxu0 0.0
        %8660 = vmatpush1.msra.mxu0 0.0
        %8661 = vmatprep.subr.mxu0 0.0
        %8662 = vmatpush1.msra.mxu0 0.0
        %8663 = vmatprep.subr.mxu0 0.0
        %8664 = vmatpush1.msra.mxu0 0.0
        %8665 = vmatprep.subr.mxu0 0.0
        %8666 = vmatpush1.msra.mxu0 0.0
        %8667 = vmatprep.subr.mxu0 0.0
        %8668 = vmatpush1.msra.mxu0 0.0
        %8669 = vmatprep.subr.mxu0 0.0
        %8670 = vmatpush1.msra.mxu0 0.0
        %8671 = vmatprep.subr.mxu0 0.0
        %8672 = vmatpush1.msra.mxu0 0.0
        %8673 = vmatprep.subr.mxu0 0.0
        %8674 = vmatpush1.msra.mxu0 0.0
        %8675 = vmatprep.subr.mxu0 0.0
        %8676 = vmatpush1.msra.mxu0 0.0
        %8677 = vmatprep.mubr.f32.mxu0 0.0
        %8678 = vmatmul.mubr.f32.gmra.mrb[0].mxu0 %v8245
        %v8679 = vpop.f32.mrb[0].mxu0
        %v8680 = vadd.f32 %v8455, %v8679
        %v8681 = vpop.f32.mrb[0].mxu0
        %8682 = vmatprep.mubr.f32.mxu0 0.0
        %8683 = vmatmul.mubr.f32.gmra.mrb[0].mxu0 %v8248
        %v8684 = vpop.f32.mrb[0].mxu0
        %v8685 = vadd.f32 %v8460, %v8684
        %v8686 = vpop.f32.mrb[0].mxu0
        %8687 = vmatprep.mubr.f32.mxu0 0.0
        %8688 = vmatmul.mubr.f32.gmra.mrb[0].mxu0 %v8251
        %v8689 = vpop.f32.mrb[0].mxu0
        %v8690 = vadd.f32 %v8465, %v8689
        %v8691 = vpop.f32.mrb[0].mxu0
        %8692 = vmatprep.mubr.f32.mxu0 0.0
        %8693 = vmatmul.mubr.f32.gmra.mrb[0].mxu0 %v8254
        %v8694 = vpop.f32.mrb[0].mxu0
        %v8695 = vadd.f32 %v8470, %v8694
        %v8696 = vpop.f32.mrb[0].mxu0
        %8697 = vmatprep.mubr.f32.mxu0 0.0
        %8698 = vmatmul.mubr.f32.gmra.mrb[0].mxu0 %v8257
        %v8699 = vpop.f32.mrb[0].mxu0
        %v8700 = vadd.f32 %v8475, %v8699
        %v8701 = vpop.f32.mrb[0].mxu0
        %8702 = vmatprep.mubr.f32.mxu0 0.0
        %8703 = vmatmul.mubr.f32.gmra.mrb[0].mxu0 %v8260
        %v8704 = vpop.f32.mrb[0].mxu0
        %v8705 = vadd.f32 %v8480, %v8704
        %v8706 = vpop.f32.mrb[0].mxu0
        %8707 = vmatprep.mubr.f32.mxu0 0.0
        %8708 = vmatmul.mubr.f32.gmra.mrb[0].mxu0 %v8263
        %v8709 = vpop.f32.mrb[0].mxu0
        %v8710 = vadd.f32 %v8485, %v8709
        %v8711 = vpop.f32.mrb[0].mxu0
        %8712 = vmatprep.mubr.f32.mxu0 0.0
        %8713 = vmatmul.mubr.f32.gmra.mrb[0].mxu0 %v8266
        %v8714 = vpop.f32.mrb[0].mxu0
        %v8715 = vadd.f32 %v8490, %v8714
        %v8716 = vpop.f32.mrb[0].mxu0
        %8717 = vmatprep.mubr.f32.mxu0 0.0
        %8718 = vmatmul.mubr.f32.gmra.mrb[0].mxu0 %v8269
        %v8719 = vpop.f32.mrb[0].mxu0
        %v8720 = vadd.f32 %v8495, %v8719
        %v8721 = vpop.f32.mrb[0].mxu0
        %8722 = vmatprep.mubr.f32.mxu0 0.0
        %8723 = vmatmul.mubr.f32.gmra.mrb[0].mxu0 %v8272
        %v8724 = vpop.f32.mrb[0].mxu0
        %v8725 = vadd.f32 %v8500, %v8724
        %v8726 = vpop.f32.mrb[0].mxu0
        %8727 = vmatprep.mubr.f32.mxu0 0.0
        %8728 = vmatmul.mubr.f32.gmra.mrb[0].mxu0 %v8275
        %v8729 = vpop.f32.mrb[0].mxu0
        %v8730 = vadd.f32 %v8505, %v8729
        %v8731 = vpop.f32.mrb[0].mxu0
        %8732 = vmatprep.mubr.f32.mxu0 0.0
        %8733 = vmatmul.mubr.f32.gmra.mrb[0].mxu0 %v8278
        %v8734 = vpop.f32.mrb[0].mxu0
        %v8735 = vadd.f32 %v8510, %v8734
        %v8736 = vpop.f32.mrb[0].mxu0
        %8737 = vmatprep.mubr.f32.mxu0 0.0
        %8738 = vmatmul.mubr.f32.gmra.mrb[0].mxu0 %v8281
        %v8739 = vpop.f32.mrb[0].mxu0
        %v8740 = vadd.f32 %v8515, %v8739
        %v8741 = vpop.f32.mrb[0].mxu0
        %8742 = vmatprep.mubr.f32.mxu0 0.0
        %8743 = vmatmul.mubr.f32.gmra.mrb[0].mxu0 %v8284
        %v8744 = vpop.f32.mrb[0].mxu0
        %v8745 = vadd.f32 %v8520, %v8744
        %v8746 = vpop.f32.mrb[0].mxu0
        %8747 = vmatprep.mubr.f32.mxu0 0.0
        %8748 = vmatmul.mubr.f32.gmra.mrb[0].mxu0 %v8287
        %v8749 = vpop.f32.mrb[0].mxu0
        %v8750 = vadd.f32 %v8525, %v8749
        %v8751 = vpop.f32.mrb[0].mxu0
        %8752 = vmatprep.mubr.f32.mxu0 0.0
        %8753 = vmatmul.mubr.f32.gmra.mrb[0].mxu0 %v8290
        %v8754 = vpop.f32.mrb[0].mxu0
        %v8755 = vadd.f32 %v8530, %v8754
        %v8756 = vpop.f32.mrb[0].mxu0
        %8757 = vmatprep.mubr.f32.mxu0 0.0
        %8758 = vmatmul.mubr.f32.gmra.mrb[0].mxu0 %v8293
        %v8759 = vpop.f32.mrb[0].mxu0
        %v8760 = vadd.f32 %v8535, %v8759
        %v8761 = vpop.f32.mrb[0].mxu0
        %8762 = vmatprep.mubr.f32.mxu0 0.0
        %8763 = vmatmul.mubr.f32.gmra.mrb[0].mxu0 %v8296
        %v8764 = vpop.f32.mrb[0].mxu0
        %v8765 = vadd.f32 %v8540, %v8764
        %v8766 = vpop.f32.mrb[0].mxu0
        %8767 = vmatprep.mubr.f32.mxu0 0.0
        %8768 = vmatmul.mubr.f32.gmra.mrb[0].mxu0 %v8299
        %v8769 = vpop.f32.mrb[0].mxu0
        %v8770 = vadd.f32 %v8545, %v8769
        %v8771 = vpop.f32.mrb[0].mxu0
        %8772 = vmatprep.mubr.f32.mxu0 0.0
        %8773 = vmatmul.mubr.f32.gmra.mrb[0].mxu0 %v8302
        %v8774 = vpop.f32.mrb[0].mxu0
        %v8775 = vadd.f32 %v8550, %v8774
        %v8776 = vpop.f32.mrb[0].mxu0
        %8777 = vmatprep.mubr.f32.mxu0 0.0
        %8778 = vmatmul.mubr.f32.gmra.mrb[0].mxu0 %v8305
        %v8779 = vpop.f32.mrb[0].mxu0
        %v8780 = vadd.f32 %v8555, %v8779
        %v8781 = vpop.f32.mrb[0].mxu0
        %8782 = vmatprep.mubr.f32.mxu0 0.0
        %8783 = vmatmul.mubr.f32.gmra.mrb[0].mxu0 %v8308
        %v8784 = vpop.f32.mrb[0].mxu0
        %v8785 = vadd.f32 %v8560, %v8784
        %v8786 = vpop.f32.mrb[0].mxu0
        %8787 = vmatprep.mubr.f32.mxu0 0.0
        %8788 = vmatmul.mubr.f32.gmra.mrb[0].mxu0 %v8311
        %v8789 = vpop.f32.mrb[0].mxu0
        %v8790 = vadd.f32 %v8565, %v8789
        %v8791 = vpop.f32.mrb[0].mxu0
        %8792 = vmatprep.mubr.f32.mxu0 0.0
        %8793 = vmatmul.mubr.f32.gmra.mrb[0].mxu0 %v8314
        %v8794 = vpop.f32.mrb[0].mxu0
        %v8795 = vadd.f32 %v8570, %v8794
        %v8796 = vpop.f32.mrb[0].mxu0
        %8797 = vmatprep.mubr.f32.mxu0 0.0
        %8798 = vmatmul.mubr.f32.gmra.mrb[0].mxu0 %v8317
        %v8799 = vpop.f32.mrb[0].mxu0
        %v8800 = vadd.f32 %v8575, %v8799
        %v8801 = vpop.f32.mrb[0].mxu0
        %8802 = vmatprep.mubr.f32.mxu0 0.0
        %8803 = vmatmul.mubr.f32.gmra.mrb[0].mxu0 %v8320
        %v8804 = vpop.f32.mrb[0].mxu0
        %v8805 = vadd.f32 %v8580, %v8804
        %v8806 = vpop.f32.mrb[0].mxu0
        %8807 = vmatprep.mubr.f32.mxu0 0.0
        %8808 = vmatmul.mubr.f32.gmra.mrb[0].mxu0 %v8323
        %v8809 = vpop.f32.mrb[0].mxu0
        %v8810 = vadd.f32 %v8585, %v8809
        %v8811 = vpop.f32.mrb[0].mxu0
        %8812 = vmatprep.mubr.f32.mxu0 0.0
        %8813 = vmatmul.mubr.f32.gmra.mrb[0].mxu0 %v8326
        %v8814 = vpop.f32.mrb[0].mxu0
        %v8815 = vadd.f32 %v8590, %v8814
        %v8816 = vpop.f32.mrb[0].mxu0
        %8817 = vmatprep.mubr.f32.mxu0 0.0
        %8818 = vmatmul.mubr.f32.gmra.mrb[0].mxu0 %v8329
        %v8819 = vpop.f32.mrb[0].mxu0
        %v8820 = vadd.f32 %v8595, %v8819
        %v8821 = vpop.f32.mrb[0].mxu0
        %8822 = vmatprep.mubr.f32.mxu0 0.0
        %8823 = vmatmul.mubr.f32.gmra.mrb[0].mxu0 %v8332
        %v8824 = vpop.f32.mrb[0].mxu0
        %v8825 = vadd.f32 %v8600, %v8824
        %v8826 = vpop.f32.mrb[0].mxu0
        %8827 = vmatprep.mubr.f32.mxu0 0.0
        %8828 = vmatmul.mubr.f32.gmra.mrb[0].mxu0 %v8335
        %v8829 = vpop.f32.mrb[0].mxu0
        %v8830 = vadd.f32 %v8605, %v8829
        %v8831 = vpop.f32.mrb[0].mxu0
        %8832 = vmatprep.mubr.f32.mxu0 0.0
        %8833 = vmatmul.mubr.f32.gmra.mrb[0].mxu0 %v8338
        %v8834 = vpop.f32.mrb[0].mxu0
        %v8835 = vadd.f32 %v8610, %v8834
        %v8836 = vpop.f32.mrb[0].mxu0
        %8837 = vdwg.mxu0
        %v8838 = vadd.f32 %v8211, %v8680
        %v8839 = vadd.f32 %v8212, %v8685
        %v8840 = vadd.f32 %v8213, %v8690
        %v8841 = vadd.f32 %v8214, %v8695
        %v8842 = vadd.f32 %v8215, %v8700
        %v8843 = vadd.f32 %v8216, %v8705
        %v8844 = vadd.f32 %v8217, %v8710
        %v8845 = vadd.f32 %v8218, %v8715
        %v8846 = vadd.f32 %v8219, %v8720
        %v8847 = vadd.f32 %v8220, %v8725
        %v8848 = vadd.f32 %v8221, %v8730
        %v8849 = vadd.f32 %v8222, %v8735
        %v8850 = vadd.f32 %v8223, %v8740
        %v8851 = vadd.f32 %v8224, %v8745
        %v8852 = vadd.f32 %v8225, %v8750
        %v8853 = vadd.f32 %v8226, %v8755
        %v8854 = vadd.f32 %v8227, %v8760
        %v8855 = vadd.f32 %v8228, %v8765
        %v8856 = vadd.f32 %v8229, %v8770
        %v8857 = vadd.f32 %v8230, %v8775
        %v8858 = vadd.f32 %v8231, %v8780
        %v8859 = vadd.f32 %v8232, %v8785
        %v8860 = vadd.f32 %v8233, %v8790
        %v8861 = vadd.f32 %v8234, %v8795
        %v8862 = vadd.f32 %v8235, %v8800
        %v8863 = vadd.f32 %v8236, %v8805
        %v8864 = vadd.f32 %v8237, %v8810
        %v8865 = vadd.f32 %v8238, %v8815
        %v8866 = vadd.f32 %v8239, %v8820
        %v8867 = vadd.f32 %v8240, %v8825
        %v8868 = vadd.f32 %v8241, %v8830
        %v8869 = vadd.f32 %v8242, %v8835
        %v8870 = vld [vmem:[%s2152] sm:$0xff]
        %v8871 = vld [vmem:[%s2152 + $0x8] sm:$0xff]
        %v8872 = vld [vmem:[%s2152 + $0x10] sm:$0xff]
        %v8873 = vld [vmem:[%s2152 + $0x18] sm:$0xff]
        %v8874 = vld [vmem:[%s2152 + $0x20] sm:$0xff]
        %v8875 = vld [vmem:[%s2152 + $0x28] sm:$0xff]
        %v8876 = vld [vmem:[%s2152 + $0x30] sm:$0xff]
        %v8877 = vld [vmem:[%s2152 + $0x38] sm:$0xff]
        %v8878 = vld [vmem:[%s2152 + $0x40] sm:$0xff]
        %v8879 = vld [vmem:[%s2152 + $0x48] sm:$0xff]
        %v8880 = vld [vmem:[%s2152 + $0x50] sm:$0xff]
        %v8881 = vld [vmem:[%s2152 + $0x58] sm:$0xff]
        %v8882 = vld [vmem:[%s2152 + $0x60] sm:$0xff]
        %v8883 = vld [vmem:[%s2152 + $0x68] sm:$0xff]
        %v8884 = vld [vmem:[%s2152 + $0x70] sm:$0xff]
        %v8885 = vld [vmem:[%s2152 + $0x78] sm:$0xff]
        %v8886 = vld [vmem:[%s2152 + $0x80] sm:$0xff]
        %v8887 = vld [vmem:[%s2152 + $0x88] sm:$0xff]
        %v8888 = vld [vmem:[%s2152 + $0x90] sm:$0xff]
        %v8889 = vld [vmem:[%s2152 + $0x98] sm:$0xff]
        %v8890 = vld [vmem:[%s2152 + $0xa0] sm:$0xff]
        %v8891 = vld [vmem:[%s2152 + $0xa8] sm:$0xff]
        %v8892 = vld [vmem:[%s2152 + $0xb0] sm:$0xff]
        %v8893 = vld [vmem:[%s2152 + $0xb8] sm:$0xff]
        %v8894 = vld [vmem:[%s2152 + $0xc0] sm:$0xff]
        %v8895 = vld [vmem:[%s2152 + $0xc8] sm:$0xff]
        %v8896 = vld [vmem:[%s2152 + $0xd0] sm:$0xff]
        %v8897 = vld [vmem:[%s2152 + $0xd8] sm:$0xff]
        %v8898 = vld [vmem:[%s2152 + $0xe0] sm:$0xff]
        %v8899 = vld [vmem:[%s2152 + $0xe8] sm:$0xff]
        %v8900 = vld [vmem:[%s2152 + $0xf0] sm:$0xff]
        %v8901 = vld [vmem:[%s2152 + $0xf8] sm:$0xff]
        %v8902 = vld [vmem:[%s2152 + $0x100] sm:$0xff]
        %v8903 = vld [vmem:[%s2152 + $0x108] sm:$0xff]
        %v8904 = vld [vmem:[%s2152 + $0x110] sm:$0xff]
        %v8905 = vld [vmem:[%s2152 + $0x118] sm:$0xff]
        %v8906 = vld [vmem:[%s2152 + $0x120] sm:$0xff]
        %v8907 = vld [vmem:[%s2152 + $0x128] sm:$0xff]
        %v8908 = vld [vmem:[%s2152 + $0x130] sm:$0xff]
        %v8909 = vld [vmem:[%s2152 + $0x138] sm:$0xff]
        %v8910 = vld [vmem:[%s2152 + $0x140] sm:$0xff]
        %v8911 = vld [vmem:[%s2152 + $0x148] sm:$0xff]
        %v8912 = vld [vmem:[%s2152 + $0x150] sm:$0xff]
        %v8913 = vld [vmem:[%s2152 + $0x158] sm:$0xff]
        %v8914 = vld [vmem:[%s2152 + $0x160] sm:$0xff]
        %v8915 = vld [vmem:[%s2152 + $0x168] sm:$0xff]
        %v8916 = vld [vmem:[%s2152 + $0x170] sm:$0xff]
        %v8917 = vld [vmem:[%s2152 + $0x178] sm:$0xff]
        %v8918 = vld [vmem:[%s2152 + $0x180] sm:$0xff]
        %v8919 = vld [vmem:[%s2152 + $0x188] sm:$0xff]
        %v8920 = vld [vmem:[%s2152 + $0x190] sm:$0xff]
        %v8921 = vld [vmem:[%s2152 + $0x198] sm:$0xff]
        %v8922 = vld [vmem:[%s2152 + $0x1a0] sm:$0xff]
        %v8923 = vld [vmem:[%s2152 + $0x1a8] sm:$0xff]
        %v8924 = vld [vmem:[%s2152 + $0x1b0] sm:$0xff]
        %v8925 = vld [vmem:[%s2152 + $0x1b8] sm:$0xff]
        %v8926 = vld [vmem:[%s2152 + $0x1c0] sm:$0xff]
        %v8927 = vld [vmem:[%s2152 + $0x1c8] sm:$0xff]
        %v8928 = vld [vmem:[%s2152 + $0x1d0] sm:$0xff]
        %v8929 = vld [vmem:[%s2152 + $0x1d8] sm:$0xff]
        %v8930 = vld [vmem:[%s2152 + $0x1e0] sm:$0xff]
        %v8931 = vld [vmem:[%s2152 + $0x1e8] sm:$0xff]
        %v8932 = vld [vmem:[%s2152 + $0x1f0] sm:$0xff]
        %v8933 = vld [vmem:[%s2152 + $0x1f8] sm:$0xff]
        %v8934 = vld [vmem:[%s2152 + $0x200] sm:$0xff]
        %v8935 = vld [vmem:[%s2152 + $0x208] sm:$0xff]
        %v8936 = vld [vmem:[%s2152 + $0x210] sm:$0xff]
        %v8937 = vld [vmem:[%s2152 + $0x218] sm:$0xff]
        %v8938 = vld [vmem:[%s2152 + $0x220] sm:$0xff]
        %v8939 = vld [vmem:[%s2152 + $0x228] sm:$0xff]
        %v8940 = vld [vmem:[%s2152 + $0x230] sm:$0xff]
        %v8941 = vld [vmem:[%s2152 + $0x238] sm:$0xff]
        %v8942 = vld [vmem:[%s2152 + $0x240] sm:$0xff]
        %v8943 = vld [vmem:[%s2152 + $0x248] sm:$0xff]
        %v8944 = vld [vmem:[%s2152 + $0x250] sm:$0xff]
        %v8945 = vld [vmem:[%s2152 + $0x258] sm:$0xff]
        %v8946 = vld [vmem:[%s2152 + $0x260] sm:$0xff]
        %v8947 = vld [vmem:[%s2152 + $0x268] sm:$0xff]
        %v8948 = vld [vmem:[%s2152 + $0x270] sm:$0xff]
        %v8949 = vld [vmem:[%s2152 + $0x278] sm:$0xff]
        %v8950 = vld [vmem:[%s2152 + $0x280] sm:$0xff]
        %v8951 = vld [vmem:[%s2152 + $0x288] sm:$0xff]
        %v8952 = vld [vmem:[%s2152 + $0x290] sm:$0xff]
        %v8953 = vld [vmem:[%s2152 + $0x298] sm:$0xff]
        %v8954 = vld [vmem:[%s2152 + $0x2a0] sm:$0xff]
        %v8955 = vld [vmem:[%s2152 + $0x2a8] sm:$0xff]
        %v8956 = vld [vmem:[%s2152 + $0x2b0] sm:$0xff]
        %v8957 = vld [vmem:[%s2152 + $0x2b8] sm:$0xff]
        %v8958 = vld [vmem:[%s2152 + $0x2c0] sm:$0xff]
        %v8959 = vld [vmem:[%s2152 + $0x2c8] sm:$0xff]
        %v8960 = vld [vmem:[%s2152 + $0x2d0] sm:$0xff]
        %v8961 = vld [vmem:[%s2152 + $0x2d8] sm:$0xff]
        %v8962 = vld [vmem:[%s2152 + $0x2e0] sm:$0xff]
        %v8963 = vld [vmem:[%s2152 + $0x2e8] sm:$0xff]
        %v8964 = vld [vmem:[%s2152 + $0x2f0] sm:$0xff]
        %v8965 = vld [vmem:[%s2152 + $0x2f8] sm:$0xff]
        %s8966 = scalar_lea.vmem [#allocation12], 768
        %v8967 = vld [vmem:[%s8966] sm:$0xff]
        %v8968 = vld [vmem:[%s8966 + $0x8] sm:$0xff]
        %v8969 = vld [vmem:[%s8966 + $0x10] sm:$0xff]
        %v8970 = vld [vmem:[%s8966 + $0x18] sm:$0xff]
        %v8971 = vld [vmem:[%s8966 + $0x20] sm:$0xff]
        %v8972 = vld [vmem:[%s8966 + $0x28] sm:$0xff]
        %v8973 = vld [vmem:[%s8966 + $0x30] sm:$0xff]
        %v8974 = vld [vmem:[%s8966 + $0x38] sm:$0xff]
        %v8975 = vld [vmem:[%s8966 + $0x40] sm:$0xff]
        %v8976 = vld [vmem:[%s8966 + $0x48] sm:$0xff]
        %v8977 = vld [vmem:[%s8966 + $0x50] sm:$0xff]
        %v8978 = vld [vmem:[%s8966 + $0x58] sm:$0xff]
        %v8979 = vld [vmem:[%s8966 + $0x60] sm:$0xff]
        %v8980 = vld [vmem:[%s8966 + $0x68] sm:$0xff]
        %v8981 = vld [vmem:[%s8966 + $0x70] sm:$0xff]
        %v8982 = vld [vmem:[%s8966 + $0x78] sm:$0xff]
        %v8983 = vld [vmem:[%s8966 + $0x80] sm:$0xff]
        %v8984 = vld [vmem:[%s8966 + $0x88] sm:$0xff]
        %v8985 = vld [vmem:[%s8966 + $0x90] sm:$0xff]
        %v8986 = vld [vmem:[%s8966 + $0x98] sm:$0xff]
        %v8987 = vld [vmem:[%s8966 + $0xa0] sm:$0xff]
        %v8988 = vld [vmem:[%s8966 + $0xa8] sm:$0xff]
        %v8989 = vld [vmem:[%s8966 + $0xb0] sm:$0xff]
        %v8990 = vld [vmem:[%s8966 + $0xb8] sm:$0xff]
        %v8991 = vld [vmem:[%s8966 + $0xc0] sm:$0xff]
        %v8992 = vld [vmem:[%s8966 + $0xc8] sm:$0xff]
        %v8993 = vld [vmem:[%s8966 + $0xd0] sm:$0xff]
        %v8994 = vld [vmem:[%s8966 + $0xd8] sm:$0xff]
        %v8995 = vld [vmem:[%s8966 + $0xe0] sm:$0xff]
        %v8996 = vld [vmem:[%s8966 + $0xe8] sm:$0xff]
        %v8997 = vld [vmem:[%s8966 + $0xf0] sm:$0xff]
        %v8998 = vld [vmem:[%s8966 + $0xf8] sm:$0xff]
        %v8999 = vld [vmem:[%s8966 + $0x100] sm:$0xff]
        %v9000 = vld [vmem:[%s8966 + $0x108] sm:$0xff]
        %v9001 = vld [vmem:[%s8966 + $0x110] sm:$0xff]
        %v9002 = vld [vmem:[%s8966 + $0x118] sm:$0xff]
        %v9003 = vld [vmem:[%s8966 + $0x120] sm:$0xff]
        %v9004 = vld [vmem:[%s8966 + $0x128] sm:$0xff]
        %v9005 = vld [vmem:[%s8966 + $0x130] sm:$0xff]
        %v9006 = vld [vmem:[%s8966 + $0x138] sm:$0xff]
        %v9007 = vld [vmem:[%s8966 + $0x140] sm:$0xff]
        %v9008 = vld [vmem:[%s8966 + $0x148] sm:$0xff]
        %v9009 = vld [vmem:[%s8966 + $0x150] sm:$0xff]
        %v9010 = vld [vmem:[%s8966 + $0x158] sm:$0xff]
        %v9011 = vld [vmem:[%s8966 + $0x160] sm:$0xff]
        %v9012 = vld [vmem:[%s8966 + $0x168] sm:$0xff]
        %v9013 = vld [vmem:[%s8966 + $0x170] sm:$0xff]
        %v9014 = vld [vmem:[%s8966 + $0x178] sm:$0xff]
        %9015 = vmatprep.subr.mxu0 0.0
        %9016 = vmatpush1.msra.mxu0 %v8967
        %9017 = vmatprep.subr.mxu0 0.0
        %9018 = vmatpush1.msra.mxu0 %v8968
        %9019 = vmatprep.subr.mxu0 0.0
        %9020 = vmatpush1.msra.mxu0 %v8969
        %9021 = vmatprep.subr.mxu0 0.0
        %9022 = vmatpush1.msra.mxu0 %v8970
        %9023 = vmatprep.subr.mxu0 0.0
        %9024 = vmatpush1.msra.mxu0 %v8971
        %9025 = vmatprep.subr.mxu0 0.0
        %9026 = vmatpush1.msra.mxu0 %v8972
        %9027 = vmatprep.subr.mxu0 0.0
        %9028 = vmatpush1.msra.mxu0 %v8973
        %9029 = vmatprep.subr.mxu0 0.0
        %9030 = vmatpush1.msra.mxu0 %v8974
        %9031 = vmatprep.subr.mxu0 0.0
        %9032 = vmatpush1.msra.mxu0 %v8975
        %9033 = vmatprep.subr.mxu0 0.0
        %9034 = vmatpush1.msra.mxu0 %v8976
        %9035 = vmatprep.subr.mxu0 0.0
        %9036 = vmatpush1.msra.mxu0 %v8977
        %9037 = vmatprep.subr.mxu0 0.0
        %9038 = vmatpush1.msra.mxu0 %v8978
        %9039 = vmatprep.subr.mxu0 0.0
        %9040 = vmatpush1.msra.mxu0 %v8979
        %9041 = vmatprep.subr.mxu0 0.0
        %9042 = vmatpush1.msra.mxu0 %v8980
        %9043 = vmatprep.subr.mxu0 0.0
        %9044 = vmatpush1.msra.mxu0 %v8981
        %9045 = vmatprep.subr.mxu0 0.0
        %9046 = vmatpush1.msra.mxu0 %v8982
        %9047 = vmatprep.subr.mxu0 0.0
        %9048 = vmatpush1.msra.mxu0 %v8983
        %9049 = vmatprep.subr.mxu0 0.0
        %9050 = vmatpush1.msra.mxu0 %v8984
        %9051 = vmatprep.subr.mxu0 0.0
        %9052 = vmatpush1.msra.mxu0 %v8985
        %9053 = vmatprep.subr.mxu0 0.0
        %9054 = vmatpush1.msra.mxu0 %v8986
        %9055 = vmatprep.subr.mxu0 0.0
        %9056 = vmatpush1.msra.mxu0 %v8987
        %9057 = vmatprep.subr.mxu0 0.0
        %9058 = vmatpush1.msra.mxu0 %v8988
        %9059 = vmatprep.subr.mxu0 0.0
        %9060 = vmatpush1.msra.mxu0 %v8989
        %9061 = vmatprep.subr.mxu0 0.0
        %9062 = vmatpush1.msra.mxu0 %v8990
        %9063 = vmatprep.subr.mxu0 0.0
        %9064 = vmatpush1.msra.mxu0 %v8991
        %9065 = vmatprep.subr.mxu0 0.0
        %9066 = vmatpush1.msra.mxu0 %v8992
        %9067 = vmatprep.subr.mxu0 0.0
        %9068 = vmatpush1.msra.mxu0 %v8993
        %9069 = vmatprep.subr.mxu0 0.0
        %9070 = vmatpush1.msra.mxu0 %v8994
        %9071 = vmatprep.subr.mxu0 0.0
        %9072 = vmatpush1.msra.mxu0 %v8995
        %9073 = vmatprep.subr.mxu0 0.0
        %9074 = vmatpush1.msra.mxu0 %v8996
        %9075 = vmatprep.subr.mxu0 0.0
        %9076 = vmatpush1.msra.mxu0 %v8997
        %9077 = vmatprep.subr.mxu0 0.0
        %9078 = vmatpush1.msra.mxu0 %v8998
        %9079 = vmatprep.mubr.f32.mxu0 %v8871
        %9080 = vmatmul.mubr.f32.gmra.mrb[0].mxu0 %v8870
        %v9081 = vpop.f32.mrb[0].mxu0
        %v9082 = vadd.f32 0.0, %v9081
        %v9083 = vpop.f32.mrb[0].mxu0
        %9084 = vmatprep.mubr.f32.mxu0 %v8874
        %9085 = vmatmul.mubr.f32.gmra.mrb[0].mxu0 %v8873
        %v9086 = vpop.f32.mrb[0].mxu0
        %v9087 = vadd.f32 0.0, %v9086
        %v9088 = vpop.f32.mrb[0].mxu0
        %9089 = vmatprep.mubr.f32.mxu0 %v8877
        %9090 = vmatmul.mubr.f32.gmra.mrb[0].mxu0 %v8876
        %v9091 = vpop.f32.mrb[0].mxu0
        %v9092 = vadd.f32 0.0, %v9091
        %v9093 = vpop.f32.mrb[0].mxu0
        %9094 = vmatprep.mubr.f32.mxu0 %v8880
        %9095 = vmatmul.mubr.f32.gmra.mrb[0].mxu0 %v8879
        %v9096 = vpop.f32.mrb[0].mxu0
        %v9097 = vadd.f32 0.0, %v9096
        %v9098 = vpop.f32.mrb[0].mxu0
        %9099 = vmatprep.mubr.f32.mxu0 %v8883
        %9100 = vmatmul.mubr.f32.gmra.mrb[0].mxu0 %v8882
        %v9101 = vpop.f32.mrb[0].mxu0
        %v9102 = vadd.f32 0.0, %v9101
        %v9103 = vpop.f32.mrb[0].mxu0
        %9104 = vmatprep.mubr.f32.mxu0 %v8886
        %9105 = vmatmul.mubr.f32.gmra.mrb[0].mxu0 %v8885
        %v9106 = vpop.f32.mrb[0].mxu0
        %v9107 = vadd.f32 0.0, %v9106
        %v9108 = vpop.f32.mrb[0].mxu0
        %9109 = vmatprep.mubr.f32.mxu0 %v8889
        %9110 = vmatmul.mubr.f32.gmra.mrb[0].mxu0 %v8888
        %v9111 = vpop.f32.mrb[0].mxu0
        %v9112 = vadd.f32 0.0, %v9111
        %v9113 = vpop.f32.mrb[0].mxu0
        %9114 = vmatprep.mubr.f32.mxu0 %v8892
        %9115 = vmatmul.mubr.f32.gmra.mrb[0].mxu0 %v8891
        %v9116 = vpop.f32.mrb[0].mxu0
        %v9117 = vadd.f32 0.0, %v9116
        %v9118 = vpop.f32.mrb[0].mxu0
        %9119 = vmatprep.mubr.f32.mxu0 %v8895
        %9120 = vmatmul.mubr.f32.gmra.mrb[0].mxu0 %v8894
        %v9121 = vpop.f32.mrb[0].mxu0
        %v9122 = vadd.f32 0.0, %v9121
        %v9123 = vpop.f32.mrb[0].mxu0
        %9124 = vmatprep.mubr.f32.mxu0 %v8898
        %9125 = vmatmul.mubr.f32.gmra.mrb[0].mxu0 %v8897
        %v9126 = vpop.f32.mrb[0].mxu0
        %v9127 = vadd.f32 0.0, %v9126
        %v9128 = vpop.f32.mrb[0].mxu0
        %9129 = vmatprep.mubr.f32.mxu0 %v8901
        %9130 = vmatmul.mubr.f32.gmra.mrb[0].mxu0 %v8900
        %v9131 = vpop.f32.mrb[0].mxu0
        %v9132 = vadd.f32 0.0, %v9131
        %v9133 = vpop.f32.mrb[0].mxu0
        %9134 = vmatprep.mubr.f32.mxu0 %v8904
        %9135 = vmatmul.mubr.f32.gmra.mrb[0].mxu0 %v8903
        %v9136 = vpop.f32.mrb[0].mxu0
        %v9137 = vadd.f32 0.0, %v9136
        %v9138 = vpop.f32.mrb[0].mxu0
        %9139 = vmatprep.mubr.f32.mxu0 %v8907
        %9140 = vmatmul.mubr.f32.gmra.mrb[0].mxu0 %v8906
        %v9141 = vpop.f32.mrb[0].mxu0
        %v9142 = vadd.f32 0.0, %v9141
        %v9143 = vpop.f32.mrb[0].mxu0
        %9144 = vmatprep.mubr.f32.mxu0 %v8910
        %9145 = vmatmul.mubr.f32.gmra.mrb[0].mxu0 %v8909
        %v9146 = vpop.f32.mrb[0].mxu0
        %v9147 = vadd.f32 0.0, %v9146
        %v9148 = vpop.f32.mrb[0].mxu0
        %9149 = vmatprep.mubr.f32.mxu0 %v8913
        %9150 = vmatmul.mubr.f32.gmra.mrb[0].mxu0 %v8912
        %v9151 = vpop.f32.mrb[0].mxu0
        %v9152 = vadd.f32 0.0, %v9151
        %v9153 = vpop.f32.mrb[0].mxu0
        %9154 = vmatprep.mubr.f32.mxu0 %v8916
        %9155 = vmatmul.mubr.f32.gmra.mrb[0].mxu0 %v8915
        %v9156 = vpop.f32.mrb[0].mxu0
        %v9157 = vadd.f32 0.0, %v9156
        %v9158 = vpop.f32.mrb[0].mxu0
        %9159 = vmatprep.mubr.f32.mxu0 %v8919
        %9160 = vmatmul.mubr.f32.gmra.mrb[0].mxu0 %v8918
        %v9161 = vpop.f32.mrb[0].mxu0
        %v9162 = vadd.f32 0.0, %v9161
        %v9163 = vpop.f32.mrb[0].mxu0
        %9164 = vmatprep.mubr.f32.mxu0 %v8922
        %9165 = vmatmul.mubr.f32.gmra.mrb[0].mxu0 %v8921
        %v9166 = vpop.f32.mrb[0].mxu0
        %v9167 = vadd.f32 0.0, %v9166
        %v9168 = vpop.f32.mrb[0].mxu0
        %9169 = vmatprep.mubr.f32.mxu0 %v8925
        %9170 = vmatmul.mubr.f32.gmra.mrb[0].mxu0 %v8924
        %v9171 = vpop.f32.mrb[0].mxu0
        %v9172 = vadd.f32 0.0, %v9171
        %v9173 = vpop.f32.mrb[0].mxu0
        %9174 = vmatprep.mubr.f32.mxu0 %v8928
        %9175 = vmatmul.mubr.f32.gmra.mrb[0].mxu0 %v8927
        %v9176 = vpop.f32.mrb[0].mxu0
        %v9177 = vadd.f32 0.0, %v9176
        %v9178 = vpop.f32.mrb[0].mxu0
        %9179 = vmatprep.mubr.f32.mxu0 %v8931
        %9180 = vmatmul.mubr.f32.gmra.mrb[0].mxu0 %v8930
        %v9181 = vpop.f32.mrb[0].mxu0
        %v9182 = vadd.f32 0.0, %v9181
        %v9183 = vpop.f32.mrb[0].mxu0
        %9184 = vmatprep.mubr.f32.mxu0 %v8934
        %9185 = vmatmul.mubr.f32.gmra.mrb[0].mxu0 %v8933
        %v9186 = vpop.f32.mrb[0].mxu0
        %v9187 = vadd.f32 0.0, %v9186
        %v9188 = vpop.f32.mrb[0].mxu0
        %9189 = vmatprep.mubr.f32.mxu0 %v8937
        %9190 = vmatmul.mubr.f32.gmra.mrb[0].mxu0 %v8936
        %v9191 = vpop.f32.mrb[0].mxu0
        %v9192 = vadd.f32 0.0, %v9191
        %v9193 = vpop.f32.mrb[0].mxu0
        %9194 = vmatprep.mubr.f32.mxu0 %v8940
        %9195 = vmatmul.mubr.f32.gmra.mrb[0].mxu0 %v8939
        %v9196 = vpop.f32.mrb[0].mxu0
        %v9197 = vadd.f32 0.0, %v9196
        %v9198 = vpop.f32.mrb[0].mxu0
        %9199 = vmatprep.mubr.f32.mxu0 %v8943
        %9200 = vmatmul.mubr.f32.gmra.mrb[0].mxu0 %v8942
        %v9201 = vpop.f32.mrb[0].mxu0
        %v9202 = vadd.f32 0.0, %v9201
        %v9203 = vpop.f32.mrb[0].mxu0
        %9204 = vmatprep.mubr.f32.mxu0 %v8946
        %9205 = vmatmul.mubr.f32.gmra.mrb[0].mxu0 %v8945
        %v9206 = vpop.f32.mrb[0].mxu0
        %v9207 = vadd.f32 0.0, %v9206
        %v9208 = vpop.f32.mrb[0].mxu0
        %9209 = vmatprep.mubr.f32.mxu0 %v8949
        %9210 = vmatmul.mubr.f32.gmra.mrb[0].mxu0 %v8948
        %v9211 = vpop.f32.mrb[0].mxu0
        %v9212 = vadd.f32 0.0, %v9211
        %v9213 = vpop.f32.mrb[0].mxu0
        %9214 = vmatprep.mubr.f32.mxu0 %v8952
        %9215 = vmatmul.mubr.f32.gmra.mrb[0].mxu0 %v8951
        %v9216 = vpop.f32.mrb[0].mxu0
        %v9217 = vadd.f32 0.0, %v9216
        %v9218 = vpop.f32.mrb[0].mxu0
        %9219 = vmatprep.mubr.f32.mxu0 %v8955
        %9220 = vmatmul.mubr.f32.gmra.mrb[0].mxu0 %v8954
        %v9221 = vpop.f32.mrb[0].mxu0
        %v9222 = vadd.f32 0.0, %v9221
        %v9223 = vpop.f32.mrb[0].mxu0
        %9224 = vmatprep.mubr.f32.mxu0 %v8958
        %9225 = vmatmul.mubr.f32.gmra.mrb[0].mxu0 %v8957
        %v9226 = vpop.f32.mrb[0].mxu0
        %v9227 = vadd.f32 0.0, %v9226
        %v9228 = vpop.f32.mrb[0].mxu0
        %9229 = vmatprep.mubr.f32.mxu0 %v8961
        %9230 = vmatmul.mubr.f32.gmra.mrb[0].mxu0 %v8960
        %v9231 = vpop.f32.mrb[0].mxu0
        %v9232 = vadd.f32 0.0, %v9231
        %v9233 = vpop.f32.mrb[0].mxu0
        %9234 = vmatprep.mubr.f32.mxu0 %v8964
        %9235 = vmatmul.mubr.f32.gmra.mrb[0].mxu0 %v8963
        %v9236 = vpop.f32.mrb[0].mxu0
        %v9237 = vadd.f32 0.0, %v9236
        %v9238 = vpop.f32.mrb[0].mxu0
        %9239 = vdwg.mxu0
        %9240 = vmatprep.subr.mxu0 0.0
        %9241 = vmatpush1.msra.mxu0 %v8999
        %9242 = vmatprep.subr.mxu0 0.0
        %9243 = vmatpush1.msra.mxu0 %v9000
        %9244 = vmatprep.subr.mxu0 0.0
        %9245 = vmatpush1.msra.mxu0 %v9001
        %9246 = vmatprep.subr.mxu0 0.0
        %9247 = vmatpush1.msra.mxu0 %v9002
        %9248 = vmatprep.subr.mxu0 0.0
        %9249 = vmatpush1.msra.mxu0 %v9003
        %9250 = vmatprep.subr.mxu0 0.0
        %9251 = vmatpush1.msra.mxu0 %v9004
        %9252 = vmatprep.subr.mxu0 0.0
        %9253 = vmatpush1.msra.mxu0 %v9005
        %9254 = vmatprep.subr.mxu0 0.0
        %9255 = vmatpush1.msra.mxu0 %v9006
        %9256 = vmatprep.subr.mxu0 0.0
        %9257 = vmatpush1.msra.mxu0 %v9007
        %9258 = vmatprep.subr.mxu0 0.0
        %9259 = vmatpush1.msra.mxu0 %v9008
        %9260 = vmatprep.subr.mxu0 0.0
        %9261 = vmatpush1.msra.mxu0 %v9009
        %9262 = vmatprep.subr.mxu0 0.0
        %9263 = vmatpush1.msra.mxu0 %v9010
        %9264 = vmatprep.subr.mxu0 0.0
        %9265 = vmatpush1.msra.mxu0 %v9011
        %9266 = vmatprep.subr.mxu0 0.0
        %9267 = vmatpush1.msra.mxu0 %v9012
        %9268 = vmatprep.subr.mxu0 0.0
        %9269 = vmatpush1.msra.mxu0 %v9013
        %9270 = vmatprep.subr.mxu0 0.0
        %9271 = vmatpush1.msra.mxu0 %v9014
        %9272 = vmatprep.subr.mxu0 0.0
        %9273 = vmatpush1.msra.mxu0 0.0
        %9274 = vmatprep.subr.mxu0 0.0
        %9275 = vmatpush1.msra.mxu0 0.0
        %9276 = vmatprep.subr.mxu0 0.0
        %9277 = vmatpush1.msra.mxu0 0.0
        %9278 = vmatprep.subr.mxu0 0.0
        %9279 = vmatpush1.msra.mxu0 0.0
        %9280 = vmatprep.subr.mxu0 0.0
        %9281 = vmatpush1.msra.mxu0 0.0
        %9282 = vmatprep.subr.mxu0 0.0
        %9283 = vmatpush1.msra.mxu0 0.0
        %9284 = vmatprep.subr.mxu0 0.0
        %9285 = vmatpush1.msra.mxu0 0.0
        %9286 = vmatprep.subr.mxu0 0.0
        %9287 = vmatpush1.msra.mxu0 0.0
        %9288 = vmatprep.subr.mxu0 0.0
        %9289 = vmatpush1.msra.mxu0 0.0
        %9290 = vmatprep.subr.mxu0 0.0
        %9291 = vmatpush1.msra.mxu0 0.0
        %9292 = vmatprep.subr.mxu0 0.0
        %9293 = vmatpush1.msra.mxu0 0.0
        %9294 = vmatprep.subr.mxu0 0.0
        %9295 = vmatpush1.msra.mxu0 0.0
        %9296 = vmatprep.subr.mxu0 0.0
        %9297 = vmatpush1.msra.mxu0 0.0
        %9298 = vmatprep.subr.mxu0 0.0
        %9299 = vmatpush1.msra.mxu0 0.0
        %9300 = vmatprep.subr.mxu0 0.0
        %9301 = vmatpush1.msra.mxu0 0.0
        %9302 = vmatprep.subr.mxu0 0.0
        %9303 = vmatpush1.msra.mxu0 0.0
        %9304 = vmatprep.mubr.f32.mxu0 0.0
        %9305 = vmatmul.mubr.f32.gmra.mrb[0].mxu0 %v8872
        %v9306 = vpop.f32.mrb[0].mxu0
        %v9307 = vadd.f32 %v9082, %v9306
        %v9308 = vpop.f32.mrb[0].mxu0
        %9309 = vmatprep.mubr.f32.mxu0 0.0
        %9310 = vmatmul.mubr.f32.gmra.mrb[0].mxu0 %v8875
        %v9311 = vpop.f32.mrb[0].mxu0
        %v9312 = vadd.f32 %v9087, %v9311
        %v9313 = vpop.f32.mrb[0].mxu0
        %9314 = vmatprep.mubr.f32.mxu0 0.0
        %9315 = vmatmul.mubr.f32.gmra.mrb[0].mxu0 %v8878
        %v9316 = vpop.f32.mrb[0].mxu0
        %v9317 = vadd.f32 %v9092, %v9316
        %v9318 = vpop.f32.mrb[0].mxu0
        %9319 = vmatprep.mubr.f32.mxu0 0.0
        %9320 = vmatmul.mubr.f32.gmra.mrb[0].mxu0 %v8881
        %v9321 = vpop.f32.mrb[0].mxu0
        %v9322 = vadd.f32 %v9097, %v9321
        %v9323 = vpop.f32.mrb[0].mxu0
        %9324 = vmatprep.mubr.f32.mxu0 0.0
        %9325 = vmatmul.mubr.f32.gmra.mrb[0].mxu0 %v8884
        %v9326 = vpop.f32.mrb[0].mxu0
        %v9327 = vadd.f32 %v9102, %v9326
        %v9328 = vpop.f32.mrb[0].mxu0
        %9329 = vmatprep.mubr.f32.mxu0 0.0
        %9330 = vmatmul.mubr.f32.gmra.mrb[0].mxu0 %v8887
        %v9331 = vpop.f32.mrb[0].mxu0
        %v9332 = vadd.f32 %v9107, %v9331
        %v9333 = vpop.f32.mrb[0].mxu0
        %9334 = vmatprep.mubr.f32.mxu0 0.0
        %9335 = vmatmul.mubr.f32.gmra.mrb[0].mxu0 %v8890
        %v9336 = vpop.f32.mrb[0].mxu0
        %v9337 = vadd.f32 %v9112, %v9336
        %v9338 = vpop.f32.mrb[0].mxu0
        %9339 = vmatprep.mubr.f32.mxu0 0.0
        %9340 = vmatmul.mubr.f32.gmra.mrb[0].mxu0 %v8893
        %v9341 = vpop.f32.mrb[0].mxu0
        %v9342 = vadd.f32 %v9117, %v9341
        %v9343 = vpop.f32.mrb[0].mxu0
        %9344 = vmatprep.mubr.f32.mxu0 0.0
        %9345 = vmatmul.mubr.f32.gmra.mrb[0].mxu0 %v8896
        %v9346 = vpop.f32.mrb[0].mxu0
        %v9347 = vadd.f32 %v9122, %v9346
        %v9348 = vpop.f32.mrb[0].mxu0
        %9349 = vmatprep.mubr.f32.mxu0 0.0
        %9350 = vmatmul.mubr.f32.gmra.mrb[0].mxu0 %v8899
        %v9351 = vpop.f32.mrb[0].mxu0
        %v9352 = vadd.f32 %v9127, %v9351
        %v9353 = vpop.f32.mrb[0].mxu0
        %9354 = vmatprep.mubr.f32.mxu0 0.0
        %9355 = vmatmul.mubr.f32.gmra.mrb[0].mxu0 %v8902
        %v9356 = vpop.f32.mrb[0].mxu0
        %v9357 = vadd.f32 %v9132, %v9356
        %v9358 = vpop.f32.mrb[0].mxu0
        %9359 = vmatprep.mubr.f32.mxu0 0.0
        %9360 = vmatmul.mubr.f32.gmra.mrb[0].mxu0 %v8905
        %v9361 = vpop.f32.mrb[0].mxu0
        %v9362 = vadd.f32 %v9137, %v9361
        %v9363 = vpop.f32.mrb[0].mxu0
        %9364 = vmatprep.mubr.f32.mxu0 0.0
        %9365 = vmatmul.mubr.f32.gmra.mrb[0].mxu0 %v8908
        %v9366 = vpop.f32.mrb[0].mxu0
        %v9367 = vadd.f32 %v9142, %v9366
        %v9368 = vpop.f32.mrb[0].mxu0
        %9369 = vmatprep.mubr.f32.mxu0 0.0
        %9370 = vmatmul.mubr.f32.gmra.mrb[0].mxu0 %v8911
        %v9371 = vpop.f32.mrb[0].mxu0
        %v9372 = vadd.f32 %v9147, %v9371
        %v9373 = vpop.f32.mrb[0].mxu0
        %9374 = vmatprep.mubr.f32.mxu0 0.0
        %9375 = vmatmul.mubr.f32.gmra.mrb[0].mxu0 %v8914
        %v9376 = vpop.f32.mrb[0].mxu0
        %v9377 = vadd.f32 %v9152, %v9376
        %v9378 = vpop.f32.mrb[0].mxu0
        %9379 = vmatprep.mubr.f32.mxu0 0.0
        %9380 = vmatmul.mubr.f32.gmra.mrb[0].mxu0 %v8917
        %v9381 = vpop.f32.mrb[0].mxu0
        %v9382 = vadd.f32 %v9157, %v9381
        %v9383 = vpop.f32.mrb[0].mxu0
        %9384 = vmatprep.mubr.f32.mxu0 0.0
        %9385 = vmatmul.mubr.f32.gmra.mrb[0].mxu0 %v8920
        %v9386 = vpop.f32.mrb[0].mxu0
        %v9387 = vadd.f32 %v9162, %v9386
        %v9388 = vpop.f32.mrb[0].mxu0
        %9389 = vmatprep.mubr.f32.mxu0 0.0
        %9390 = vmatmul.mubr.f32.gmra.mrb[0].mxu0 %v8923
        %v9391 = vpop.f32.mrb[0].mxu0
        %v9392 = vadd.f32 %v9167, %v9391
        %v9393 = vpop.f32.mrb[0].mxu0
        %9394 = vmatprep.mubr.f32.mxu0 0.0
        %9395 = vmatmul.mubr.f32.gmra.mrb[0].mxu0 %v8926
        %v9396 = vpop.f32.mrb[0].mxu0
        %v9397 = vadd.f32 %v9172, %v9396
        %v9398 = vpop.f32.mrb[0].mxu0
        %9399 = vmatprep.mubr.f32.mxu0 0.0
        %9400 = vmatmul.mubr.f32.gmra.mrb[0].mxu0 %v8929
        %v9401 = vpop.f32.mrb[0].mxu0
        %v9402 = vadd.f32 %v9177, %v9401
        %v9403 = vpop.f32.mrb[0].mxu0
        %9404 = vmatprep.mubr.f32.mxu0 0.0
        %9405 = vmatmul.mubr.f32.gmra.mrb[0].mxu0 %v8932
        %v9406 = vpop.f32.mrb[0].mxu0
        %v9407 = vadd.f32 %v9182, %v9406
        %v9408 = vpop.f32.mrb[0].mxu0
        %9409 = vmatprep.mubr.f32.mxu0 0.0
        %9410 = vmatmul.mubr.f32.gmra.mrb[0].mxu0 %v8935
        %v9411 = vpop.f32.mrb[0].mxu0
        %v9412 = vadd.f32 %v9187, %v9411
        %v9413 = vpop.f32.mrb[0].mxu0
        %9414 = vmatprep.mubr.f32.mxu0 0.0
        %9415 = vmatmul.mubr.f32.gmra.mrb[0].mxu0 %v8938
        %v9416 = vpop.f32.mrb[0].mxu0
        %v9417 = vadd.f32 %v9192, %v9416
        %v9418 = vpop.f32.mrb[0].mxu0
        %9419 = vmatprep.mubr.f32.mxu0 0.0
        %9420 = vmatmul.mubr.f32.gmra.mrb[0].mxu0 %v8941
        %v9421 = vpop.f32.mrb[0].mxu0
        %v9422 = vadd.f32 %v9197, %v9421
        %v9423 = vpop.f32.mrb[0].mxu0
        %9424 = vmatprep.mubr.f32.mxu0 0.0
        %9425 = vmatmul.mubr.f32.gmra.mrb[0].mxu0 %v8944
        %v9426 = vpop.f32.mrb[0].mxu0
        %v9427 = vadd.f32 %v9202, %v9426
        %v9428 = vpop.f32.mrb[0].mxu0
        %9429 = vmatprep.mubr.f32.mxu0 0.0
        %9430 = vmatmul.mubr.f32.gmra.mrb[0].mxu0 %v8947
        %v9431 = vpop.f32.mrb[0].mxu0
        %v9432 = vadd.f32 %v9207, %v9431
        %v9433 = vpop.f32.mrb[0].mxu0
        %9434 = vmatprep.mubr.f32.mxu0 0.0
        %9435 = vmatmul.mubr.f32.gmra.mrb[0].mxu0 %v8950
        %v9436 = vpop.f32.mrb[0].mxu0
        %v9437 = vadd.f32 %v9212, %v9436
        %v9438 = vpop.f32.mrb[0].mxu0
        %9439 = vmatprep.mubr.f32.mxu0 0.0
        %9440 = vmatmul.mubr.f32.gmra.mrb[0].mxu0 %v8953
        %v9441 = vpop.f32.mrb[0].mxu0
        %v9442 = vadd.f32 %v9217, %v9441
        %v9443 = vpop.f32.mrb[0].mxu0
        %9444 = vmatprep.mubr.f32.mxu0 0.0
        %9445 = vmatmul.mubr.f32.gmra.mrb[0].mxu0 %v8956
        %v9446 = vpop.f32.mrb[0].mxu0
        %v9447 = vadd.f32 %v9222, %v9446
        %v9448 = vpop.f32.mrb[0].mxu0
        %9449 = vmatprep.mubr.f32.mxu0 0.0
        %9450 = vmatmul.mubr.f32.gmra.mrb[0].mxu0 %v8959
        %v9451 = vpop.f32.mrb[0].mxu0
        %v9452 = vadd.f32 %v9227, %v9451
        %v9453 = vpop.f32.mrb[0].mxu0
        %9454 = vmatprep.mubr.f32.mxu0 0.0
        %9455 = vmatmul.mubr.f32.gmra.mrb[0].mxu0 %v8962
        %v9456 = vpop.f32.mrb[0].mxu0
        %v9457 = vadd.f32 %v9232, %v9456
        %v9458 = vpop.f32.mrb[0].mxu0
        %9459 = vmatprep.mubr.f32.mxu0 0.0
        %9460 = vmatmul.mubr.f32.gmra.mrb[0].mxu0 %v8965
        %v9461 = vpop.f32.mrb[0].mxu0
        %v9462 = vadd.f32 %v9237, %v9461
        %v9463 = vpop.f32.mrb[0].mxu0
        %9464 = vdwg.mxu0
        %v9465 = vadd.f32 %v8838, %v9307
        %v9466 = vadd.f32 %v8839, %v9312
        %v9467 = vadd.f32 %v8840, %v9317
        %v9468 = vadd.f32 %v8841, %v9322
        %v9469 = vadd.f32 %v8842, %v9327
        %v9470 = vadd.f32 %v8843, %v9332
        %v9471 = vadd.f32 %v8844, %v9337
        %v9472 = vadd.f32 %v8845, %v9342
        %v9473 = vadd.f32 %v8846, %v9347
        %v9474 = vadd.f32 %v8847, %v9352
        %v9475 = vadd.f32 %v8848, %v9357
        %v9476 = vadd.f32 %v8849, %v9362
        %v9477 = vadd.f32 %v8850, %v9367
        %v9478 = vadd.f32 %v8851, %v9372
        %v9479 = vadd.f32 %v8852, %v9377
        %v9480 = vadd.f32 %v8853, %v9382
        %v9481 = vadd.f32 %v8854, %v9387
        %v9482 = vadd.f32 %v8855, %v9392
        %v9483 = vadd.f32 %v8856, %v9397
        %v9484 = vadd.f32 %v8857, %v9402
        %v9485 = vadd.f32 %v8858, %v9407
        %v9486 = vadd.f32 %v8859, %v9412
        %v9487 = vadd.f32 %v8860, %v9417
        %v9488 = vadd.f32 %v8861, %v9422
        %v9489 = vadd.f32 %v8862, %v9427
        %v9490 = vadd.f32 %v8863, %v9432
        %v9491 = vadd.f32 %v8864, %v9437
        %v9492 = vadd.f32 %v8865, %v9442
        %v9493 = vadd.f32 %v8866, %v9447
        %v9494 = vadd.f32 %v8867, %v9452
        %v9495 = vadd.f32 %v8868, %v9457
        %v9496 = vadd.f32 %v8869, %v9462
        %v9497 = vld [vmem:[#allocation14] sm:$0xff]
        %v9498 = vld [vmem:[#allocation14 + $0x8] sm:$0xff]
        %v9499 = vld [vmem:[#allocation14 + $0x10] sm:$0xff]
        %v9500 = vld [vmem:[#allocation14 + $0x18] sm:$0xff]
        %v9501 = vld [vmem:[#allocation14 + $0x20] sm:$0xff]
        %v9502 = vld [vmem:[#allocation14 + $0x28] sm:$0xff]
        %v9503 = vld [vmem:[#allocation14 + $0x30] sm:$0xff]
        %v9504 = vld [vmem:[#allocation14 + $0x38] sm:$0xff]
        %v9505 = vld [vmem:[#allocation14 + $0x40] sm:$0xff]
        %v9506 = vld [vmem:[#allocation14 + $0x48] sm:$0xff]
        %v9507 = vld [vmem:[#allocation14 + $0x50] sm:$0xff]
        %v9508 = vld [vmem:[#allocation14 + $0x58] sm:$0xff]
        %v9509 = vld [vmem:[#allocation14 + $0x60] sm:$0xff]
        %v9510 = vld [vmem:[#allocation14 + $0x68] sm:$0xff]
        %v9511 = vld [vmem:[#allocation14 + $0x70] sm:$0xff]
        %v9512 = vld [vmem:[#allocation14 + $0x78] sm:$0xff]
        %9513 = vmatprep.subr.mxu0 0.0
        %9514 = vmatpush1.msra.mxu0 %v9497
        %9515 = vmatprep.subr.mxu0 0.0
        %9516 = vmatpush1.msra.mxu0 %v9498
        %9517 = vmatprep.subr.mxu0 0.0
        %9518 = vmatpush1.msra.mxu0 %v9499
        %9519 = vmatprep.subr.mxu0 0.0
        %9520 = vmatpush1.msra.mxu0 %v9500
        %9521 = vmatprep.subr.mxu0 0.0
        %9522 = vmatpush1.msra.mxu0 %v9501
        %9523 = vmatprep.subr.mxu0 0.0
        %9524 = vmatpush1.msra.mxu0 %v9502
        %9525 = vmatprep.subr.mxu0 0.0
        %9526 = vmatpush1.msra.mxu0 %v9503
        %9527 = vmatprep.subr.mxu0 0.0
        %9528 = vmatpush1.msra.mxu0 %v9504
        %9529 = vmatprep.subr.mxu0 0.0
        %9530 = vmatpush1.msra.mxu0 %v9505
        %9531 = vmatprep.subr.mxu0 0.0
        %9532 = vmatpush1.msra.mxu0 %v9506
        %9533 = vmatprep.subr.mxu0 0.0
        %9534 = vmatpush1.msra.mxu0 %v9507
        %9535 = vmatprep.subr.mxu0 0.0
        %9536 = vmatpush1.msra.mxu0 %v9508
        %9537 = vmatprep.subr.mxu0 0.0
        %9538 = vmatpush1.msra.mxu0 %v9509
        %9539 = vmatprep.subr.mxu0 0.0
        %9540 = vmatpush1.msra.mxu0 %v9510
        %9541 = vmatprep.subr.mxu0 0.0
        %9542 = vmatpush1.msra.mxu0 %v9511
        %9543 = vmatprep.subr.mxu0 0.0
        %9544 = vmatpush1.msra.mxu0 %v9512
        %9545 = vmatprep.subr.mxu0 0.0
        %9546 = vmatpush1.msra.mxu0 0.0
        %9547 = vmatprep.subr.mxu0 0.0
        %9548 = vmatpush1.msra.mxu0 0.0
        %9549 = vmatprep.subr.mxu0 0.0
        %9550 = vmatpush1.msra.mxu0 0.0
        %9551 = vmatprep.subr.mxu0 0.0
        %9552 = vmatpush1.msra.mxu0 0.0
        %9553 = vmatprep.subr.mxu0 0.0
        %9554 = vmatpush1.msra.mxu0 0.0
        %9555 = vmatprep.subr.mxu0 0.0
        %9556 = vmatpush1.msra.mxu0 0.0
        %9557 = vmatprep.subr.mxu0 0.0
        %9558 = vmatpush1.msra.mxu0 0.0
        %9559 = vmatprep.subr.mxu0 0.0
        %9560 = vmatpush1.msra.mxu0 0.0
        %9561 = vmatprep.subr.mxu0 0.0
        %9562 = vmatpush1.msra.mxu0 0.0
        %9563 = vmatprep.subr.mxu0 0.0
        %9564 = vmatpush1.msra.mxu0 0.0
        %9565 = vmatprep.subr.mxu0 0.0
        %9566 = vmatpush1.msra.mxu0 0.0
        %9567 = vmatprep.subr.mxu0 0.0
        %9568 = vmatpush1.msra.mxu0 0.0
        %9569 = vmatprep.subr.mxu0 0.0
        %9570 = vmatpush1.msra.mxu0 0.0
        %9571 = vmatprep.subr.mxu0 0.0
        %9572 = vmatpush1.msra.mxu0 0.0
        %9573 = vmatprep.subr.mxu0 0.0
        %9574 = vmatpush1.msra.mxu0 0.0
        %9575 = vmatprep.subr.mxu0 0.0
        %9576 = vmatpush1.msra.mxu0 0.0
        %9577 = vmatprep.mubr.f32.mxu0 0.0
        %9578 = vmatmul.mubr.f32.gmra.mrb[0].mxu0 %v5051
        %v9579 = vpop.f32.mrb[0].mxu0
        %v9580 = vadd.f32 0.0, %v9579
        %v9581 = vpop.f32.mrb[0].mxu0
        %9582 = vmatprep.mubr.f32.mxu0 0.0
        %9583 = vmatmul.mubr.f32.gmra.mrb[0].mxu0 %v5052
        %v9584 = vpop.f32.mrb[0].mxu0
        %v9585 = vadd.f32 0.0, %v9584
        %v9586 = vpop.f32.mrb[0].mxu0
        %9587 = vmatprep.mubr.f32.mxu0 0.0
        %9588 = vmatmul.mubr.f32.gmra.mrb[0].mxu0 %v5053
        %v9589 = vpop.f32.mrb[0].mxu0
        %v9590 = vadd.f32 0.0, %v9589
        %v9591 = vpop.f32.mrb[0].mxu0
        %9592 = vmatprep.mubr.f32.mxu0 0.0
        %9593 = vmatmul.mubr.f32.gmra.mrb[0].mxu0 %v5054
        %v9594 = vpop.f32.mrb[0].mxu0
        %v9595 = vadd.f32 0.0, %v9594
        %v9596 = vpop.f32.mrb[0].mxu0
        %9597 = vmatprep.mubr.f32.mxu0 0.0
        %9598 = vmatmul.mubr.f32.gmra.mrb[0].mxu0 %v5055
        %v9599 = vpop.f32.mrb[0].mxu0
        %v9600 = vadd.f32 0.0, %v9599
        %v9601 = vpop.f32.mrb[0].mxu0
        %9602 = vmatprep.mubr.f32.mxu0 0.0
        %9603 = vmatmul.mubr.f32.gmra.mrb[0].mxu0 %v5056
        %v9604 = vpop.f32.mrb[0].mxu0
        %v9605 = vadd.f32 0.0, %v9604
        %v9606 = vpop.f32.mrb[0].mxu0
        %9607 = vmatprep.mubr.f32.mxu0 0.0
        %9608 = vmatmul.mubr.f32.gmra.mrb[0].mxu0 %v5057
        %v9609 = vpop.f32.mrb[0].mxu0
        %v9610 = vadd.f32 0.0, %v9609
        %v9611 = vpop.f32.mrb[0].mxu0
        %9612 = vmatprep.mubr.f32.mxu0 0.0
        %9613 = vmatmul.mubr.f32.gmra.mrb[0].mxu0 %v5058
        %v9614 = vpop.f32.mrb[0].mxu0
        %v9615 = vadd.f32 0.0, %v9614
        %v9616 = vpop.f32.mrb[0].mxu0
        %9617 = vmatprep.mubr.f32.mxu0 0.0
        %9618 = vmatmul.mubr.f32.gmra.mrb[0].mxu0 %v5059
        %v9619 = vpop.f32.mrb[0].mxu0
        %v9620 = vadd.f32 0.0, %v9619
        %v9621 = vpop.f32.mrb[0].mxu0
        %9622 = vmatprep.mubr.f32.mxu0 0.0
        %9623 = vmatmul.mubr.f32.gmra.mrb[0].mxu0 %v5060
        %v9624 = vpop.f32.mrb[0].mxu0
        %v9625 = vadd.f32 0.0, %v9624
        %v9626 = vpop.f32.mrb[0].mxu0
        %9627 = vmatprep.mubr.f32.mxu0 0.0
        %9628 = vmatmul.mubr.f32.gmra.mrb[0].mxu0 %v5061
        %v9629 = vpop.f32.mrb[0].mxu0
        %v9630 = vadd.f32 0.0, %v9629
        %v9631 = vpop.f32.mrb[0].mxu0
        %9632 = vmatprep.mubr.f32.mxu0 0.0
        %9633 = vmatmul.mubr.f32.gmra.mrb[0].mxu0 %v5062
        %v9634 = vpop.f32.mrb[0].mxu0
        %v9635 = vadd.f32 0.0, %v9634
        %v9636 = vpop.f32.mrb[0].mxu0
        %9637 = vmatprep.mubr.f32.mxu0 0.0
        %9638 = vmatmul.mubr.f32.gmra.mrb[0].mxu0 %v5063
        %v9639 = vpop.f32.mrb[0].mxu0
        %v9640 = vadd.f32 0.0, %v9639
        %v9641 = vpop.f32.mrb[0].mxu0
        %9642 = vmatprep.mubr.f32.mxu0 0.0
        %9643 = vmatmul.mubr.f32.gmra.mrb[0].mxu0 %v5064
        %v9644 = vpop.f32.mrb[0].mxu0
        %v9645 = vadd.f32 0.0, %v9644
        %v9646 = vpop.f32.mrb[0].mxu0
        %9647 = vmatprep.mubr.f32.mxu0 0.0
        %9648 = vmatmul.mubr.f32.gmra.mrb[0].mxu0 %v5065
        %v9649 = vpop.f32.mrb[0].mxu0
        %v9650 = vadd.f32 0.0, %v9649
        %v9651 = vpop.f32.mrb[0].mxu0
        %9652 = vmatprep.mubr.f32.mxu0 0.0
        %9653 = vmatmul.mubr.f32.gmra.mrb[0].mxu0 %v5066
        %v9654 = vpop.f32.mrb[0].mxu0
        %v9655 = vadd.f32 0.0, %v9654
        %v9656 = vpop.f32.mrb[0].mxu0
        %9657 = vmatprep.mubr.f32.mxu0 0.0
        %9658 = vmatmul.mubr.f32.gmra.mrb[0].mxu0 %v5067
        %v9659 = vpop.f32.mrb[0].mxu0
        %v9660 = vadd.f32 0.0, %v9659
        %v9661 = vpop.f32.mrb[0].mxu0
        %9662 = vmatprep.mubr.f32.mxu0 0.0
        %9663 = vmatmul.mubr.f32.gmra.mrb[0].mxu0 %v5068
        %v9664 = vpop.f32.mrb[0].mxu0
        %v9665 = vadd.f32 0.0, %v9664
        %v9666 = vpop.f32.mrb[0].mxu0
        %9667 = vmatprep.mubr.f32.mxu0 0.0
        %9668 = vmatmul.mubr.f32.gmra.mrb[0].mxu0 %v5069
        %v9669 = vpop.f32.mrb[0].mxu0
        %v9670 = vadd.f32 0.0, %v9669
        %v9671 = vpop.f32.mrb[0].mxu0
        %9672 = vmatprep.mubr.f32.mxu0 0.0
        %9673 = vmatmul.mubr.f32.gmra.mrb[0].mxu0 %v5070
        %v9674 = vpop.f32.mrb[0].mxu0
        %v9675 = vadd.f32 0.0, %v9674
        %v9676 = vpop.f32.mrb[0].mxu0
        %9677 = vmatprep.mubr.f32.mxu0 0.0
        %9678 = vmatmul.mubr.f32.gmra.mrb[0].mxu0 %v5071
        %v9679 = vpop.f32.mrb[0].mxu0
        %v9680 = vadd.f32 0.0, %v9679
        %v9681 = vpop.f32.mrb[0].mxu0
        %9682 = vmatprep.mubr.f32.mxu0 0.0
        %9683 = vmatmul.mubr.f32.gmra.mrb[0].mxu0 %v5072
        %v9684 = vpop.f32.mrb[0].mxu0
        %v9685 = vadd.f32 0.0, %v9684
        %v9686 = vpop.f32.mrb[0].mxu0
        %9687 = vmatprep.mubr.f32.mxu0 0.0
        %9688 = vmatmul.mubr.f32.gmra.mrb[0].mxu0 %v5073
        %v9689 = vpop.f32.mrb[0].mxu0
        %v9690 = vadd.f32 0.0, %v9689
        %v9691 = vpop.f32.mrb[0].mxu0
        %9692 = vmatprep.mubr.f32.mxu0 0.0
        %9693 = vmatmul.mubr.f32.gmra.mrb[0].mxu0 %v5074
        %v9694 = vpop.f32.mrb[0].mxu0
        %v9695 = vadd.f32 0.0, %v9694
        %v9696 = vpop.f32.mrb[0].mxu0
        %9697 = vmatprep.mubr.f32.mxu0 0.0
        %9698 = vmatmul.mubr.f32.gmra.mrb[0].mxu0 %v5075
        %v9699 = vpop.f32.mrb[0].mxu0
        %v9700 = vadd.f32 0.0, %v9699
        %v9701 = vpop.f32.mrb[0].mxu0
        %9702 = vmatprep.mubr.f32.mxu0 0.0
        %9703 = vmatmul.mubr.f32.gmra.mrb[0].mxu0 %v5076
        %v9704 = vpop.f32.mrb[0].mxu0
        %v9705 = vadd.f32 0.0, %v9704
        %v9706 = vpop.f32.mrb[0].mxu0
        %9707 = vmatprep.mubr.f32.mxu0 0.0
        %9708 = vmatmul.mubr.f32.gmra.mrb[0].mxu0 %v5077
        %v9709 = vpop.f32.mrb[0].mxu0
        %v9710 = vadd.f32 0.0, %v9709
        %v9711 = vpop.f32.mrb[0].mxu0
        %9712 = vmatprep.mubr.f32.mxu0 0.0
        %9713 = vmatmul.mubr.f32.gmra.mrb[0].mxu0 %v5078
        %v9714 = vpop.f32.mrb[0].mxu0
        %v9715 = vadd.f32 0.0, %v9714
        %v9716 = vpop.f32.mrb[0].mxu0
        %9717 = vmatprep.mubr.f32.mxu0 0.0
        %9718 = vmatmul.mubr.f32.gmra.mrb[0].mxu0 %v5079
        %v9719 = vpop.f32.mrb[0].mxu0
        %v9720 = vadd.f32 0.0, %v9719
        %v9721 = vpop.f32.mrb[0].mxu0
        %9722 = vmatprep.mubr.f32.mxu0 0.0
        %9723 = vmatmul.mubr.f32.gmra.mrb[0].mxu0 %v5080
        %v9724 = vpop.f32.mrb[0].mxu0
        %v9725 = vadd.f32 0.0, %v9724
        %v9726 = vpop.f32.mrb[0].mxu0
        %9727 = vmatprep.mubr.f32.mxu0 0.0
        %9728 = vmatmul.mubr.f32.gmra.mrb[0].mxu0 %v5081
        %v9729 = vpop.f32.mrb[0].mxu0
        %v9730 = vadd.f32 0.0, %v9729
        %v9731 = vpop.f32.mrb[0].mxu0
        %9732 = vmatprep.mubr.f32.mxu0 0.0
        %9733 = vmatmul.mubr.f32.gmra.mrb[0].mxu0 %v5082
        %v9734 = vpop.f32.mrb[0].mxu0
        %v9735 = vadd.f32 0.0, %v9734
        %v9736 = vpop.f32.mrb[0].mxu0
        %9737 = vdwg.mxu0
        %v9738 = vadd.f32 %v9465, %v9580
        %v9739 = vadd.f32 %v9466, %v9585
        %v9740 = vadd.f32 %v9467, %v9590
        %v9741 = vadd.f32 %v9468, %v9595
        %v9742 = vadd.f32 %v9469, %v9600
        %v9743 = vadd.f32 %v9470, %v9605
        %v9744 = vadd.f32 %v9471, %v9610
        %v9745 = vadd.f32 %v9472, %v9615
        %v9746 = vadd.f32 %v9473, %v9620
        %v9747 = vadd.f32 %v9474, %v9625
        %v9748 = vadd.f32 %v9475, %v9630
        %v9749 = vadd.f32 %v9476, %v9635
        %v9750 = vadd.f32 %v9477, %v9640
        %v9751 = vadd.f32 %v9478, %v9645
        %v9752 = vadd.f32 %v9479, %v9650
        %v9753 = vadd.f32 %v9480, %v9655
        %v9754 = vadd.f32 %v9481, %v9660
        %v9755 = vadd.f32 %v9482, %v9665
        %v9756 = vadd.f32 %v9483, %v9670
        %v9757 = vadd.f32 %v9484, %v9675
        %v9758 = vadd.f32 %v9485, %v9680
        %v9759 = vadd.f32 %v9486, %v9685
        %v9760 = vadd.f32 %v9487, %v9690
        %v9761 = vadd.f32 %v9488, %v9695
        %v9762 = vadd.f32 %v9489, %v9700
        %v9763 = vadd.f32 %v9490, %v9705
        %v9764 = vadd.f32 %v9491, %v9710
        %v9765 = vadd.f32 %v9492, %v9715
        %v9766 = vadd.f32 %v9493, %v9720
        %v9767 = vadd.f32 %v9494, %v9725
        %v9768 = vadd.f32 %v9495, %v9730
        %v9769 = vadd.f32 %v9496, %v9735
        %9770 = vst [vmem:[%s516] sm:$0xff] %v9738
        %9771 = vst [vmem:[%s516 + $0x8] sm:$0xff] %v9739
        %9772 = vst [vmem:[%s516 + $0x10] sm:$0xff] %v9740
        %9773 = vst [vmem:[%s516 + $0x18] sm:$0xff] %v9741
        %9774 = vst [vmem:[%s516 + $0x20] sm:$0xff] %v9742
        %9775 = vst [vmem:[%s516 + $0x28] sm:$0xff] %v9743
        %9776 = vst [vmem:[%s516 + $0x30] sm:$0xff] %v9744
        %9777 = vst [vmem:[%s516 + $0x38] sm:$0xff] %v9745
        %9778 = vst [vmem:[%s516 + $0x40] sm:$0xff] %v9746
        %9779 = vst [vmem:[%s516 + $0x48] sm:$0xff] %v9747
        %9780 = vst [vmem:[%s516 + $0x50] sm:$0xff] %v9748
        %9781 = vst [vmem:[%s516 + $0x58] sm:$0xff] %v9749
        %9782 = vst [vmem:[%s516 + $0x60] sm:$0xff] %v9750
        %9783 = vst [vmem:[%s516 + $0x68] sm:$0xff] %v9751
        %9784 = vst [vmem:[%s516 + $0x70] sm:$0xff] %v9752
        %9785 = vst [vmem:[%s516 + $0x78] sm:$0xff] %v9753
        %9786 = vst [vmem:[%s516 + $0x80] sm:$0xff] %v9754
        %9787 = vst [vmem:[%s516 + $0x88] sm:$0xff] %v9755
        %9788 = vst [vmem:[%s516 + $0x90] sm:$0xff] %v9756
        %9789 = vst [vmem:[%s516 + $0x98] sm:$0xff] %v9757
        %9790 = vst [vmem:[%s516 + $0xa0] sm:$0xff] %v9758
        %9791 = vst [vmem:[%s516 + $0xa8] sm:$0xff] %v9759
        %9792 = vst [vmem:[%s516 + $0xb0] sm:$0xff] %v9760
        %9793 = vst [vmem:[%s516 + $0xb8] sm:$0xff] %v9761
        %9794 = vst [vmem:[%s516 + $0xc0] sm:$0xff] %v9762
        %9795 = vst [vmem:[%s516 + $0xc8] sm:$0xff] %v9763
        %9796 = vst [vmem:[%s516 + $0xd0] sm:$0xff] %v9764
        %9797 = vst [vmem:[%s516 + $0xd8] sm:$0xff] %v9765
        %9798 = vst [vmem:[%s516 + $0xe0] sm:$0xff] %v9766
        %9799 = vst [vmem:[%s516 + $0xe8] sm:$0xff] %v9767
        %9800 = vst [vmem:[%s516 + $0xf0] sm:$0xff] %v9768
        %9801 = vst [vmem:[%s516 + $0xf8] sm:$0xff] %v9769
        %s9802 = sand.u32 %s282, 1
        %s9803 = scalar_lea.sflag [#allocation5], %s9802
        %s9804 = sand.u32 %s282, 1
        %s9805 = smul.addr %s9804, 256
        %s9806 = scalar_lea.vmem [#allocation15], %s9805
        // Predicated region
        $region93: #{tpu_custom_call.1} parent=63 // pred_check
          %p9807 = pneg %p292
        $region94: #{tpu_custom_call.1} parent=63 // pred_check_branch
          %9809 = sbr.rel (%p9807) target = $region96
        $region95: #{tpu_custom_call.1} parent=63 // pred_region
          %s9811 = ssub.s32 4096, 4096
          %9812 = vsyncadd %s9803, %s9811
          %s9813 = smul.addr %s33, 32
          %s9814 = smul.addr %s9813, 128
          %s9815 = scalar_lea.hbm %s11, %s9814
          %s9816 = sshll.u32 %s9806, 4
          %s9817 = int_to_ptr.vmem [resolvable:$true] %s9816
          %9822 = dma.vmem_to_hbm [thread:$0]  %s9817, 4096, %s9815, %s9803, 128, 128, 8
        $region96: #{tpu_custom_call.1} parent=63 // pred_fallthru
          _
      $region64: #{tpu_custom_call.1} parent=5 // pred_fallthru
        _
      %p9823 = scmp.le.s32.totalorder 2, %s28
      // Predicated region
      $region97: #{tpu_custom_call.1} parent=5 // pred_check
        %p9824 = pneg %p9823
      $region98: #{tpu_custom_call.1} parent=5 // pred_check_branch
        %9826 = sbr.rel (%p9824) target = $region100
      $region99: #{tpu_custom_call.1} parent=5 // pred_region
        %s9827 = ssub.s32 %s28, 2
        // Predicated region
        $region101: #{tpu_custom_call.1} parent=99 // pred_check
          %p9828 = pneg %p298
        $region102: #{tpu_custom_call.1} parent=99 // pred_check_branch
          %9830 = sbr.rel (%p9828) target = $region104
        $region103: #{tpu_custom_call.1} parent=99 // pred_region
          %s9831 = sand.u32 %s283, 1
          %s9832 = scalar_lea.sflag [#allocation5], %s9831
          %s9833 = sand.u32 %s283, 1
          %s9834 = smul.addr %s9833, 256
          %s9835 = scalar_lea.vmem [#allocation15], %s9834
          %9836 = dma.done %s9832, 4096
        $region104: #{tpu_custom_call.1} parent=99 // pred_fallthru
          _
      $region100: #{tpu_custom_call.1} parent=5 // pred_fallthru
        _
    $region6: #{tpu_custom_call.1} parent=1 // loop_footer
      %s32 = sadd.s32 1, %s28
    $region7: #{tpu_custom_call.1} parent=1 // loop_footer_branch
      %27 = sbr.rel target = $region3
    $region8: #{tpu_custom_call.1} parent=1 // loop_exit
      _
    %9837 = vsyncpa [#allocation4], 1
    %s9838 = scalar_lea.sflag [#allocation4], 1
    %9839 = vsyncpa %s9838, 1
    %9840 = vsyncpa [#allocation7], 1
    %s9841 = scalar_lea.sflag [#allocation7], 1
    %9842 = vsyncpa %s9841, 1
    %9843 = vsyncpa [#allocation10], 1
    %9844 = vsyncpa [#allocation13], 1
    %9845 = vsyncpa [#allocation5], 1
    %s9846 = scalar_lea.sflag [#allocation5], 1
    %9847 = vsyncpa %s9846, 1

</llo_original>
